<compile_context>
chip_gen: v7x
topology: tpu7x:2x2x1
jax: 0.10.0
libtpu: 0.0.40
codegen_flags: <defaults>
</compile_context>

<pallas_src>
import jax
import jax.numpy as jnp
from jax.experimental import pallas as pl
from jax.experimental.pallas import tpu as pltpu

# ---- small synthetic DistilBERT config ----
NUM_MODELS = 2
NUM_LAYERS = 2
HIDDEN     = 32
NUM_HEADS  = 2
HEAD_DIM   = HIDDEN // NUM_HEADS
FFN        = 4 * HIDDEN
VOCAB      = 64
MAX_LEN    = 8
BATCH      = 2
LN_EPS     = 1e-12


class EnsembleOutput:
    def __init__(self, start_logits, end_logits):
        self.start_logits = start_logits
        self.end_logits = end_logits


def _layernorm(x, g, b):
    mu = jnp.mean(x, axis=-1, keepdims=True)
    var = jnp.mean((x - mu) ** 2, axis=-1, keepdims=True)
    return (x - mu) * jax.lax.rsqrt(var + LN_EPS) * g + b


def _gelu(x):
    # TODO(synk): HF DistilBERT uses exact (erf) GELU; tanh approximation used here.
    return jax.nn.gelu(x, approximate=True)


def _ensemble_kernel(x_ref, mask_ref, wa_ref, w2_ref, vec_ref, b1_ref,
                     qaw_ref, qab_ref, out_ref):
    # x_ref:   (M, B, S, H)   embedded + layernormed hidden states
    # mask_ref:(B, S)
    # wa_ref:  (M, L, H, 8H)  packed [Wq | Wk | Wv | Wo | W1]
    # w2_ref:  (M, L, FFN, H)
    # vec_ref: (M, L, 9, H)   rows: qb,kb,vb,ob,sa_g,sa_b,b2,out_g,out_b
    # b1_ref:  (M, L, FFN)
    # qaw_ref: (M, H, 2), qab_ref: (M, 2)
    # out_ref: (M, B, S, 2)   QA logits (start, end) per model
    H = HIDDEN
    mask_b = (mask_ref[...] > 0.0)[:, None, :]          # (B, 1, S_k)
    neg = jnp.finfo(jnp.float32).min
    inv_sqrt_d = 1.0 / jnp.sqrt(jnp.float32(HEAD_DIM))

    for m in range(NUM_MODELS):                          # unrolled, M = 2
        x = x_ref[m]                                     # (B, S, H)
        for l in range(NUM_LAYERS):                      # unrolled, L = 2
            wa = wa_ref[m, l]                            # (H, 8H)
            wqkv = wa[:, 0:3 * H]                        # (H, 3H)
            wo   = wa[:, 3 * H:4 * H]                    # (H, H)
            w1   = wa[:, 4 * H:8 * H]                    # (H, FFN)
            qb   = vec_ref[m, l, 0]
            kb   = vec_ref[m, l, 1]
            vb   = vec_ref[m, l, 2]
            ob   = vec_ref[m, l, 3]
            sa_g = vec_ref[m, l, 4]
            sa_b = vec_ref[m, l, 5]
            b2   = vec_ref[m, l, 6]
            o_g  = vec_ref[m, l, 7]
            o_b  = vec_ref[m, l, 8]

            # fused Q/K/V projection: one (B,S,H) @ (H,3H) matmul
            qkv = jnp.einsum('bsh,hk->bsk', x, wqkv,
                             preferred_element_type=jnp.float32)
            q = qkv[:, :, 0:H] + qb
            k = qkv[:, :, H:2 * H] + kb
            v = qkv[:, :, 2 * H:3 * H] + vb

            # multi-head attention (NUM_HEADS = 2, statically unrolled)
            ctx_parts = []
            for h_idx in range(NUM_HEADS):
                lo, hi = h_idx * HEAD_DIM, (h_idx + 1) * HEAD_DIM
                qh, kh, vh = q[:, :, lo:hi], k[:, :, lo:hi], v[:, :, lo:hi]
                s = jnp.einsum('bqd,bkd->bqk', qh, kh,
                               preferred_element_type=jnp.float32) * inv_sqrt_d
                s = jnp.where(mask_b, s, neg)
                s = s - jnp.max(s, axis=-1, keepdims=True)
                p = jnp.exp(s)
                p = p * pl.reciprocal(jnp.sum(p, axis=-1, keepdims=True),
                                      approx=True)
                ctx_parts.append(jnp.einsum('bqk,bkd->bqd', p, vh,
                                            preferred_element_type=jnp.float32))
            ctx = jnp.concatenate(ctx_parts, axis=-1)    # (B, S, H)

            attn_out = jnp.einsum('bsh,hk->bsk', ctx, wo,
                                  preferred_element_type=jnp.float32) + ob
            x = _layernorm(attn_out + x, sa_g, sa_b)

            # feed-forward
            hdn = jnp.einsum('bsh,hf->bsf', x, w1,
                             preferred_element_type=jnp.float32) + b1_ref[m, l]
            hdn = _gelu(hdn)
            hdn = jnp.einsum('bsf,fh->bsh', hdn, w2_ref[m, l],
                             preferred_element_type=jnp.float32) + b2
            x = _layernorm(hdn + x, o_g, o_b)

        # QA head: (B, S, H) @ (H, 2) -> (B, S, 2); no in-kernel split
        logits = jnp.einsum('bsh,hc->bsc', x, qaw_ref[m],
                            preferred_element_type=jnp.float32) + qab_ref[m]
        out_ref[m] = logits


def _embed(params, input_ids):
    """Per-model embedding lookup + position embedding + layernorm (plain-JAX glue)."""
    def one(we, pe, g, b):
        e = we[input_ids] + pe[None, : input_ids.shape[1], :]
        return _layernorm(e, g, b)
    return jax.vmap(one)(params['word_emb'], params['pos_emb'],
                         params['emb_ln_g'], params['emb_ln_b'])   # (M, B, S, H)


def ensemble_forward(params, input_ids, attention_mask):
    x = _embed(params, input_ids).astype(jnp.float32)               # (M, B, S, H)
    mask = attention_mask.astype(jnp.float32)                       # (B, S)
    B, S = input_ids.shape

    # ---- pack the 20 per-model parameters into a handful of slabs ----
    wa = jnp.concatenate([params['qw'], params['kw'], params['vw'],
                          params['ow'], params['w1']], axis=-1)      # (M, L, H, 8H)
    vecs = jnp.stack([params['qb'], params['kb'], params['vb'], params['ob'],
                      params['sa_ln_g'], params['sa_ln_b'], params['b2'],
                      params['out_ln_g'], params['out_ln_b']], axis=2)  # (M, L, 9, H)

    vmem = pl.BlockSpec(memory_space=pltpu.MemorySpace.VMEM)
    logits = pl.pallas_call(
        _ensemble_kernel,
        out_shape=jax.ShapeDtypeStruct((NUM_MODELS, B, S, 2), jnp.float32),
        in_specs=[vmem] * 8,
        out_specs=vmem,
    )(x, mask, wa, params['w2'], vecs, params['b1'],
      params['qa_w'], params['qa_b'])

    # (M, B, S, 2) -> start/end of shape (B, num_models, S), matching torch.cat(dim=1)
    start = jnp.transpose(logits[..., 0], (1, 0, 2))
    end = jnp.transpose(logits[..., 1], (1, 0, 2))
    return EnsembleOutput(start, end)


def init_params(key):
    std = 0.02
    ks = jax.random.split(key, 10)
    f32 = jnp.float32
    M, L, H = NUM_MODELS, NUM_LAYERS, HIDDEN
    return {
        'word_emb': jax.random.normal(ks[0], (M, VOCAB, H), f32) * std,
        'pos_emb':  jax.random.normal(ks[1], (M, MAX_LEN, H), f32) * std,
        'emb_ln_g': jnp.ones((M, H), f32),
        'emb_ln_b': jnp.zeros((M, H), f32),
        'qw': jax.random.normal(ks[2], (M, L, H, H), f32) * std,
        'qb': jnp.zeros((M, L, H), f32),
        'kw': jax.random.normal(ks[3], (M, L, H, H), f32) * std,
        'kb': jnp.zeros((M, L, H), f32),
        'vw': jax.random.normal(ks[4], (M, L, H, H), f32) * std,
        'vb': jnp.zeros((M, L, H), f32),
        'ow': jax.random.normal(ks[5], (M, L, H, H), f32) * std,
        'ob': jnp.zeros((M, L, H), f32),
        'sa_ln_g': jnp.ones((M, L, H), f32),
        'sa_ln_b': jnp.zeros((M, L, H), f32),
        'w1': jax.random.normal(ks[6], (M, L, H, FFN), f32) * std,
        'b1': jnp.zeros((M, L, FFN), f32),
        'w2': jax.random.normal(ks[7], (M, L, FFN, H), f32) * std,
        'b2': jnp.zeros((M, L, H), f32),
        'out_ln_g': jnp.ones((M, L, H), f32),
        'out_ln_b': jnp.zeros((M, L, H), f32),
        'qa_w': jax.random.normal(ks[8], (M, H, 2), f32) * std,
        'qa_b': jnp.zeros((M, 2), f32),
    }


if __name__ == "__main__":
    key = jax.random.PRNGKey(0)
    pkey, ikey = jax.random.split(key)
    params = init_params(pkey)

    input_ids = jax.random.randint(ikey, (BATCH, MAX_LEN), 0, VOCAB, dtype=jnp.int32)
    # deterministic attention mask: row 0 fully attended, row 1 has last 3 tokens padded
    pos = jnp.arange(MAX_LEN)[None, :]
    lens = jnp.array([[MAX_LEN], [MAX_LEN - 3]], dtype=jnp.int32)
    attention_mask = (pos < lens).astype(jnp.int32)                  # (B, S)

    out = ensemble_forward(params, input_ids, attention_mask)
    jax.block_until_ready(out.start_logits)
    jax.block_until_ready(out.end_logits)

    assert out.start_logits.shape == (BATCH, NUM_MODELS, MAX_LEN)
    assert out.end_logits.shape == (BATCH, NUM_MODELS, MAX_LEN)
    print("KERNEL_OK")
</pallas_src>

<mosaic_0001>
module attributes {stable_mosaic.version = 11 : i64} {
  func.func @_ensemble_kernel(%arg0: memref<2x2x8x32xf32, #tpu.memory_space<vmem>>, %arg1: memref<2x8xf32, #tpu.memory_space<vmem>>, %arg2: memref<2x2x32x256xf32, #tpu.memory_space<vmem>>, %arg3: memref<2x2x128x32xf32, #tpu.memory_space<vmem>>, %arg4: memref<2x2x9x32xf32, #tpu.memory_space<vmem>>, %arg5: memref<2x2x128xf32, #tpu.memory_space<vmem>>, %arg6: memref<2x32x2xf32, #tpu.memory_space<vmem>>, %arg7: memref<2x2xf32, #tpu.memory_space<vmem>>, %arg8: memref<2x2x8x2xf32, #tpu.memory_space<vmem>>) attributes {dimension_semantics = [], scalar_prefetch = 0 : i64, scratch_operands = 0 : i64, tpu.core_type = #tpu.core_type<tc>} {
    %c0 = arith.constant 0 : index
    %c0_0 = arith.constant 0 : index
    %0 = vector.load %arg1[%c0, %c0_0] : memref<2x8xf32, #tpu.memory_space<vmem>>, vector<2x8xf32>
    %cst = arith.constant 0.000000e+00 : f32
    %1 = vector.broadcast %cst : f32 to vector<2x8xf32>
    %2 = arith.cmpf ogt, %0, %1 : vector<2x8xf32>
    %3 = vector.shape_cast %2 : vector<2x8xi1> to vector<2x1x8xi1>
    %cst_1 = arith.constant 1.600000e+01 : f32
    %4 = math.sqrt %cst_1 : f32
    %cst_2 = arith.constant 1.000000e+00 : f32
    %5 = arith.divf %cst_2, %4 : f32
    %c0_3 = arith.constant 0 : index
    %c0_4 = arith.constant 0 : index
    %c0_5 = arith.constant 0 : index
    %c0_6 = arith.constant 0 : index
    %6 = vector.load %arg0[%c0_3, %c0_4, %c0_5, %c0_6] : memref<2x2x8x32xf32, #tpu.memory_space<vmem>>, vector<1x2x8x32xf32>
    %7 = vector.shape_cast %6 : vector<1x2x8x32xf32> to vector<2x8x32xf32>
    %c0_7 = arith.constant 0 : index
    %c0_8 = arith.constant 0 : index
    %c0_9 = arith.constant 0 : index
    %c0_10 = arith.constant 0 : index
    %8 = vector.load %arg2[%c0_7, %c0_8, %c0_9, %c0_10] : memref<2x2x32x256xf32, #tpu.memory_space<vmem>>, vector<1x1x32x256xf32>
    %9 = vector.shape_cast %8 : vector<1x1x32x256xf32> to vector<32x256xf32>
    %10 = vector.extract_strided_slice %9 {offsets = [0, 0], sizes = [32, 96], strides = [1, 1]} : vector<32x256xf32> to vector<32x96xf32>
    %11 = vector.extract_strided_slice %9 {offsets = [0, 96], sizes = [32, 32], strides = [1, 1]} : vector<32x256xf32> to vector<32x32xf32>
    %12 = vector.extract_strided_slice %9 {offsets = [0, 128], sizes = [32, 128], strides = [1, 1]} : vector<32x256xf32> to vector<32x128xf32>
    %c0_11 = arith.constant 0 : index
    %c0_12 = arith.constant 0 : index
    %c0_13 = arith.constant 0 : index
    %c0_14 = arith.constant 0 : index
    %13 = vector.load %arg4[%c0_11, %c0_12, %c0_13, %c0_14] : memref<2x2x9x32xf32, #tpu.memory_space<vmem>>, vector<1x1x1x32xf32>
    %14 = vector.shape_cast %13 : vector<1x1x1x32xf32> to vector<32xf32>
    %c0_15 = arith.constant 0 : index
    %c0_16 = arith.constant 0 : index
    %c1 = arith.constant 1 : index
    %c0_17 = arith.constant 0 : index
    %15 = vector.load %arg4[%c0_15, %c0_16, %c1, %c0_17] : memref<2x2x9x32xf32, #tpu.memory_space<vmem>>, vector<1x1x1x32xf32>
    %16 = vector.shape_cast %15 : vector<1x1x1x32xf32> to vector<32xf32>
    %c0_18 = arith.constant 0 : index
    %c0_19 = arith.constant 0 : index
    %c2 = arith.constant 2 : index
    %c0_20 = arith.constant 0 : index
    %17 = vector.load %arg4[%c0_18, %c0_19, %c2, %c0_20] : memref<2x2x9x32xf32, #tpu.memory_space<vmem>>, vector<1x1x1x32xf32>
    %18 = vector.shape_cast %17 : vector<1x1x1x32xf32> to vector<32xf32>
    %c0_21 = arith.constant 0 : index
    %c0_22 = arith.constant 0 : index
    %c3 = arith.constant 3 : index
    %c0_23 = arith.constant 0 : index
    %19 = vector.load %arg4[%c0_21, %c0_22, %c3, %c0_23] : memref<2x2x9x32xf32, #tpu.memory_space<vmem>>, vector<1x1x1x32xf32>
    %20 = vector.shape_cast %19 : vector<1x1x1x32xf32> to vector<32xf32>
    %c0_24 = arith.constant 0 : index
    %c0_25 = arith.constant 0 : index
    %c4 = arith.constant 4 : index
    %c0_26 = arith.constant 0 : index
    %21 = vector.load %arg4[%c0_24, %c0_25, %c4, %c0_26] : memref<2x2x9x32xf32, #tpu.memory_space<vmem>>, vector<1x1x1x32xf32>
    %22 = vector.shape_cast %21 : vector<1x1x1x32xf32> to vector<32xf32>
    %c0_27 = arith.constant 0 : index
    %c0_28 = arith.constant 0 : index
    %c5 = arith.constant 5 : index
    %c0_29 = arith.constant 0 : index
    %23 = vector.load %arg4[%c0_27, %c0_28, %c5, %c0_29] : memref<2x2x9x32xf32, #tpu.memory_space<vmem>>, vector<1x1x1x32xf32>
    %24 = vector.shape_cast %23 : vector<1x1x1x32xf32> to vector<32xf32>
    %c0_30 = arith.constant 0 : index
    %c0_31 = arith.constant 0 : index
    %c6 = arith.constant 6 : index
    %c0_32 = arith.constant 0 : index
    %25 = vector.load %arg4[%c0_30, %c0_31, %c6, %c0_32] : memref<2x2x9x32xf32, #tpu.memory_space<vmem>>, vector<1x1x1x32xf32>
    %26 = vector.shape_cast %25 : vector<1x1x1x32xf32> to vector<32xf32>
    %c0_33 = arith.constant 0 : index
    %c0_34 = arith.constant 0 : index
    %c7 = arith.constant 7 : index
    %c0_35 = arith.constant 0 : index
    %27 = vector.load %arg4[%c0_33, %c0_34, %c7, %c0_35] : memref<2x2x9x32xf32, #tpu.memory_space<vmem>>, vector<1x1x1x32xf32>
    %28 = vector.shape_cast %27 : vector<1x1x1x32xf32> to vector<32xf32>
    %c0_36 = arith.constant 0 : index
    %c0_37 = arith.constant 0 : index
    %c8 = arith.constant 8 : index
    %c0_38 = arith.constant 0 : index
    %29 = vector.load %arg4[%c0_36, %c0_37, %c8, %c0_38] : memref<2x2x9x32xf32, #tpu.memory_space<vmem>>, vector<1x1x1x32xf32>
    %30 = vector.shape_cast %29 : vector<1x1x1x32xf32> to vector<32xf32>
    "tpu.trace_start"() <{level = 10 : i32, message = "bsh,hk->bsk"}> : () -> ()
    %cst_39 = arith.constant dense<0.000000e+00> : vector<2x8x96xf32>
    %31 = tpu.matmul %7, %10, %cst_39 {dimension_numbers = #tpu.dot_dimension_numbers<[2], [0], [0, 1], [1], [0, 0, 0, 1, 1, 1], [], []>} : vector<2x8x32xf32>, vector<32x96xf32>, vector<2x8x96xf32> -> vector<2x8x96xf32>
    "tpu.trace_stop"() : () -> ()
    %32 = vector.extract_strided_slice %31 {offsets = [0, 0, 0], sizes = [2, 8, 32], strides = [1, 1, 1]} : vector<2x8x96xf32> to vector<2x8x32xf32>
    %33 = vector.shape_cast %14 : vector<32xf32> to vector<1x1x32xf32>
    %34 = vector.broadcast %33 : vector<1x1x32xf32> to vector<2x8x32xf32>
    %35 = arith.addf %32, %34 : vector<2x8x32xf32>
    %36 = vector.extract_strided_slice %31 {offsets = [0, 0, 32], sizes = [2, 8, 32], strides = [1, 1, 1]} : vector<2x8x96xf32> to vector<2x8x32xf32>
    %37 = vector.shape_cast %16 : vector<32xf32> to vector<1x1x32xf32>
    %38 = vector.broadcast %37 : vector<1x1x32xf32> to vector<2x8x32xf32>
    %39 = arith.addf %36, %38 : vector<2x8x32xf32>
    %40 = vector.extract_strided_slice %31 {offsets = [0, 0, 64], sizes = [2, 8, 32], strides = [1, 1, 1]} : vector<2x8x96xf32> to vector<2x8x32xf32>
    %41 = vector.shape_cast %18 : vector<32xf32> to vector<1x1x32xf32>
    %42 = vector.broadcast %41 : vector<1x1x32xf32> to vector<2x8x32xf32>
    %43 = arith.addf %40, %42 : vector<2x8x32xf32>
    %44 = vector.extract_strided_slice %35 {offsets = [0, 0, 0], sizes = [2, 8, 16], strides = [1, 1, 1]} : vector<2x8x32xf32> to vector<2x8x16xf32>
    %45 = vector.extract_strided_slice %39 {offsets = [0, 0, 0], sizes = [2, 8, 16], strides = [1, 1, 1]} : vector<2x8x32xf32> to vector<2x8x16xf32>
    %46 = vector.extract_strided_slice %43 {offsets = [0, 0, 0], sizes = [2, 8, 16], strides = [1, 1, 1]} : vector<2x8x32xf32> to vector<2x8x16xf32>
    "tpu.trace_start"() <{level = 10 : i32, message = "bqd,bkd->bqk"}> : () -> ()
    %cst_40 = arith.constant dense<0.000000e+00> : vector<2x8x8xf32>
    %47 = tpu.matmul %44, %45, %cst_40 {dimension_numbers = #tpu.dot_dimension_numbers<[2], [2], [1], [1], [0, 0, 0, 1, 1, 1], [0], [0]>} : vector<2x8x16xf32>, vector<2x8x16xf32>, vector<2x8x8xf32> -> vector<2x8x8xf32>
    "tpu.trace_stop"() : () -> ()
    %48 = vector.broadcast %5 : f32 to vector<2x8x8xf32>
    %49 = arith.mulf %47, %48 : vector<2x8x8xf32>
    %cst_41 = arith.constant -3.40282347E+38 : f32
    %50 = vector.shape_cast %3 : vector<2x1x8xi1> to vector<2x1x8xi1>
    %51 = vector.broadcast %50 : vector<2x1x8xi1> to vector<2x8x8xi1>
    %52 = vector.broadcast %cst_41 : f32 to vector<2x8x8xf32>
    %53 = arith.select %51, %49, %52 : vector<2x8x8xi1>, vector<2x8x8xf32>
    %cst_42 = arith.constant dense<0xFF800000> : vector<2x8xf32>
    %54 = vector.multi_reduction <maximumf>, %53, %cst_42 [2] : vector<2x8x8xf32> to vector<2x8xf32>
    %55 = vector.shape_cast %54 : vector<2x8xf32> to vector<2x8x1xf32>
    %56 = vector.broadcast %55 : vector<2x8x1xf32> to vector<2x8x8xf32>
    %57 = arith.subf %53, %56 : vector<2x8x8xf32>
    %58 = math.exp %57 : vector<2x8x8xf32>
    %cst_43 = arith.constant dense<0.000000e+00> : vector<2x8xf32>
    %59 = vector.multi_reduction <add>, %58, %cst_43 [2] : vector<2x8x8xf32> to vector<2x8xf32>
    %60 = vector.shape_cast %59 : vector<2x8xf32> to vector<2x8x1xf32>
    %61 = tpu.reciprocal %60 {approx = true} : vector<2x8x1xf32> -> vector<2x8x1xf32>
    %62 = vector.broadcast %61 : vector<2x8x1xf32> to vector<2x8x8xf32>
    %63 = arith.mulf %58, %62 : vector<2x8x8xf32>
    "tpu.trace_start"() <{level = 10 : i32, message = "bqk,bkd->bqd"}> : () -> ()
    %cst_44 = arith.constant dense<0.000000e+00> : vector<2x8x16xf32>
    %64 = tpu.matmul %63, %46, %cst_44 {dimension_numbers = #tpu.dot_dimension_numbers<[2], [1], [1], [2], [0, 0, 0, 1, 1, 2], [0], [0]>} : vector<2x8x8xf32>, vector<2x8x16xf32>, vector<2x8x16xf32> -> vector<2x8x16xf32>
    "tpu.trace_stop"() : () -> ()
    %65 = vector.extract_strided_slice %35 {offsets = [0, 0, 16], sizes = [2, 8, 16], strides = [1, 1, 1]} : vector<2x8x32xf32> to vector<2x8x16xf32>
    %66 = vector.extract_strided_slice %39 {offsets = [0, 0, 16], sizes = [2, 8, 16], strides = [1, 1, 1]} : vector<2x8x32xf32> to vector<2x8x16xf32>
    %67 = vector.extract_strided_slice %43 {offsets = [0, 0, 16], sizes = [2, 8, 16], strides = [1, 1, 1]} : vector<2x8x32xf32> to vector<2x8x16xf32>
    "tpu.trace_start"() <{level = 10 : i32, message = "bqd,bkd->bqk"}> : () -> ()
    %cst_45 = arith.constant dense<0.000000e+00> : vector<2x8x8xf32>
    %68 = tpu.matmul %65, %66, %cst_45 {dimension_numbers = #tpu.dot_dimension_numbers<[2], [2], [1], [1], [0, 0, 0, 1, 1, 1], [0], [0]>} : vector<2x8x16xf32>, vector<2x8x16xf32>, vector<2x8x8xf32> -> vector<2x8x8xf32>
    "tpu.trace_stop"() : () -> ()
    %69 = vector.broadcast %5 : f32 to vector<2x8x8xf32>
    %70 = arith.mulf %68, %69 : vector<2x8x8xf32>
    %cst_46 = arith.constant -3.40282347E+38 : f32
    %71 = vector.shape_cast %3 : vector<2x1x8xi1> to vector<2x1x8xi1>
    %72 = vector.broadcast %71 : vector<2x1x8xi1> to vector<2x8x8xi1>
    %73 = vector.broadcast %cst_46 : f32 to vector<2x8x8xf32>
    %74 = arith.select %72, %70, %73 : vector<2x8x8xi1>, vector<2x8x8xf32>
    %cst_47 = arith.constant dense<0xFF800000> : vector<2x8xf32>
    %75 = vector.multi_reduction <maximumf>, %74, %cst_47 [2] : vector<2x8x8xf32> to vector<2x8xf32>
    %76 = vector.shape_cast %75 : vector<2x8xf32> to vector<2x8x1xf32>
    %77 = vector.broadcast %76 : vector<2x8x1xf32> to vector<2x8x8xf32>
    %78 = arith.subf %74, %77 : vector<2x8x8xf32>
    %79 = math.exp %78 : vector<2x8x8xf32>
    %cst_48 = arith.constant dense<0.000000e+00> : vector<2x8xf32>
    %80 = vector.multi_reduction <add>, %79, %cst_48 [2] : vector<2x8x8xf32> to vector<2x8xf32>
    %81 = vector.shape_cast %80 : vector<2x8xf32> to vector<2x8x1xf32>
    %82 = tpu.reciprocal %81 {approx = true} : vector<2x8x1xf32> -> vector<2x8x1xf32>
    %83 = vector.broadcast %82 : vector<2x8x1xf32> to vector<2x8x8xf32>
    %84 = arith.mulf %79, %83 : vector<2x8x8xf32>
    "tpu.trace_start"() <{level = 10 : i32, message = "bqk,bkd->bqd"}> : () -> ()
    %cst_49 = arith.constant dense<0.000000e+00> : vector<2x8x16xf32>
    %85 = tpu.matmul %84, %67, %cst_49 {dimension_numbers = #tpu.dot_dimension_numbers<[2], [1], [1], [2], [0, 0, 0, 1, 1, 2], [0], [0]>} : vector<2x8x8xf32>, vector<2x8x16xf32>, vector<2x8x16xf32> -> vector<2x8x16xf32>
    "tpu.trace_stop"() : () -> ()
    %86 = tpu.concatenate %64, %85 in 2 : vector<2x8x16xf32>, vector<2x8x16xf32> -> vector<2x8x32xf32>
    "tpu.trace_start"() <{level = 10 : i32, message = "bsh,hk->bsk"}> : () -> ()
    %cst_50 = arith.constant dense<0.000000e+00> : vector<2x8x32xf32>
    %87 = tpu.matmul %86, %11, %cst_50 {dimension_numbers = #tpu.dot_dimension_numbers<[2], [0], [0, 1], [1], [0, 0, 0, 1, 1, 1], [], []>} : vector<2x8x32xf32>, vector<32x32xf32>, vector<2x8x32xf32> -> vector<2x8x32xf32>
    "tpu.trace_stop"() : () -> ()
    %88 = vector.shape_cast %20 : vector<32xf32> to vector<1x1x32xf32>
    %89 = vector.broadcast %88 : vector<1x1x32xf32> to vector<2x8x32xf32>
    %90 = arith.addf %87, %89 : vector<2x8x32xf32>
    %91 = arith.addf %90, %7 : vector<2x8x32xf32>
    %cst_51 = arith.constant dense<0.000000e+00> : vector<2x8xf32>
    %92 = vector.multi_reduction <add>, %91, %cst_51 [2] : vector<2x8x32xf32> to vector<2x8xf32>
    %93 = vector.shape_cast %92 : vector<2x8xf32> to vector<2x8x1xf32>
    %cst_52 = arith.constant 3.200000e+01 : f32
    %94 = vector.broadcast %cst_52 : f32 to vector<2x8x1xf32>
    %95 = arith.divf %93, %94 : vector<2x8x1xf32>
    %96 = vector.broadcast %95 : vector<2x8x1xf32> to vector<2x8x32xf32>
    %97 = arith.subf %91, %96 : vector<2x8x32xf32>
    %98 = arith.mulf %97, %97 : vector<2x8x32xf32>
    %cst_53 = arith.constant dense<0.000000e+00> : vector<2x8xf32>
    %99 = vector.multi_reduction <add>, %98, %cst_53 [2] : vector<2x8x32xf32> to vector<2x8xf32>
    %100 = vector.shape_cast %99 : vector<2x8xf32> to vector<2x8x1xf32>
    %cst_54 = arith.constant 3.200000e+01 : f32
    %101 = vector.broadcast %cst_54 : f32 to vector<2x8x1xf32>
    %102 = arith.divf %100, %101 : vector<2x8x1xf32>
    %103 = vector.broadcast %95 : vector<2x8x1xf32> to vector<2x8x32xf32>
    %104 = arith.subf %91, %103 : vector<2x8x32xf32>
    %cst_55 = arith.constant 9.99999996E-13 : f32
    %105 = vector.broadcast %cst_55 : f32 to vector<2x8x1xf32>
    %106 = arith.addf %102, %105 : vector<2x8x1xf32>
    %107 = math.rsqrt %106 : vector<2x8x1xf32>
    %108 = vector.broadcast %107 : vector<2x8x1xf32> to vector<2x8x32xf32>
    %109 = arith.mulf %104, %108 : vector<2x8x32xf32>
    %110 = vector.shape_cast %22 : vector<32xf32> to vector<1x1x32xf32>
    %111 = vector.broadcast %110 : vector<1x1x32xf32> to vector<2x8x32xf32>
    %112 = arith.mulf %109, %111 : vector<2x8x32xf32>
    %113 = vector.shape_cast %24 : vector<32xf32> to vector<1x1x32xf32>
    %114 = vector.broadcast %113 : vector<1x1x32xf32> to vector<2x8x32xf32>
    %115 = arith.addf %112, %114 : vector<2x8x32xf32>
    "tpu.trace_start"() <{level = 10 : i32, message = "bsh,hf->bsf"}> : () -> ()
    %cst_56 = arith.constant dense<0.000000e+00> : vector<2x8x128xf32>
    %116 = tpu.matmul %115, %12, %cst_56 {dimension_numbers = #tpu.dot_dimension_numbers<[2], [0], [0, 1], [1], [0, 0, 0, 1, 1, 1], [], []>} : vector<2x8x32xf32>, vector<32x128xf32>, vector<2x8x128xf32> -> vector<2x8x128xf32>
    "tpu.trace_stop"() : () -> ()
    %c0_57 = arith.constant 0 : index
    %c0_58 = arith.constant 0 : index
    %c0_59 = arith.constant 0 : index
    %117 = vector.load %arg5[%c0_57, %c0_58, %c0_59] : memref<2x2x128xf32, #tpu.memory_space<vmem>>, vector<1x1x128xf32>
    %118 = vector.shape_cast %117 : vector<1x1x128xf32> to vector<128xf32>
    %119 = vector.shape_cast %118 : vector<128xf32> to vector<1x1x128xf32>
    %120 = vector.broadcast %119 : vector<1x1x128xf32> to vector<2x8x128xf32>
    %121 = arith.addf %116, %120 : vector<2x8x128xf32>
    %122 = arith.mulf %121, %121 : vector<2x8x128xf32>
    %123 = arith.mulf %121, %122 : vector<2x8x128xf32>
    %cst_60 = arith.constant 4.471500e-02 : f32
    %124 = vector.broadcast %cst_60 : f32 to vector<2x8x128xf32>
    %125 = arith.mulf %124, %123 : vector<2x8x128xf32>
    %126 = arith.addf %121, %125 : vector<2x8x128xf32>
    %cst_61 = arith.constant 0.797884583 : f32
    %127 = vector.broadcast %cst_61 : f32 to vector<2x8x128xf32>
    %128 = arith.mulf %127, %126 : vector<2x8x128xf32>
    %129 = math.tanh %128 : vector<2x8x128xf32>
    %cst_62 = arith.constant 1.000000e+00 : f32
    %130 = vector.broadcast %cst_62 : f32 to vector<2x8x128xf32>
    %131 = arith.addf %130, %129 : vector<2x8x128xf32>
    %cst_63 = arith.constant 5.000000e-01 : f32
    %132 = vector.broadcast %cst_63 : f32 to vector<2x8x128xf32>
    %133 = arith.mulf %132, %131 : vector<2x8x128xf32>
    %134 = arith.mulf %121, %133 : vector<2x8x128xf32>
    %c0_64 = arith.constant 0 : index
    %c0_65 = arith.constant 0 : index
    %c0_66 = arith.constant 0 : index
    %c0_67 = arith.constant 0 : index
    %135 = vector.load %arg3[%c0_64, %c0_65, %c0_66, %c0_67] : memref<2x2x128x32xf32, #tpu.memory_space<vmem>>, vector<1x1x128x32xf32>
    %136 = vector.shape_cast %135 : vector<1x1x128x32xf32> to vector<128x32xf32>
    "tpu.trace_start"() <{level = 10 : i32, message = "bsf,fh->bsh"}> : () -> ()
    %cst_68 = arith.constant dense<0.000000e+00> : vector<2x8x32xf32>
    %137 = tpu.matmul %134, %136, %cst_68 {dimension_numbers = #tpu.dot_dimension_numbers<[2], [0], [0, 1], [1], [0, 0, 0, 1, 1, 1], [], []>} : vector<2x8x128xf32>, vector<128x32xf32>, vector<2x8x32xf32> -> vector<2x8x32xf32>
    "tpu.trace_stop"() : () -> ()
    %138 = vector.shape_cast %26 : vector<32xf32> to vector<1x1x32xf32>
    %139 = vector.broadcast %138 : vector<1x1x32xf32> to vector<2x8x32xf32>
    %140 = arith.addf %137, %139 : vector<2x8x32xf32>
    %141 = arith.addf %140, %115 : vector<2x8x32xf32>
    %cst_69 = arith.constant dense<0.000000e+00> : vector<2x8xf32>
    %142 = vector.multi_reduction <add>, %141, %cst_69 [2] : vector<2x8x32xf32> to vector<2x8xf32>
    %143 = vector.shape_cast %142 : vector<2x8xf32> to vector<2x8x1xf32>
    %cst_70 = arith.constant 3.200000e+01 : f32
    %144 = vector.broadcast %cst_70 : f32 to vector<2x8x1xf32>
    %145 = arith.divf %143, %144 : vector<2x8x1xf32>
    %146 = vector.broadcast %145 : vector<2x8x1xf32> to vector<2x8x32xf32>
    %147 = arith.subf %141, %146 : vector<2x8x32xf32>
    %148 = arith.mulf %147, %147 : vector<2x8x32xf32>
    %cst_71 = arith.constant dense<0.000000e+00> : vector<2x8xf32>
    %149 = vector.multi_reduction <add>, %148, %cst_71 [2] : vector<2x8x32xf32> to vector<2x8xf32>
    %150 = vector.shape_cast %149 : vector<2x8xf32> to vector<2x8x1xf32>
    %cst_72 = arith.constant 3.200000e+01 : f32
    %151 = vector.broadcast %cst_72 : f32 to vector<2x8x1xf32>
    %152 = arith.divf %150, %151 : vector<2x8x1xf32>
    %153 = vector.broadcast %145 : vector<2x8x1xf32> to vector<2x8x32xf32>
    %154 = arith.subf %141, %153 : vector<2x8x32xf32>
    %cst_73 = arith.constant 9.99999996E-13 : f32
    %155 = vector.broadcast %cst_73 : f32 to vector<2x8x1xf32>
    %156 = arith.addf %152, %155 : vector<2x8x1xf32>
    %157 = math.rsqrt %156 : vector<2x8x1xf32>
    %158 = vector.broadcast %157 : vector<2x8x1xf32> to vector<2x8x32xf32>
    %159 = arith.mulf %154, %158 : vector<2x8x32xf32>
    %160 = vector.shape_cast %28 : vector<32xf32> to vector<1x1x32xf32>
    %161 = vector.broadcast %160 : vector<1x1x32xf32> to vector<2x8x32xf32>
    %162 = arith.mulf %159, %161 : vector<2x8x32xf32>
    %163 = vector.shape_cast %30 : vector<32xf32> to vector<1x1x32xf32>
    %164 = vector.broadcast %163 : vector<1x1x32xf32> to vector<2x8x32xf32>
    %165 = arith.addf %162, %164 : vector<2x8x32xf32>
    %c0_74 = arith.constant 0 : index
    %c1_75 = arith.constant 1 : index
    %c0_76 = arith.constant 0 : index
    %c0_77 = arith.constant 0 : index
    %166 = vector.load %arg2[%c0_74, %c1_75, %c0_76, %c0_77] : memref<2x2x32x256xf32, #tpu.memory_space<vmem>>, vector<1x1x32x256xf32>
    %167 = vector.shape_cast %166 : vector<1x1x32x256xf32> to vector<32x256xf32>
    %168 = vector.extract_strided_slice %167 {offsets = [0, 0], sizes = [32, 96], strides = [1, 1]} : vector<32x256xf32> to vector<32x96xf32>
    %169 = vector.extract_strided_slice %167 {offsets = [0, 96], sizes = [32, 32], strides = [1, 1]} : vector<32x256xf32> to vector<32x32xf32>
    %170 = vector.extract_strided_slice %167 {offsets = [0, 128], sizes = [32, 128], strides = [1, 1]} : vector<32x256xf32> to vector<32x128xf32>
    %c0_78 = arith.constant 0 : index
    %c1_79 = arith.constant 1 : index
    %c0_80 = arith.constant 0 : index
    %c0_81 = arith.constant 0 : index
    %171 = vector.load %arg4[%c0_78, %c1_79, %c0_80, %c0_81] : memref<2x2x9x32xf32, #tpu.memory_space<vmem>>, vector<1x1x1x32xf32>
    %172 = vector.shape_cast %171 : vector<1x1x1x32xf32> to vector<32xf32>
    %c0_82 = arith.constant 0 : index
    %c1_83 = arith.constant 1 : index
    %c1_84 = arith.constant 1 : index
    %c0_85 = arith.constant 0 : index
    %173 = vector.load %arg4[%c0_82, %c1_83, %c1_84, %c0_85] : memref<2x2x9x32xf32, #tpu.memory_space<vmem>>, vector<1x1x1x32xf32>
    %174 = vector.shape_cast %173 : vector<1x1x1x32xf32> to vector<32xf32>
    %c0_86 = arith.constant 0 : index
    %c1_87 = arith.constant 1 : index
    %c2_88 = arith.constant 2 : index
    %c0_89 = arith.constant 0 : index
    %175 = vector.load %arg4[%c0_86, %c1_87, %c2_88, %c0_89] : memref<2x2x9x32xf32, #tpu.memory_space<vmem>>, vector<1x1x1x32xf32>
    %176 = vector.shape_cast %175 : vector<1x1x1x32xf32> to vector<32xf32>
    %c0_90 = arith.constant 0 : index
    %c1_91 = arith.constant 1 : index
    %c3_92 = arith.constant 3 : index
    %c0_93 = arith.constant 0 : index
    %177 = vector.load %arg4[%c0_90, %c1_91, %c3_92, %c0_93] : memref<2x2x9x32xf32, #tpu.memory_space<vmem>>, vector<1x1x1x32xf32>
    %178 = vector.shape_cast %177 : vector<1x1x1x32xf32> to vector<32xf32>
    %c0_94 = arith.constant 0 : index
    %c1_95 = arith.constant 1 : index
    %c4_96 = arith.constant 4 : index
    %c0_97 = arith.constant 0 : index
    %179 = vector.load %arg4[%c0_94, %c1_95, %c4_96, %c0_97] : memref<2x2x9x32xf32, #tpu.memory_space<vmem>>, vector<1x1x1x32xf32>
    %180 = vector.shape_cast %179 : vector<1x1x1x32xf32> to vector<32xf32>
    %c0_98 = arith.constant 0 : index
    %c1_99 = arith.constant 1 : index
    %c5_100 = arith.constant 5 : index
    %c0_101 = arith.constant 0 : index
    %181 = vector.load %arg4[%c0_98, %c1_99, %c5_100, %c0_101] : memref<2x2x9x32xf32, #tpu.memory_space<vmem>>, vector<1x1x1x32xf32>
    %182 = vector.shape_cast %181 : vector<1x1x1x32xf32> to vector<32xf32>
    %c0_102 = arith.constant 0 : index
    %c1_103 = arith.constant 1 : index
    %c6_104 = arith.constant 6 : index
    %c0_105 = arith.constant 0 : index
    %183 = vector.load %arg4[%c0_102, %c1_103, %c6_104, %c0_105] : memref<2x2x9x32xf32, #tpu.memory_space<vmem>>, vector<1x1x1x32xf32>
    %184 = vector.shape_cast %183 : vector<1x1x1x32xf32> to vector<32xf32>
    %c0_106 = arith.constant 0 : index
    %c1_107 = arith.constant 1 : index
    %c7_108 = arith.constant 7 : index
    %c0_109 = arith.constant 0 : index
    %185 = vector.load %arg4[%c0_106, %c1_107, %c7_108, %c0_109] : memref<2x2x9x32xf32, #tpu.memory_space<vmem>>, vector<1x1x1x32xf32>
    %186 = vector.shape_cast %185 : vector<1x1x1x32xf32> to vector<32xf32>
    %c0_110 = arith.constant 0 : index
    %c1_111 = arith.constant 1 : index
    %c8_112 = arith.constant 8 : index
    %c0_113 = arith.constant 0 : index
    %187 = vector.load %arg4[%c0_110, %c1_111, %c8_112, %c0_113] : memref<2x2x9x32xf32, #tpu.memory_space<vmem>>, vector<1x1x1x32xf32>
    %188 = vector.shape_cast %187 : vector<1x1x1x32xf32> to vector<32xf32>
    "tpu.trace_start"() <{level = 10 : i32, message = "bsh,hk->bsk"}> : () -> ()
    %cst_114 = arith.constant dense<0.000000e+00> : vector<2x8x96xf32>
    %189 = tpu.matmul %165, %168, %cst_114 {dimension_numbers = #tpu.dot_dimension_numbers<[2], [0], [0, 1], [1], [0, 0, 0, 1, 1, 1], [], []>} : vector<2x8x32xf32>, vector<32x96xf32>, vector<2x8x96xf32> -> vector<2x8x96xf32>
    "tpu.trace_stop"() : () -> ()
    %190 = vector.extract_strided_slice %189 {offsets = [0, 0, 0], sizes = [2, 8, 32], strides = [1, 1, 1]} : vector<2x8x96xf32> to vector<2x8x32xf32>
    %191 = vector.shape_cast %172 : vector<32xf32> to vector<1x1x32xf32>
    %192 = vector.broadcast %191 : vector<1x1x32xf32> to vector<2x8x32xf32>
    %193 = arith.addf %190, %192 : vector<2x8x32xf32>
    %194 = vector.extract_strided_slice %189 {offsets = [0, 0, 32], sizes = [2, 8, 32], strides = [1, 1, 1]} : vector<2x8x96xf32> to vector<2x8x32xf32>
    %195 = vector.shape_cast %174 : vector<32xf32> to vector<1x1x32xf32>
    %196 = vector.broadcast %195 : vector<1x1x32xf32> to vector<2x8x32xf32>
    %197 = arith.addf %194, %196 : vector<2x8x32xf32>
    %198 = vector.extract_strided_slice %189 {offsets = [0, 0, 64], sizes = [2, 8, 32], strides = [1, 1, 1]} : vector<2x8x96xf32> to vector<2x8x32xf32>
    %199 = vector.shape_cast %176 : vector<32xf32> to vector<1x1x32xf32>
    %200 = vector.broadcast %199 : vector<1x1x32xf32> to vector<2x8x32xf32>
    %201 = arith.addf %198, %200 : vector<2x8x32xf32>
    %202 = vector.extract_strided_slice %193 {offsets = [0, 0, 0], sizes = [2, 8, 16], strides = [1, 1, 1]} : vector<2x8x32xf32> to vector<2x8x16xf32>
    %203 = vector.extract_strided_slice %197 {offsets = [0, 0, 0], sizes = [2, 8, 16], strides = [1, 1, 1]} : vector<2x8x32xf32> to vector<2x8x16xf32>
    %204 = vector.extract_strided_slice %201 {offsets = [0, 0, 0], sizes = [2, 8, 16], strides = [1, 1, 1]} : vector<2x8x32xf32> to vector<2x8x16xf32>
    "tpu.trace_start"() <{level = 10 : i32, message = "bqd,bkd->bqk"}> : () -> ()
    %cst_115 = arith.constant dense<0.000000e+00> : vector<2x8x8xf32>
    %205 = tpu.matmul %202, %203, %cst_115 {dimension_numbers = #tpu.dot_dimension_numbers<[2], [2], [1], [1], [0, 0, 0, 1, 1, 1], [0], [0]>} : vector<2x8x16xf32>, vector<2x8x16xf32>, vector<2x8x8xf32> -> vector<2x8x8xf32>
    "tpu.trace_stop"() : () -> ()
    %206 = vector.broadcast %5 : f32 to vector<2x8x8xf32>
    %207 = arith.mulf %205, %206 : vector<2x8x8xf32>
    %cst_116 = arith.constant -3.40282347E+38 : f32
    %208 = vector.shape_cast %3 : vector<2x1x8xi1> to vector<2x1x8xi1>
    %209 = vector.broadcast %208 : vector<2x1x8xi1> to vector<2x8x8xi1>
    %210 = vector.broadcast %cst_116 : f32 to vector<2x8x8xf32>
    %211 = arith.select %209, %207, %210 : vector<2x8x8xi1>, vector<2x8x8xf32>
    %cst_117 = arith.constant dense<0xFF800000> : vector<2x8xf32>
    %212 = vector.multi_reduction <maximumf>, %211, %cst_117 [2] : vector<2x8x8xf32> to vector<2x8xf32>
    %213 = vector.shape_cast %212 : vector<2x8xf32> to vector<2x8x1xf32>
    %214 = vector.broadcast %213 : vector<2x8x1xf32> to vector<2x8x8xf32>
    %215 = arith.subf %211, %214 : vector<2x8x8xf32>
    %216 = math.exp %215 : vector<2x8x8xf32>
    %cst_118 = arith.constant dense<0.000000e+00> : vector<2x8xf32>
    %217 = vector.multi_reduction <add>, %216, %cst_118 [2] : vector<2x8x8xf32> to vector<2x8xf32>
    %218 = vector.shape_cast %217 : vector<2x8xf32> to vector<2x8x1xf32>
    %219 = tpu.reciprocal %218 {approx = true} : vector<2x8x1xf32> -> vector<2x8x1xf32>
    %220 = vector.broadcast %219 : vector<2x8x1xf32> to vector<2x8x8xf32>
    %221 = arith.mulf %216, %220 : vector<2x8x8xf32>
    "tpu.trace_start"() <{level = 10 : i32, message = "bqk,bkd->bqd"}> : () -> ()
    %cst_119 = arith.constant dense<0.000000e+00> : vector<2x8x16xf32>
    %222 = tpu.matmul %221, %204, %cst_119 {dimension_numbers = #tpu.dot_dimension_numbers<[2], [1], [1], [2], [0, 0, 0, 1, 1, 2], [0], [0]>} : vector<2x8x8xf32>, vector<2x8x16xf32>, vector<2x8x16xf32> -> vector<2x8x16xf32>
    "tpu.trace_stop"() : () -> ()
    %223 = vector.extract_strided_slice %193 {offsets = [0, 0, 16], sizes = [2, 8, 16], strides = [1, 1, 1]} : vector<2x8x32xf32> to vector<2x8x16xf32>
    %224 = vector.extract_strided_slice %197 {offsets = [0, 0, 16], sizes = [2, 8, 16], strides = [1, 1, 1]} : vector<2x8x32xf32> to vector<2x8x16xf32>
    %225 = vector.extract_strided_slice %201 {offsets = [0, 0, 16], sizes = [2, 8, 16], strides = [1, 1, 1]} : vector<2x8x32xf32> to vector<2x8x16xf32>
    "tpu.trace_start"() <{level = 10 : i32, message = "bqd,bkd->bqk"}> : () -> ()
    %cst_120 = arith.constant dense<0.000000e+00> : vector<2x8x8xf32>
    %226 = tpu.matmul %223, %224, %cst_120 {dimension_numbers = #tpu.dot_dimension_numbers<[2], [2], [1], [1], [0, 0, 0, 1, 1, 1], [0], [0]>} : vector<2x8x16xf32>, vector<2x8x16xf32>, vector<2x8x8xf32> -> vector<2x8x8xf32>
    "tpu.trace_stop"() : () -> ()
    %227 = vector.broadcast %5 : f32 to vector<2x8x8xf32>
    %228 = arith.mulf %226, %227 : vector<2x8x8xf32>
    %cst_121 = arith.constant -3.40282347E+38 : f32
    %229 = vector.shape_cast %3 : vector<2x1x8xi1> to vector<2x1x8xi1>
    %230 = vector.broadcast %229 : vector<2x1x8xi1> to vector<2x8x8xi1>
    %231 = vector.broadcast %cst_121 : f32 to vector<2x8x8xf32>
    %232 = arith.select %230, %228, %231 : vector<2x8x8xi1>, vector<2x8x8xf32>
    %cst_122 = arith.constant dense<0xFF800000> : vector<2x8xf32>
    %233 = vector.multi_reduction <maximumf>, %232, %cst_122 [2] : vector<2x8x8xf32> to vector<2x8xf32>
    %234 = vector.shape_cast %233 : vector<2x8xf32> to vector<2x8x1xf32>
    %235 = vector.broadcast %234 : vector<2x8x1xf32> to vector<2x8x8xf32>
    %236 = arith.subf %232, %235 : vector<2x8x8xf32>
    %237 = math.exp %236 : vector<2x8x8xf32>
    %cst_123 = arith.constant dense<0.000000e+00> : vector<2x8xf32>
    %238 = vector.multi_reduction <add>, %237, %cst_123 [2] : vector<2x8x8xf32> to vector<2x8xf32>
    %239 = vector.shape_cast %238 : vector<2x8xf32> to vector<2x8x1xf32>
    %240 = tpu.reciprocal %239 {approx = true} : vector<2x8x1xf32> -> vector<2x8x1xf32>
    %241 = vector.broadcast %240 : vector<2x8x1xf32> to vector<2x8x8xf32>
    %242 = arith.mulf %237, %241 : vector<2x8x8xf32>
    "tpu.trace_start"() <{level = 10 : i32, message = "bqk,bkd->bqd"}> : () -> ()
    %cst_124 = arith.constant dense<0.000000e+00> : vector<2x8x16xf32>
    %243 = tpu.matmul %242, %225, %cst_124 {dimension_numbers = #tpu.dot_dimension_numbers<[2], [1], [1], [2], [0, 0, 0, 1, 1, 2], [0], [0]>} : vector<2x8x8xf32>, vector<2x8x16xf32>, vector<2x8x16xf32> -> vector<2x8x16xf32>
    "tpu.trace_stop"() : () -> ()
    %244 = tpu.concatenate %222, %243 in 2 : vector<2x8x16xf32>, vector<2x8x16xf32> -> vector<2x8x32xf32>
    "tpu.trace_start"() <{level = 10 : i32, message = "bsh,hk->bsk"}> : () -> ()
    %cst_125 = arith.constant dense<0.000000e+00> : vector<2x8x32xf32>
    %245 = tpu.matmul %244, %169, %cst_125 {dimension_numbers = #tpu.dot_dimension_numbers<[2], [0], [0, 1], [1], [0, 0, 0, 1, 1, 1], [], []>} : vector<2x8x32xf32>, vector<32x32xf32>, vector<2x8x32xf32> -> vector<2x8x32xf32>
    "tpu.trace_stop"() : () -> ()
    %246 = vector.shape_cast %178 : vector<32xf32> to vector<1x1x32xf32>
    %247 = vector.broadcast %246 : vector<1x1x32xf32> to vector<2x8x32xf32>
    %248 = arith.addf %245, %247 : vector<2x8x32xf32>
    %249 = arith.addf %248, %165 : vector<2x8x32xf32>
    %cst_126 = arith.constant dense<0.000000e+00> : vector<2x8xf32>
    %250 = vector.multi_reduction <add>, %249, %cst_126 [2] : vector<2x8x32xf32> to vector<2x8xf32>
    %251 = vector.shape_cast %250 : vector<2x8xf32> to vector<2x8x1xf32>
    %cst_127 = arith.constant 3.200000e+01 : f32
    %252 = vector.broadcast %cst_127 : f32 to vector<2x8x1xf32>
    %253 = arith.divf %251, %252 : vector<2x8x1xf32>
    %254 = vector.broadcast %253 : vector<2x8x1xf32> to vector<2x8x32xf32>
    %255 = arith.subf %249, %254 : vector<2x8x32xf32>
    %256 = arith.mulf %255, %255 : vector<2x8x32xf32>
    %cst_128 = arith.constant dense<0.000000e+00> : vector<2x8xf32>
    %257 = vector.multi_reduction <add>, %256, %cst_128 [2] : vector<2x8x32xf32> to vector<2x8xf32>
    %258 = vector.shape_cast %257 : vector<2x8xf32> to vector<2x8x1xf32>
    %cst_129 = arith.constant 3.200000e+01 : f32
    %259 = vector.broadcast %cst_129 : f32 to vector<2x8x1xf32>
    %260 = arith.divf %258, %259 : vector<2x8x1xf32>
    %261 = vector.broadcast %253 : vector<2x8x1xf32> to vector<2x8x32xf32>
    %262 = arith.subf %249, %261 : vector<2x8x32xf32>
    %cst_130 = arith.constant 9.99999996E-13 : f32
    %263 = vector.broadcast %cst_130 : f32 to vector<2x8x1xf32>
    %264 = arith.addf %260, %263 : vector<2x8x1xf32>
    %265 = math.rsqrt %264 : vector<2x8x1xf32>
    %266 = vector.broadcast %265 : vector<2x8x1xf32> to vector<2x8x32xf32>
    %267 = arith.mulf %262, %266 : vector<2x8x32xf32>
    %268 = vector.shape_cast %180 : vector<32xf32> to vector<1x1x32xf32>
    %269 = vector.broadcast %268 : vector<1x1x32xf32> to vector<2x8x32xf32>
    %270 = arith.mulf %267, %269 : vector<2x8x32xf32>
    %271 = vector.shape_cast %182 : vector<32xf32> to vector<1x1x32xf32>
    %272 = vector.broadcast %271 : vector<1x1x32xf32> to vector<2x8x32xf32>
    %273 = arith.addf %270, %272 : vector<2x8x32xf32>
    "tpu.trace_start"() <{level = 10 : i32, message = "bsh,hf->bsf"}> : () -> ()
    %cst_131 = arith.constant dense<0.000000e+00> : vector<2x8x128xf32>
    %274 = tpu.matmul %273, %170, %cst_131 {dimension_numbers = #tpu.dot_dimension_numbers<[2], [0], [0, 1], [1], [0, 0, 0, 1, 1, 1], [], []>} : vector<2x8x32xf32>, vector<32x128xf32>, vector<2x8x128xf32> -> vector<2x8x128xf32>
    "tpu.trace_stop"() : () -> ()
    %c0_132 = arith.constant 0 : index
    %c1_133 = arith.constant 1 : index
    %c0_134 = arith.constant 0 : index
    %275 = vector.load %arg5[%c0_132, %c1_133, %c0_134] : memref<2x2x128xf32, #tpu.memory_space<vmem>>, vector<1x1x128xf32>
    %276 = vector.shape_cast %275 : vector<1x1x128xf32> to vector<128xf32>
    %277 = vector.shape_cast %276 : vector<128xf32> to vector<1x1x128xf32>
    %278 = vector.broadcast %277 : vector<1x1x128xf32> to vector<2x8x128xf32>
    %279 = arith.addf %274, %278 : vector<2x8x128xf32>
    %280 = arith.mulf %279, %279 : vector<2x8x128xf32>
    %281 = arith.mulf %279, %280 : vector<2x8x128xf32>
    %cst_135 = arith.constant 4.471500e-02 : f32
    %282 = vector.broadcast %cst_135 : f32 to vector<2x8x128xf32>
    %283 = arith.mulf %282, %281 : vector<2x8x128xf32>
    %284 = arith.addf %279, %283 : vector<2x8x128xf32>
    %cst_136 = arith.constant 0.797884583 : f32
    %285 = vector.broadcast %cst_136 : f32 to vector<2x8x128xf32>
    %286 = arith.mulf %285, %284 : vector<2x8x128xf32>
    %287 = math.tanh %286 : vector<2x8x128xf32>
    %cst_137 = arith.constant 1.000000e+00 : f32
    %288 = vector.broadcast %cst_137 : f32 to vector<2x8x128xf32>
    %289 = arith.addf %288, %287 : vector<2x8x128xf32>
    %cst_138 = arith.constant 5.000000e-01 : f32
    %290 = vector.broadcast %cst_138 : f32 to vector<2x8x128xf32>
    %291 = arith.mulf %290, %289 : vector<2x8x128xf32>
    %292 = arith.mulf %279, %291 : vector<2x8x128xf32>
    %c0_139 = arith.constant 0 : index
    %c1_140 = arith.constant 1 : index
    %c0_141 = arith.constant 0 : index
    %c0_142 = arith.constant 0 : index
    %293 = vector.load %arg3[%c0_139, %c1_140, %c0_141, %c0_142] : memref<2x2x128x32xf32, #tpu.memory_space<vmem>>, vector<1x1x128x32xf32>
    %294 = vector.shape_cast %293 : vector<1x1x128x32xf32> to vector<128x32xf32>
    "tpu.trace_start"() <{level = 10 : i32, message = "bsf,fh->bsh"}> : () -> ()
    %cst_143 = arith.constant dense<0.000000e+00> : vector<2x8x32xf32>
    %295 = tpu.matmul %292, %294, %cst_143 {dimension_numbers = #tpu.dot_dimension_numbers<[2], [0], [0, 1], [1], [0, 0, 0, 1, 1, 1], [], []>} : vector<2x8x128xf32>, vector<128x32xf32>, vector<2x8x32xf32> -> vector<2x8x32xf32>
    "tpu.trace_stop"() : () -> ()
    %296 = vector.shape_cast %184 : vector<32xf32> to vector<1x1x32xf32>
    %297 = vector.broadcast %296 : vector<1x1x32xf32> to vector<2x8x32xf32>
    %298 = arith.addf %295, %297 : vector<2x8x32xf32>
    %299 = arith.addf %298, %273 : vector<2x8x32xf32>
    %cst_144 = arith.constant dense<0.000000e+00> : vector<2x8xf32>
    %300 = vector.multi_reduction <add>, %299, %cst_144 [2] : vector<2x8x32xf32> to vector<2x8xf32>
    %301 = vector.shape_cast %300 : vector<2x8xf32> to vector<2x8x1xf32>
    %cst_145 = arith.constant 3.200000e+01 : f32
    %302 = vector.broadcast %cst_145 : f32 to vector<2x8x1xf32>
    %303 = arith.divf %301, %302 : vector<2x8x1xf32>
    %304 = vector.broadcast %303 : vector<2x8x1xf32> to vector<2x8x32xf32>
    %305 = arith.subf %299, %304 : vector<2x8x32xf32>
    %306 = arith.mulf %305, %305 : vector<2x8x32xf32>
    %cst_146 = arith.constant dense<0.000000e+00> : vector<2x8xf32>
    %307 = vector.multi_reduction <add>, %306, %cst_146 [2] : vector<2x8x32xf32> to vector<2x8xf32>
    %308 = vector.shape_cast %307 : vector<2x8xf32> to vector<2x8x1xf32>
    %cst_147 = arith.constant 3.200000e+01 : f32
    %309 = vector.broadcast %cst_147 : f32 to vector<2x8x1xf32>
    %310 = arith.divf %308, %309 : vector<2x8x1xf32>
    %311 = vector.broadcast %303 : vector<2x8x1xf32> to vector<2x8x32xf32>
    %312 = arith.subf %299, %311 : vector<2x8x32xf32>
    %cst_148 = arith.constant 9.99999996E-13 : f32
    %313 = vector.broadcast %cst_148 : f32 to vector<2x8x1xf32>
    %314 = arith.addf %310, %313 : vector<2x8x1xf32>
    %315 = math.rsqrt %314 : vector<2x8x1xf32>
    %316 = vector.broadcast %315 : vector<2x8x1xf32> to vector<2x8x32xf32>
    %317 = arith.mulf %312, %316 : vector<2x8x32xf32>
    %318 = vector.shape_cast %186 : vector<32xf32> to vector<1x1x32xf32>
    %319 = vector.broadcast %318 : vector<1x1x32xf32> to vector<2x8x32xf32>
    %320 = arith.mulf %317, %319 : vector<2x8x32xf32>
    %321 = vector.shape_cast %188 : vector<32xf32> to vector<1x1x32xf32>
    %322 = vector.broadcast %321 : vector<1x1x32xf32> to vector<2x8x32xf32>
    %323 = arith.addf %320, %322 : vector<2x8x32xf32>
    %c0_149 = arith.constant 0 : index
    %c0_150 = arith.constant 0 : index
    %c0_151 = arith.constant 0 : index
    %324 = vector.load %arg6[%c0_149, %c0_150, %c0_151] : memref<2x32x2xf32, #tpu.memory_space<vmem>>, vector<1x32x2xf32>
    %325 = vector.shape_cast %324 : vector<1x32x2xf32> to vector<32x2xf32>
    "tpu.trace_start"() <{level = 10 : i32, message = "bsh,hc->bsc"}> : () -> ()
    %cst_152 = arith.constant dense<0.000000e+00> : vector<2x8x2xf32>
    %326 = tpu.matmul %323, %325, %cst_152 {dimension_numbers = #tpu.dot_dimension_numbers<[2], [0], [0, 1], [1], [0, 0, 0, 1, 1, 1], [], []>} : vector<2x8x32xf32>, vector<32x2xf32>, vector<2x8x2xf32> -> vector<2x8x2xf32>
    "tpu.trace_stop"() : () -> ()
    %c0_153 = arith.constant 0 : index
    %c0_154 = arith.constant 0 : index
    %327 = vector.load %arg7[%c0_153, %c0_154] : memref<2x2xf32, #tpu.memory_space<vmem>>, vector<1x2xf32>
    %328 = vector.shape_cast %327 : vector<1x2xf32> to vector<2xf32>
    %329 = vector.shape_cast %328 : vector<2xf32> to vector<1x1x2xf32>
    %330 = vector.broadcast %329 : vector<1x1x2xf32> to vector<2x8x2xf32>
    %331 = arith.addf %326, %330 : vector<2x8x2xf32>
    %c0_155 = arith.constant 0 : index
    %c0_156 = arith.constant 0 : index
    %c0_157 = arith.constant 0 : index
    %c0_158 = arith.constant 0 : index
    %332 = vector.load %arg8[%c0_155, %c0_156, %c0_157, %c0_158] : memref<2x2x8x2xf32, #tpu.memory_space<vmem>>, vector<1x2x8x2xf32>
    %333 = vector.shape_cast %332 : vector<1x2x8x2xf32> to vector<2x8x2xf32>
    %334 = vector.shape_cast %331 : vector<2x8x2xf32> to vector<1x2x8x2xf32>
    tpu.vector_store %arg8[%c0_155, %c0_156, %c0_157, %c0_158], %334 {strides = array<i32>} : memref<2x2x8x2xf32, #tpu.memory_space<vmem>>, vector<1x2x8x2xf32>,
    %c1_159 = arith.constant 1 : index
    %c0_160 = arith.constant 0 : index
    %c0_161 = arith.constant 0 : index
    %c0_162 = arith.constant 0 : index
    %335 = vector.load %arg0[%c1_159, %c0_160, %c0_161, %c0_162] : memref<2x2x8x32xf32, #tpu.memory_space<vmem>>, vector<1x2x8x32xf32>
    %336 = vector.shape_cast %335 : vector<1x2x8x32xf32> to vector<2x8x32xf32>
    %c1_163 = arith.constant 1 : index
    %c0_164 = arith.constant 0 : index
    %c0_165 = arith.constant 0 : index
    %c0_166 = arith.constant 0 : index
    %337 = vector.load %arg2[%c1_163, %c0_164, %c0_165, %c0_166] : memref<2x2x32x256xf32, #tpu.memory_space<vmem>>, vector<1x1x32x256xf32>
    %338 = vector.shape_cast %337 : vector<1x1x32x256xf32> to vector<32x256xf32>
    %339 = vector.extract_strided_slice %338 {offsets = [0, 0], sizes = [32, 96], strides = [1, 1]} : vector<32x256xf32> to vector<32x96xf32>
    %340 = vector.extract_strided_slice %338 {offsets = [0, 96], sizes = [32, 32], strides = [1, 1]} : vector<32x256xf32> to vector<32x32xf32>
    %341 = vector.extract_strided_slice %338 {offsets = [0, 128], sizes = [32, 128], strides = [1, 1]} : vector<32x256xf32> to vector<32x128xf32>
    %c1_167 = arith.constant 1 : index
    %c0_168 = arith.constant 0 : index
    %c0_169 = arith.constant 0 : index
    %c0_170 = arith.constant 0 : index
    %342 = vector.load %arg4[%c1_167, %c0_168, %c0_169, %c0_170] : memref<2x2x9x32xf32, #tpu.memory_space<vmem>>, vector<1x1x1x32xf32>
    %343 = vector.shape_cast %342 : vector<1x1x1x32xf32> to vector<32xf32>
    %c1_171 = arith.constant 1 : index
    %c0_172 = arith.constant 0 : index
    %c1_173 = arith.constant 1 : index
    %c0_174 = arith.constant 0 : index
    %344 = vector.load %arg4[%c1_171, %c0_172, %c1_173, %c0_174] : memref<2x2x9x32xf32, #tpu.memory_space<vmem>>, vector<1x1x1x32xf32>
    %345 = vector.shape_cast %344 : vector<1x1x1x32xf32> to vector<32xf32>
    %c1_175 = arith.constant 1 : index
    %c0_176 = arith.constant 0 : index
    %c2_177 = arith.constant 2 : index
    %c0_178 = arith.constant 0 : index
    %346 = vector.load %arg4[%c1_175, %c0_176, %c2_177, %c0_178] : memref<2x2x9x32xf32, #tpu.memory_space<vmem>>, vector<1x1x1x32xf32>
    %347 = vector.shape_cast %346 : vector<1x1x1x32xf32> to vector<32xf32>
    %c1_179 = arith.constant 1 : index
    %c0_180 = arith.constant 0 : index
    %c3_181 = arith.constant 3 : index
    %c0_182 = arith.constant 0 : index
    %348 = vector.load %arg4[%c1_179, %c0_180, %c3_181, %c0_182] : memref<2x2x9x32xf32, #tpu.memory_space<vmem>>, vector<1x1x1x32xf32>
    %349 = vector.shape_cast %348 : vector<1x1x1x32xf32> to vector<32xf32>
    %c1_183 = arith.constant 1 : index
    %c0_184 = arith.constant 0 : index
    %c4_185 = arith.constant 4 : index
    %c0_186 = arith.constant 0 : index
    %350 = vector.load %arg4[%c1_183, %c0_184, %c4_185, %c0_186] : memref<2x2x9x32xf32, #tpu.memory_space<vmem>>, vector<1x1x1x32xf32>
    %351 = vector.shape_cast %350 : vector<1x1x1x32xf32> to vector<32xf32>
    %c1_187 = arith.constant 1 : index
    %c0_188 = arith.constant 0 : index
    %c5_189 = arith.constant 5 : index
    %c0_190 = arith.constant 0 : index
    %352 = vector.load %arg4[%c1_187, %c0_188, %c5_189, %c0_190] : memref<2x2x9x32xf32, #tpu.memory_space<vmem>>, vector<1x1x1x32xf32>
    %353 = vector.shape_cast %352 : vector<1x1x1x32xf32> to vector<32xf32>
    %c1_191 = arith.constant 1 : index
    %c0_192 = arith.constant 0 : index
    %c6_193 = arith.constant 6 : index
    %c0_194 = arith.constant 0 : index
    %354 = vector.load %arg4[%c1_191, %c0_192, %c6_193, %c0_194] : memref<2x2x9x32xf32, #tpu.memory_space<vmem>>, vector<1x1x1x32xf32>
    %355 = vector.shape_cast %354 : vector<1x1x1x32xf32> to vector<32xf32>
    %c1_195 = arith.constant 1 : index
    %c0_196 = arith.constant 0 : index
    %c7_197 = arith.constant 7 : index
    %c0_198 = arith.constant 0 : index
    %356 = vector.load %arg4[%c1_195, %c0_196, %c7_197, %c0_198] : memref<2x2x9x32xf32, #tpu.memory_space<vmem>>, vector<1x1x1x32xf32>
    %357 = vector.shape_cast %356 : vector<1x1x1x32xf32> to vector<32xf32>
    %c1_199 = arith.constant 1 : index
    %c0_200 = arith.constant 0 : index
    %c8_201 = arith.constant 8 : index
    %c0_202 = arith.constant 0 : index
    %358 = vector.load %arg4[%c1_199, %c0_200, %c8_201, %c0_202] : memref<2x2x9x32xf32, #tpu.memory_space<vmem>>, vector<1x1x1x32xf32>
    %359 = vector.shape_cast %358 : vector<1x1x1x32xf32> to vector<32xf32>
    "tpu.trace_start"() <{level = 10 : i32, message = "bsh,hk->bsk"}> : () -> ()
    %cst_203 = arith.constant dense<0.000000e+00> : vector<2x8x96xf32>
    %360 = tpu.matmul %336, %339, %cst_203 {dimension_numbers = #tpu.dot_dimension_numbers<[2], [0], [0, 1], [1], [0, 0, 0, 1, 1, 1], [], []>} : vector<2x8x32xf32>, vector<32x96xf32>, vector<2x8x96xf32> -> vector<2x8x96xf32>
    "tpu.trace_stop"() : () -> ()
    %361 = vector.extract_strided_slice %360 {offsets = [0, 0, 0], sizes = [2, 8, 32], strides = [1, 1, 1]} : vector<2x8x96xf32> to vector<2x8x32xf32>
    %362 = vector.shape_cast %343 : vector<32xf32> to vector<1x1x32xf32>
    %363 = vector.broadcast %362 : vector<1x1x32xf32> to vector<2x8x32xf32>
    %364 = arith.addf %361, %363 : vector<2x8x32xf32>
    %365 = vector.extract_strided_slice %360 {offsets = [0, 0, 32], sizes = [2, 8, 32], strides = [1, 1, 1]} : vector<2x8x96xf32> to vector<2x8x32xf32>
    %366 = vector.shape_cast %345 : vector<32xf32> to vector<1x1x32xf32>
    %367 = vector.broadcast %366 : vector<1x1x32xf32> to vector<2x8x32xf32>
    %368 = arith.addf %365, %367 : vector<2x8x32xf32>
    %369 = vector.extract_strided_slice %360 {offsets = [0, 0, 64], sizes = [2, 8, 32], strides = [1, 1, 1]} : vector<2x8x96xf32> to vector<2x8x32xf32>
    %370 = vector.shape_cast %347 : vector<32xf32> to vector<1x1x32xf32>
    %371 = vector.broadcast %370 : vector<1x1x32xf32> to vector<2x8x32xf32>
    %372 = arith.addf %369, %371 : vector<2x8x32xf32>
    %373 = vector.extract_strided_slice %364 {offsets = [0, 0, 0], sizes = [2, 8, 16], strides = [1, 1, 1]} : vector<2x8x32xf32> to vector<2x8x16xf32>
    %374 = vector.extract_strided_slice %368 {offsets = [0, 0, 0], sizes = [2, 8, 16], strides = [1, 1, 1]} : vector<2x8x32xf32> to vector<2x8x16xf32>
    %375 = vector.extract_strided_slice %372 {offsets = [0, 0, 0], sizes = [2, 8, 16], strides = [1, 1, 1]} : vector<2x8x32xf32> to vector<2x8x16xf32>
    "tpu.trace_start"() <{level = 10 : i32, message = "bqd,bkd->bqk"}> : () -> ()
    %cst_204 = arith.constant dense<0.000000e+00> : vector<2x8x8xf32>
    %376 = tpu.matmul %373, %374, %cst_204 {dimension_numbers = #tpu.dot_dimension_numbers<[2], [2], [1], [1], [0, 0, 0, 1, 1, 1], [0], [0]>} : vector<2x8x16xf32>, vector<2x8x16xf32>, vector<2x8x8xf32> -> vector<2x8x8xf32>
    "tpu.trace_stop"() : () -> ()
    %377 = vector.broadcast %5 : f32 to vector<2x8x8xf32>
    %378 = arith.mulf %376, %377 : vector<2x8x8xf32>
    %cst_205 = arith.constant -3.40282347E+38 : f32
    %379 = vector.shape_cast %3 : vector<2x1x8xi1> to vector<2x1x8xi1>
    %380 = vector.broadcast %379 : vector<2x1x8xi1> to vector<2x8x8xi1>
    %381 = vector.broadcast %cst_205 : f32 to vector<2x8x8xf32>
    %382 = arith.select %380, %378, %381 : vector<2x8x8xi1>, vector<2x8x8xf32>
    %cst_206 = arith.constant dense<0xFF800000> : vector<2x8xf32>
    %383 = vector.multi_reduction <maximumf>, %382, %cst_206 [2] : vector<2x8x8xf32> to vector<2x8xf32>
    %384 = vector.shape_cast %383 : vector<2x8xf32> to vector<2x8x1xf32>
    %385 = vector.broadcast %384 : vector<2x8x1xf32> to vector<2x8x8xf32>
    %386 = arith.subf %382, %385 : vector<2x8x8xf32>
    %387 = math.exp %386 : vector<2x8x8xf32>
    %cst_207 = arith.constant dense<0.000000e+00> : vector<2x8xf32>
    %388 = vector.multi_reduction <add>, %387, %cst_207 [2] : vector<2x8x8xf32> to vector<2x8xf32>
    %389 = vector.shape_cast %388 : vector<2x8xf32> to vector<2x8x1xf32>
    %390 = tpu.reciprocal %389 {approx = true} : vector<2x8x1xf32> -> vector<2x8x1xf32>
    %391 = vector.broadcast %390 : vector<2x8x1xf32> to vector<2x8x8xf32>
    %392 = arith.mulf %387, %391 : vector<2x8x8xf32>
    "tpu.trace_start"() <{level = 10 : i32, message = "bqk,bkd->bqd"}> : () -> ()
    %cst_208 = arith.constant dense<0.000000e+00> : vector<2x8x16xf32>
    %393 = tpu.matmul %392, %375, %cst_208 {dimension_numbers = #tpu.dot_dimension_numbers<[2], [1], [1], [2], [0, 0, 0, 1, 1, 2], [0], [0]>} : vector<2x8x8xf32>, vector<2x8x16xf32>, vector<2x8x16xf32> -> vector<2x8x16xf32>
    "tpu.trace_stop"() : () -> ()
    %394 = vector.extract_strided_slice %364 {offsets = [0, 0, 16], sizes = [2, 8, 16], strides = [1, 1, 1]} : vector<2x8x32xf32> to vector<2x8x16xf32>
    %395 = vector.extract_strided_slice %368 {offsets = [0, 0, 16], sizes = [2, 8, 16], strides = [1, 1, 1]} : vector<2x8x32xf32> to vector<2x8x16xf32>
    %396 = vector.extract_strided_slice %372 {offsets = [0, 0, 16], sizes = [2, 8, 16], strides = [1, 1, 1]} : vector<2x8x32xf32> to vector<2x8x16xf32>
    "tpu.trace_start"() <{level = 10 : i32, message = "bqd,bkd->bqk"}> : () -> ()
    %cst_209 = arith.constant dense<0.000000e+00> : vector<2x8x8xf32>
    %397 = tpu.matmul %394, %395, %cst_209 {dimension_numbers = #tpu.dot_dimension_numbers<[2], [2], [1], [1], [0, 0, 0, 1, 1, 1], [0], [0]>} : vector<2x8x16xf32>, vector<2x8x16xf32>, vector<2x8x8xf32> -> vector<2x8x8xf32>
    "tpu.trace_stop"() : () -> ()
    %398 = vector.broadcast %5 : f32 to vector<2x8x8xf32>
    %399 = arith.mulf %397, %398 : vector<2x8x8xf32>
    %cst_210 = arith.constant -3.40282347E+38 : f32
    %400 = vector.shape_cast %3 : vector<2x1x8xi1> to vector<2x1x8xi1>
    %401 = vector.broadcast %400 : vector<2x1x8xi1> to vector<2x8x8xi1>
    %402 = vector.broadcast %cst_210 : f32 to vector<2x8x8xf32>
    %403 = arith.select %401, %399, %402 : vector<2x8x8xi1>, vector<2x8x8xf32>
    %cst_211 = arith.constant dense<0xFF800000> : vector<2x8xf32>
    %404 = vector.multi_reduction <maximumf>, %403, %cst_211 [2] : vector<2x8x8xf32> to vector<2x8xf32>
    %405 = vector.shape_cast %404 : vector<2x8xf32> to vector<2x8x1xf32>
    %406 = vector.broadcast %405 : vector<2x8x1xf32> to vector<2x8x8xf32>
    %407 = arith.subf %403, %406 : vector<2x8x8xf32>
    %408 = math.exp %407 : vector<2x8x8xf32>
    %cst_212 = arith.constant dense<0.000000e+00> : vector<2x8xf32>
    %409 = vector.multi_reduction <add>, %408, %cst_212 [2] : vector<2x8x8xf32> to vector<2x8xf32>
    %410 = vector.shape_cast %409 : vector<2x8xf32> to vector<2x8x1xf32>
    %411 = tpu.reciprocal %410 {approx = true} : vector<2x8x1xf32> -> vector<2x8x1xf32>
    %412 = vector.broadcast %411 : vector<2x8x1xf32> to vector<2x8x8xf32>
    %413 = arith.mulf %408, %412 : vector<2x8x8xf32>
    "tpu.trace_start"() <{level = 10 : i32, message = "bqk,bkd->bqd"}> : () -> ()
    %cst_213 = arith.constant dense<0.000000e+00> : vector<2x8x16xf32>
    %414 = tpu.matmul %413, %396, %cst_213 {dimension_numbers = #tpu.dot_dimension_numbers<[2], [1], [1], [2], [0, 0, 0, 1, 1, 2], [0], [0]>} : vector<2x8x8xf32>, vector<2x8x16xf32>, vector<2x8x16xf32> -> vector<2x8x16xf32>
    "tpu.trace_stop"() : () -> ()
    %415 = tpu.concatenate %393, %414 in 2 : vector<2x8x16xf32>, vector<2x8x16xf32> -> vector<2x8x32xf32>
    "tpu.trace_start"() <{level = 10 : i32, message = "bsh,hk->bsk"}> : () -> ()
    %cst_214 = arith.constant dense<0.000000e+00> : vector<2x8x32xf32>
    %416 = tpu.matmul %415, %340, %cst_214 {dimension_numbers = #tpu.dot_dimension_numbers<[2], [0], [0, 1], [1], [0, 0, 0, 1, 1, 1], [], []>} : vector<2x8x32xf32>, vector<32x32xf32>, vector<2x8x32xf32> -> vector<2x8x32xf32>
    "tpu.trace_stop"() : () -> ()
    %417 = vector.shape_cast %349 : vector<32xf32> to vector<1x1x32xf32>
    %418 = vector.broadcast %417 : vector<1x1x32xf32> to vector<2x8x32xf32>
    %419 = arith.addf %416, %418 : vector<2x8x32xf32>
    %420 = arith.addf %419, %336 : vector<2x8x32xf32>
    %cst_215 = arith.constant dense<0.000000e+00> : vector<2x8xf32>
    %421 = vector.multi_reduction <add>, %420, %cst_215 [2] : vector<2x8x32xf32> to vector<2x8xf32>
    %422 = vector.shape_cast %421 : vector<2x8xf32> to vector<2x8x1xf32>
    %cst_216 = arith.constant 3.200000e+01 : f32
    %423 = vector.broadcast %cst_216 : f32 to vector<2x8x1xf32>
    %424 = arith.divf %422, %423 : vector<2x8x1xf32>
    %425 = vector.broadcast %424 : vector<2x8x1xf32> to vector<2x8x32xf32>
    %426 = arith.subf %420, %425 : vector<2x8x32xf32>
    %427 = arith.mulf %426, %426 : vector<2x8x32xf32>
    %cst_217 = arith.constant dense<0.000000e+00> : vector<2x8xf32>
    %428 = vector.multi_reduction <add>, %427, %cst_217 [2] : vector<2x8x32xf32> to vector<2x8xf32>
    %429 = vector.shape_cast %428 : vector<2x8xf32> to vector<2x8x1xf32>
    %cst_218 = arith.constant 3.200000e+01 : f32
    %430 = vector.broadcast %cst_218 : f32 to vector<2x8x1xf32>
    %431 = arith.divf %429, %430 : vector<2x8x1xf32>
    %432 = vector.broadcast %424 : vector<2x8x1xf32> to vector<2x8x32xf32>
    %433 = arith.subf %420, %432 : vector<2x8x32xf32>
    %cst_219 = arith.constant 9.99999996E-13 : f32
    %434 = vector.broadcast %cst_219 : f32 to vector<2x8x1xf32>
    %435 = arith.addf %431, %434 : vector<2x8x1xf32>
    %436 = math.rsqrt %435 : vector<2x8x1xf32>
    %437 = vector.broadcast %436 : vector<2x8x1xf32> to vector<2x8x32xf32>
    %438 = arith.mulf %433, %437 : vector<2x8x32xf32>
    %439 = vector.shape_cast %351 : vector<32xf32> to vector<1x1x32xf32>
    %440 = vector.broadcast %439 : vector<1x1x32xf32> to vector<2x8x32xf32>
    %441 = arith.mulf %438, %440 : vector<2x8x32xf32>
    %442 = vector.shape_cast %353 : vector<32xf32> to vector<1x1x32xf32>
    %443 = vector.broadcast %442 : vector<1x1x32xf32> to vector<2x8x32xf32>
    %444 = arith.addf %441, %443 : vector<2x8x32xf32>
    "tpu.trace_start"() <{level = 10 : i32, message = "bsh,hf->bsf"}> : () -> ()
    %cst_220 = arith.constant dense<0.000000e+00> : vector<2x8x128xf32>
    %445 = tpu.matmul %444, %341, %cst_220 {dimension_numbers = #tpu.dot_dimension_numbers<[2], [0], [0, 1], [1], [0, 0, 0, 1, 1, 1], [], []>} : vector<2x8x32xf32>, vector<32x128xf32>, vector<2x8x128xf32> -> vector<2x8x128xf32>
    "tpu.trace_stop"() : () -> ()
    %c1_221 = arith.constant 1 : index
    %c0_222 = arith.constant 0 : index
    %c0_223 = arith.constant 0 : index
    %446 = vector.load %arg5[%c1_221, %c0_222, %c0_223] : memref<2x2x128xf32, #tpu.memory_space<vmem>>, vector<1x1x128xf32>
    %447 = vector.shape_cast %446 : vector<1x1x128xf32> to vector<128xf32>
    %448 = vector.shape_cast %447 : vector<128xf32> to vector<1x1x128xf32>
    %449 = vector.broadcast %448 : vector<1x1x128xf32> to vector<2x8x128xf32>
    %450 = arith.addf %445, %449 : vector<2x8x128xf32>
    %451 = arith.mulf %450, %450 : vector<2x8x128xf32>
    %452 = arith.mulf %450, %451 : vector<2x8x128xf32>
    %cst_224 = arith.constant 4.471500e-02 : f32
    %453 = vector.broadcast %cst_224 : f32 to vector<2x8x128xf32>
    %454 = arith.mulf %453, %452 : vector<2x8x128xf32>
    %455 = arith.addf %450, %454 : vector<2x8x128xf32>
    %cst_225 = arith.constant 0.797884583 : f32
    %456 = vector.broadcast %cst_225 : f32 to vector<2x8x128xf32>
    %457 = arith.mulf %456, %455 : vector<2x8x128xf32>
    %458 = math.tanh %457 : vector<2x8x128xf32>
    %cst_226 = arith.constant 1.000000e+00 : f32
    %459 = vector.broadcast %cst_226 : f32 to vector<2x8x128xf32>
    %460 = arith.addf %459, %458 : vector<2x8x128xf32>
    %cst_227 = arith.constant 5.000000e-01 : f32
    %461 = vector.broadcast %cst_227 : f32 to vector<2x8x128xf32>
    %462 = arith.mulf %461, %460 : vector<2x8x128xf32>
    %463 = arith.mulf %450, %462 : vector<2x8x128xf32>
    %c1_228 = arith.constant 1 : index
    %c0_229 = arith.constant 0 : index
    %c0_230 = arith.constant 0 : index
    %c0_231 = arith.constant 0 : index
    %464 = vector.load %arg3[%c1_228, %c0_229, %c0_230, %c0_231] : memref<2x2x128x32xf32, #tpu.memory_space<vmem>>, vector<1x1x128x32xf32>
    %465 = vector.shape_cast %464 : vector<1x1x128x32xf32> to vector<128x32xf32>
    "tpu.trace_start"() <{level = 10 : i32, message = "bsf,fh->bsh"}> : () -> ()
    %cst_232 = arith.constant dense<0.000000e+00> : vector<2x8x32xf32>
    %466 = tpu.matmul %463, %465, %cst_232 {dimension_numbers = #tpu.dot_dimension_numbers<[2], [0], [0, 1], [1], [0, 0, 0, 1, 1, 1], [], []>} : vector<2x8x128xf32>, vector<128x32xf32>, vector<2x8x32xf32> -> vector<2x8x32xf32>
    "tpu.trace_stop"() : () -> ()
    %467 = vector.shape_cast %355 : vector<32xf32> to vector<1x1x32xf32>
    %468 = vector.broadcast %467 : vector<1x1x32xf32> to vector<2x8x32xf32>
    %469 = arith.addf %466, %468 : vector<2x8x32xf32>
    %470 = arith.addf %469, %444 : vector<2x8x32xf32>
    %cst_233 = arith.constant dense<0.000000e+00> : vector<2x8xf32>
    %471 = vector.multi_reduction <add>, %470, %cst_233 [2] : vector<2x8x32xf32> to vector<2x8xf32>
    %472 = vector.shape_cast %471 : vector<2x8xf32> to vector<2x8x1xf32>
    %cst_234 = arith.constant 3.200000e+01 : f32
    %473 = vector.broadcast %cst_234 : f32 to vector<2x8x1xf32>
    %474 = arith.divf %472, %473 : vector<2x8x1xf32>
    %475 = vector.broadcast %474 : vector<2x8x1xf32> to vector<2x8x32xf32>
    %476 = arith.subf %470, %475 : vector<2x8x32xf32>
    %477 = arith.mulf %476, %476 : vector<2x8x32xf32>
    %cst_235 = arith.constant dense<0.000000e+00> : vector<2x8xf32>
    %478 = vector.multi_reduction <add>, %477, %cst_235 [2] : vector<2x8x32xf32> to vector<2x8xf32>
    %479 = vector.shape_cast %478 : vector<2x8xf32> to vector<2x8x1xf32>
    %cst_236 = arith.constant 3.200000e+01 : f32
    %480 = vector.broadcast %cst_236 : f32 to vector<2x8x1xf32>
    %481 = arith.divf %479, %480 : vector<2x8x1xf32>
    %482 = vector.broadcast %474 : vector<2x8x1xf32> to vector<2x8x32xf32>
    %483 = arith.subf %470, %482 : vector<2x8x32xf32>
    %cst_237 = arith.constant 9.99999996E-13 : f32
    %484 = vector.broadcast %cst_237 : f32 to vector<2x8x1xf32>
    %485 = arith.addf %481, %484 : vector<2x8x1xf32>
    %486 = math.rsqrt %485 : vector<2x8x1xf32>
    %487 = vector.broadcast %486 : vector<2x8x1xf32> to vector<2x8x32xf32>
    %488 = arith.mulf %483, %487 : vector<2x8x32xf32>
    %489 = vector.shape_cast %357 : vector<32xf32> to vector<1x1x32xf32>
    %490 = vector.broadcast %489 : vector<1x1x32xf32> to vector<2x8x32xf32>
    %491 = arith.mulf %488, %490 : vector<2x8x32xf32>
    %492 = vector.shape_cast %359 : vector<32xf32> to vector<1x1x32xf32>
    %493 = vector.broadcast %492 : vector<1x1x32xf32> to vector<2x8x32xf32>
    %494 = arith.addf %491, %493 : vector<2x8x32xf32>
    %c1_238 = arith.constant 1 : index
    %c1_239 = arith.constant 1 : index
    %c0_240 = arith.constant 0 : index
    %c0_241 = arith.constant 0 : index
    %495 = vector.load %arg2[%c1_238, %c1_239, %c0_240, %c0_241] : memref<2x2x32x256xf32, #tpu.memory_space<vmem>>, vector<1x1x32x256xf32>
    %496 = vector.shape_cast %495 : vector<1x1x32x256xf32> to vector<32x256xf32>
    %497 = vector.extract_strided_slice %496 {offsets = [0, 0], sizes = [32, 96], strides = [1, 1]} : vector<32x256xf32> to vector<32x96xf32>
    %498 = vector.extract_strided_slice %496 {offsets = [0, 96], sizes = [32, 32], strides = [1, 1]} : vector<32x256xf32> to vector<32x32xf32>
    %499 = vector.extract_strided_slice %496 {offsets = [0, 128], sizes = [32, 128], strides = [1, 1]} : vector<32x256xf32> to vector<32x128xf32>
    %c1_242 = arith.constant 1 : index
    %c1_243 = arith.constant 1 : index
    %c0_244 = arith.constant 0 : index
    %c0_245 = arith.constant 0 : index
    %500 = vector.load %arg4[%c1_242, %c1_243, %c0_244, %c0_245] : memref<2x2x9x32xf32, #tpu.memory_space<vmem>>, vector<1x1x1x32xf32>
    %501 = vector.shape_cast %500 : vector<1x1x1x32xf32> to vector<32xf32>
    %c1_246 = arith.constant 1 : index
    %c1_247 = arith.constant 1 : index
    %c1_248 = arith.constant 1 : index
    %c0_249 = arith.constant 0 : index
    %502 = vector.load %arg4[%c1_246, %c1_247, %c1_248, %c0_249] : memref<2x2x9x32xf32, #tpu.memory_space<vmem>>, vector<1x1x1x32xf32>
    %503 = vector.shape_cast %502 : vector<1x1x1x32xf32> to vector<32xf32>
    %c1_250 = arith.constant 1 : index
    %c1_251 = arith.constant 1 : index
    %c2_252 = arith.constant 2 : index
    %c0_253 = arith.constant 0 : index
    %504 = vector.load %arg4[%c1_250, %c1_251, %c2_252, %c0_253] : memref<2x2x9x32xf32, #tpu.memory_space<vmem>>, vector<1x1x1x32xf32>
    %505 = vector.shape_cast %504 : vector<1x1x1x32xf32> to vector<32xf32>
    %c1_254 = arith.constant 1 : index
    %c1_255 = arith.constant 1 : index
    %c3_256 = arith.constant 3 : index
    %c0_257 = arith.constant 0 : index
    %506 = vector.load %arg4[%c1_254, %c1_255, %c3_256, %c0_257] : memref<2x2x9x32xf32, #tpu.memory_space<vmem>>, vector<1x1x1x32xf32>
    %507 = vector.shape_cast %506 : vector<1x1x1x32xf32> to vector<32xf32>
    %c1_258 = arith.constant 1 : index
    %c1_259 = arith.constant 1 : index
    %c4_260 = arith.constant 4 : index
    %c0_261 = arith.constant 0 : index
    %508 = vector.load %arg4[%c1_258, %c1_259, %c4_260, %c0_261] : memref<2x2x9x32xf32, #tpu.memory_space<vmem>>, vector<1x1x1x32xf32>
    %509 = vector.shape_cast %508 : vector<1x1x1x32xf32> to vector<32xf32>
    %c1_262 = arith.constant 1 : index
    %c1_263 = arith.constant 1 : index
    %c5_264 = arith.constant 5 : index
    %c0_265 = arith.constant 0 : index
    %510 = vector.load %arg4[%c1_262, %c1_263, %c5_264, %c0_265] : memref<2x2x9x32xf32, #tpu.memory_space<vmem>>, vector<1x1x1x32xf32>
    %511 = vector.shape_cast %510 : vector<1x1x1x32xf32> to vector<32xf32>
    %c1_266 = arith.constant 1 : index
    %c1_267 = arith.constant 1 : index
    %c6_268 = arith.constant 6 : index
    %c0_269 = arith.constant 0 : index
    %512 = vector.load %arg4[%c1_266, %c1_267, %c6_268, %c0_269] : memref<2x2x9x32xf32, #tpu.memory_space<vmem>>, vector<1x1x1x32xf32>
    %513 = vector.shape_cast %512 : vector<1x1x1x32xf32> to vector<32xf32>
    %c1_270 = arith.constant 1 : index
    %c1_271 = arith.constant 1 : index
    %c7_272 = arith.constant 7 : index
    %c0_273 = arith.constant 0 : index
    %514 = vector.load %arg4[%c1_270, %c1_271, %c7_272, %c0_273] : memref<2x2x9x32xf32, #tpu.memory_space<vmem>>, vector<1x1x1x32xf32>
    %515 = vector.shape_cast %514 : vector<1x1x1x32xf32> to vector<32xf32>
    %c1_274 = arith.constant 1 : index
    %c1_275 = arith.constant 1 : index
    %c8_276 = arith.constant 8 : index
    %c0_277 = arith.constant 0 : index
    %516 = vector.load %arg4[%c1_274, %c1_275, %c8_276, %c0_277] : memref<2x2x9x32xf32, #tpu.memory_space<vmem>>, vector<1x1x1x32xf32>
    %517 = vector.shape_cast %516 : vector<1x1x1x32xf32> to vector<32xf32>
    "tpu.trace_start"() <{level = 10 : i32, message = "bsh,hk->bsk"}> : () -> ()
    %cst_278 = arith.constant dense<0.000000e+00> : vector<2x8x96xf32>
    %518 = tpu.matmul %494, %497, %cst_278 {dimension_numbers = #tpu.dot_dimension_numbers<[2], [0], [0, 1], [1], [0, 0, 0, 1, 1, 1], [], []>} : vector<2x8x32xf32>, vector<32x96xf32>, vector<2x8x96xf32> -> vector<2x8x96xf32>
    "tpu.trace_stop"() : () -> ()
    %519 = vector.extract_strided_slice %518 {offsets = [0, 0, 0], sizes = [2, 8, 32], strides = [1, 1, 1]} : vector<2x8x96xf32> to vector<2x8x32xf32>
    %520 = vector.shape_cast %501 : vector<32xf32> to vector<1x1x32xf32>
    %521 = vector.broadcast %520 : vector<1x1x32xf32> to vector<2x8x32xf32>
    %522 = arith.addf %519, %521 : vector<2x8x32xf32>
    %523 = vector.extract_strided_slice %518 {offsets = [0, 0, 32], sizes = [2, 8, 32], strides = [1, 1, 1]} : vector<2x8x96xf32> to vector<2x8x32xf32>
    %524 = vector.shape_cast %503 : vector<32xf32> to vector<1x1x32xf32>
    %525 = vector.broadcast %524 : vector<1x1x32xf32> to vector<2x8x32xf32>
    %526 = arith.addf %523, %525 : vector<2x8x32xf32>
    %527 = vector.extract_strided_slice %518 {offsets = [0, 0, 64], sizes = [2, 8, 32], strides = [1, 1, 1]} : vector<2x8x96xf32> to vector<2x8x32xf32>
    %528 = vector.shape_cast %505 : vector<32xf32> to vector<1x1x32xf32>
    %529 = vector.broadcast %528 : vector<1x1x32xf32> to vector<2x8x32xf32>
    %530 = arith.addf %527, %529 : vector<2x8x32xf32>
    %531 = vector.extract_strided_slice %522 {offsets = [0, 0, 0], sizes = [2, 8, 16], strides = [1, 1, 1]} : vector<2x8x32xf32> to vector<2x8x16xf32>
    %532 = vector.extract_strided_slice %526 {offsets = [0, 0, 0], sizes = [2, 8, 16], strides = [1, 1, 1]} : vector<2x8x32xf32> to vector<2x8x16xf32>
    %533 = vector.extract_strided_slice %530 {offsets = [0, 0, 0], sizes = [2, 8, 16], strides = [1, 1, 1]} : vector<2x8x32xf32> to vector<2x8x16xf32>
    "tpu.trace_start"() <{level = 10 : i32, message = "bqd,bkd->bqk"}> : () -> ()
    %cst_279 = arith.constant dense<0.000000e+00> : vector<2x8x8xf32>
    %534 = tpu.matmul %531, %532, %cst_279 {dimension_numbers = #tpu.dot_dimension_numbers<[2], [2], [1], [1], [0, 0, 0, 1, 1, 1], [0], [0]>} : vector<2x8x16xf32>, vector<2x8x16xf32>, vector<2x8x8xf32> -> vector<2x8x8xf32>
    "tpu.trace_stop"() : () -> ()
    %535 = vector.broadcast %5 : f32 to vector<2x8x8xf32>
    %536 = arith.mulf %534, %535 : vector<2x8x8xf32>
    %cst_280 = arith.constant -3.40282347E+38 : f32
    %537 = vector.shape_cast %3 : vector<2x1x8xi1> to vector<2x1x8xi1>
    %538 = vector.broadcast %537 : vector<2x1x8xi1> to vector<2x8x8xi1>
    %539 = vector.broadcast %cst_280 : f32 to vector<2x8x8xf32>
    %540 = arith.select %538, %536, %539 : vector<2x8x8xi1>, vector<2x8x8xf32>
    %cst_281 = arith.constant dense<0xFF800000> : vector<2x8xf32>
    %541 = vector.multi_reduction <maximumf>, %540, %cst_281 [2] : vector<2x8x8xf32> to vector<2x8xf32>
    %542 = vector.shape_cast %541 : vector<2x8xf32> to vector<2x8x1xf32>
    %543 = vector.broadcast %542 : vector<2x8x1xf32> to vector<2x8x8xf32>
    %544 = arith.subf %540, %543 : vector<2x8x8xf32>
    %545 = math.exp %544 : vector<2x8x8xf32>
    %cst_282 = arith.constant dense<0.000000e+00> : vector<2x8xf32>
    %546 = vector.multi_reduction <add>, %545, %cst_282 [2] : vector<2x8x8xf32> to vector<2x8xf32>
    %547 = vector.shape_cast %546 : vector<2x8xf32> to vector<2x8x1xf32>
    %548 = tpu.reciprocal %547 {approx = true} : vector<2x8x1xf32> -> vector<2x8x1xf32>
    %549 = vector.broadcast %548 : vector<2x8x1xf32> to vector<2x8x8xf32>
    %550 = arith.mulf %545, %549 : vector<2x8x8xf32>
    "tpu.trace_start"() <{level = 10 : i32, message = "bqk,bkd->bqd"}> : () -> ()
    %cst_283 = arith.constant dense<0.000000e+00> : vector<2x8x16xf32>
    %551 = tpu.matmul %550, %533, %cst_283 {dimension_numbers = #tpu.dot_dimension_numbers<[2], [1], [1], [2], [0, 0, 0, 1, 1, 2], [0], [0]>} : vector<2x8x8xf32>, vector<2x8x16xf32>, vector<2x8x16xf32> -> vector<2x8x16xf32>
    "tpu.trace_stop"() : () -> ()
    %552 = vector.extract_strided_slice %522 {offsets = [0, 0, 16], sizes = [2, 8, 16], strides = [1, 1, 1]} : vector<2x8x32xf32> to vector<2x8x16xf32>
    %553 = vector.extract_strided_slice %526 {offsets = [0, 0, 16], sizes = [2, 8, 16], strides = [1, 1, 1]} : vector<2x8x32xf32> to vector<2x8x16xf32>
    %554 = vector.extract_strided_slice %530 {offsets = [0, 0, 16], sizes = [2, 8, 16], strides = [1, 1, 1]} : vector<2x8x32xf32> to vector<2x8x16xf32>
    "tpu.trace_start"() <{level = 10 : i32, message = "bqd,bkd->bqk"}> : () -> ()
    %cst_284 = arith.constant dense<0.000000e+00> : vector<2x8x8xf32>
    %555 = tpu.matmul %552, %553, %cst_284 {dimension_numbers = #tpu.dot_dimension_numbers<[2], [2], [1], [1], [0, 0, 0, 1, 1, 1], [0], [0]>} : vector<2x8x16xf32>, vector<2x8x16xf32>, vector<2x8x8xf32> -> vector<2x8x8xf32>
    "tpu.trace_stop"() : () -> ()
    %556 = vector.broadcast %5 : f32 to vector<2x8x8xf32>
    %557 = arith.mulf %555, %556 : vector<2x8x8xf32>
    %cst_285 = arith.constant -3.40282347E+38 : f32
    %558 = vector.shape_cast %3 : vector<2x1x8xi1> to vector<2x1x8xi1>
    %559 = vector.broadcast %558 : vector<2x1x8xi1> to vector<2x8x8xi1>
    %560 = vector.broadcast %cst_285 : f32 to vector<2x8x8xf32>
    %561 = arith.select %559, %557, %560 : vector<2x8x8xi1>, vector<2x8x8xf32>
    %cst_286 = arith.constant dense<0xFF800000> : vector<2x8xf32>
    %562 = vector.multi_reduction <maximumf>, %561, %cst_286 [2] : vector<2x8x8xf32> to vector<2x8xf32>
    %563 = vector.shape_cast %562 : vector<2x8xf32> to vector<2x8x1xf32>
    %564 = vector.broadcast %563 : vector<2x8x1xf32> to vector<2x8x8xf32>
    %565 = arith.subf %561, %564 : vector<2x8x8xf32>
    %566 = math.exp %565 : vector<2x8x8xf32>
    %cst_287 = arith.constant dense<0.000000e+00> : vector<2x8xf32>
    %567 = vector.multi_reduction <add>, %566, %cst_287 [2] : vector<2x8x8xf32> to vector<2x8xf32>
    %568 = vector.shape_cast %567 : vector<2x8xf32> to vector<2x8x1xf32>
    %569 = tpu.reciprocal %568 {approx = true} : vector<2x8x1xf32> -> vector<2x8x1xf32>
    %570 = vector.broadcast %569 : vector<2x8x1xf32> to vector<2x8x8xf32>
    %571 = arith.mulf %566, %570 : vector<2x8x8xf32>
    "tpu.trace_start"() <{level = 10 : i32, message = "bqk,bkd->bqd"}> : () -> ()
    %cst_288 = arith.constant dense<0.000000e+00> : vector<2x8x16xf32>
    %572 = tpu.matmul %571, %554, %cst_288 {dimension_numbers = #tpu.dot_dimension_numbers<[2], [1], [1], [2], [0, 0, 0, 1, 1, 2], [0], [0]>} : vector<2x8x8xf32>, vector<2x8x16xf32>, vector<2x8x16xf32> -> vector<2x8x16xf32>
    "tpu.trace_stop"() : () -> ()
    %573 = tpu.concatenate %551, %572 in 2 : vector<2x8x16xf32>, vector<2x8x16xf32> -> vector<2x8x32xf32>
    "tpu.trace_start"() <{level = 10 : i32, message = "bsh,hk->bsk"}> : () -> ()
    %cst_289 = arith.constant dense<0.000000e+00> : vector<2x8x32xf32>
    %574 = tpu.matmul %573, %498, %cst_289 {dimension_numbers = #tpu.dot_dimension_numbers<[2], [0], [0, 1], [1], [0, 0, 0, 1, 1, 1], [], []>} : vector<2x8x32xf32>, vector<32x32xf32>, vector<2x8x32xf32> -> vector<2x8x32xf32>
    "tpu.trace_stop"() : () -> ()
    %575 = vector.shape_cast %507 : vector<32xf32> to vector<1x1x32xf32>
    %576 = vector.broadcast %575 : vector<1x1x32xf32> to vector<2x8x32xf32>
    %577 = arith.addf %574, %576 : vector<2x8x32xf32>
    %578 = arith.addf %577, %494 : vector<2x8x32xf32>
    %cst_290 = arith.constant dense<0.000000e+00> : vector<2x8xf32>
    %579 = vector.multi_reduction <add>, %578, %cst_290 [2] : vector<2x8x32xf32> to vector<2x8xf32>
    %580 = vector.shape_cast %579 : vector<2x8xf32> to vector<2x8x1xf32>
    %cst_291 = arith.constant 3.200000e+01 : f32
    %581 = vector.broadcast %cst_291 : f32 to vector<2x8x1xf32>
    %582 = arith.divf %580, %581 : vector<2x8x1xf32>
    %583 = vector.broadcast %582 : vector<2x8x1xf32> to vector<2x8x32xf32>
    %584 = arith.subf %578, %583 : vector<2x8x32xf32>
    %585 = arith.mulf %584, %584 : vector<2x8x32xf32>
    %cst_292 = arith.constant dense<0.000000e+00> : vector<2x8xf32>
    %586 = vector.multi_reduction <add>, %585, %cst_292 [2] : vector<2x8x32xf32> to vector<2x8xf32>
    %587 = vector.shape_cast %586 : vector<2x8xf32> to vector<2x8x1xf32>
    %cst_293 = arith.constant 3.200000e+01 : f32
    %588 = vector.broadcast %cst_293 : f32 to vector<2x8x1xf32>
    %589 = arith.divf %587, %588 : vector<2x8x1xf32>
    %590 = vector.broadcast %582 : vector<2x8x1xf32> to vector<2x8x32xf32>
    %591 = arith.subf %578, %590 : vector<2x8x32xf32>
    %cst_294 = arith.constant 9.99999996E-13 : f32
    %592 = vector.broadcast %cst_294 : f32 to vector<2x8x1xf32>
    %593 = arith.addf %589, %592 : vector<2x8x1xf32>
    %594 = math.rsqrt %593 : vector<2x8x1xf32>
    %595 = vector.broadcast %594 : vector<2x8x1xf32> to vector<2x8x32xf32>
    %596 = arith.mulf %591, %595 : vector<2x8x32xf32>
    %597 = vector.shape_cast %509 : vector<32xf32> to vector<1x1x32xf32>
    %598 = vector.broadcast %597 : vector<1x1x32xf32> to vector<2x8x32xf32>
    %599 = arith.mulf %596, %598 : vector<2x8x32xf32>
    %600 = vector.shape_cast %511 : vector<32xf32> to vector<1x1x32xf32>
    %601 = vector.broadcast %600 : vector<1x1x32xf32> to vector<2x8x32xf32>
    %602 = arith.addf %599, %601 : vector<2x8x32xf32>
    "tpu.trace_start"() <{level = 10 : i32, message = "bsh,hf->bsf"}> : () -> ()
    %cst_295 = arith.constant dense<0.000000e+00> : vector<2x8x128xf32>
    %603 = tpu.matmul %602, %499, %cst_295 {dimension_numbers = #tpu.dot_dimension_numbers<[2], [0], [0, 1], [1], [0, 0, 0, 1, 1, 1], [], []>} : vector<2x8x32xf32>, vector<32x128xf32>, vector<2x8x128xf32> -> vector<2x8x128xf32>
    "tpu.trace_stop"() : () -> ()
    %c1_296 = arith.constant 1 : index
    %c1_297 = arith.constant 1 : index
    %c0_298 = arith.constant 0 : index
    %604 = vector.load %arg5[%c1_296, %c1_297, %c0_298] : memref<2x2x128xf32, #tpu.memory_space<vmem>>, vector<1x1x128xf32>
    %605 = vector.shape_cast %604 : vector<1x1x128xf32> to vector<128xf32>
    %606 = vector.shape_cast %605 : vector<128xf32> to vector<1x1x128xf32>
    %607 = vector.broadcast %606 : vector<1x1x128xf32> to vector<2x8x128xf32>
    %608 = arith.addf %603, %607 : vector<2x8x128xf32>
    %609 = arith.mulf %608, %608 : vector<2x8x128xf32>
    %610 = arith.mulf %608, %609 : vector<2x8x128xf32>
    %cst_299 = arith.constant 4.471500e-02 : f32
    %611 = vector.broadcast %cst_299 : f32 to vector<2x8x128xf32>
    %612 = arith.mulf %611, %610 : vector<2x8x128xf32>
    %613 = arith.addf %608, %612 : vector<2x8x128xf32>
    %cst_300 = arith.constant 0.797884583 : f32
    %614 = vector.broadcast %cst_300 : f32 to vector<2x8x128xf32>
    %615 = arith.mulf %614, %613 : vector<2x8x128xf32>
    %616 = math.tanh %615 : vector<2x8x128xf32>
    %cst_301 = arith.constant 1.000000e+00 : f32
    %617 = vector.broadcast %cst_301 : f32 to vector<2x8x128xf32>
    %618 = arith.addf %617, %616 : vector<2x8x128xf32>
    %cst_302 = arith.constant 5.000000e-01 : f32
    %619 = vector.broadcast %cst_302 : f32 to vector<2x8x128xf32>
    %620 = arith.mulf %619, %618 : vector<2x8x128xf32>
    %621 = arith.mulf %608, %620 : vector<2x8x128xf32>
    %c1_303 = arith.constant 1 : index
    %c1_304 = arith.constant 1 : index
    %c0_305 = arith.constant 0 : index
    %c0_306 = arith.constant 0 : index
    %622 = vector.load %arg3[%c1_303, %c1_304, %c0_305, %c0_306] : memref<2x2x128x32xf32, #tpu.memory_space<vmem>>, vector<1x1x128x32xf32>
    %623 = vector.shape_cast %622 : vector<1x1x128x32xf32> to vector<128x32xf32>
    "tpu.trace_start"() <{level = 10 : i32, message = "bsf,fh->bsh"}> : () -> ()
    %cst_307 = arith.constant dense<0.000000e+00> : vector<2x8x32xf32>
    %624 = tpu.matmul %621, %623, %cst_307 {dimension_numbers = #tpu.dot_dimension_numbers<[2], [0], [0, 1], [1], [0, 0, 0, 1, 1, 1], [], []>} : vector<2x8x128xf32>, vector<128x32xf32>, vector<2x8x32xf32> -> vector<2x8x32xf32>
    "tpu.trace_stop"() : () -> ()
    %625 = vector.shape_cast %513 : vector<32xf32> to vector<1x1x32xf32>
    %626 = vector.broadcast %625 : vector<1x1x32xf32> to vector<2x8x32xf32>
    %627 = arith.addf %624, %626 : vector<2x8x32xf32>
    %628 = arith.addf %627, %602 : vector<2x8x32xf32>
    %cst_308 = arith.constant dense<0.000000e+00> : vector<2x8xf32>
    %629 = vector.multi_reduction <add>, %628, %cst_308 [2] : vector<2x8x32xf32> to vector<2x8xf32>
    %630 = vector.shape_cast %629 : vector<2x8xf32> to vector<2x8x1xf32>
    %cst_309 = arith.constant 3.200000e+01 : f32
    %631 = vector.broadcast %cst_309 : f32 to vector<2x8x1xf32>
    %632 = arith.divf %630, %631 : vector<2x8x1xf32>
    %633 = vector.broadcast %632 : vector<2x8x1xf32> to vector<2x8x32xf32>
    %634 = arith.subf %628, %633 : vector<2x8x32xf32>
    %635 = arith.mulf %634, %634 : vector<2x8x32xf32>
    %cst_310 = arith.constant dense<0.000000e+00> : vector<2x8xf32>
    %636 = vector.multi_reduction <add>, %635, %cst_310 [2] : vector<2x8x32xf32> to vector<2x8xf32>
    %637 = vector.shape_cast %636 : vector<2x8xf32> to vector<2x8x1xf32>
    %cst_311 = arith.constant 3.200000e+01 : f32
    %638 = vector.broadcast %cst_311 : f32 to vector<2x8x1xf32>
    %639 = arith.divf %637, %638 : vector<2x8x1xf32>
    %640 = vector.broadcast %632 : vector<2x8x1xf32> to vector<2x8x32xf32>
    %641 = arith.subf %628, %640 : vector<2x8x32xf32>
    %cst_312 = arith.constant 9.99999996E-13 : f32
    %642 = vector.broadcast %cst_312 : f32 to vector<2x8x1xf32>
    %643 = arith.addf %639, %642 : vector<2x8x1xf32>
    %644 = math.rsqrt %643 : vector<2x8x1xf32>
    %645 = vector.broadcast %644 : vector<2x8x1xf32> to vector<2x8x32xf32>
    %646 = arith.mulf %641, %645 : vector<2x8x32xf32>
    %647 = vector.shape_cast %515 : vector<32xf32> to vector<1x1x32xf32>
    %648 = vector.broadcast %647 : vector<1x1x32xf32> to vector<2x8x32xf32>
    %649 = arith.mulf %646, %648 : vector<2x8x32xf32>
    %650 = vector.shape_cast %517 : vector<32xf32> to vector<1x1x32xf32>
    %651 = vector.broadcast %650 : vector<1x1x32xf32> to vector<2x8x32xf32>
    %652 = arith.addf %649, %651 : vector<2x8x32xf32>
    %c1_313 = arith.constant 1 : index
    %c0_314 = arith.constant 0 : index
    %c0_315 = arith.constant 0 : index
    %653 = vector.load %arg6[%c1_313, %c0_314, %c0_315] : memref<2x32x2xf32, #tpu.memory_space<vmem>>, vector<1x32x2xf32>
    %654 = vector.shape_cast %653 : vector<1x32x2xf32> to vector<32x2xf32>
    "tpu.trace_start"() <{level = 10 : i32, message = "bsh,hc->bsc"}> : () -> ()
    %cst_316 = arith.constant dense<0.000000e+00> : vector<2x8x2xf32>
    %655 = tpu.matmul %652, %654, %cst_316 {dimension_numbers = #tpu.dot_dimension_numbers<[2], [0], [0, 1], [1], [0, 0, 0, 1, 1, 1], [], []>} : vector<2x8x32xf32>, vector<32x2xf32>, vector<2x8x2xf32> -> vector<2x8x2xf32>
    "tpu.trace_stop"() : () -> ()
    %c1_317 = arith.constant 1 : index
    %c0_318 = arith.constant 0 : index
    %656 = vector.load %arg7[%c1_317, %c0_318] : memref<2x2xf32, #tpu.memory_space<vmem>>, vector<1x2xf32>
    %657 = vector.shape_cast %656 : vector<1x2xf32> to vector<2xf32>
    %658 = vector.shape_cast %657 : vector<2xf32> to vector<1x1x2xf32>
    %659 = vector.broadcast %658 : vector<1x1x2xf32> to vector<2x8x2xf32>
    %660 = arith.addf %655, %659 : vector<2x8x2xf32>
    %c1_319 = arith.constant 1 : index
    %c0_320 = arith.constant 0 : index
    %c0_321 = arith.constant 0 : index
    %c0_322 = arith.constant 0 : index
    %661 = vector.load %arg8[%c1_319, %c0_320, %c0_321, %c0_322] : memref<2x2x8x2xf32, #tpu.memory_space<vmem>>, vector<1x2x8x2xf32>
    %662 = vector.shape_cast %661 : vector<1x2x8x2xf32> to vector<2x8x2xf32>
    %663 = vector.shape_cast %660 : vector<2x8x2xf32> to vector<1x2x8x2xf32>
    tpu.vector_store %arg8[%c1_319, %c0_320, %c0_321, %c0_322], %663 {strides = array<i32>} : memref<2x2x8x2xf32, #tpu.memory_space<vmem>>, vector<1x2x8x2xf32>,
    return
  }
}

</mosaic_0001>

<llo_original>
// kernel: tpu_custom_call.1
$region0: #{tpu_custom_call.1}
  #allocation0 [shape = 'u32[]', space=smem, size = 0x4, offset = 0x4, fixed_abs, tag = 'smem constant byte address 0x4 - core index']
  #allocation1 [shape = 'u32[144,128]{1,0:T(1,128)}', space=vmem, size = 0x12000, scoped, tag = 'internal scratch']
  %s0 = inlined_call_operand.vmem [shape: f32[2,2,8,32], index: 0, kind: input, shape index: {}]
  %s1 = inlined_call_operand.vmem [shape: f32[2,8], index: 1, kind: input, shape index: {}]
  %s2 = inlined_call_operand.vmem [shape: f32[2,2,32,256], index: 2, kind: input, shape index: {}]
  %s3 = inlined_call_operand.vmem [shape: f32[2,2,128,32], index: 3, kind: input, shape index: {}]
  %s4 = inlined_call_operand.vmem [shape: f32[2,2,9,32], index: 4, kind: input, shape index: {}]
  %s5 = inlined_call_operand.vmem [shape: f32[2,2,128], index: 5, kind: input, shape index: {}]
  %s6 = inlined_call_operand.vmem [shape: f32[2,32,2], index: 6, kind: input, shape index: {}]
  %s7 = inlined_call_operand.vmem [shape: f32[2,2], index: 7, kind: input, shape index: {}]
  %s8 = inlined_call_operand.vmem [shape: f32[2,2,8,2], index: 8, kind: output, shape index: {}]
  %s9 = sld [smem:[#allocation0]]
  $region42: #{tpu_custom_call.1} parent=0
    _
  %s11 = ssub.s32 1, %s9
  %s12 = scalar_select 0, %s11, %s9
  // Predicated region
  $region2: #{tpu_custom_call.1} parent=0 // pred_check
    _
  $region3: #{tpu_custom_call.1} parent=0 // pred_check_branch
    %14 = sbr.rel (0) target = $region5
  $region4: #{tpu_custom_call.1} parent=0 // pred_region
    _
  $region5: #{tpu_custom_call.1} parent=0 // pred_fallthru
    _
  // Predicated region
  $region6: #{tpu_custom_call.1} parent=0 // pred_check
    _
  $region7: #{tpu_custom_call.1} parent=0 // pred_check_branch
    %16 = sbr.rel (0) target = $region9
  $region8: #{tpu_custom_call.1} parent=0 // pred_region
    _
  $region9: #{tpu_custom_call.1} parent=0 // pred_fallthru
    _
  // Predicated region
  $region10: #{tpu_custom_call.1} parent=0 // pred_check
    _
  $region11: #{tpu_custom_call.1} parent=0 // pred_check_branch
    %18 = sbr.rel (0) target = $region13
  $region12: #{tpu_custom_call.1} parent=0 // pred_region
    _
  $region13: #{tpu_custom_call.1} parent=0 // pred_fallthru
    _
  // Predicated region
  $region14: #{tpu_custom_call.1} parent=0 // pred_check
    _
  $region15: #{tpu_custom_call.1} parent=0 // pred_check_branch
    %20 = sbr.rel (0) target = $region17
  $region16: #{tpu_custom_call.1} parent=0 // pred_region
    _
  $region17: #{tpu_custom_call.1} parent=0 // pred_fallthru
    _
  // Predicated region
  $region18: #{tpu_custom_call.1} parent=0 // pred_check
    _
  $region19: #{tpu_custom_call.1} parent=0 // pred_check_branch
    %22 = sbr.rel (0) target = $region21
  $region20: #{tpu_custom_call.1} parent=0 // pred_region
    _
  $region21: #{tpu_custom_call.1} parent=0 // pred_fallthru
    _
  // Predicated region
  $region22: #{tpu_custom_call.1} parent=0 // pred_check
    _
  $region23: #{tpu_custom_call.1} parent=0 // pred_check_branch
    %24 = sbr.rel (0) target = $region25
  $region24: #{tpu_custom_call.1} parent=0 // pred_region
    _
  $region25: #{tpu_custom_call.1} parent=0 // pred_fallthru
    _
  // Predicated region
  $region26: #{tpu_custom_call.1} parent=0 // pred_check
    _
  $region27: #{tpu_custom_call.1} parent=0 // pred_check_branch
    %26 = sbr.rel (0) target = $region29
  $region28: #{tpu_custom_call.1} parent=0 // pred_region
    _
  $region29: #{tpu_custom_call.1} parent=0 // pred_fallthru
    _
  // Predicated region
  $region30: #{tpu_custom_call.1} parent=0 // pred_check
    _
  $region31: #{tpu_custom_call.1} parent=0 // pred_check_branch
    %28 = sbr.rel (0) target = $region33
  $region32: #{tpu_custom_call.1} parent=0 // pred_region
    _
  $region33: #{tpu_custom_call.1} parent=0 // pred_fallthru
    _
  %v29 = vld [vmem:[%s1] sm:$0x3]
  %vm30 = vcmp.gt.f32.partialorder %v29, 0.0
  %v31 = vsel %vm30, 1, 0
  %v33 = vunpack.c.l.s4 1966171168
  %v34 = vunpack.c.0.s8 %v33
  %v35 = vlaneseq
  %v36 = vshrl.u32 %v35, 7
  %v37 = vsub.s32 %v34, %v36
  %v38 = vrot.slane %v31, %v37
  %v39 = vcombine.high %v38, %v38
  %v41 = vunpack.c.l.s4 1966171168
  %v42 = vunpack.c.0.s8 %v41
  %v43 = vlaneseq
  %v44 = vshrl.u32 %v43, 7
  %v45 = vsub.s32 %v42, %v44
  %v46 = vrot.slane %v38, %v45
  %v48 = vunpack.c.l.s4 1966171168
  %v49 = vunpack.c.0.s8 %v48
  %v50 = vlaneseq
  %v51 = vshrl.u32 %v50, 7
  %v52 = vsub.s32 %v49, %v51
  %v53 = vrot.slane %v39, %v52
  %vm54 = vcmp.ne.s32.totalorder %v46, 0
  %vm55 = vcmp.ne.s32.totalorder %v53, 0
  %v56 = vld [vmem:[%s0] sm:$0xff]
  %v57 = vld [vmem:[%s0 + $0x8] sm:$0xff]
  %v58 = vld [vmem:[%s2] sm:$0xff]
  %v59 = vld [vmem:[%s2 + $0x8] sm:$0xff]
  %v60 = vld [vmem:[%s2 + $0x10] sm:$0xff]
  %v61 = vld [vmem:[%s2 + $0x18] sm:$0xff]
  %v62 = vld [vmem:[%s2 + $0x20] sm:$0xff]
  %v63 = vld [vmem:[%s2 + $0x28] sm:$0xff]
  %v64 = vld [vmem:[%s2 + $0x30] sm:$0xff]
  %v65 = vld [vmem:[%s2 + $0x38] sm:$0xff]
  %v66 = vld [vmem:[%s4] sm:$0x1]
  %v67 = vld [vmem:[%s4 + $0x1] sm:$0x1]
  %v68 = vld [vmem:[%s4 + $0x2] sm:$0x1]
  %v69 = vld [vmem:[%s4 + $0x3] sm:$0x1]
  %v70 = vld [vmem:[%s4 + $0x4] sm:$0x1]
  %v71 = vld [vmem:[%s4 + $0x5] sm:$0x1]
  %v72 = vld [vmem:[%s4 + $0x6] sm:$0x1]
  %v73 = vld [vmem:[%s4 + $0x7] sm:$0x1]
  %v74 = vld [vmem:[%s4 + $0x8] sm:$0x1]
  %vm75 = vcmask 261120
  %v77 = vsel %vm75, %v56, 0
  %v80 = vsel %vm75, %v57, 0
  %82 = vmatprep.subr.mxu0 0.0
  %83 = vmatpush1.msra.mxu0 %v58
  %84 = vmatprep.subr.mxu0 0.0
  %85 = vmatpush1.msra.mxu0 %v60
  %86 = vmatprep.subr.mxu0 0.0
  %87 = vmatpush1.msra.mxu0 %v62
  %88 = vmatprep.subr.mxu0 0.0
  %89 = vmatpush1.msra.mxu0 %v64
  %90 = vmatprep.subr.mxu0 0.0
  %91 = vmatpush1.msra.mxu0 0.0
  %92 = vmatprep.subr.mxu0 0.0
  %93 = vmatpush1.msra.mxu0 0.0
  %94 = vmatprep.subr.mxu0 0.0
  %95 = vmatpush1.msra.mxu0 0.0
  %96 = vmatprep.subr.mxu0 0.0
  %97 = vmatpush1.msra.mxu0 0.0
  %98 = vmatprep.subr.mxu0 0.0
  %99 = vmatpush1.msra.mxu0 0.0
  %100 = vmatprep.subr.mxu0 0.0
  %101 = vmatpush1.msra.mxu0 0.0
  %102 = vmatprep.subr.mxu0 0.0
  %103 = vmatpush1.msra.mxu0 0.0
  %104 = vmatprep.subr.mxu0 0.0
  %105 = vmatpush1.msra.mxu0 0.0
  %106 = vmatprep.subr.mxu0 0.0
  %107 = vmatpush1.msra.mxu0 0.0
  %108 = vmatprep.subr.mxu0 0.0
  %109 = vmatpush1.msra.mxu0 0.0
  %110 = vmatprep.subr.mxu0 0.0
  %111 = vmatpush1.msra.mxu0 0.0
  %112 = vmatprep.subr.mxu0 0.0
  %113 = vmatpush1.msra.mxu0 0.0
  %114 = vmatprep.subr.mxu0 0.0
  %115 = vmatpush1.msra.mxu0 0.0
  %116 = vmatprep.subr.mxu0 0.0
  %117 = vmatpush1.msra.mxu0 0.0
  %118 = vmatprep.subr.mxu0 0.0
  %119 = vmatpush1.msra.mxu0 0.0
  %120 = vmatprep.subr.mxu0 0.0
  %121 = vmatpush1.msra.mxu0 0.0
  %122 = vmatprep.subr.mxu0 0.0
  %123 = vmatpush1.msra.mxu0 0.0
  %124 = vmatprep.subr.mxu0 0.0
  %125 = vmatpush1.msra.mxu0 0.0
  %126 = vmatprep.subr.mxu0 0.0
  %127 = vmatpush1.msra.mxu0 0.0
  %128 = vmatprep.subr.mxu0 0.0
  %129 = vmatpush1.msra.mxu0 0.0
  %130 = vmatprep.subr.mxu0 0.0
  %131 = vmatpush1.msra.mxu0 0.0
  %132 = vmatprep.subr.mxu0 0.0
  %133 = vmatpush1.msra.mxu0 0.0
  %134 = vmatprep.subr.mxu0 0.0
  %135 = vmatpush1.msra.mxu0 0.0
  %136 = vmatprep.subr.mxu0 0.0
  %137 = vmatpush1.msra.mxu0 0.0
  %138 = vmatprep.subr.mxu0 0.0
  %139 = vmatpush1.msra.mxu0 0.0
  %140 = vmatprep.subr.mxu0 0.0
  %141 = vmatpush1.msra.mxu0 0.0
  %142 = vmatprep.subr.mxu0 0.0
  %143 = vmatpush1.msra.mxu0 0.0
  %144 = vmatprep.subr.mxu0 0.0
  %145 = vmatpush1.msra.mxu0 0.0
  %146 = vmatprep.mubr.f32.mxu0 0.0
  %147 = vmatmul.mubr.f32.gmra.mrb[0].mxu0 %v77
  %v148 = vpop.f32.mrb[0].mxu0
  %v149 = vadd.f32 0.0, %v148
  %v150 = vpop.f32.mrb[0].mxu0
  %151 = vmatprep.mubr.f32.mxu0 0.0
  %152 = vmatmul.mubr.f32.gmra.mrb[0].mxu0 %v80
  %v153 = vpop.f32.mrb[0].mxu0
  %v154 = vadd.f32 0.0, %v153
  %v155 = vpop.f32.mrb[0].mxu0
  %156 = vdwg.mxu0
  %v157 = vlaneseq
  %v158 = vshrl.u32 %v157, 7
  %v159 = vsub.s32 0, %v158
  %v160 = vrot.slane %v66, %v159
  %v161 = vadd.f32 %v149, %v160
  %v162 = vadd.f32 %v154, %v160
  %v163 = vlaneseq
  %v164 = vshrl.u32 %v163, 7
  %v165 = vsub.s32 0, %v164
  %v166 = vrot.slane %v67, %v165
  %168 = vrot.lane.b32.xlu0 %v166, 32
  %v169 = vpop.permute.xlu0 %168
  %v171 = vadd.f32 %v149, %v169
  %v172 = vadd.f32 %v154, %v169
  %v173 = vlaneseq
  %v174 = vshrl.u32 %v173, 7
  %v175 = vsub.s32 0, %v174
  %v176 = vrot.slane %v68, %v175
  %178 = vrot.lane.b32.xlu0 %v176, 64
  %v179 = vpop.permute.xlu0 %178
  %v181 = vadd.f32 %v149, %v179
  %v182 = vadd.f32 %v154, %v179
  %184 = vrot.lane.b32.xlu0 %v171, 96
  %v185 = vpop.permute.xlu0 %184
  %vm186 = vcmask 130048
  %v188 = vsel %vm186, %v161, 0
  %v190 = vsel %vm186, %v185, 0
  %192 = vmatprep.subr.mxu0 0.0
  %193 = vmatpush1.xpose.msra.mxu0 %v190
  %194 = vmatprep.subr.mxu0 0.0
  %195 = vmatpush1.xpose.msra.mxu0 0.0
  %196 = vmatprep.subr.mxu0 0.0
  %197 = vmatpush1.xpose.msra.mxu0 0.0
  %198 = vmatprep.subr.mxu0 0.0
  %199 = vmatpush1.xpose.msra.mxu0 0.0
  %200 = vmatprep.subr.mxu0 0.0
  %201 = vmatpush1.xpose.msra.mxu0 0.0
  %202 = vmatprep.subr.mxu0 0.0
  %203 = vmatpush1.xpose.msra.mxu0 0.0
  %204 = vmatprep.subr.mxu0 0.0
  %205 = vmatpush1.xpose.msra.mxu0 0.0
  %206 = vmatprep.subr.mxu0 0.0
  %207 = vmatpush1.xpose.msra.mxu0 0.0
  %208 = vmatprep.subr.mxu0 0.0
  %209 = vmatpush1.xpose.msra.mxu0 0.0
  %210 = vmatprep.subr.mxu0 0.0
  %211 = vmatpush1.xpose.msra.mxu0 0.0
  %212 = vmatprep.subr.mxu0 0.0
  %213 = vmatpush1.xpose.msra.mxu0 0.0
  %214 = vmatprep.subr.mxu0 0.0
  %215 = vmatpush1.xpose.msra.mxu0 0.0
  %216 = vmatprep.subr.mxu0 0.0
  %217 = vmatpush1.xpose.msra.mxu0 0.0
  %218 = vmatprep.subr.mxu0 0.0
  %219 = vmatpush1.xpose.msra.mxu0 0.0
  %220 = vmatprep.subr.mxu0 0.0
  %221 = vmatpush1.xpose.msra.mxu0 0.0
  %222 = vmatprep.subr.mxu0 0.0
  %223 = vmatpush1.xpose.msra.mxu0 0.0
  %224 = vmatprep.subr.mxu0 0.0
  %225 = vmatpush1.xpose.msra.mxu0 0.0
  %226 = vmatprep.subr.mxu0 0.0
  %227 = vmatpush1.xpose.msra.mxu0 0.0
  %228 = vmatprep.subr.mxu0 0.0
  %229 = vmatpush1.xpose.msra.mxu0 0.0
  %230 = vmatprep.subr.mxu0 0.0
  %231 = vmatpush1.xpose.msra.mxu0 0.0
  %232 = vmatprep.subr.mxu0 0.0
  %233 = vmatpush1.xpose.msra.mxu0 0.0
  %234 = vmatprep.subr.mxu0 0.0
  %235 = vmatpush1.xpose.msra.mxu0 0.0
  %236 = vmatprep.subr.mxu0 0.0
  %237 = vmatpush1.xpose.msra.mxu0 0.0
  %238 = vmatprep.subr.mxu0 0.0
  %239 = vmatpush1.xpose.msra.mxu0 0.0
  %240 = vmatprep.subr.mxu0 0.0
  %241 = vmatpush1.xpose.msra.mxu0 0.0
  %242 = vmatprep.subr.mxu0 0.0
  %243 = vmatpush1.xpose.msra.mxu0 0.0
  %244 = vmatprep.subr.mxu0 0.0
  %245 = vmatpush1.xpose.msra.mxu0 0.0
  %246 = vmatprep.subr.mxu0 0.0
  %247 = vmatpush1.xpose.msra.mxu0 0.0
  %248 = vmatprep.subr.mxu0 0.0
  %249 = vmatpush1.xpose.msra.mxu0 0.0
  %250 = vmatprep.subr.mxu0 0.0
  %251 = vmatpush1.xpose.msra.mxu0 0.0
  %252 = vmatprep.subr.mxu0 0.0
  %253 = vmatpush1.xpose.msra.mxu0 0.0
  %254 = vmatprep.subr.mxu0 0.0
  %255 = vmatpush1.xpose.msra.mxu0 0.0
  %256 = vmatprep.mubr.f32.mxu0 0.0
  %257 = vmatmul.mubr.f32.gmra.mrb[0].mxu0 %v188
  %v258 = vpop.f32.mrb[0].mxu0
  %v259 = vadd.f32 0.0, %v258
  %v260 = vpop.f32.mrb[0].mxu0
  %261 = vdwg.mxu0
  %263 = vrot.lane.b32.xlu0 %v172, 96
  %v264 = vpop.permute.xlu0 %263
  %v266 = vsel %vm186, %v162, 0
  %v268 = vsel %vm186, %v264, 0
  %270 = vmatprep.subr.mxu0 0.0
  %271 = vmatpush1.xpose.msra.mxu0 %v268
  %272 = vmatprep.subr.mxu0 0.0
  %273 = vmatpush1.xpose.msra.mxu0 0.0
  %274 = vmatprep.subr.mxu0 0.0
  %275 = vmatpush1.xpose.msra.mxu0 0.0
  %276 = vmatprep.subr.mxu0 0.0
  %277 = vmatpush1.xpose.msra.mxu0 0.0
  %278 = vmatprep.subr.mxu0 0.0
  %279 = vmatpush1.xpose.msra.mxu0 0.0
  %280 = vmatprep.subr.mxu0 0.0
  %281 = vmatpush1.xpose.msra.mxu0 0.0
  %282 = vmatprep.subr.mxu0 0.0
  %283 = vmatpush1.xpose.msra.mxu0 0.0
  %284 = vmatprep.subr.mxu0 0.0
  %285 = vmatpush1.xpose.msra.mxu0 0.0
  %286 = vmatprep.subr.mxu0 0.0
  %287 = vmatpush1.xpose.msra.mxu0 0.0
  %288 = vmatprep.subr.mxu0 0.0
  %289 = vmatpush1.xpose.msra.mxu0 0.0
  %290 = vmatprep.subr.mxu0 0.0
  %291 = vmatpush1.xpose.msra.mxu0 0.0
  %292 = vmatprep.subr.mxu0 0.0
  %293 = vmatpush1.xpose.msra.mxu0 0.0
  %294 = vmatprep.subr.mxu0 0.0
  %295 = vmatpush1.xpose.msra.mxu0 0.0
  %296 = vmatprep.subr.mxu0 0.0
  %297 = vmatpush1.xpose.msra.mxu0 0.0
  %298 = vmatprep.subr.mxu0 0.0
  %299 = vmatpush1.xpose.msra.mxu0 0.0
  %300 = vmatprep.subr.mxu0 0.0
  %301 = vmatpush1.xpose.msra.mxu0 0.0
  %302 = vmatprep.subr.mxu0 0.0
  %303 = vmatpush1.xpose.msra.mxu0 0.0
  %304 = vmatprep.subr.mxu0 0.0
  %305 = vmatpush1.xpose.msra.mxu0 0.0
  %306 = vmatprep.subr.mxu0 0.0
  %307 = vmatpush1.xpose.msra.mxu0 0.0
  %308 = vmatprep.subr.mxu0 0.0
  %309 = vmatpush1.xpose.msra.mxu0 0.0
  %310 = vmatprep.subr.mxu0 0.0
  %311 = vmatpush1.xpose.msra.mxu0 0.0
  %312 = vmatprep.subr.mxu0 0.0
  %313 = vmatpush1.xpose.msra.mxu0 0.0
  %314 = vmatprep.subr.mxu0 0.0
  %315 = vmatpush1.xpose.msra.mxu0 0.0
  %316 = vmatprep.subr.mxu0 0.0
  %317 = vmatpush1.xpose.msra.mxu0 0.0
  %318 = vmatprep.subr.mxu0 0.0
  %319 = vmatpush1.xpose.msra.mxu0 0.0
  %320 = vmatprep.subr.mxu0 0.0
  %321 = vmatpush1.xpose.msra.mxu0 0.0
  %322 = vmatprep.subr.mxu0 0.0
  %323 = vmatpush1.xpose.msra.mxu0 0.0
  %324 = vmatprep.subr.mxu0 0.0
  %325 = vmatpush1.xpose.msra.mxu0 0.0
  %326 = vmatprep.subr.mxu0 0.0
  %327 = vmatpush1.xpose.msra.mxu0 0.0
  %328 = vmatprep.subr.mxu0 0.0
  %329 = vmatpush1.xpose.msra.mxu0 0.0
  %330 = vmatprep.subr.mxu0 0.0
  %331 = vmatpush1.xpose.msra.mxu0 0.0
  %332 = vmatprep.subr.mxu0 0.0
  %333 = vmatpush1.xpose.msra.mxu0 0.0
  %334 = vmatprep.mubr.f32.mxu0 0.0
  %335 = vmatmul.mubr.f32.gmra.mrb[0].mxu0 %v266
  %v336 = vpop.f32.mrb[0].mxu0
  %v337 = vadd.f32 0.0, %v336
  %v338 = vpop.f32.mrb[0].mxu0
  %339 = vdwg.mxu0
  %v340 = vmul.f32 %v259, 0.25
  %v341 = vmul.f32 %v337, 0.25
  %v342 = vsel %vm54, 1, 0
  %v343 = vsel %vm55, 1, 0
  %v344 = vlaneseq
  %v345 = vshrl.u32 %v344, 7
  %v346 = vsub.s32 0, %v345
  %v347 = vrot.slane %v342, %v346
  %v348 = vlaneseq
  %v349 = vshrl.u32 %v348, 7
  %v350 = vsub.s32 0, %v349
  %v351 = vrot.slane %v343, %v350
  %vm352 = vcmp.eq.s32.totalorder %v347, 1
  %vm353 = vcmp.eq.s32.totalorder %v351, 1
  %v354 = vsel %vm352, %v340, -3.4028235e+38
  %v355 = vsel %vm353, %v341, -3.4028235e+38
  %vm356 = vcmask 64512
  %v357 = vsel %vm356, %v354, -inf
  %358 = vmax.xlane.f32.xlu0 %v357
  %v359 = vpop.xlane.xlu0 %358
  %v360 = vsel %vm356, %v355, -inf
  %361 = vmax.xlane.f32.xlu0 %v360
  %v362 = vpop.xlane.xlu0 %361
  %v363 = vsub.f32 %v354, %v359
  %v364 = vsub.f32 %v355, %v362
  %v365 = vmul.f32 %v363, 1.442695
  %v366 = vpow.pop %v365
  %v367 = vmul.f32 %v364, 1.442695
  %v368 = vpow.pop %v367
  %v369 = vsel %vm356, %v366, 0.0
  %370 = vadd.xlane.f32.xlu0 %v369
  %v371 = vpop.xlane.xlu0 %370
  %v372 = vsel %vm356, %v368, 0.0
  %373 = vadd.xlane.f32.xlu0 %v372
  %v374 = vpop.xlane.xlu0 %373
  %v375 = vrcp.pop %v371
  %v376 = vrcp.pop %v374
  %v377 = vmul.f32 %v366, %v375
  %v378 = vmul.f32 %v368, %v376
  %380 = vrot.lane.b32.xlu0 %v181, 64
  %v381 = vpop.permute.xlu0 %380
  %v384 = vsel %vm356, %v377, 0
  %386 = vmatprep.subr.mxu0 0.0
  %387 = vmatpush1.msra.mxu0 %v381
  %388 = vmatprep.subr.mxu0 0.0
  %389 = vmatpush1.msra.mxu0 0.0
  %390 = vmatprep.subr.mxu0 0.0
  %391 = vmatpush1.msra.mxu0 0.0
  %392 = vmatprep.subr.mxu0 0.0
  %393 = vmatpush1.msra.mxu0 0.0
  %394 = vmatprep.subr.mxu0 0.0
  %395 = vmatpush1.msra.mxu0 0.0
  %396 = vmatprep.subr.mxu0 0.0
  %397 = vmatpush1.msra.mxu0 0.0
  %398 = vmatprep.subr.mxu0 0.0
  %399 = vmatpush1.msra.mxu0 0.0
  %400 = vmatprep.subr.mxu0 0.0
  %401 = vmatpush1.msra.mxu0 0.0
  %402 = vmatprep.subr.mxu0 0.0
  %403 = vmatpush1.msra.mxu0 0.0
  %404 = vmatprep.subr.mxu0 0.0
  %405 = vmatpush1.msra.mxu0 0.0
  %406 = vmatprep.subr.mxu0 0.0
  %407 = vmatpush1.msra.mxu0 0.0
  %408 = vmatprep.subr.mxu0 0.0
  %409 = vmatpush1.msra.mxu0 0.0
  %410 = vmatprep.subr.mxu0 0.0
  %411 = vmatpush1.msra.mxu0 0.0
  %412 = vmatprep.subr.mxu0 0.0
  %413 = vmatpush1.msra.mxu0 0.0
  %414 = vmatprep.subr.mxu0 0.0
  %415 = vmatpush1.msra.mxu0 0.0
  %416 = vmatprep.subr.mxu0 0.0
  %417 = vmatpush1.msra.mxu0 0.0
  %418 = vmatprep.subr.mxu0 0.0
  %419 = vmatpush1.msra.mxu0 0.0
  %420 = vmatprep.subr.mxu0 0.0
  %421 = vmatpush1.msra.mxu0 0.0
  %422 = vmatprep.subr.mxu0 0.0
  %423 = vmatpush1.msra.mxu0 0.0
  %424 = vmatprep.subr.mxu0 0.0
  %425 = vmatpush1.msra.mxu0 0.0
  %426 = vmatprep.subr.mxu0 0.0
  %427 = vmatpush1.msra.mxu0 0.0
  %428 = vmatprep.subr.mxu0 0.0
  %429 = vmatpush1.msra.mxu0 0.0
  %430 = vmatprep.subr.mxu0 0.0
  %431 = vmatpush1.msra.mxu0 0.0
  %432 = vmatprep.subr.mxu0 0.0
  %433 = vmatpush1.msra.mxu0 0.0
  %434 = vmatprep.subr.mxu0 0.0
  %435 = vmatpush1.msra.mxu0 0.0
  %436 = vmatprep.subr.mxu0 0.0
  %437 = vmatpush1.msra.mxu0 0.0
  %438 = vmatprep.subr.mxu0 0.0
  %439 = vmatpush1.msra.mxu0 0.0
  %440 = vmatprep.subr.mxu0 0.0
  %441 = vmatpush1.msra.mxu0 0.0
  %442 = vmatprep.subr.mxu0 0.0
  %443 = vmatpush1.msra.mxu0 0.0
  %444 = vmatprep.subr.mxu0 0.0
  %445 = vmatpush1.msra.mxu0 0.0
  %446 = vmatprep.subr.mxu0 0.0
  %447 = vmatpush1.msra.mxu0 0.0
  %448 = vmatprep.subr.mxu0 0.0
  %449 = vmatpush1.msra.mxu0 0.0
  %450 = vmatprep.mubr.f32.mxu0 0.0
  %451 = vmatmul.mubr.f32.gmra.mrb[0].mxu0 %v384
  %v452 = vpop.f32.mrb[0].mxu0
  %v453 = vadd.f32 0.0, %v452
  %v454 = vpop.f32.mrb[0].mxu0
  %455 = vdwg.mxu0
  %457 = vrot.lane.b32.xlu0 %v182, 64
  %v458 = vpop.permute.xlu0 %457
  %v461 = vsel %vm356, %v378, 0
  %463 = vmatprep.subr.mxu0 0.0
  %464 = vmatpush1.msra.mxu0 %v458
  %465 = vmatprep.subr.mxu0 0.0
  %466 = vmatpush1.msra.mxu0 0.0
  %467 = vmatprep.subr.mxu0 0.0
  %468 = vmatpush1.msra.mxu0 0.0
  %469 = vmatprep.subr.mxu0 0.0
  %470 = vmatpush1.msra.mxu0 0.0
  %471 = vmatprep.subr.mxu0 0.0
  %472 = vmatpush1.msra.mxu0 0.0
  %473 = vmatprep.subr.mxu0 0.0
  %474 = vmatpush1.msra.mxu0 0.0
  %475 = vmatprep.subr.mxu0 0.0
  %476 = vmatpush1.msra.mxu0 0.0
  %477 = vmatprep.subr.mxu0 0.0
  %478 = vmatpush1.msra.mxu0 0.0
  %479 = vmatprep.subr.mxu0 0.0
  %480 = vmatpush1.msra.mxu0 0.0
  %481 = vmatprep.subr.mxu0 0.0
  %482 = vmatpush1.msra.mxu0 0.0
  %483 = vmatprep.subr.mxu0 0.0
  %484 = vmatpush1.msra.mxu0 0.0
  %485 = vmatprep.subr.mxu0 0.0
  %486 = vmatpush1.msra.mxu0 0.0
  %487 = vmatprep.subr.mxu0 0.0
  %488 = vmatpush1.msra.mxu0 0.0
  %489 = vmatprep.subr.mxu0 0.0
  %490 = vmatpush1.msra.mxu0 0.0
  %491 = vmatprep.subr.mxu0 0.0
  %492 = vmatpush1.msra.mxu0 0.0
  %493 = vmatprep.subr.mxu0 0.0
  %494 = vmatpush1.msra.mxu0 0.0
  %495 = vmatprep.subr.mxu0 0.0
  %496 = vmatpush1.msra.mxu0 0.0
  %497 = vmatprep.subr.mxu0 0.0
  %498 = vmatpush1.msra.mxu0 0.0
  %499 = vmatprep.subr.mxu0 0.0
  %500 = vmatpush1.msra.mxu0 0.0
  %501 = vmatprep.subr.mxu0 0.0
  %502 = vmatpush1.msra.mxu0 0.0
  %503 = vmatprep.subr.mxu0 0.0
  %504 = vmatpush1.msra.mxu0 0.0
  %505 = vmatprep.subr.mxu0 0.0
  %506 = vmatpush1.msra.mxu0 0.0
  %507 = vmatprep.subr.mxu0 0.0
  %508 = vmatpush1.msra.mxu0 0.0
  %509 = vmatprep.subr.mxu0 0.0
  %510 = vmatpush1.msra.mxu0 0.0
  %511 = vmatprep.subr.mxu0 0.0
  %512 = vmatpush1.msra.mxu0 0.0
  %513 = vmatprep.subr.mxu0 0.0
  %514 = vmatpush1.msra.mxu0 0.0
  %515 = vmatprep.subr.mxu0 0.0
  %516 = vmatpush1.msra.mxu0 0.0
  %517 = vmatprep.subr.mxu0 0.0
  %518 = vmatpush1.msra.mxu0 0.0
  %519 = vmatprep.subr.mxu0 0.0
  %520 = vmatpush1.msra.mxu0 0.0
  %521 = vmatprep.subr.mxu0 0.0
  %522 = vmatpush1.msra.mxu0 0.0
  %523 = vmatprep.subr.mxu0 0.0
  %524 = vmatpush1.msra.mxu0 0.0
  %525 = vmatprep.subr.mxu0 0.0
  %526 = vmatpush1.msra.mxu0 0.0
  %527 = vmatprep.mubr.f32.mxu0 0.0
  %528 = vmatmul.mubr.f32.gmra.mrb[0].mxu0 %v461
  %v529 = vpop.f32.mrb[0].mxu0
  %v530 = vadd.f32 0.0, %v529
  %v531 = vpop.f32.mrb[0].mxu0
  %532 = vdwg.mxu0
  %533 = vrot.lane.b32.xlu0 %v161, 112
  %v534 = vpop.permute.xlu0 %533
  %535 = vrot.lane.b32.xlu0 %v171, 80
  %v536 = vpop.permute.xlu0 %535
  %v537 = vsel %vm186, %v534, 0
  %v539 = vsel %vm186, %v536, 0
  %541 = vmatprep.subr.mxu0 0.0
  %542 = vmatpush1.xpose.msra.mxu0 %v539
  %543 = vmatprep.subr.mxu0 0.0
  %544 = vmatpush1.xpose.msra.mxu0 0.0
  %545 = vmatprep.subr.mxu0 0.0
  %546 = vmatpush1.xpose.msra.mxu0 0.0
  %547 = vmatprep.subr.mxu0 0.0
  %548 = vmatpush1.xpose.msra.mxu0 0.0
  %549 = vmatprep.subr.mxu0 0.0
  %550 = vmatpush1.xpose.msra.mxu0 0.0
  %551 = vmatprep.subr.mxu0 0.0
  %552 = vmatpush1.xpose.msra.mxu0 0.0
  %553 = vmatprep.subr.mxu0 0.0
  %554 = vmatpush1.xpose.msra.mxu0 0.0
  %555 = vmatprep.subr.mxu0 0.0
  %556 = vmatpush1.xpose.msra.mxu0 0.0
  %557 = vmatprep.subr.mxu0 0.0
  %558 = vmatpush1.xpose.msra.mxu0 0.0
  %559 = vmatprep.subr.mxu0 0.0
  %560 = vmatpush1.xpose.msra.mxu0 0.0
  %561 = vmatprep.subr.mxu0 0.0
  %562 = vmatpush1.xpose.msra.mxu0 0.0
  %563 = vmatprep.subr.mxu0 0.0
  %564 = vmatpush1.xpose.msra.mxu0 0.0
  %565 = vmatprep.subr.mxu0 0.0
  %566 = vmatpush1.xpose.msra.mxu0 0.0
  %567 = vmatprep.subr.mxu0 0.0
  %568 = vmatpush1.xpose.msra.mxu0 0.0
  %569 = vmatprep.subr.mxu0 0.0
  %570 = vmatpush1.xpose.msra.mxu0 0.0
  %571 = vmatprep.subr.mxu0 0.0
  %572 = vmatpush1.xpose.msra.mxu0 0.0
  %573 = vmatprep.subr.mxu0 0.0
  %574 = vmatpush1.xpose.msra.mxu0 0.0
  %575 = vmatprep.subr.mxu0 0.0
  %576 = vmatpush1.xpose.msra.mxu0 0.0
  %577 = vmatprep.subr.mxu0 0.0
  %578 = vmatpush1.xpose.msra.mxu0 0.0
  %579 = vmatprep.subr.mxu0 0.0
  %580 = vmatpush1.xpose.msra.mxu0 0.0
  %581 = vmatprep.subr.mxu0 0.0
  %582 = vmatpush1.xpose.msra.mxu0 0.0
  %583 = vmatprep.subr.mxu0 0.0
  %584 = vmatpush1.xpose.msra.mxu0 0.0
  %585 = vmatprep.subr.mxu0 0.0
  %586 = vmatpush1.xpose.msra.mxu0 0.0
  %587 = vmatprep.subr.mxu0 0.0
  %588 = vmatpush1.xpose.msra.mxu0 0.0
  %589 = vmatprep.subr.mxu0 0.0
  %590 = vmatpush1.xpose.msra.mxu0 0.0
  %591 = vmatprep.subr.mxu0 0.0
  %592 = vmatpush1.xpose.msra.mxu0 0.0
  %593 = vmatprep.subr.mxu0 0.0
  %594 = vmatpush1.xpose.msra.mxu0 0.0
  %595 = vmatprep.subr.mxu0 0.0
  %596 = vmatpush1.xpose.msra.mxu0 0.0
  %597 = vmatprep.subr.mxu0 0.0
  %598 = vmatpush1.xpose.msra.mxu0 0.0
  %599 = vmatprep.subr.mxu0 0.0
  %600 = vmatpush1.xpose.msra.mxu0 0.0
  %601 = vmatprep.subr.mxu0 0.0
  %602 = vmatpush1.xpose.msra.mxu0 0.0
  %603 = vmatprep.subr.mxu0 0.0
  %604 = vmatpush1.xpose.msra.mxu0 0.0
  %605 = vmatprep.mubr.f32.mxu0 0.0
  %606 = vmatmul.mubr.f32.gmra.mrb[0].mxu0 %v537
  %v607 = vpop.f32.mrb[0].mxu0
  %v608 = vadd.f32 0.0, %v607
  %v609 = vpop.f32.mrb[0].mxu0
  %610 = vdwg.mxu0
  %611 = vrot.lane.b32.xlu0 %v162, 112
  %v612 = vpop.permute.xlu0 %611
  %613 = vrot.lane.b32.xlu0 %v172, 80
  %v614 = vpop.permute.xlu0 %613
  %v615 = vsel %vm186, %v612, 0
  %v617 = vsel %vm186, %v614, 0
  %619 = vmatprep.subr.mxu0 0.0
  %620 = vmatpush1.xpose.msra.mxu0 %v617
  %621 = vmatprep.subr.mxu0 0.0
  %622 = vmatpush1.xpose.msra.mxu0 0.0
  %623 = vmatprep.subr.mxu0 0.0
  %624 = vmatpush1.xpose.msra.mxu0 0.0
  %625 = vmatprep.subr.mxu0 0.0
  %626 = vmatpush1.xpose.msra.mxu0 0.0
  %627 = vmatprep.subr.mxu0 0.0
  %628 = vmatpush1.xpose.msra.mxu0 0.0
  %629 = vmatprep.subr.mxu0 0.0
  %630 = vmatpush1.xpose.msra.mxu0 0.0
  %631 = vmatprep.subr.mxu0 0.0
  %632 = vmatpush1.xpose.msra.mxu0 0.0
  %633 = vmatprep.subr.mxu0 0.0
  %634 = vmatpush1.xpose.msra.mxu0 0.0
  %635 = vmatprep.subr.mxu0 0.0
  %636 = vmatpush1.xpose.msra.mxu0 0.0
  %637 = vmatprep.subr.mxu0 0.0
  %638 = vmatpush1.xpose.msra.mxu0 0.0
  %639 = vmatprep.subr.mxu0 0.0
  %640 = vmatpush1.xpose.msra.mxu0 0.0
  %641 = vmatprep.subr.mxu0 0.0
  %642 = vmatpush1.xpose.msra.mxu0 0.0
  %643 = vmatprep.subr.mxu0 0.0
  %644 = vmatpush1.xpose.msra.mxu0 0.0
  %645 = vmatprep.subr.mxu0 0.0
  %646 = vmatpush1.xpose.msra.mxu0 0.0
  %647 = vmatprep.subr.mxu0 0.0
  %648 = vmatpush1.xpose.msra.mxu0 0.0
  %649 = vmatprep.subr.mxu0 0.0
  %650 = vmatpush1.xpose.msra.mxu0 0.0
  %651 = vmatprep.subr.mxu0 0.0
  %652 = vmatpush1.xpose.msra.mxu0 0.0
  %653 = vmatprep.subr.mxu0 0.0
  %654 = vmatpush1.xpose.msra.mxu0 0.0
  %655 = vmatprep.subr.mxu0 0.0
  %656 = vmatpush1.xpose.msra.mxu0 0.0
  %657 = vmatprep.subr.mxu0 0.0
  %658 = vmatpush1.xpose.msra.mxu0 0.0
  %659 = vmatprep.subr.mxu0 0.0
  %660 = vmatpush1.xpose.msra.mxu0 0.0
  %661 = vmatprep.subr.mxu0 0.0
  %662 = vmatpush1.xpose.msra.mxu0 0.0
  %663 = vmatprep.subr.mxu0 0.0
  %664 = vmatpush1.xpose.msra.mxu0 0.0
  %665 = vmatprep.subr.mxu0 0.0
  %666 = vmatpush1.xpose.msra.mxu0 0.0
  %667 = vmatprep.subr.mxu0 0.0
  %668 = vmatpush1.xpose.msra.mxu0 0.0
  %669 = vmatprep.subr.mxu0 0.0
  %670 = vmatpush1.xpose.msra.mxu0 0.0
  %671 = vmatprep.subr.mxu0 0.0
  %672 = vmatpush1.xpose.msra.mxu0 0.0
  %673 = vmatprep.subr.mxu0 0.0
  %674 = vmatpush1.xpose.msra.mxu0 0.0
  %675 = vmatprep.subr.mxu0 0.0
  %676 = vmatpush1.xpose.msra.mxu0 0.0
  %677 = vmatprep.subr.mxu0 0.0
  %678 = vmatpush1.xpose.msra.mxu0 0.0
  %679 = vmatprep.subr.mxu0 0.0
  %680 = vmatpush1.xpose.msra.mxu0 0.0
  %681 = vmatprep.subr.mxu0 0.0
  %682 = vmatpush1.xpose.msra.mxu0 0.0
  %683 = vmatprep.mubr.f32.mxu0 0.0
  %684 = vmatmul.mubr.f32.gmra.mrb[0].mxu0 %v615
  %v685 = vpop.f32.mrb[0].mxu0
  %v686 = vadd.f32 0.0, %v685
  %v687 = vpop.f32.mrb[0].mxu0
  %688 = vdwg.mxu0
  %v689 = vmul.f32 %v608, 0.25
  %v690 = vmul.f32 %v686, 0.25
  %v691 = vsel %vm352, %v689, -3.4028235e+38
  %v692 = vsel %vm353, %v690, -3.4028235e+38
  %v693 = vsel %vm356, %v691, -inf
  %694 = vmax.xlane.f32.xlu0 %v693
  %v695 = vpop.xlane.xlu0 %694
  %v696 = vsel %vm356, %v692, -inf
  %697 = vmax.xlane.f32.xlu0 %v696
  %v698 = vpop.xlane.xlu0 %697
  %v699 = vsub.f32 %v691, %v695
  %v700 = vsub.f32 %v692, %v698
  %v701 = vmul.f32 %v699, 1.442695
  %v702 = vpow.pop %v701
  %v703 = vmul.f32 %v700, 1.442695
  %v704 = vpow.pop %v703
  %v705 = vsel %vm356, %v702, 0.0
  %706 = vadd.xlane.f32.xlu0 %v705
  %v707 = vpop.xlane.xlu0 %706
  %v708 = vsel %vm356, %v704, 0.0
  %709 = vadd.xlane.f32.xlu0 %v708
  %v710 = vpop.xlane.xlu0 %709
  %v711 = vrcp.pop %v707
  %v712 = vrcp.pop %v710
  %v713 = vmul.f32 %v702, %v711
  %v714 = vmul.f32 %v704, %v712
  %715 = vrot.lane.b32.xlu0 %v181, 48
  %v716 = vpop.permute.xlu0 %715
  %v719 = vsel %vm356, %v713, 0
  %721 = vmatprep.subr.mxu0 0.0
  %722 = vmatpush1.msra.mxu0 %v716
  %723 = vmatprep.subr.mxu0 0.0
  %724 = vmatpush1.msra.mxu0 0.0
  %725 = vmatprep.subr.mxu0 0.0
  %726 = vmatpush1.msra.mxu0 0.0
  %727 = vmatprep.subr.mxu0 0.0
  %728 = vmatpush1.msra.mxu0 0.0
  %729 = vmatprep.subr.mxu0 0.0
  %730 = vmatpush1.msra.mxu0 0.0
  %731 = vmatprep.subr.mxu0 0.0
  %732 = vmatpush1.msra.mxu0 0.0
  %733 = vmatprep.subr.mxu0 0.0
  %734 = vmatpush1.msra.mxu0 0.0
  %735 = vmatprep.subr.mxu0 0.0
  %736 = vmatpush1.msra.mxu0 0.0
  %737 = vmatprep.subr.mxu0 0.0
  %738 = vmatpush1.msra.mxu0 0.0
  %739 = vmatprep.subr.mxu0 0.0
  %740 = vmatpush1.msra.mxu0 0.0
  %741 = vmatprep.subr.mxu0 0.0
  %742 = vmatpush1.msra.mxu0 0.0
  %743 = vmatprep.subr.mxu0 0.0
  %744 = vmatpush1.msra.mxu0 0.0
  %745 = vmatprep.subr.mxu0 0.0
  %746 = vmatpush1.msra.mxu0 0.0
  %747 = vmatprep.subr.mxu0 0.0
  %748 = vmatpush1.msra.mxu0 0.0
  %749 = vmatprep.subr.mxu0 0.0
  %750 = vmatpush1.msra.mxu0 0.0
  %751 = vmatprep.subr.mxu0 0.0
  %752 = vmatpush1.msra.mxu0 0.0
  %753 = vmatprep.subr.mxu0 0.0
  %754 = vmatpush1.msra.mxu0 0.0
  %755 = vmatprep.subr.mxu0 0.0
  %756 = vmatpush1.msra.mxu0 0.0
  %757 = vmatprep.subr.mxu0 0.0
  %758 = vmatpush1.msra.mxu0 0.0
  %759 = vmatprep.subr.mxu0 0.0
  %760 = vmatpush1.msra.mxu0 0.0
  %761 = vmatprep.subr.mxu0 0.0
  %762 = vmatpush1.msra.mxu0 0.0
  %763 = vmatprep.subr.mxu0 0.0
  %764 = vmatpush1.msra.mxu0 0.0
  %765 = vmatprep.subr.mxu0 0.0
  %766 = vmatpush1.msra.mxu0 0.0
  %767 = vmatprep.subr.mxu0 0.0
  %768 = vmatpush1.msra.mxu0 0.0
  %769 = vmatprep.subr.mxu0 0.0
  %770 = vmatpush1.msra.mxu0 0.0
  %771 = vmatprep.subr.mxu0 0.0
  %772 = vmatpush1.msra.mxu0 0.0
  %773 = vmatprep.subr.mxu0 0.0
  %774 = vmatpush1.msra.mxu0 0.0
  %775 = vmatprep.subr.mxu0 0.0
  %776 = vmatpush1.msra.mxu0 0.0
  %777 = vmatprep.subr.mxu0 0.0
  %778 = vmatpush1.msra.mxu0 0.0
  %779 = vmatprep.subr.mxu0 0.0
  %780 = vmatpush1.msra.mxu0 0.0
  %781 = vmatprep.subr.mxu0 0.0
  %782 = vmatpush1.msra.mxu0 0.0
  %783 = vmatprep.subr.mxu0 0.0
  %784 = vmatpush1.msra.mxu0 0.0
  %785 = vmatprep.mubr.f32.mxu0 0.0
  %786 = vmatmul.mubr.f32.gmra.mrb[0].mxu0 %v719
  %v787 = vpop.f32.mrb[0].mxu0
  %v788 = vadd.f32 0.0, %v787
  %v789 = vpop.f32.mrb[0].mxu0
  %790 = vdwg.mxu0
  %791 = vrot.lane.b32.xlu0 %v182, 48
  %v792 = vpop.permute.xlu0 %791
  %v795 = vsel %vm356, %v714, 0
  %797 = vmatprep.subr.mxu0 0.0
  %798 = vmatpush1.msra.mxu0 %v792
  %799 = vmatprep.subr.mxu0 0.0
  %800 = vmatpush1.msra.mxu0 0.0
  %801 = vmatprep.subr.mxu0 0.0
  %802 = vmatpush1.msra.mxu0 0.0
  %803 = vmatprep.subr.mxu0 0.0
  %804 = vmatpush1.msra.mxu0 0.0
  %805 = vmatprep.subr.mxu0 0.0
  %806 = vmatpush1.msra.mxu0 0.0
  %807 = vmatprep.subr.mxu0 0.0
  %808 = vmatpush1.msra.mxu0 0.0
  %809 = vmatprep.subr.mxu0 0.0
  %810 = vmatpush1.msra.mxu0 0.0
  %811 = vmatprep.subr.mxu0 0.0
  %812 = vmatpush1.msra.mxu0 0.0
  %813 = vmatprep.subr.mxu0 0.0
  %814 = vmatpush1.msra.mxu0 0.0
  %815 = vmatprep.subr.mxu0 0.0
  %816 = vmatpush1.msra.mxu0 0.0
  %817 = vmatprep.subr.mxu0 0.0
  %818 = vmatpush1.msra.mxu0 0.0
  %819 = vmatprep.subr.mxu0 0.0
  %820 = vmatpush1.msra.mxu0 0.0
  %821 = vmatprep.subr.mxu0 0.0
  %822 = vmatpush1.msra.mxu0 0.0
  %823 = vmatprep.subr.mxu0 0.0
  %824 = vmatpush1.msra.mxu0 0.0
  %825 = vmatprep.subr.mxu0 0.0
  %826 = vmatpush1.msra.mxu0 0.0
  %827 = vmatprep.subr.mxu0 0.0
  %828 = vmatpush1.msra.mxu0 0.0
  %829 = vmatprep.subr.mxu0 0.0
  %830 = vmatpush1.msra.mxu0 0.0
  %831 = vmatprep.subr.mxu0 0.0
  %832 = vmatpush1.msra.mxu0 0.0
  %833 = vmatprep.subr.mxu0 0.0
  %834 = vmatpush1.msra.mxu0 0.0
  %835 = vmatprep.subr.mxu0 0.0
  %836 = vmatpush1.msra.mxu0 0.0
  %837 = vmatprep.subr.mxu0 0.0
  %838 = vmatpush1.msra.mxu0 0.0
  %839 = vmatprep.subr.mxu0 0.0
  %840 = vmatpush1.msra.mxu0 0.0
  %841 = vmatprep.subr.mxu0 0.0
  %842 = vmatpush1.msra.mxu0 0.0
  %843 = vmatprep.subr.mxu0 0.0
  %844 = vmatpush1.msra.mxu0 0.0
  %845 = vmatprep.subr.mxu0 0.0
  %846 = vmatpush1.msra.mxu0 0.0
  %847 = vmatprep.subr.mxu0 0.0
  %848 = vmatpush1.msra.mxu0 0.0
  %849 = vmatprep.subr.mxu0 0.0
  %850 = vmatpush1.msra.mxu0 0.0
  %851 = vmatprep.subr.mxu0 0.0
  %852 = vmatpush1.msra.mxu0 0.0
  %853 = vmatprep.subr.mxu0 0.0
  %854 = vmatpush1.msra.mxu0 0.0
  %855 = vmatprep.subr.mxu0 0.0
  %856 = vmatpush1.msra.mxu0 0.0
  %857 = vmatprep.subr.mxu0 0.0
  %858 = vmatpush1.msra.mxu0 0.0
  %859 = vmatprep.subr.mxu0 0.0
  %860 = vmatpush1.msra.mxu0 0.0
  %861 = vmatprep.mubr.f32.mxu0 0.0
  %862 = vmatmul.mubr.f32.gmra.mrb[0].mxu0 %v795
  %v863 = vpop.f32.mrb[0].mxu0
  %v864 = vadd.f32 0.0, %v863
  %v865 = vpop.f32.mrb[0].mxu0
  %866 = vdwg.mxu0
  %869 = vrot.lane.b32.xlu0 %v788, 16
  %v870 = vpop.permute.xlu0 %869
  %871 = vrot.lane.b32.xlu0 %v864, 16
  %v872 = vpop.permute.xlu0 %871
  %v875 = vsel %vm186, %v453, %v870
  %v876 = vsel %vm186, %v530, %v872
  %v877 = vlaneseq
  %v878 = vshrl.u32 %v877, 7
  %v879 = vsub.s32 0, %v878
  %v880 = vrot.slane %v69, %v879
  %885 = vrot.lane.b32.xlu0 %v58, 32
  %v886 = vpop.permute.xlu0 %885
  %887 = vrot.lane.b32.xlu0 %v60, 32
  %v888 = vpop.permute.xlu0 %887
  %889 = vrot.lane.b32.xlu0 %v62, 32
  %v890 = vpop.permute.xlu0 %889
  %891 = vrot.lane.b32.xlu0 %v64, 32
  %v892 = vpop.permute.xlu0 %891
  %v898 = vsel %vm75, %v875, 0
  %v901 = vsel %vm75, %v876, 0
  %903 = vmatprep.subr.mxu0 0.0
  %904 = vmatpush1.msra.mxu0 %v886
  %905 = vmatprep.subr.mxu0 0.0
  %906 = vmatpush1.msra.mxu0 %v888
  %907 = vmatprep.subr.mxu0 0.0
  %908 = vmatpush1.msra.mxu0 %v890
  %909 = vmatprep.subr.mxu0 0.0
  %910 = vmatpush1.msra.mxu0 %v892
  %911 = vmatprep.subr.mxu0 0.0
  %912 = vmatpush1.msra.mxu0 0.0
  %913 = vmatprep.subr.mxu0 0.0
  %914 = vmatpush1.msra.mxu0 0.0
  %915 = vmatprep.subr.mxu0 0.0
  %916 = vmatpush1.msra.mxu0 0.0
  %917 = vmatprep.subr.mxu0 0.0
  %918 = vmatpush1.msra.mxu0 0.0
  %919 = vmatprep.subr.mxu0 0.0
  %920 = vmatpush1.msra.mxu0 0.0
  %921 = vmatprep.subr.mxu0 0.0
  %922 = vmatpush1.msra.mxu0 0.0
  %923 = vmatprep.subr.mxu0 0.0
  %924 = vmatpush1.msra.mxu0 0.0
  %925 = vmatprep.subr.mxu0 0.0
  %926 = vmatpush1.msra.mxu0 0.0
  %927 = vmatprep.subr.mxu0 0.0
  %928 = vmatpush1.msra.mxu0 0.0
  %929 = vmatprep.subr.mxu0 0.0
  %930 = vmatpush1.msra.mxu0 0.0
  %931 = vmatprep.subr.mxu0 0.0
  %932 = vmatpush1.msra.mxu0 0.0
  %933 = vmatprep.subr.mxu0 0.0
  %934 = vmatpush1.msra.mxu0 0.0
  %935 = vmatprep.subr.mxu0 0.0
  %936 = vmatpush1.msra.mxu0 0.0
  %937 = vmatprep.subr.mxu0 0.0
  %938 = vmatpush1.msra.mxu0 0.0
  %939 = vmatprep.subr.mxu0 0.0
  %940 = vmatpush1.msra.mxu0 0.0
  %941 = vmatprep.subr.mxu0 0.0
  %942 = vmatpush1.msra.mxu0 0.0
  %943 = vmatprep.subr.mxu0 0.0
  %944 = vmatpush1.msra.mxu0 0.0
  %945 = vmatprep.subr.mxu0 0.0
  %946 = vmatpush1.msra.mxu0 0.0
  %947 = vmatprep.subr.mxu0 0.0
  %948 = vmatpush1.msra.mxu0 0.0
  %949 = vmatprep.subr.mxu0 0.0
  %950 = vmatpush1.msra.mxu0 0.0
  %951 = vmatprep.subr.mxu0 0.0
  %952 = vmatpush1.msra.mxu0 0.0
  %953 = vmatprep.subr.mxu0 0.0
  %954 = vmatpush1.msra.mxu0 0.0
  %955 = vmatprep.subr.mxu0 0.0
  %956 = vmatpush1.msra.mxu0 0.0
  %957 = vmatprep.subr.mxu0 0.0
  %958 = vmatpush1.msra.mxu0 0.0
  %959 = vmatprep.subr.mxu0 0.0
  %960 = vmatpush1.msra.mxu0 0.0
  %961 = vmatprep.subr.mxu0 0.0
  %962 = vmatpush1.msra.mxu0 0.0
  %963 = vmatprep.subr.mxu0 0.0
  %964 = vmatpush1.msra.mxu0 0.0
  %965 = vmatprep.subr.mxu0 0.0
  %966 = vmatpush1.msra.mxu0 0.0
  %967 = vmatprep.mubr.f32.mxu0 0.0
  %968 = vmatmul.mubr.f32.gmra.mrb[0].mxu0 %v898
  %v969 = vpop.f32.mrb[0].mxu0
  %v970 = vadd.f32 %v880, %v969
  %v971 = vpop.f32.mrb[0].mxu0
  %972 = vmatprep.mubr.f32.mxu0 0.0
  %973 = vmatmul.mubr.f32.gmra.mrb[0].mxu0 %v901
  %v974 = vpop.f32.mrb[0].mxu0
  %v975 = vadd.f32 %v880, %v974
  %v976 = vpop.f32.mrb[0].mxu0
  %977 = vdwg.mxu0
  %v978 = vadd.f32 %v970, %v56
  %v979 = vadd.f32 %v975, %v57
  %v980 = vsel %vm75, %v978, 0.0
  %981 = vadd.xlane.f32.xlu0 %v980
  %v982 = vpop.xlane.xlu0 %981
  %v983 = vsel %vm75, %v979, 0.0
  %984 = vadd.xlane.f32.xlu0 %v983
  %v985 = vpop.xlane.xlu0 %984
  %v986 = vrcp.pop 32.0
  %v987 = vmul.f32 %v982, %v986
  %v988 = vmul.f32 %v985, %v986
  %v989 = vsub.f32 %v978, %v987
  %v990 = vsub.f32 %v979, %v988
  %v991 = vmul.f32 %v989, %v989
  %v992 = vmul.f32 %v990, %v990
  %v993 = vsel %vm75, %v991, 0.0
  %994 = vadd.xlane.f32.xlu0 %v993
  %v995 = vpop.xlane.xlu0 %994
  %v996 = vsel %vm75, %v992, 0.0
  %997 = vadd.xlane.f32.xlu0 %v996
  %v998 = vpop.xlane.xlu0 %997
  %v999 = vmul.f32 %v995, %v986
  %v1000 = vmul.f32 %v998, %v986
  %v1001 = vadd.f32 %v999, 1e-12
  %v1002 = vadd.f32 %v1000, 1e-12
  %v1003 = vrsqrt.pop %v1001
  %v1004 = vrsqrt.pop %v1002
  %v1005 = vmul.f32 %v989, %v1003
  %v1006 = vmul.f32 %v990, %v1004
  %v1007 = vlaneseq
  %v1008 = vshrl.u32 %v1007, 7
  %v1009 = vsub.s32 0, %v1008
  %v1010 = vrot.slane %v70, %v1009
  %v1011 = vmul.f32 %v1005, %v1010
  %v1012 = vmul.f32 %v1006, %v1010
  %v1013 = vlaneseq
  %v1014 = vshrl.u32 %v1013, 7
  %v1015 = vsub.s32 0, %v1014
  %v1016 = vrot.slane %v71, %v1015
  %v1017 = vadd.f32 %v1011, %v1016
  %v1018 = vadd.f32 %v1012, %v1016
  %v1019 = vld [vmem:[%s5] sm:$0x1]
  %v1020 = vlaneseq
  %v1021 = vshrl.u32 %v1020, 7
  %v1022 = vsub.s32 0, %v1021
  %v1023 = vrot.slane %v1019, %v1022
  %v1025 = vsel %vm75, %v1017, 0
  %v1028 = vsel %vm75, %v1018, 0
  %1030 = vmatprep.subr.mxu0 0.0
  %1031 = vmatpush1.msra.mxu0 %v59
  %1032 = vmatprep.subr.mxu0 0.0
  %1033 = vmatpush1.msra.mxu0 %v61
  %1034 = vmatprep.subr.mxu0 0.0
  %1035 = vmatpush1.msra.mxu0 %v63
  %1036 = vmatprep.subr.mxu0 0.0
  %1037 = vmatpush1.msra.mxu0 %v65
  %1038 = vmatprep.subr.mxu0 0.0
  %1039 = vmatpush1.msra.mxu0 0.0
  %1040 = vmatprep.subr.mxu0 0.0
  %1041 = vmatpush1.msra.mxu0 0.0
  %1042 = vmatprep.subr.mxu0 0.0
  %1043 = vmatpush1.msra.mxu0 0.0
  %1044 = vmatprep.subr.mxu0 0.0
  %1045 = vmatpush1.msra.mxu0 0.0
  %1046 = vmatprep.subr.mxu0 0.0
  %1047 = vmatpush1.msra.mxu0 0.0
  %1048 = vmatprep.subr.mxu0 0.0
  %1049 = vmatpush1.msra.mxu0 0.0
  %1050 = vmatprep.subr.mxu0 0.0
  %1051 = vmatpush1.msra.mxu0 0.0
  %1052 = vmatprep.subr.mxu0 0.0
  %1053 = vmatpush1.msra.mxu0 0.0
  %1054 = vmatprep.subr.mxu0 0.0
  %1055 = vmatpush1.msra.mxu0 0.0
  %1056 = vmatprep.subr.mxu0 0.0
  %1057 = vmatpush1.msra.mxu0 0.0
  %1058 = vmatprep.subr.mxu0 0.0
  %1059 = vmatpush1.msra.mxu0 0.0
  %1060 = vmatprep.subr.mxu0 0.0
  %1061 = vmatpush1.msra.mxu0 0.0
  %1062 = vmatprep.subr.mxu0 0.0
  %1063 = vmatpush1.msra.mxu0 0.0
  %1064 = vmatprep.subr.mxu0 0.0
  %1065 = vmatpush1.msra.mxu0 0.0
  %1066 = vmatprep.subr.mxu0 0.0
  %1067 = vmatpush1.msra.mxu0 0.0
  %1068 = vmatprep.subr.mxu0 0.0
  %1069 = vmatpush1.msra.mxu0 0.0
  %1070 = vmatprep.subr.mxu0 0.0
  %1071 = vmatpush1.msra.mxu0 0.0
  %1072 = vmatprep.subr.mxu0 0.0
  %1073 = vmatpush1.msra.mxu0 0.0
  %1074 = vmatprep.subr.mxu0 0.0
  %1075 = vmatpush1.msra.mxu0 0.0
  %1076 = vmatprep.subr.mxu0 0.0
  %1077 = vmatpush1.msra.mxu0 0.0
  %1078 = vmatprep.subr.mxu0 0.0
  %1079 = vmatpush1.msra.mxu0 0.0
  %1080 = vmatprep.subr.mxu0 0.0
  %1081 = vmatpush1.msra.mxu0 0.0
  %1082 = vmatprep.subr.mxu0 0.0
  %1083 = vmatpush1.msra.mxu0 0.0
  %1084 = vmatprep.subr.mxu0 0.0
  %1085 = vmatpush1.msra.mxu0 0.0
  %1086 = vmatprep.subr.mxu0 0.0
  %1087 = vmatpush1.msra.mxu0 0.0
  %1088 = vmatprep.subr.mxu0 0.0
  %1089 = vmatpush1.msra.mxu0 0.0
  %1090 = vmatprep.subr.mxu0 0.0
  %1091 = vmatpush1.msra.mxu0 0.0
  %1092 = vmatprep.subr.mxu0 0.0
  %1093 = vmatpush1.msra.mxu0 0.0
  %1094 = vmatprep.mubr.f32.mxu0 0.0
  %1095 = vmatmul.mubr.f32.gmra.mrb[0].mxu0 %v1025
  %v1096 = vpop.f32.mrb[0].mxu0
  %v1097 = vadd.f32 %v1023, %v1096
  %v1098 = vpop.f32.mrb[0].mxu0
  %1099 = vmatprep.mubr.f32.mxu0 0.0
  %1100 = vmatmul.mubr.f32.gmra.mrb[0].mxu0 %v1028
  %v1101 = vpop.f32.mrb[0].mxu0
  %v1102 = vadd.f32 %v1023, %v1101
  %v1103 = vpop.f32.mrb[0].mxu0
  %1104 = vdwg.mxu0
  %v1105 = vmul.f32 %v1097, %v1097
  %v1106 = vmul.f32 %v1102, %v1102
  %v1107 = vmul.f32 %v1097, %v1105
  %v1108 = vmul.f32 %v1102, %v1106
  %v1109 = vmul.f32 %v1107, 0.044715
  %v1110 = vmul.f32 %v1108, 0.044715
  %v1111 = vadd.f32 %v1097, %v1109
  %v1112 = vadd.f32 %v1102, %v1110
  %v1113 = vmul.f32 %v1111, 0.7978846
  %v1114 = vmul.f32 %v1112, 0.7978846
  %v1115 = vtanh.pop %v1113
  %v1116 = vtanh.pop %v1114
  %v1117 = vadd.f32 %v1115, 1.0
  %v1118 = vadd.f32 %v1116, 1.0
  %v1119 = vmul.f32 %v1117, 0.5
  %v1120 = vmul.f32 %v1118, 0.5
  %v1121 = vmul.f32 %v1097, %v1119
  %v1122 = vmul.f32 %v1102, %v1120
  %v1123 = vld [vmem:[%s3] sm:$0xff]
  %v1124 = vld [vmem:[%s3 + $0x8] sm:$0xff]
  %v1125 = vld [vmem:[%s3 + $0x10] sm:$0xff]
  %v1126 = vld [vmem:[%s3 + $0x18] sm:$0xff]
  %v1127 = vld [vmem:[%s3 + $0x20] sm:$0xff]
  %v1128 = vld [vmem:[%s3 + $0x28] sm:$0xff]
  %v1129 = vld [vmem:[%s3 + $0x30] sm:$0xff]
  %v1130 = vld [vmem:[%s3 + $0x38] sm:$0xff]
  %v1131 = vld [vmem:[%s3 + $0x40] sm:$0xff]
  %v1132 = vld [vmem:[%s3 + $0x48] sm:$0xff]
  %v1133 = vld [vmem:[%s3 + $0x50] sm:$0xff]
  %v1134 = vld [vmem:[%s3 + $0x58] sm:$0xff]
  %v1135 = vld [vmem:[%s3 + $0x60] sm:$0xff]
  %v1136 = vld [vmem:[%s3 + $0x68] sm:$0xff]
  %v1137 = vld [vmem:[%s3 + $0x70] sm:$0xff]
  %v1138 = vld [vmem:[%s3 + $0x78] sm:$0xff]
  %v1139 = vlaneseq
  %v1140 = vshrl.u32 %v1139, 7
  %v1141 = vsub.s32 0, %v1140
  %v1142 = vrot.slane %v72, %v1141
  %1143 = vmatprep.subr.mxu0 0.0
  %1144 = vmatpush1.msra.mxu0 %v1123
  %1145 = vmatprep.subr.mxu0 0.0
  %1146 = vmatpush1.msra.mxu0 %v1124
  %1147 = vmatprep.subr.mxu0 0.0
  %1148 = vmatpush1.msra.mxu0 %v1125
  %1149 = vmatprep.subr.mxu0 0.0
  %1150 = vmatpush1.msra.mxu0 %v1126
  %1151 = vmatprep.subr.mxu0 0.0
  %1152 = vmatpush1.msra.mxu0 %v1127
  %1153 = vmatprep.subr.mxu0 0.0
  %1154 = vmatpush1.msra.mxu0 %v1128
  %1155 = vmatprep.subr.mxu0 0.0
  %1156 = vmatpush1.msra.mxu0 %v1129
  %1157 = vmatprep.subr.mxu0 0.0
  %1158 = vmatpush1.msra.mxu0 %v1130
  %1159 = vmatprep.subr.mxu0 0.0
  %1160 = vmatpush1.msra.mxu0 %v1131
  %1161 = vmatprep.subr.mxu0 0.0
  %1162 = vmatpush1.msra.mxu0 %v1132
  %1163 = vmatprep.subr.mxu0 0.0
  %1164 = vmatpush1.msra.mxu0 %v1133
  %1165 = vmatprep.subr.mxu0 0.0
  %1166 = vmatpush1.msra.mxu0 %v1134
  %1167 = vmatprep.subr.mxu0 0.0
  %1168 = vmatpush1.msra.mxu0 %v1135
  %1169 = vmatprep.subr.mxu0 0.0
  %1170 = vmatpush1.msra.mxu0 %v1136
  %1171 = vmatprep.subr.mxu0 0.0
  %1172 = vmatpush1.msra.mxu0 %v1137
  %1173 = vmatprep.subr.mxu0 0.0
  %1174 = vmatpush1.msra.mxu0 %v1138
  %1175 = vmatprep.subr.mxu0 0.0
  %1176 = vmatpush1.msra.mxu0 0.0
  %1177 = vmatprep.subr.mxu0 0.0
  %1178 = vmatpush1.msra.mxu0 0.0
  %1179 = vmatprep.subr.mxu0 0.0
  %1180 = vmatpush1.msra.mxu0 0.0
  %1181 = vmatprep.subr.mxu0 0.0
  %1182 = vmatpush1.msra.mxu0 0.0
  %1183 = vmatprep.subr.mxu0 0.0
  %1184 = vmatpush1.msra.mxu0 0.0
  %1185 = vmatprep.subr.mxu0 0.0
  %1186 = vmatpush1.msra.mxu0 0.0
  %1187 = vmatprep.subr.mxu0 0.0
  %1188 = vmatpush1.msra.mxu0 0.0
  %1189 = vmatprep.subr.mxu0 0.0
  %1190 = vmatpush1.msra.mxu0 0.0
  %1191 = vmatprep.subr.mxu0 0.0
  %1192 = vmatpush1.msra.mxu0 0.0
  %1193 = vmatprep.subr.mxu0 0.0
  %1194 = vmatpush1.msra.mxu0 0.0
  %1195 = vmatprep.subr.mxu0 0.0
  %1196 = vmatpush1.msra.mxu0 0.0
  %1197 = vmatprep.subr.mxu0 0.0
  %1198 = vmatpush1.msra.mxu0 0.0
  %1199 = vmatprep.subr.mxu0 0.0
  %1200 = vmatpush1.msra.mxu0 0.0
  %1201 = vmatprep.subr.mxu0 0.0
  %1202 = vmatpush1.msra.mxu0 0.0
  %1203 = vmatprep.subr.mxu0 0.0
  %1204 = vmatpush1.msra.mxu0 0.0
  %1205 = vmatprep.subr.mxu0 0.0
  %1206 = vmatpush1.msra.mxu0 0.0
  %1207 = vmatprep.mubr.f32.mxu0 0.0
  %1208 = vmatmul.mubr.f32.gmra.mrb[0].mxu0 %v1121
  %v1209 = vpop.f32.mrb[0].mxu0
  %v1210 = vadd.f32 %v1142, %v1209
  %v1211 = vpop.f32.mrb[0].mxu0
  %1212 = vmatprep.mubr.f32.mxu0 0.0
  %1213 = vmatmul.mubr.f32.gmra.mrb[0].mxu0 %v1122
  %v1214 = vpop.f32.mrb[0].mxu0
  %v1215 = vadd.f32 %v1142, %v1214
  %v1216 = vpop.f32.mrb[0].mxu0
  %1217 = vdwg.mxu0
  %v1218 = vadd.f32 %v1210, %v1017
  %v1219 = vadd.f32 %v1215, %v1018
  %v1220 = vsel %vm75, %v1218, 0.0
  %1221 = vadd.xlane.f32.xlu0 %v1220
  %v1222 = vpop.xlane.xlu0 %1221
  %v1223 = vsel %vm75, %v1219, 0.0
  %1224 = vadd.xlane.f32.xlu0 %v1223
  %v1225 = vpop.xlane.xlu0 %1224
  %v1226 = vmul.f32 %v1222, %v986
  %v1227 = vmul.f32 %v1225, %v986
  %v1228 = vsub.f32 %v1218, %v1226
  %v1229 = vsub.f32 %v1219, %v1227
  %v1230 = vmul.f32 %v1228, %v1228
  %v1231 = vmul.f32 %v1229, %v1229
  %v1232 = vsel %vm75, %v1230, 0.0
  %1233 = vadd.xlane.f32.xlu0 %v1232
  %v1234 = vpop.xlane.xlu0 %1233
  %v1235 = vsel %vm75, %v1231, 0.0
  %1236 = vadd.xlane.f32.xlu0 %v1235
  %v1237 = vpop.xlane.xlu0 %1236
  %v1238 = vmul.f32 %v1234, %v986
  %v1239 = vmul.f32 %v1237, %v986
  %v1240 = vadd.f32 %v1238, 1e-12
  %v1241 = vadd.f32 %v1239, 1e-12
  %v1242 = vrsqrt.pop %v1240
  %v1243 = vrsqrt.pop %v1241
  %v1244 = vmul.f32 %v1228, %v1242
  %v1245 = vmul.f32 %v1229, %v1243
  %v1246 = vlaneseq
  %v1247 = vshrl.u32 %v1246, 7
  %v1248 = vsub.s32 0, %v1247
  %v1249 = vrot.slane %v73, %v1248
  %v1250 = vmul.f32 %v1244, %v1249
  %v1251 = vmul.f32 %v1245, %v1249
  %v1252 = vlaneseq
  %v1253 = vshrl.u32 %v1252, 7
  %v1254 = vsub.s32 0, %v1253
  %v1255 = vrot.slane %v74, %v1254
  %v1256 = vadd.f32 %v1250, %v1255
  %v1257 = vadd.f32 %v1251, %v1255
  %s1258 = scalar_lea.vmem %s2, 64
  %v1259 = vld [vmem:[%s1258] sm:$0xff]
  %v1260 = vld [vmem:[%s1258 + $0x8] sm:$0xff]
  %v1261 = vld [vmem:[%s1258 + $0x10] sm:$0xff]
  %v1262 = vld [vmem:[%s1258 + $0x18] sm:$0xff]
  %v1263 = vld [vmem:[%s1258 + $0x20] sm:$0xff]
  %v1264 = vld [vmem:[%s1258 + $0x28] sm:$0xff]
  %v1265 = vld [vmem:[%s1258 + $0x30] sm:$0xff]
  %v1266 = vld [vmem:[%s1258 + $0x38] sm:$0xff]
  %s1267 = scalar_lea.vmem %s4, 16
  %v1268 = vld [vmem:[%s1267] sm:$0x1]
  %v1269 = vld [vmem:[%s1267 + $0x1] sm:$0x1]
  %v1270 = vld [vmem:[%s1267 + $0x2] sm:$0x1]
  %v1271 = vld [vmem:[%s1267 + $0x3] sm:$0x1]
  %v1272 = vld [vmem:[%s1267 + $0x4] sm:$0x1]
  %v1273 = vld [vmem:[%s1267 + $0x5] sm:$0x1]
  %v1274 = vld [vmem:[%s1267 + $0x6] sm:$0x1]
  %v1275 = vld [vmem:[%s1267 + $0x7] sm:$0x1]
  %v1276 = vld [vmem:[%s1267 + $0x8] sm:$0x1]
  %v1278 = vsel %vm75, %v1256, 0
  %v1281 = vsel %vm75, %v1257, 0
  %1283 = vmatprep.subr.mxu0 0.0
  %1284 = vmatpush1.msra.mxu0 %v1259
  %1285 = vmatprep.subr.mxu0 0.0
  %1286 = vmatpush1.msra.mxu0 %v1261
  %1287 = vmatprep.subr.mxu0 0.0
  %1288 = vmatpush1.msra.mxu0 %v1263
  %1289 = vmatprep.subr.mxu0 0.0
  %1290 = vmatpush1.msra.mxu0 %v1265
  %1291 = vmatprep.subr.mxu0 0.0
  %1292 = vmatpush1.msra.mxu0 0.0
  %1293 = vmatprep.subr.mxu0 0.0
  %1294 = vmatpush1.msra.mxu0 0.0
  %1295 = vmatprep.subr.mxu0 0.0
  %1296 = vmatpush1.msra.mxu0 0.0
  %1297 = vmatprep.subr.mxu0 0.0
  %1298 = vmatpush1.msra.mxu0 0.0
  %1299 = vmatprep.subr.mxu0 0.0
  %1300 = vmatpush1.msra.mxu0 0.0
  %1301 = vmatprep.subr.mxu0 0.0
  %1302 = vmatpush1.msra.mxu0 0.0
  %1303 = vmatprep.subr.mxu0 0.0
  %1304 = vmatpush1.msra.mxu0 0.0
  %1305 = vmatprep.subr.mxu0 0.0
  %1306 = vmatpush1.msra.mxu0 0.0
  %1307 = vmatprep.subr.mxu0 0.0
  %1308 = vmatpush1.msra.mxu0 0.0
  %1309 = vmatprep.subr.mxu0 0.0
  %1310 = vmatpush1.msra.mxu0 0.0
  %1311 = vmatprep.subr.mxu0 0.0
  %1312 = vmatpush1.msra.mxu0 0.0
  %1313 = vmatprep.subr.mxu0 0.0
  %1314 = vmatpush1.msra.mxu0 0.0
  %1315 = vmatprep.subr.mxu0 0.0
  %1316 = vmatpush1.msra.mxu0 0.0
  %1317 = vmatprep.subr.mxu0 0.0
  %1318 = vmatpush1.msra.mxu0 0.0
  %1319 = vmatprep.subr.mxu0 0.0
  %1320 = vmatpush1.msra.mxu0 0.0
  %1321 = vmatprep.subr.mxu0 0.0
  %1322 = vmatpush1.msra.mxu0 0.0
  %1323 = vmatprep.subr.mxu0 0.0
  %1324 = vmatpush1.msra.mxu0 0.0
  %1325 = vmatprep.subr.mxu0 0.0
  %1326 = vmatpush1.msra.mxu0 0.0
  %1327 = vmatprep.subr.mxu0 0.0
  %1328 = vmatpush1.msra.mxu0 0.0
  %1329 = vmatprep.subr.mxu0 0.0
  %1330 = vmatpush1.msra.mxu0 0.0
  %1331 = vmatprep.subr.mxu0 0.0
  %1332 = vmatpush1.msra.mxu0 0.0
  %1333 = vmatprep.subr.mxu0 0.0
  %1334 = vmatpush1.msra.mxu0 0.0
  %1335 = vmatprep.subr.mxu0 0.0
  %1336 = vmatpush1.msra.mxu0 0.0
  %1337 = vmatprep.subr.mxu0 0.0
  %1338 = vmatpush1.msra.mxu0 0.0
  %1339 = vmatprep.subr.mxu0 0.0
  %1340 = vmatpush1.msra.mxu0 0.0
  %1341 = vmatprep.subr.mxu0 0.0
  %1342 = vmatpush1.msra.mxu0 0.0
  %1343 = vmatprep.subr.mxu0 0.0
  %1344 = vmatpush1.msra.mxu0 0.0
  %1345 = vmatprep.subr.mxu0 0.0
  %1346 = vmatpush1.msra.mxu0 0.0
  %1347 = vmatprep.mubr.f32.mxu0 0.0
  %1348 = vmatmul.mubr.f32.gmra.mrb[0].mxu0 %v1278
  %v1349 = vpop.f32.mrb[0].mxu0
  %v1350 = vadd.f32 0.0, %v1349
  %v1351 = vpop.f32.mrb[0].mxu0
  %1352 = vmatprep.mubr.f32.mxu0 0.0
  %1353 = vmatmul.mubr.f32.gmra.mrb[0].mxu0 %v1281
  %v1354 = vpop.f32.mrb[0].mxu0
  %v1355 = vadd.f32 0.0, %v1354
  %v1356 = vpop.f32.mrb[0].mxu0
  %1357 = vdwg.mxu0
  %v1358 = vlaneseq
  %v1359 = vshrl.u32 %v1358, 7
  %v1360 = vsub.s32 0, %v1359
  %v1361 = vrot.slane %v1268, %v1360
  %v1362 = vadd.f32 %v1350, %v1361
  %v1363 = vadd.f32 %v1355, %v1361
  %v1364 = vlaneseq
  %v1365 = vshrl.u32 %v1364, 7
  %v1366 = vsub.s32 0, %v1365
  %v1367 = vrot.slane %v1269, %v1366
  %1369 = vrot.lane.b32.xlu0 %v1367, 32
  %v1370 = vpop.permute.xlu0 %1369
  %v1372 = vadd.f32 %v1350, %v1370
  %v1373 = vadd.f32 %v1355, %v1370
  %v1374 = vlaneseq
  %v1375 = vshrl.u32 %v1374, 7
  %v1376 = vsub.s32 0, %v1375
  %v1377 = vrot.slane %v1270, %v1376
  %1379 = vrot.lane.b32.xlu0 %v1377, 64
  %v1380 = vpop.permute.xlu0 %1379
  %v1382 = vadd.f32 %v1350, %v1380
  %v1383 = vadd.f32 %v1355, %v1380
  %1385 = vrot.lane.b32.xlu0 %v1372, 96
  %v1386 = vpop.permute.xlu0 %1385
  %v1388 = vsel %vm186, %v1362, 0
  %v1390 = vsel %vm186, %v1386, 0
  %1392 = vmatprep.subr.mxu0 0.0
  %1393 = vmatpush1.xpose.msra.mxu0 %v1390
  %1394 = vmatprep.subr.mxu0 0.0
  %1395 = vmatpush1.xpose.msra.mxu0 0.0
  %1396 = vmatprep.subr.mxu0 0.0
  %1397 = vmatpush1.xpose.msra.mxu0 0.0
  %1398 = vmatprep.subr.mxu0 0.0
  %1399 = vmatpush1.xpose.msra.mxu0 0.0
  %1400 = vmatprep.subr.mxu0 0.0
  %1401 = vmatpush1.xpose.msra.mxu0 0.0
  %1402 = vmatprep.subr.mxu0 0.0
  %1403 = vmatpush1.xpose.msra.mxu0 0.0
  %1404 = vmatprep.subr.mxu0 0.0
  %1405 = vmatpush1.xpose.msra.mxu0 0.0
  %1406 = vmatprep.subr.mxu0 0.0
  %1407 = vmatpush1.xpose.msra.mxu0 0.0
  %1408 = vmatprep.subr.mxu0 0.0
  %1409 = vmatpush1.xpose.msra.mxu0 0.0
  %1410 = vmatprep.subr.mxu0 0.0
  %1411 = vmatpush1.xpose.msra.mxu0 0.0
  %1412 = vmatprep.subr.mxu0 0.0
  %1413 = vmatpush1.xpose.msra.mxu0 0.0
  %1414 = vmatprep.subr.mxu0 0.0
  %1415 = vmatpush1.xpose.msra.mxu0 0.0
  %1416 = vmatprep.subr.mxu0 0.0
  %1417 = vmatpush1.xpose.msra.mxu0 0.0
  %1418 = vmatprep.subr.mxu0 0.0
  %1419 = vmatpush1.xpose.msra.mxu0 0.0
  %1420 = vmatprep.subr.mxu0 0.0
  %1421 = vmatpush1.xpose.msra.mxu0 0.0
  %1422 = vmatprep.subr.mxu0 0.0
  %1423 = vmatpush1.xpose.msra.mxu0 0.0
  %1424 = vmatprep.subr.mxu0 0.0
  %1425 = vmatpush1.xpose.msra.mxu0 0.0
  %1426 = vmatprep.subr.mxu0 0.0
  %1427 = vmatpush1.xpose.msra.mxu0 0.0
  %1428 = vmatprep.subr.mxu0 0.0
  %1429 = vmatpush1.xpose.msra.mxu0 0.0
  %1430 = vmatprep.subr.mxu0 0.0
  %1431 = vmatpush1.xpose.msra.mxu0 0.0
  %1432 = vmatprep.subr.mxu0 0.0
  %1433 = vmatpush1.xpose.msra.mxu0 0.0
  %1434 = vmatprep.subr.mxu0 0.0
  %1435 = vmatpush1.xpose.msra.mxu0 0.0
  %1436 = vmatprep.subr.mxu0 0.0
  %1437 = vmatpush1.xpose.msra.mxu0 0.0
  %1438 = vmatprep.subr.mxu0 0.0
  %1439 = vmatpush1.xpose.msra.mxu0 0.0
  %1440 = vmatprep.subr.mxu0 0.0
  %1441 = vmatpush1.xpose.msra.mxu0 0.0
  %1442 = vmatprep.subr.mxu0 0.0
  %1443 = vmatpush1.xpose.msra.mxu0 0.0
  %1444 = vmatprep.subr.mxu0 0.0
  %1445 = vmatpush1.xpose.msra.mxu0 0.0
  %1446 = vmatprep.subr.mxu0 0.0
  %1447 = vmatpush1.xpose.msra.mxu0 0.0
  %1448 = vmatprep.subr.mxu0 0.0
  %1449 = vmatpush1.xpose.msra.mxu0 0.0
  %1450 = vmatprep.subr.mxu0 0.0
  %1451 = vmatpush1.xpose.msra.mxu0 0.0
  %1452 = vmatprep.subr.mxu0 0.0
  %1453 = vmatpush1.xpose.msra.mxu0 0.0
  %1454 = vmatprep.subr.mxu0 0.0
  %1455 = vmatpush1.xpose.msra.mxu0 0.0
  %1456 = vmatprep.mubr.f32.mxu0 0.0
  %1457 = vmatmul.mubr.f32.gmra.mrb[0].mxu0 %v1388
  %v1458 = vpop.f32.mrb[0].mxu0
  %v1459 = vadd.f32 0.0, %v1458
  %v1460 = vpop.f32.mrb[0].mxu0
  %1461 = vdwg.mxu0
  %1463 = vrot.lane.b32.xlu0 %v1373, 96
  %v1464 = vpop.permute.xlu0 %1463
  %v1466 = vsel %vm186, %v1363, 0
  %v1468 = vsel %vm186, %v1464, 0
  %1470 = vmatprep.subr.mxu0 0.0
  %1471 = vmatpush1.xpose.msra.mxu0 %v1468
  %1472 = vmatprep.subr.mxu0 0.0
  %1473 = vmatpush1.xpose.msra.mxu0 0.0
  %1474 = vmatprep.subr.mxu0 0.0
  %1475 = vmatpush1.xpose.msra.mxu0 0.0
  %1476 = vmatprep.subr.mxu0 0.0
  %1477 = vmatpush1.xpose.msra.mxu0 0.0
  %1478 = vmatprep.subr.mxu0 0.0
  %1479 = vmatpush1.xpose.msra.mxu0 0.0
  %1480 = vmatprep.subr.mxu0 0.0
  %1481 = vmatpush1.xpose.msra.mxu0 0.0
  %1482 = vmatprep.subr.mxu0 0.0
  %1483 = vmatpush1.xpose.msra.mxu0 0.0
  %1484 = vmatprep.subr.mxu0 0.0
  %1485 = vmatpush1.xpose.msra.mxu0 0.0
  %1486 = vmatprep.subr.mxu0 0.0
  %1487 = vmatpush1.xpose.msra.mxu0 0.0
  %1488 = vmatprep.subr.mxu0 0.0
  %1489 = vmatpush1.xpose.msra.mxu0 0.0
  %1490 = vmatprep.subr.mxu0 0.0
  %1491 = vmatpush1.xpose.msra.mxu0 0.0
  %1492 = vmatprep.subr.mxu0 0.0
  %1493 = vmatpush1.xpose.msra.mxu0 0.0
  %1494 = vmatprep.subr.mxu0 0.0
  %1495 = vmatpush1.xpose.msra.mxu0 0.0
  %1496 = vmatprep.subr.mxu0 0.0
  %1497 = vmatpush1.xpose.msra.mxu0 0.0
  %1498 = vmatprep.subr.mxu0 0.0
  %1499 = vmatpush1.xpose.msra.mxu0 0.0
  %1500 = vmatprep.subr.mxu0 0.0
  %1501 = vmatpush1.xpose.msra.mxu0 0.0
  %1502 = vmatprep.subr.mxu0 0.0
  %1503 = vmatpush1.xpose.msra.mxu0 0.0
  %1504 = vmatprep.subr.mxu0 0.0
  %1505 = vmatpush1.xpose.msra.mxu0 0.0
  %1506 = vmatprep.subr.mxu0 0.0
  %1507 = vmatpush1.xpose.msra.mxu0 0.0
  %1508 = vmatprep.subr.mxu0 0.0
  %1509 = vmatpush1.xpose.msra.mxu0 0.0
  %1510 = vmatprep.subr.mxu0 0.0
  %1511 = vmatpush1.xpose.msra.mxu0 0.0
  %1512 = vmatprep.subr.mxu0 0.0
  %1513 = vmatpush1.xpose.msra.mxu0 0.0
  %1514 = vmatprep.subr.mxu0 0.0
  %1515 = vmatpush1.xpose.msra.mxu0 0.0
  %1516 = vmatprep.subr.mxu0 0.0
  %1517 = vmatpush1.xpose.msra.mxu0 0.0
  %1518 = vmatprep.subr.mxu0 0.0
  %1519 = vmatpush1.xpose.msra.mxu0 0.0
  %1520 = vmatprep.subr.mxu0 0.0
  %1521 = vmatpush1.xpose.msra.mxu0 0.0
  %1522 = vmatprep.subr.mxu0 0.0
  %1523 = vmatpush1.xpose.msra.mxu0 0.0
  %1524 = vmatprep.subr.mxu0 0.0
  %1525 = vmatpush1.xpose.msra.mxu0 0.0
  %1526 = vmatprep.subr.mxu0 0.0
  %1527 = vmatpush1.xpose.msra.mxu0 0.0
  %1528 = vmatprep.subr.mxu0 0.0
  %1529 = vmatpush1.xpose.msra.mxu0 0.0
  %1530 = vmatprep.subr.mxu0 0.0
  %1531 = vmatpush1.xpose.msra.mxu0 0.0
  %1532 = vmatprep.subr.mxu0 0.0
  %1533 = vmatpush1.xpose.msra.mxu0 0.0
  %1534 = vmatprep.mubr.f32.mxu0 0.0
  %1535 = vmatmul.mubr.f32.gmra.mrb[0].mxu0 %v1466
  %v1536 = vpop.f32.mrb[0].mxu0
  %v1537 = vadd.f32 0.0, %v1536
  %v1538 = vpop.f32.mrb[0].mxu0
  %1539 = vdwg.mxu0
  %v1540 = vmul.f32 %v1459, 0.25
  %v1541 = vmul.f32 %v1537, 0.25
  %v1542 = vsel %vm352, %v1540, -3.4028235e+38
  %v1543 = vsel %vm353, %v1541, -3.4028235e+38
  %v1544 = vsel %vm356, %v1542, -inf
  %1545 = vmax.xlane.f32.xlu0 %v1544
  %v1546 = vpop.xlane.xlu0 %1545
  %v1547 = vsel %vm356, %v1543, -inf
  %1548 = vmax.xlane.f32.xlu0 %v1547
  %v1549 = vpop.xlane.xlu0 %1548
  %v1550 = vsub.f32 %v1542, %v1546
  %v1551 = vsub.f32 %v1543, %v1549
  %v1552 = vmul.f32 %v1550, 1.442695
  %v1553 = vpow.pop %v1552
  %v1554 = vmul.f32 %v1551, 1.442695
  %v1555 = vpow.pop %v1554
  %v1556 = vsel %vm356, %v1553, 0.0
  %1557 = vadd.xlane.f32.xlu0 %v1556
  %v1558 = vpop.xlane.xlu0 %1557
  %v1559 = vsel %vm356, %v1555, 0.0
  %1560 = vadd.xlane.f32.xlu0 %v1559
  %v1561 = vpop.xlane.xlu0 %1560
  %v1562 = vrcp.pop %v1558
  %v1563 = vrcp.pop %v1561
  %v1564 = vmul.f32 %v1553, %v1562
  %v1565 = vmul.f32 %v1555, %v1563
  %1567 = vrot.lane.b32.xlu0 %v1382, 64
  %v1568 = vpop.permute.xlu0 %1567
  %v1571 = vsel %vm356, %v1564, 0
  %1573 = vmatprep.subr.mxu0 0.0
  %1574 = vmatpush1.msra.mxu0 %v1568
  %1575 = vmatprep.subr.mxu0 0.0
  %1576 = vmatpush1.msra.mxu0 0.0
  %1577 = vmatprep.subr.mxu0 0.0
  %1578 = vmatpush1.msra.mxu0 0.0
  %1579 = vmatprep.subr.mxu0 0.0
  %1580 = vmatpush1.msra.mxu0 0.0
  %1581 = vmatprep.subr.mxu0 0.0
  %1582 = vmatpush1.msra.mxu0 0.0
  %1583 = vmatprep.subr.mxu0 0.0
  %1584 = vmatpush1.msra.mxu0 0.0
  %1585 = vmatprep.subr.mxu0 0.0
  %1586 = vmatpush1.msra.mxu0 0.0
  %1587 = vmatprep.subr.mxu0 0.0
  %1588 = vmatpush1.msra.mxu0 0.0
  %1589 = vmatprep.subr.mxu0 0.0
  %1590 = vmatpush1.msra.mxu0 0.0
  %1591 = vmatprep.subr.mxu0 0.0
  %1592 = vmatpush1.msra.mxu0 0.0
  %1593 = vmatprep.subr.mxu0 0.0
  %1594 = vmatpush1.msra.mxu0 0.0
  %1595 = vmatprep.subr.mxu0 0.0
  %1596 = vmatpush1.msra.mxu0 0.0
  %1597 = vmatprep.subr.mxu0 0.0
  %1598 = vmatpush1.msra.mxu0 0.0
  %1599 = vmatprep.subr.mxu0 0.0
  %1600 = vmatpush1.msra.mxu0 0.0
  %1601 = vmatprep.subr.mxu0 0.0
  %1602 = vmatpush1.msra.mxu0 0.0
  %1603 = vmatprep.subr.mxu0 0.0
  %1604 = vmatpush1.msra.mxu0 0.0
  %1605 = vmatprep.subr.mxu0 0.0
  %1606 = vmatpush1.msra.mxu0 0.0
  %1607 = vmatprep.subr.mxu0 0.0
  %1608 = vmatpush1.msra.mxu0 0.0
  %1609 = vmatprep.subr.mxu0 0.0
  %1610 = vmatpush1.msra.mxu0 0.0
  %1611 = vmatprep.subr.mxu0 0.0
  %1612 = vmatpush1.msra.mxu0 0.0
  %1613 = vmatprep.subr.mxu0 0.0
  %1614 = vmatpush1.msra.mxu0 0.0
  %1615 = vmatprep.subr.mxu0 0.0
  %1616 = vmatpush1.msra.mxu0 0.0
  %1617 = vmatprep.subr.mxu0 0.0
  %1618 = vmatpush1.msra.mxu0 0.0
  %1619 = vmatprep.subr.mxu0 0.0
  %1620 = vmatpush1.msra.mxu0 0.0
  %1621 = vmatprep.subr.mxu0 0.0
  %1622 = vmatpush1.msra.mxu0 0.0
  %1623 = vmatprep.subr.mxu0 0.0
  %1624 = vmatpush1.msra.mxu0 0.0
  %1625 = vmatprep.subr.mxu0 0.0
  %1626 = vmatpush1.msra.mxu0 0.0
  %1627 = vmatprep.subr.mxu0 0.0
  %1628 = vmatpush1.msra.mxu0 0.0
  %1629 = vmatprep.subr.mxu0 0.0
  %1630 = vmatpush1.msra.mxu0 0.0
  %1631 = vmatprep.subr.mxu0 0.0
  %1632 = vmatpush1.msra.mxu0 0.0
  %1633 = vmatprep.subr.mxu0 0.0
  %1634 = vmatpush1.msra.mxu0 0.0
  %1635 = vmatprep.subr.mxu0 0.0
  %1636 = vmatpush1.msra.mxu0 0.0
  %1637 = vmatprep.mubr.f32.mxu0 0.0
  %1638 = vmatmul.mubr.f32.gmra.mrb[0].mxu0 %v1571
  %v1639 = vpop.f32.mrb[0].mxu0
  %v1640 = vadd.f32 0.0, %v1639
  %v1641 = vpop.f32.mrb[0].mxu0
  %1642 = vdwg.mxu0
  %1644 = vrot.lane.b32.xlu0 %v1383, 64
  %v1645 = vpop.permute.xlu0 %1644
  %v1648 = vsel %vm356, %v1565, 0
  %1650 = vmatprep.subr.mxu0 0.0
  %1651 = vmatpush1.msra.mxu0 %v1645
  %1652 = vmatprep.subr.mxu0 0.0
  %1653 = vmatpush1.msra.mxu0 0.0
  %1654 = vmatprep.subr.mxu0 0.0
  %1655 = vmatpush1.msra.mxu0 0.0
  %1656 = vmatprep.subr.mxu0 0.0
  %1657 = vmatpush1.msra.mxu0 0.0
  %1658 = vmatprep.subr.mxu0 0.0
  %1659 = vmatpush1.msra.mxu0 0.0
  %1660 = vmatprep.subr.mxu0 0.0
  %1661 = vmatpush1.msra.mxu0 0.0
  %1662 = vmatprep.subr.mxu0 0.0
  %1663 = vmatpush1.msra.mxu0 0.0
  %1664 = vmatprep.subr.mxu0 0.0
  %1665 = vmatpush1.msra.mxu0 0.0
  %1666 = vmatprep.subr.mxu0 0.0
  %1667 = vmatpush1.msra.mxu0 0.0
  %1668 = vmatprep.subr.mxu0 0.0
  %1669 = vmatpush1.msra.mxu0 0.0
  %1670 = vmatprep.subr.mxu0 0.0
  %1671 = vmatpush1.msra.mxu0 0.0
  %1672 = vmatprep.subr.mxu0 0.0
  %1673 = vmatpush1.msra.mxu0 0.0
  %1674 = vmatprep.subr.mxu0 0.0
  %1675 = vmatpush1.msra.mxu0 0.0
  %1676 = vmatprep.subr.mxu0 0.0
  %1677 = vmatpush1.msra.mxu0 0.0
  %1678 = vmatprep.subr.mxu0 0.0
  %1679 = vmatpush1.msra.mxu0 0.0
  %1680 = vmatprep.subr.mxu0 0.0
  %1681 = vmatpush1.msra.mxu0 0.0
  %1682 = vmatprep.subr.mxu0 0.0
  %1683 = vmatpush1.msra.mxu0 0.0
  %1684 = vmatprep.subr.mxu0 0.0
  %1685 = vmatpush1.msra.mxu0 0.0
  %1686 = vmatprep.subr.mxu0 0.0
  %1687 = vmatpush1.msra.mxu0 0.0
  %1688 = vmatprep.subr.mxu0 0.0
  %1689 = vmatpush1.msra.mxu0 0.0
  %1690 = vmatprep.subr.mxu0 0.0
  %1691 = vmatpush1.msra.mxu0 0.0
  %1692 = vmatprep.subr.mxu0 0.0
  %1693 = vmatpush1.msra.mxu0 0.0
  %1694 = vmatprep.subr.mxu0 0.0
  %1695 = vmatpush1.msra.mxu0 0.0
  %1696 = vmatprep.subr.mxu0 0.0
  %1697 = vmatpush1.msra.mxu0 0.0
  %1698 = vmatprep.subr.mxu0 0.0
  %1699 = vmatpush1.msra.mxu0 0.0
  %1700 = vmatprep.subr.mxu0 0.0
  %1701 = vmatpush1.msra.mxu0 0.0
  %1702 = vmatprep.subr.mxu0 0.0
  %1703 = vmatpush1.msra.mxu0 0.0
  %1704 = vmatprep.subr.mxu0 0.0
  %1705 = vmatpush1.msra.mxu0 0.0
  %1706 = vmatprep.subr.mxu0 0.0
  %1707 = vmatpush1.msra.mxu0 0.0
  %1708 = vmatprep.subr.mxu0 0.0
  %1709 = vmatpush1.msra.mxu0 0.0
  %1710 = vmatprep.subr.mxu0 0.0
  %1711 = vmatpush1.msra.mxu0 0.0
  %1712 = vmatprep.subr.mxu0 0.0
  %1713 = vmatpush1.msra.mxu0 0.0
  %1714 = vmatprep.mubr.f32.mxu0 0.0
  %1715 = vmatmul.mubr.f32.gmra.mrb[0].mxu0 %v1648
  %v1716 = vpop.f32.mrb[0].mxu0
  %v1717 = vadd.f32 0.0, %v1716
  %v1718 = vpop.f32.mrb[0].mxu0
  %1719 = vdwg.mxu0
  %1720 = vrot.lane.b32.xlu0 %v1362, 112
  %v1721 = vpop.permute.xlu0 %1720
  %1722 = vrot.lane.b32.xlu0 %v1372, 80
  %v1723 = vpop.permute.xlu0 %1722
  %v1724 = vsel %vm186, %v1721, 0
  %v1726 = vsel %vm186, %v1723, 0
  %1728 = vmatprep.subr.mxu0 0.0
  %1729 = vmatpush1.xpose.msra.mxu0 %v1726
  %1730 = vmatprep.subr.mxu0 0.0
  %1731 = vmatpush1.xpose.msra.mxu0 0.0
  %1732 = vmatprep.subr.mxu0 0.0
  %1733 = vmatpush1.xpose.msra.mxu0 0.0
  %1734 = vmatprep.subr.mxu0 0.0
  %1735 = vmatpush1.xpose.msra.mxu0 0.0
  %1736 = vmatprep.subr.mxu0 0.0
  %1737 = vmatpush1.xpose.msra.mxu0 0.0
  %1738 = vmatprep.subr.mxu0 0.0
  %1739 = vmatpush1.xpose.msra.mxu0 0.0
  %1740 = vmatprep.subr.mxu0 0.0
  %1741 = vmatpush1.xpose.msra.mxu0 0.0
  %1742 = vmatprep.subr.mxu0 0.0
  %1743 = vmatpush1.xpose.msra.mxu0 0.0
  %1744 = vmatprep.subr.mxu0 0.0
  %1745 = vmatpush1.xpose.msra.mxu0 0.0
  %1746 = vmatprep.subr.mxu0 0.0
  %1747 = vmatpush1.xpose.msra.mxu0 0.0
  %1748 = vmatprep.subr.mxu0 0.0
  %1749 = vmatpush1.xpose.msra.mxu0 0.0
  %1750 = vmatprep.subr.mxu0 0.0
  %1751 = vmatpush1.xpose.msra.mxu0 0.0
  %1752 = vmatprep.subr.mxu0 0.0
  %1753 = vmatpush1.xpose.msra.mxu0 0.0
  %1754 = vmatprep.subr.mxu0 0.0
  %1755 = vmatpush1.xpose.msra.mxu0 0.0
  %1756 = vmatprep.subr.mxu0 0.0
  %1757 = vmatpush1.xpose.msra.mxu0 0.0
  %1758 = vmatprep.subr.mxu0 0.0
  %1759 = vmatpush1.xpose.msra.mxu0 0.0
  %1760 = vmatprep.subr.mxu0 0.0
  %1761 = vmatpush1.xpose.msra.mxu0 0.0
  %1762 = vmatprep.subr.mxu0 0.0
  %1763 = vmatpush1.xpose.msra.mxu0 0.0
  %1764 = vmatprep.subr.mxu0 0.0
  %1765 = vmatpush1.xpose.msra.mxu0 0.0
  %1766 = vmatprep.subr.mxu0 0.0
  %1767 = vmatpush1.xpose.msra.mxu0 0.0
  %1768 = vmatprep.subr.mxu0 0.0
  %1769 = vmatpush1.xpose.msra.mxu0 0.0
  %1770 = vmatprep.subr.mxu0 0.0
  %1771 = vmatpush1.xpose.msra.mxu0 0.0
  %1772 = vmatprep.subr.mxu0 0.0
  %1773 = vmatpush1.xpose.msra.mxu0 0.0
  %1774 = vmatprep.subr.mxu0 0.0
  %1775 = vmatpush1.xpose.msra.mxu0 0.0
  %1776 = vmatprep.subr.mxu0 0.0
  %1777 = vmatpush1.xpose.msra.mxu0 0.0
  %1778 = vmatprep.subr.mxu0 0.0
  %1779 = vmatpush1.xpose.msra.mxu0 0.0
  %1780 = vmatprep.subr.mxu0 0.0
  %1781 = vmatpush1.xpose.msra.mxu0 0.0
  %1782 = vmatprep.subr.mxu0 0.0
  %1783 = vmatpush1.xpose.msra.mxu0 0.0
  %1784 = vmatprep.subr.mxu0 0.0
  %1785 = vmatpush1.xpose.msra.mxu0 0.0
  %1786 = vmatprep.subr.mxu0 0.0
  %1787 = vmatpush1.xpose.msra.mxu0 0.0
  %1788 = vmatprep.subr.mxu0 0.0
  %1789 = vmatpush1.xpose.msra.mxu0 0.0
  %1790 = vmatprep.subr.mxu0 0.0
  %1791 = vmatpush1.xpose.msra.mxu0 0.0
  %1792 = vmatprep.mubr.f32.mxu0 0.0
  %1793 = vmatmul.mubr.f32.gmra.mrb[0].mxu0 %v1724
  %v1794 = vpop.f32.mrb[0].mxu0
  %v1795 = vadd.f32 0.0, %v1794
  %v1796 = vpop.f32.mrb[0].mxu0
  %1797 = vdwg.mxu0
  %1798 = vrot.lane.b32.xlu0 %v1363, 112
  %v1799 = vpop.permute.xlu0 %1798
  %1800 = vrot.lane.b32.xlu0 %v1373, 80
  %v1801 = vpop.permute.xlu0 %1800
  %v1802 = vsel %vm186, %v1799, 0
  %v1804 = vsel %vm186, %v1801, 0
  %1806 = vmatprep.subr.mxu0 0.0
  %1807 = vmatpush1.xpose.msra.mxu0 %v1804
  %1808 = vmatprep.subr.mxu0 0.0
  %1809 = vmatpush1.xpose.msra.mxu0 0.0
  %1810 = vmatprep.subr.mxu0 0.0
  %1811 = vmatpush1.xpose.msra.mxu0 0.0
  %1812 = vmatprep.subr.mxu0 0.0
  %1813 = vmatpush1.xpose.msra.mxu0 0.0
  %1814 = vmatprep.subr.mxu0 0.0
  %1815 = vmatpush1.xpose.msra.mxu0 0.0
  %1816 = vmatprep.subr.mxu0 0.0
  %1817 = vmatpush1.xpose.msra.mxu0 0.0
  %1818 = vmatprep.subr.mxu0 0.0
  %1819 = vmatpush1.xpose.msra.mxu0 0.0
  %1820 = vmatprep.subr.mxu0 0.0
  %1821 = vmatpush1.xpose.msra.mxu0 0.0
  %1822 = vmatprep.subr.mxu0 0.0
  %1823 = vmatpush1.xpose.msra.mxu0 0.0
  %1824 = vmatprep.subr.mxu0 0.0
  %1825 = vmatpush1.xpose.msra.mxu0 0.0
  %1826 = vmatprep.subr.mxu0 0.0
  %1827 = vmatpush1.xpose.msra.mxu0 0.0
  %1828 = vmatprep.subr.mxu0 0.0
  %1829 = vmatpush1.xpose.msra.mxu0 0.0
  %1830 = vmatprep.subr.mxu0 0.0
  %1831 = vmatpush1.xpose.msra.mxu0 0.0
  %1832 = vmatprep.subr.mxu0 0.0
  %1833 = vmatpush1.xpose.msra.mxu0 0.0
  %1834 = vmatprep.subr.mxu0 0.0
  %1835 = vmatpush1.xpose.msra.mxu0 0.0
  %1836 = vmatprep.subr.mxu0 0.0
  %1837 = vmatpush1.xpose.msra.mxu0 0.0
  %1838 = vmatprep.subr.mxu0 0.0
  %1839 = vmatpush1.xpose.msra.mxu0 0.0
  %1840 = vmatprep.subr.mxu0 0.0
  %1841 = vmatpush1.xpose.msra.mxu0 0.0
  %1842 = vmatprep.subr.mxu0 0.0
  %1843 = vmatpush1.xpose.msra.mxu0 0.0
  %1844 = vmatprep.subr.mxu0 0.0
  %1845 = vmatpush1.xpose.msra.mxu0 0.0
  %1846 = vmatprep.subr.mxu0 0.0
  %1847 = vmatpush1.xpose.msra.mxu0 0.0
  %1848 = vmatprep.subr.mxu0 0.0
  %1849 = vmatpush1.xpose.msra.mxu0 0.0
  %1850 = vmatprep.subr.mxu0 0.0
  %1851 = vmatpush1.xpose.msra.mxu0 0.0
  %1852 = vmatprep.subr.mxu0 0.0
  %1853 = vmatpush1.xpose.msra.mxu0 0.0
  %1854 = vmatprep.subr.mxu0 0.0
  %1855 = vmatpush1.xpose.msra.mxu0 0.0
  %1856 = vmatprep.subr.mxu0 0.0
  %1857 = vmatpush1.xpose.msra.mxu0 0.0
  %1858 = vmatprep.subr.mxu0 0.0
  %1859 = vmatpush1.xpose.msra.mxu0 0.0
  %1860 = vmatprep.subr.mxu0 0.0
  %1861 = vmatpush1.xpose.msra.mxu0 0.0
  %1862 = vmatprep.subr.mxu0 0.0
  %1863 = vmatpush1.xpose.msra.mxu0 0.0
  %1864 = vmatprep.subr.mxu0 0.0
  %1865 = vmatpush1.xpose.msra.mxu0 0.0
  %1866 = vmatprep.subr.mxu0 0.0
  %1867 = vmatpush1.xpose.msra.mxu0 0.0
  %1868 = vmatprep.subr.mxu0 0.0
  %1869 = vmatpush1.xpose.msra.mxu0 0.0
  %1870 = vmatprep.mubr.f32.mxu0 0.0
  %1871 = vmatmul.mubr.f32.gmra.mrb[0].mxu0 %v1802
  %v1872 = vpop.f32.mrb[0].mxu0
  %v1873 = vadd.f32 0.0, %v1872
  %v1874 = vpop.f32.mrb[0].mxu0
  %1875 = vdwg.mxu0
  %v1876 = vmul.f32 %v1795, 0.25
  %v1877 = vmul.f32 %v1873, 0.25
  %v1878 = vsel %vm352, %v1876, -3.4028235e+38
  %v1879 = vsel %vm353, %v1877, -3.4028235e+38
  %v1880 = vsel %vm356, %v1878, -inf
  %1881 = vmax.xlane.f32.xlu0 %v1880
  %v1882 = vpop.xlane.xlu0 %1881
  %v1883 = vsel %vm356, %v1879, -inf
  %1884 = vmax.xlane.f32.xlu0 %v1883
  %v1885 = vpop.xlane.xlu0 %1884
  %v1886 = vsub.f32 %v1878, %v1882
  %v1887 = vsub.f32 %v1879, %v1885
  %v1888 = vmul.f32 %v1886, 1.442695
  %v1889 = vpow.pop %v1888
  %v1890 = vmul.f32 %v1887, 1.442695
  %v1891 = vpow.pop %v1890
  %v1892 = vsel %vm356, %v1889, 0.0
  %1893 = vadd.xlane.f32.xlu0 %v1892
  %v1894 = vpop.xlane.xlu0 %1893
  %v1895 = vsel %vm356, %v1891, 0.0
  %1896 = vadd.xlane.f32.xlu0 %v1895
  %v1897 = vpop.xlane.xlu0 %1896
  %v1898 = vrcp.pop %v1894
  %v1899 = vrcp.pop %v1897
  %v1900 = vmul.f32 %v1889, %v1898
  %v1901 = vmul.f32 %v1891, %v1899
  %1902 = vrot.lane.b32.xlu0 %v1382, 48
  %v1903 = vpop.permute.xlu0 %1902
  %v1906 = vsel %vm356, %v1900, 0
  %1908 = vmatprep.subr.mxu0 0.0
  %1909 = vmatpush1.msra.mxu0 %v1903
  %1910 = vmatprep.subr.mxu0 0.0
  %1911 = vmatpush1.msra.mxu0 0.0
  %1912 = vmatprep.subr.mxu0 0.0
  %1913 = vmatpush1.msra.mxu0 0.0
  %1914 = vmatprep.subr.mxu0 0.0
  %1915 = vmatpush1.msra.mxu0 0.0
  %1916 = vmatprep.subr.mxu0 0.0
  %1917 = vmatpush1.msra.mxu0 0.0
  %1918 = vmatprep.subr.mxu0 0.0
  %1919 = vmatpush1.msra.mxu0 0.0
  %1920 = vmatprep.subr.mxu0 0.0
  %1921 = vmatpush1.msra.mxu0 0.0
  %1922 = vmatprep.subr.mxu0 0.0
  %1923 = vmatpush1.msra.mxu0 0.0
  %1924 = vmatprep.subr.mxu0 0.0
  %1925 = vmatpush1.msra.mxu0 0.0
  %1926 = vmatprep.subr.mxu0 0.0
  %1927 = vmatpush1.msra.mxu0 0.0
  %1928 = vmatprep.subr.mxu0 0.0
  %1929 = vmatpush1.msra.mxu0 0.0
  %1930 = vmatprep.subr.mxu0 0.0
  %1931 = vmatpush1.msra.mxu0 0.0
  %1932 = vmatprep.subr.mxu0 0.0
  %1933 = vmatpush1.msra.mxu0 0.0
  %1934 = vmatprep.subr.mxu0 0.0
  %1935 = vmatpush1.msra.mxu0 0.0
  %1936 = vmatprep.subr.mxu0 0.0
  %1937 = vmatpush1.msra.mxu0 0.0
  %1938 = vmatprep.subr.mxu0 0.0
  %1939 = vmatpush1.msra.mxu0 0.0
  %1940 = vmatprep.subr.mxu0 0.0
  %1941 = vmatpush1.msra.mxu0 0.0
  %1942 = vmatprep.subr.mxu0 0.0
  %1943 = vmatpush1.msra.mxu0 0.0
  %1944 = vmatprep.subr.mxu0 0.0
  %1945 = vmatpush1.msra.mxu0 0.0
  %1946 = vmatprep.subr.mxu0 0.0
  %1947 = vmatpush1.msra.mxu0 0.0
  %1948 = vmatprep.subr.mxu0 0.0
  %1949 = vmatpush1.msra.mxu0 0.0
  %1950 = vmatprep.subr.mxu0 0.0
  %1951 = vmatpush1.msra.mxu0 0.0
  %1952 = vmatprep.subr.mxu0 0.0
  %1953 = vmatpush1.msra.mxu0 0.0
  %1954 = vmatprep.subr.mxu0 0.0
  %1955 = vmatpush1.msra.mxu0 0.0
  %1956 = vmatprep.subr.mxu0 0.0
  %1957 = vmatpush1.msra.mxu0 0.0
  %1958 = vmatprep.subr.mxu0 0.0
  %1959 = vmatpush1.msra.mxu0 0.0
  %1960 = vmatprep.subr.mxu0 0.0
  %1961 = vmatpush1.msra.mxu0 0.0
  %1962 = vmatprep.subr.mxu0 0.0
  %1963 = vmatpush1.msra.mxu0 0.0
  %1964 = vmatprep.subr.mxu0 0.0
  %1965 = vmatpush1.msra.mxu0 0.0
  %1966 = vmatprep.subr.mxu0 0.0
  %1967 = vmatpush1.msra.mxu0 0.0
  %1968 = vmatprep.subr.mxu0 0.0
  %1969 = vmatpush1.msra.mxu0 0.0
  %1970 = vmatprep.subr.mxu0 0.0
  %1971 = vmatpush1.msra.mxu0 0.0
  %1972 = vmatprep.mubr.f32.mxu0 0.0
  %1973 = vmatmul.mubr.f32.gmra.mrb[0].mxu0 %v1906
  %v1974 = vpop.f32.mrb[0].mxu0
  %v1975 = vadd.f32 0.0, %v1974
  %v1976 = vpop.f32.mrb[0].mxu0
  %1977 = vdwg.mxu0
  %1978 = vrot.lane.b32.xlu0 %v1383, 48
  %v1979 = vpop.permute.xlu0 %1978
  %v1982 = vsel %vm356, %v1901, 0
  %1984 = vmatprep.subr.mxu0 0.0
  %1985 = vmatpush1.msra.mxu0 %v1979
  %1986 = vmatprep.subr.mxu0 0.0
  %1987 = vmatpush1.msra.mxu0 0.0
  %1988 = vmatprep.subr.mxu0 0.0
  %1989 = vmatpush1.msra.mxu0 0.0
  %1990 = vmatprep.subr.mxu0 0.0
  %1991 = vmatpush1.msra.mxu0 0.0
  %1992 = vmatprep.subr.mxu0 0.0
  %1993 = vmatpush1.msra.mxu0 0.0
  %1994 = vmatprep.subr.mxu0 0.0
  %1995 = vmatpush1.msra.mxu0 0.0
  %1996 = vmatprep.subr.mxu0 0.0
  %1997 = vmatpush1.msra.mxu0 0.0
  %1998 = vmatprep.subr.mxu0 0.0
  %1999 = vmatpush1.msra.mxu0 0.0
  %2000 = vmatprep.subr.mxu0 0.0
  %2001 = vmatpush1.msra.mxu0 0.0
  %2002 = vmatprep.subr.mxu0 0.0
  %2003 = vmatpush1.msra.mxu0 0.0
  %2004 = vmatprep.subr.mxu0 0.0
  %2005 = vmatpush1.msra.mxu0 0.0
  %2006 = vmatprep.subr.mxu0 0.0
  %2007 = vmatpush1.msra.mxu0 0.0
  %2008 = vmatprep.subr.mxu0 0.0
  %2009 = vmatpush1.msra.mxu0 0.0
  %2010 = vmatprep.subr.mxu0 0.0
  %2011 = vmatpush1.msra.mxu0 0.0
  %2012 = vmatprep.subr.mxu0 0.0
  %2013 = vmatpush1.msra.mxu0 0.0
  %2014 = vmatprep.subr.mxu0 0.0
  %2015 = vmatpush1.msra.mxu0 0.0
  %2016 = vmatprep.subr.mxu0 0.0
  %2017 = vmatpush1.msra.mxu0 0.0
  %2018 = vmatprep.subr.mxu0 0.0
  %2019 = vmatpush1.msra.mxu0 0.0
  %2020 = vmatprep.subr.mxu0 0.0
  %2021 = vmatpush1.msra.mxu0 0.0
  %2022 = vmatprep.subr.mxu0 0.0
  %2023 = vmatpush1.msra.mxu0 0.0
  %2024 = vmatprep.subr.mxu0 0.0
  %2025 = vmatpush1.msra.mxu0 0.0
  %2026 = vmatprep.subr.mxu0 0.0
  %2027 = vmatpush1.msra.mxu0 0.0
  %2028 = vmatprep.subr.mxu0 0.0
  %2029 = vmatpush1.msra.mxu0 0.0
  %2030 = vmatprep.subr.mxu0 0.0
  %2031 = vmatpush1.msra.mxu0 0.0
  %2032 = vmatprep.subr.mxu0 0.0
  %2033 = vmatpush1.msra.mxu0 0.0
  %2034 = vmatprep.subr.mxu0 0.0
  %2035 = vmatpush1.msra.mxu0 0.0
  %2036 = vmatprep.subr.mxu0 0.0
  %2037 = vmatpush1.msra.mxu0 0.0
  %2038 = vmatprep.subr.mxu0 0.0
  %2039 = vmatpush1.msra.mxu0 0.0
  %2040 = vmatprep.subr.mxu0 0.0
  %2041 = vmatpush1.msra.mxu0 0.0
  %2042 = vmatprep.subr.mxu0 0.0
  %2043 = vmatpush1.msra.mxu0 0.0
  %2044 = vmatprep.subr.mxu0 0.0
  %2045 = vmatpush1.msra.mxu0 0.0
  %2046 = vmatprep.subr.mxu0 0.0
  %2047 = vmatpush1.msra.mxu0 0.0
  %2048 = vmatprep.mubr.f32.mxu0 0.0
  %2049 = vmatmul.mubr.f32.gmra.mrb[0].mxu0 %v1982
  %v2050 = vpop.f32.mrb[0].mxu0
  %v2051 = vadd.f32 0.0, %v2050
  %v2052 = vpop.f32.mrb[0].mxu0
  %2053 = vdwg.mxu0
  %2056 = vrot.lane.b32.xlu0 %v1975, 16
  %v2057 = vpop.permute.xlu0 %2056
  %2058 = vrot.lane.b32.xlu0 %v2051, 16
  %v2059 = vpop.permute.xlu0 %2058
  %v2062 = vsel %vm186, %v1640, %v2057
  %v2063 = vsel %vm186, %v1717, %v2059
  %v2064 = vlaneseq
  %v2065 = vshrl.u32 %v2064, 7
  %v2066 = vsub.s32 0, %v2065
  %v2067 = vrot.slane %v1271, %v2066
  %2072 = vrot.lane.b32.xlu0 %v1259, 32
  %v2073 = vpop.permute.xlu0 %2072
  %2074 = vrot.lane.b32.xlu0 %v1261, 32
  %v2075 = vpop.permute.xlu0 %2074
  %2076 = vrot.lane.b32.xlu0 %v1263, 32
  %v2077 = vpop.permute.xlu0 %2076
  %2078 = vrot.lane.b32.xlu0 %v1265, 32
  %v2079 = vpop.permute.xlu0 %2078
  %v2085 = vsel %vm75, %v2062, 0
  %v2088 = vsel %vm75, %v2063, 0
  %2090 = vmatprep.subr.mxu0 0.0
  %2091 = vmatpush1.msra.mxu0 %v2073
  %2092 = vmatprep.subr.mxu0 0.0
  %2093 = vmatpush1.msra.mxu0 %v2075
  %2094 = vmatprep.subr.mxu0 0.0
  %2095 = vmatpush1.msra.mxu0 %v2077
  %2096 = vmatprep.subr.mxu0 0.0
  %2097 = vmatpush1.msra.mxu0 %v2079
  %2098 = vmatprep.subr.mxu0 0.0
  %2099 = vmatpush1.msra.mxu0 0.0
  %2100 = vmatprep.subr.mxu0 0.0
  %2101 = vmatpush1.msra.mxu0 0.0
  %2102 = vmatprep.subr.mxu0 0.0
  %2103 = vmatpush1.msra.mxu0 0.0
  %2104 = vmatprep.subr.mxu0 0.0
  %2105 = vmatpush1.msra.mxu0 0.0
  %2106 = vmatprep.subr.mxu0 0.0
  %2107 = vmatpush1.msra.mxu0 0.0
  %2108 = vmatprep.subr.mxu0 0.0
  %2109 = vmatpush1.msra.mxu0 0.0
  %2110 = vmatprep.subr.mxu0 0.0
  %2111 = vmatpush1.msra.mxu0 0.0
  %2112 = vmatprep.subr.mxu0 0.0
  %2113 = vmatpush1.msra.mxu0 0.0
  %2114 = vmatprep.subr.mxu0 0.0
  %2115 = vmatpush1.msra.mxu0 0.0
  %2116 = vmatprep.subr.mxu0 0.0
  %2117 = vmatpush1.msra.mxu0 0.0
  %2118 = vmatprep.subr.mxu0 0.0
  %2119 = vmatpush1.msra.mxu0 0.0
  %2120 = vmatprep.subr.mxu0 0.0
  %2121 = vmatpush1.msra.mxu0 0.0
  %2122 = vmatprep.subr.mxu0 0.0
  %2123 = vmatpush1.msra.mxu0 0.0
  %2124 = vmatprep.subr.mxu0 0.0
  %2125 = vmatpush1.msra.mxu0 0.0
  %2126 = vmatprep.subr.mxu0 0.0
  %2127 = vmatpush1.msra.mxu0 0.0
  %2128 = vmatprep.subr.mxu0 0.0
  %2129 = vmatpush1.msra.mxu0 0.0
  %2130 = vmatprep.subr.mxu0 0.0
  %2131 = vmatpush1.msra.mxu0 0.0
  %2132 = vmatprep.subr.mxu0 0.0
  %2133 = vmatpush1.msra.mxu0 0.0
  %2134 = vmatprep.subr.mxu0 0.0
  %2135 = vmatpush1.msra.mxu0 0.0
  %2136 = vmatprep.subr.mxu0 0.0
  %2137 = vmatpush1.msra.mxu0 0.0
  %2138 = vmatprep.subr.mxu0 0.0
  %2139 = vmatpush1.msra.mxu0 0.0
  %2140 = vmatprep.subr.mxu0 0.0
  %2141 = vmatpush1.msra.mxu0 0.0
  %2142 = vmatprep.subr.mxu0 0.0
  %2143 = vmatpush1.msra.mxu0 0.0
  %2144 = vmatprep.subr.mxu0 0.0
  %2145 = vmatpush1.msra.mxu0 0.0
  %2146 = vmatprep.subr.mxu0 0.0
  %2147 = vmatpush1.msra.mxu0 0.0
  %2148 = vmatprep.subr.mxu0 0.0
  %2149 = vmatpush1.msra.mxu0 0.0
  %2150 = vmatprep.subr.mxu0 0.0
  %2151 = vmatpush1.msra.mxu0 0.0
  %2152 = vmatprep.subr.mxu0 0.0
  %2153 = vmatpush1.msra.mxu0 0.0
  %2154 = vmatprep.mubr.f32.mxu0 0.0
  %2155 = vmatmul.mubr.f32.gmra.mrb[0].mxu0 %v2085
  %v2156 = vpop.f32.mrb[0].mxu0
  %v2157 = vadd.f32 %v2067, %v2156
  %v2158 = vpop.f32.mrb[0].mxu0
  %2159 = vmatprep.mubr.f32.mxu0 0.0
  %2160 = vmatmul.mubr.f32.gmra.mrb[0].mxu0 %v2088
  %v2161 = vpop.f32.mrb[0].mxu0
  %v2162 = vadd.f32 %v2067, %v2161
  %v2163 = vpop.f32.mrb[0].mxu0
  %2164 = vdwg.mxu0
  %v2165 = vadd.f32 %v2157, %v1256
  %v2166 = vadd.f32 %v2162, %v1257
  %v2167 = vsel %vm75, %v2165, 0.0
  %2168 = vadd.xlane.f32.xlu0 %v2167
  %v2169 = vpop.xlane.xlu0 %2168
  %v2170 = vsel %vm75, %v2166, 0.0
  %2171 = vadd.xlane.f32.xlu0 %v2170
  %v2172 = vpop.xlane.xlu0 %2171
  %v2173 = vmul.f32 %v2169, %v986
  %v2174 = vmul.f32 %v2172, %v986
  %v2175 = vsub.f32 %v2165, %v2173
  %v2176 = vsub.f32 %v2166, %v2174
  %v2177 = vmul.f32 %v2175, %v2175
  %v2178 = vmul.f32 %v2176, %v2176
  %v2179 = vsel %vm75, %v2177, 0.0
  %2180 = vadd.xlane.f32.xlu0 %v2179
  %v2181 = vpop.xlane.xlu0 %2180
  %v2182 = vsel %vm75, %v2178, 0.0
  %2183 = vadd.xlane.f32.xlu0 %v2182
  %v2184 = vpop.xlane.xlu0 %2183
  %v2185 = vmul.f32 %v2181, %v986
  %v2186 = vmul.f32 %v2184, %v986
  %v2187 = vadd.f32 %v2185, 1e-12
  %v2188 = vadd.f32 %v2186, 1e-12
  %v2189 = vrsqrt.pop %v2187
  %v2190 = vrsqrt.pop %v2188
  %v2191 = vmul.f32 %v2175, %v2189
  %v2192 = vmul.f32 %v2176, %v2190
  %v2193 = vlaneseq
  %v2194 = vshrl.u32 %v2193, 7
  %v2195 = vsub.s32 0, %v2194
  %v2196 = vrot.slane %v1272, %v2195
  %v2197 = vmul.f32 %v2191, %v2196
  %v2198 = vmul.f32 %v2192, %v2196
  %v2199 = vlaneseq
  %v2200 = vshrl.u32 %v2199, 7
  %v2201 = vsub.s32 0, %v2200
  %v2202 = vrot.slane %v1273, %v2201
  %v2203 = vadd.f32 %v2197, %v2202
  %v2204 = vadd.f32 %v2198, %v2202
  %v2205 = vld [vmem:[%s5 + $0x1] sm:$0x1]
  %v2206 = vlaneseq
  %v2207 = vshrl.u32 %v2206, 7
  %v2208 = vsub.s32 0, %v2207
  %v2209 = vrot.slane %v2205, %v2208
  %v2211 = vsel %vm75, %v2203, 0
  %v2214 = vsel %vm75, %v2204, 0
  %2216 = vmatprep.subr.mxu0 0.0
  %2217 = vmatpush1.msra.mxu0 %v1260
  %2218 = vmatprep.subr.mxu0 0.0
  %2219 = vmatpush1.msra.mxu0 %v1262
  %2220 = vmatprep.subr.mxu0 0.0
  %2221 = vmatpush1.msra.mxu0 %v1264
  %2222 = vmatprep.subr.mxu0 0.0
  %2223 = vmatpush1.msra.mxu0 %v1266
  %2224 = vmatprep.subr.mxu0 0.0
  %2225 = vmatpush1.msra.mxu0 0.0
  %2226 = vmatprep.subr.mxu0 0.0
  %2227 = vmatpush1.msra.mxu0 0.0
  %2228 = vmatprep.subr.mxu0 0.0
  %2229 = vmatpush1.msra.mxu0 0.0
  %2230 = vmatprep.subr.mxu0 0.0
  %2231 = vmatpush1.msra.mxu0 0.0
  %2232 = vmatprep.subr.mxu0 0.0
  %2233 = vmatpush1.msra.mxu0 0.0
  %2234 = vmatprep.subr.mxu0 0.0
  %2235 = vmatpush1.msra.mxu0 0.0
  %2236 = vmatprep.subr.mxu0 0.0
  %2237 = vmatpush1.msra.mxu0 0.0
  %2238 = vmatprep.subr.mxu0 0.0
  %2239 = vmatpush1.msra.mxu0 0.0
  %2240 = vmatprep.subr.mxu0 0.0
  %2241 = vmatpush1.msra.mxu0 0.0
  %2242 = vmatprep.subr.mxu0 0.0
  %2243 = vmatpush1.msra.mxu0 0.0
  %2244 = vmatprep.subr.mxu0 0.0
  %2245 = vmatpush1.msra.mxu0 0.0
  %2246 = vmatprep.subr.mxu0 0.0
  %2247 = vmatpush1.msra.mxu0 0.0
  %2248 = vmatprep.subr.mxu0 0.0
  %2249 = vmatpush1.msra.mxu0 0.0
  %2250 = vmatprep.subr.mxu0 0.0
  %2251 = vmatpush1.msra.mxu0 0.0
  %2252 = vmatprep.subr.mxu0 0.0
  %2253 = vmatpush1.msra.mxu0 0.0
  %2254 = vmatprep.subr.mxu0 0.0
  %2255 = vmatpush1.msra.mxu0 0.0
  %2256 = vmatprep.subr.mxu0 0.0
  %2257 = vmatpush1.msra.mxu0 0.0
  %2258 = vmatprep.subr.mxu0 0.0
  %2259 = vmatpush1.msra.mxu0 0.0
  %2260 = vmatprep.subr.mxu0 0.0
  %2261 = vmatpush1.msra.mxu0 0.0
  %2262 = vmatprep.subr.mxu0 0.0
  %2263 = vmatpush1.msra.mxu0 0.0
  %2264 = vmatprep.subr.mxu0 0.0
  %2265 = vmatpush1.msra.mxu0 0.0
  %2266 = vmatprep.subr.mxu0 0.0
  %2267 = vmatpush1.msra.mxu0 0.0
  %2268 = vmatprep.subr.mxu0 0.0
  %2269 = vmatpush1.msra.mxu0 0.0
  %2270 = vmatprep.subr.mxu0 0.0
  %2271 = vmatpush1.msra.mxu0 0.0
  %2272 = vmatprep.subr.mxu0 0.0
  %2273 = vmatpush1.msra.mxu0 0.0
  %2274 = vmatprep.subr.mxu0 0.0
  %2275 = vmatpush1.msra.mxu0 0.0
  %2276 = vmatprep.subr.mxu0 0.0
  %2277 = vmatpush1.msra.mxu0 0.0
  %2278 = vmatprep.subr.mxu0 0.0
  %2279 = vmatpush1.msra.mxu0 0.0
  %2280 = vmatprep.mubr.f32.mxu0 0.0
  %2281 = vmatmul.mubr.f32.gmra.mrb[0].mxu0 %v2211
  %v2282 = vpop.f32.mrb[0].mxu0
  %v2283 = vadd.f32 %v2209, %v2282
  %v2284 = vpop.f32.mrb[0].mxu0
  %2285 = vmatprep.mubr.f32.mxu0 0.0
  %2286 = vmatmul.mubr.f32.gmra.mrb[0].mxu0 %v2214
  %v2287 = vpop.f32.mrb[0].mxu0
  %v2288 = vadd.f32 %v2209, %v2287
  %v2289 = vpop.f32.mrb[0].mxu0
  %2290 = vdwg.mxu0
  %v2291 = vmul.f32 %v2283, %v2283
  %v2292 = vmul.f32 %v2288, %v2288
  %v2293 = vmul.f32 %v2283, %v2291
  %v2294 = vmul.f32 %v2288, %v2292
  %v2295 = vmul.f32 %v2293, 0.044715
  %v2296 = vmul.f32 %v2294, 0.044715
  %v2297 = vadd.f32 %v2283, %v2295
  %v2298 = vadd.f32 %v2288, %v2296
  %v2299 = vmul.f32 %v2297, 0.7978846
  %v2300 = vmul.f32 %v2298, 0.7978846
  %v2301 = vtanh.pop %v2299
  %v2302 = vtanh.pop %v2300
  %v2303 = vadd.f32 %v2301, 1.0
  %v2304 = vadd.f32 %v2302, 1.0
  %v2305 = vmul.f32 %v2303, 0.5
  %v2306 = vmul.f32 %v2304, 0.5
  %v2307 = vmul.f32 %v2283, %v2305
  %v2308 = vmul.f32 %v2288, %v2306
  %s2309 = scalar_lea.vmem %s3, 128
  %v2310 = vld [vmem:[%s2309] sm:$0xff]
  %v2311 = vld [vmem:[%s2309 + $0x8] sm:$0xff]
  %v2312 = vld [vmem:[%s2309 + $0x10] sm:$0xff]
  %v2313 = vld [vmem:[%s2309 + $0x18] sm:$0xff]
  %v2314 = vld [vmem:[%s2309 + $0x20] sm:$0xff]
  %v2315 = vld [vmem:[%s2309 + $0x28] sm:$0xff]
  %v2316 = vld [vmem:[%s2309 + $0x30] sm:$0xff]
  %v2317 = vld [vmem:[%s2309 + $0x38] sm:$0xff]
  %v2318 = vld [vmem:[%s2309 + $0x40] sm:$0xff]
  %v2319 = vld [vmem:[%s2309 + $0x48] sm:$0xff]
  %v2320 = vld [vmem:[%s2309 + $0x50] sm:$0xff]
  %v2321 = vld [vmem:[%s2309 + $0x58] sm:$0xff]
  %v2322 = vld [vmem:[%s2309 + $0x60] sm:$0xff]
  %v2323 = vld [vmem:[%s2309 + $0x68] sm:$0xff]
  %v2324 = vld [vmem:[%s2309 + $0x70] sm:$0xff]
  %v2325 = vld [vmem:[%s2309 + $0x78] sm:$0xff]
  %v2326 = vlaneseq
  %v2327 = vshrl.u32 %v2326, 7
  %v2328 = vsub.s32 0, %v2327
  %v2329 = vrot.slane %v1274, %v2328
  %2330 = vmatprep.subr.mxu0 0.0
  %2331 = vmatpush1.msra.mxu0 %v2310
  %2332 = vmatprep.subr.mxu0 0.0
  %2333 = vmatpush1.msra.mxu0 %v2311
  %2334 = vmatprep.subr.mxu0 0.0
  %2335 = vmatpush1.msra.mxu0 %v2312
  %2336 = vmatprep.subr.mxu0 0.0
  %2337 = vmatpush1.msra.mxu0 %v2313
  %2338 = vmatprep.subr.mxu0 0.0
  %2339 = vmatpush1.msra.mxu0 %v2314
  %2340 = vmatprep.subr.mxu0 0.0
  %2341 = vmatpush1.msra.mxu0 %v2315
  %2342 = vmatprep.subr.mxu0 0.0
  %2343 = vmatpush1.msra.mxu0 %v2316
  %2344 = vmatprep.subr.mxu0 0.0
  %2345 = vmatpush1.msra.mxu0 %v2317
  %2346 = vmatprep.subr.mxu0 0.0
  %2347 = vmatpush1.msra.mxu0 %v2318
  %2348 = vmatprep.subr.mxu0 0.0
  %2349 = vmatpush1.msra.mxu0 %v2319
  %2350 = vmatprep.subr.mxu0 0.0
  %2351 = vmatpush1.msra.mxu0 %v2320
  %2352 = vmatprep.subr.mxu0 0.0
  %2353 = vmatpush1.msra.mxu0 %v2321
  %2354 = vmatprep.subr.mxu0 0.0
  %2355 = vmatpush1.msra.mxu0 %v2322
  %2356 = vmatprep.subr.mxu0 0.0
  %2357 = vmatpush1.msra.mxu0 %v2323
  %2358 = vmatprep.subr.mxu0 0.0
  %2359 = vmatpush1.msra.mxu0 %v2324
  %2360 = vmatprep.subr.mxu0 0.0
  %2361 = vmatpush1.msra.mxu0 %v2325
  %2362 = vmatprep.subr.mxu0 0.0
  %2363 = vmatpush1.msra.mxu0 0.0
  %2364 = vmatprep.subr.mxu0 0.0
  %2365 = vmatpush1.msra.mxu0 0.0
  %2366 = vmatprep.subr.mxu0 0.0
  %2367 = vmatpush1.msra.mxu0 0.0
  %2368 = vmatprep.subr.mxu0 0.0
  %2369 = vmatpush1.msra.mxu0 0.0
  %2370 = vmatprep.subr.mxu0 0.0
  %2371 = vmatpush1.msra.mxu0 0.0
  %2372 = vmatprep.subr.mxu0 0.0
  %2373 = vmatpush1.msra.mxu0 0.0
  %2374 = vmatprep.subr.mxu0 0.0
  %2375 = vmatpush1.msra.mxu0 0.0
  %2376 = vmatprep.subr.mxu0 0.0
  %2377 = vmatpush1.msra.mxu0 0.0
  %2378 = vmatprep.subr.mxu0 0.0
  %2379 = vmatpush1.msra.mxu0 0.0
  %2380 = vmatprep.subr.mxu0 0.0
  %2381 = vmatpush1.msra.mxu0 0.0
  %2382 = vmatprep.subr.mxu0 0.0
  %2383 = vmatpush1.msra.mxu0 0.0
  %2384 = vmatprep.subr.mxu0 0.0
  %2385 = vmatpush1.msra.mxu0 0.0
  %2386 = vmatprep.subr.mxu0 0.0
  %2387 = vmatpush1.msra.mxu0 0.0
  %2388 = vmatprep.subr.mxu0 0.0
  %2389 = vmatpush1.msra.mxu0 0.0
  %2390 = vmatprep.subr.mxu0 0.0
  %2391 = vmatpush1.msra.mxu0 0.0
  %2392 = vmatprep.subr.mxu0 0.0
  %2393 = vmatpush1.msra.mxu0 0.0
  %2394 = vmatprep.mubr.f32.mxu0 0.0
  %2395 = vmatmul.mubr.f32.gmra.mrb[0].mxu0 %v2307
  %v2396 = vpop.f32.mrb[0].mxu0
  %v2397 = vadd.f32 %v2329, %v2396
  %v2398 = vpop.f32.mrb[0].mxu0
  %2399 = vmatprep.mubr.f32.mxu0 0.0
  %2400 = vmatmul.mubr.f32.gmra.mrb[0].mxu0 %v2308
  %v2401 = vpop.f32.mrb[0].mxu0
  %v2402 = vadd.f32 %v2329, %v2401
  %v2403 = vpop.f32.mrb[0].mxu0
  %2404 = vdwg.mxu0
  %v2405 = vadd.f32 %v2397, %v2203
  %v2406 = vadd.f32 %v2402, %v2204
  %v2407 = vsel %vm75, %v2405, 0.0
  %2408 = vadd.xlane.f32.xlu0 %v2407
  %v2409 = vpop.xlane.xlu0 %2408
  %v2410 = vsel %vm75, %v2406, 0.0
  %2411 = vadd.xlane.f32.xlu0 %v2410
  %v2412 = vpop.xlane.xlu0 %2411
  %v2413 = vmul.f32 %v2409, %v986
  %v2414 = vmul.f32 %v2412, %v986
  %v2415 = vsub.f32 %v2405, %v2413
  %v2416 = vsub.f32 %v2406, %v2414
  %v2417 = vmul.f32 %v2415, %v2415
  %v2418 = vmul.f32 %v2416, %v2416
  %v2419 = vsel %vm75, %v2417, 0.0
  %2420 = vadd.xlane.f32.xlu0 %v2419
  %v2421 = vpop.xlane.xlu0 %2420
  %v2422 = vsel %vm75, %v2418, 0.0
  %2423 = vadd.xlane.f32.xlu0 %v2422
  %v2424 = vpop.xlane.xlu0 %2423
  %v2425 = vmul.f32 %v2421, %v986
  %v2426 = vmul.f32 %v2424, %v986
  %v2427 = vadd.f32 %v2425, 1e-12
  %v2428 = vadd.f32 %v2426, 1e-12
  %v2429 = vrsqrt.pop %v2427
  %v2430 = vrsqrt.pop %v2428
  %v2431 = vmul.f32 %v2415, %v2429
  %v2432 = vmul.f32 %v2416, %v2430
  %v2433 = vlaneseq
  %v2434 = vshrl.u32 %v2433, 7
  %v2435 = vsub.s32 0, %v2434
  %v2436 = vrot.slane %v1275, %v2435
  %v2437 = vmul.f32 %v2431, %v2436
  %v2438 = vmul.f32 %v2432, %v2436
  %v2439 = vlaneseq
  %v2440 = vshrl.u32 %v2439, 7
  %v2441 = vsub.s32 0, %v2440
  %v2442 = vrot.slane %v1276, %v2441
  %v2443 = vadd.f32 %v2437, %v2442
  %v2444 = vadd.f32 %v2438, %v2442
  %v2445 = vld [vmem:[%s6] sm:$0xff]
  %v2446 = vld [vmem:[%s6 + $0x8] sm:$0xff]
  %v2447 = vld [vmem:[%s6 + $0x10] sm:$0xff]
  %v2448 = vld [vmem:[%s6 + $0x18] sm:$0xff]
  %v2449 = vld [vmem:[%s7] sm:$0x1]
  %v2450 = vlaneseq
  %v2451 = vshrl.u32 %v2450, 7
  %v2452 = vsub.s32 0, %v2451
  %v2453 = vrot.slane %v2449, %v2452
  %v2455 = vsel %vm75, %v2443, 0
  %v2458 = vsel %vm75, %v2444, 0
  %2460 = vmatprep.subr.mxu0 0.0
  %2461 = vmatpush1.msra.mxu0 %v2445
  %2462 = vmatprep.subr.mxu0 0.0
  %2463 = vmatpush1.msra.mxu0 %v2446
  %2464 = vmatprep.subr.mxu0 0.0
  %2465 = vmatpush1.msra.mxu0 %v2447
  %2466 = vmatprep.subr.mxu0 0.0
  %2467 = vmatpush1.msra.mxu0 %v2448
  %2468 = vmatprep.subr.mxu0 0.0
  %2469 = vmatpush1.msra.mxu0 0.0
  %2470 = vmatprep.subr.mxu0 0.0
  %2471 = vmatpush1.msra.mxu0 0.0
  %2472 = vmatprep.subr.mxu0 0.0
  %2473 = vmatpush1.msra.mxu0 0.0
  %2474 = vmatprep.subr.mxu0 0.0
  %2475 = vmatpush1.msra.mxu0 0.0
  %2476 = vmatprep.subr.mxu0 0.0
  %2477 = vmatpush1.msra.mxu0 0.0
  %2478 = vmatprep.subr.mxu0 0.0
  %2479 = vmatpush1.msra.mxu0 0.0
  %2480 = vmatprep.subr.mxu0 0.0
  %2481 = vmatpush1.msra.mxu0 0.0
  %2482 = vmatprep.subr.mxu0 0.0
  %2483 = vmatpush1.msra.mxu0 0.0
  %2484 = vmatprep.subr.mxu0 0.0
  %2485 = vmatpush1.msra.mxu0 0.0
  %2486 = vmatprep.subr.mxu0 0.0
  %2487 = vmatpush1.msra.mxu0 0.0
  %2488 = vmatprep.subr.mxu0 0.0
  %2489 = vmatpush1.msra.mxu0 0.0
  %2490 = vmatprep.subr.mxu0 0.0
  %2491 = vmatpush1.msra.mxu0 0.0
  %2492 = vmatprep.subr.mxu0 0.0
  %2493 = vmatpush1.msra.mxu0 0.0
  %2494 = vmatprep.subr.mxu0 0.0
  %2495 = vmatpush1.msra.mxu0 0.0
  %2496 = vmatprep.subr.mxu0 0.0
  %2497 = vmatpush1.msra.mxu0 0.0
  %2498 = vmatprep.subr.mxu0 0.0
  %2499 = vmatpush1.msra.mxu0 0.0
  %2500 = vmatprep.subr.mxu0 0.0
  %2501 = vmatpush1.msra.mxu0 0.0
  %2502 = vmatprep.subr.mxu0 0.0
  %2503 = vmatpush1.msra.mxu0 0.0
  %2504 = vmatprep.subr.mxu0 0.0
  %2505 = vmatpush1.msra.mxu0 0.0
  %2506 = vmatprep.subr.mxu0 0.0
  %2507 = vmatpush1.msra.mxu0 0.0
  %2508 = vmatprep.subr.mxu0 0.0
  %2509 = vmatpush1.msra.mxu0 0.0
  %2510 = vmatprep.subr.mxu0 0.0
  %2511 = vmatpush1.msra.mxu0 0.0
  %2512 = vmatprep.subr.mxu0 0.0
  %2513 = vmatpush1.msra.mxu0 0.0
  %2514 = vmatprep.subr.mxu0 0.0
  %2515 = vmatpush1.msra.mxu0 0.0
  %2516 = vmatprep.subr.mxu0 0.0
  %2517 = vmatpush1.msra.mxu0 0.0
  %2518 = vmatprep.subr.mxu0 0.0
  %2519 = vmatpush1.msra.mxu0 0.0
  %2520 = vmatprep.subr.mxu0 0.0
  %2521 = vmatpush1.msra.mxu0 0.0
  %2522 = vmatprep.subr.mxu0 0.0
  %2523 = vmatpush1.msra.mxu0 0.0
  %2524 = vmatprep.mubr.f32.mxu0 0.0
  %2525 = vmatmul.mubr.f32.gmra.mrb[0].mxu0 %v2455
  %v2526 = vpop.f32.mrb[0].mxu0
  %v2527 = vadd.f32 %v2453, %v2526
  %v2528 = vpop.f32.mrb[0].mxu0
  %2529 = vmatprep.mubr.f32.mxu0 0.0
  %2530 = vmatmul.mubr.f32.gmra.mrb[0].mxu0 %v2458
  %v2531 = vpop.f32.mrb[0].mxu0
  %v2532 = vadd.f32 %v2453, %v2531
  %v2533 = vpop.f32.mrb[0].mxu0
  %2534 = vdwg.mxu0
  %vm2535 = vcmask 15360
  %2536 = vst.msk [vmem:[%s8] sm:$0xff] %vm2535, %v2527
  %2537 = vst.msk [vmem:[%s8 + $0x8] sm:$0xff] %vm2535, %v2532
  %s2538 = scalar_lea.vmem %s0, 16
  %v2539 = vld [vmem:[%s2538] sm:$0xff]
  %v2540 = vld [vmem:[%s2538 + $0x8] sm:$0xff]
  %s2541 = scalar_lea.vmem %s2, 128
  %v2542 = vld [vmem:[%s2541] sm:$0xff]
  %v2543 = vld [vmem:[%s2541 + $0x8] sm:$0xff]
  %v2544 = vld [vmem:[%s2541 + $0x10] sm:$0xff]
  %v2545 = vld [vmem:[%s2541 + $0x18] sm:$0xff]
  %v2546 = vld [vmem:[%s2541 + $0x20] sm:$0xff]
  %v2547 = vld [vmem:[%s2541 + $0x28] sm:$0xff]
  %v2548 = vld [vmem:[%s2541 + $0x30] sm:$0xff]
  %v2549 = vld [vmem:[%s2541 + $0x38] sm:$0xff]
  %s2550 = scalar_lea.vmem %s4, 32
  %v2551 = vld [vmem:[%s2550] sm:$0x1]
  %v2552 = vld [vmem:[%s2550 + $0x1] sm:$0x1]
  %v2553 = vld [vmem:[%s2550 + $0x2] sm:$0x1]
  %v2554 = vld [vmem:[%s2550 + $0x3] sm:$0x1]
  %v2555 = vld [vmem:[%s2550 + $0x4] sm:$0x1]
  %v2556 = vld [vmem:[%s2550 + $0x5] sm:$0x1]
  %v2557 = vld [vmem:[%s2550 + $0x6] sm:$0x1]
  %v2558 = vld [vmem:[%s2550 + $0x7] sm:$0x1]
  %v2559 = vld [vmem:[%s2550 + $0x8] sm:$0x1]
  %v2561 = vsel %vm75, %v2539, 0
  %v2564 = vsel %vm75, %v2540, 0
  %2566 = vmatprep.subr.mxu0 0.0
  %2567 = vmatpush1.msra.mxu0 %v2542
  %2568 = vmatprep.subr.mxu0 0.0
  %2569 = vmatpush1.msra.mxu0 %v2544
  %2570 = vmatprep.subr.mxu0 0.0
  %2571 = vmatpush1.msra.mxu0 %v2546
  %2572 = vmatprep.subr.mxu0 0.0
  %2573 = vmatpush1.msra.mxu0 %v2548
  %2574 = vmatprep.subr.mxu0 0.0
  %2575 = vmatpush1.msra.mxu0 0.0
  %2576 = vmatprep.subr.mxu0 0.0
  %2577 = vmatpush1.msra.mxu0 0.0
  %2578 = vmatprep.subr.mxu0 0.0
  %2579 = vmatpush1.msra.mxu0 0.0
  %2580 = vmatprep.subr.mxu0 0.0
  %2581 = vmatpush1.msra.mxu0 0.0
  %2582 = vmatprep.subr.mxu0 0.0
  %2583 = vmatpush1.msra.mxu0 0.0
  %2584 = vmatprep.subr.mxu0 0.0
  %2585 = vmatpush1.msra.mxu0 0.0
  %2586 = vmatprep.subr.mxu0 0.0
  %2587 = vmatpush1.msra.mxu0 0.0
  %2588 = vmatprep.subr.mxu0 0.0
  %2589 = vmatpush1.msra.mxu0 0.0
  %2590 = vmatprep.subr.mxu0 0.0
  %2591 = vmatpush1.msra.mxu0 0.0
  %2592 = vmatprep.subr.mxu0 0.0
  %2593 = vmatpush1.msra.mxu0 0.0
  %2594 = vmatprep.subr.mxu0 0.0
  %2595 = vmatpush1.msra.mxu0 0.0
  %2596 = vmatprep.subr.mxu0 0.0
  %2597 = vmatpush1.msra.mxu0 0.0
  %2598 = vmatprep.subr.mxu0 0.0
  %2599 = vmatpush1.msra.mxu0 0.0
  %2600 = vmatprep.subr.mxu0 0.0
  %2601 = vmatpush1.msra.mxu0 0.0
  %2602 = vmatprep.subr.mxu0 0.0
  %2603 = vmatpush1.msra.mxu0 0.0
  %2604 = vmatprep.subr.mxu0 0.0
  %2605 = vmatpush1.msra.mxu0 0.0
  %2606 = vmatprep.subr.mxu0 0.0
  %2607 = vmatpush1.msra.mxu0 0.0
  %2608 = vmatprep.subr.mxu0 0.0
  %2609 = vmatpush1.msra.mxu0 0.0
  %2610 = vmatprep.subr.mxu0 0.0
  %2611 = vmatpush1.msra.mxu0 0.0
  %2612 = vmatprep.subr.mxu0 0.0
  %2613 = vmatpush1.msra.mxu0 0.0
  %2614 = vmatprep.subr.mxu0 0.0
  %2615 = vmatpush1.msra.mxu0 0.0
  %2616 = vmatprep.subr.mxu0 0.0
  %2617 = vmatpush1.msra.mxu0 0.0
  %2618 = vmatprep.subr.mxu0 0.0
  %2619 = vmatpush1.msra.mxu0 0.0
  %2620 = vmatprep.subr.mxu0 0.0
  %2621 = vmatpush1.msra.mxu0 0.0
  %2622 = vmatprep.subr.mxu0 0.0
  %2623 = vmatpush1.msra.mxu0 0.0
  %2624 = vmatprep.subr.mxu0 0.0
  %2625 = vmatpush1.msra.mxu0 0.0
  %2626 = vmatprep.subr.mxu0 0.0
  %2627 = vmatpush1.msra.mxu0 0.0
  %2628 = vmatprep.subr.mxu0 0.0
  %2629 = vmatpush1.msra.mxu0 0.0
  %2630 = vmatprep.mubr.f32.mxu0 0.0
  %2631 = vmatmul.mubr.f32.gmra.mrb[0].mxu0 %v2561
  %v2632 = vpop.f32.mrb[0].mxu0
  %v2633 = vadd.f32 0.0, %v2632
  %v2634 = vpop.f32.mrb[0].mxu0
  %2635 = vmatprep.mubr.f32.mxu0 0.0
  %2636 = vmatmul.mubr.f32.gmra.mrb[0].mxu0 %v2564
  %v2637 = vpop.f32.mrb[0].mxu0
  %v2638 = vadd.f32 0.0, %v2637
  %v2639 = vpop.f32.mrb[0].mxu0
  %2640 = vdwg.mxu0
  %v2641 = vlaneseq
  %v2642 = vshrl.u32 %v2641, 7
  %v2643 = vsub.s32 0, %v2642
  %v2644 = vrot.slane %v2551, %v2643
  %v2645 = vadd.f32 %v2633, %v2644
  %v2646 = vadd.f32 %v2638, %v2644
  %v2647 = vlaneseq
  %v2648 = vshrl.u32 %v2647, 7
  %v2649 = vsub.s32 0, %v2648
  %v2650 = vrot.slane %v2552, %v2649
  %2652 = vrot.lane.b32.xlu0 %v2650, 32
  %v2653 = vpop.permute.xlu0 %2652
  %v2655 = vadd.f32 %v2633, %v2653
  %v2656 = vadd.f32 %v2638, %v2653
  %v2657 = vlaneseq
  %v2658 = vshrl.u32 %v2657, 7
  %v2659 = vsub.s32 0, %v2658
  %v2660 = vrot.slane %v2553, %v2659
  %2662 = vrot.lane.b32.xlu0 %v2660, 64
  %v2663 = vpop.permute.xlu0 %2662
  %v2665 = vadd.f32 %v2633, %v2663
  %v2666 = vadd.f32 %v2638, %v2663
  %2668 = vrot.lane.b32.xlu0 %v2655, 96
  %v2669 = vpop.permute.xlu0 %2668
  %v2671 = vsel %vm186, %v2645, 0
  %v2673 = vsel %vm186, %v2669, 0
  %2675 = vmatprep.subr.mxu0 0.0
  %2676 = vmatpush1.xpose.msra.mxu0 %v2673
  %2677 = vmatprep.subr.mxu0 0.0
  %2678 = vmatpush1.xpose.msra.mxu0 0.0
  %2679 = vmatprep.subr.mxu0 0.0
  %2680 = vmatpush1.xpose.msra.mxu0 0.0
  %2681 = vmatprep.subr.mxu0 0.0
  %2682 = vmatpush1.xpose.msra.mxu0 0.0
  %2683 = vmatprep.subr.mxu0 0.0
  %2684 = vmatpush1.xpose.msra.mxu0 0.0
  %2685 = vmatprep.subr.mxu0 0.0
  %2686 = vmatpush1.xpose.msra.mxu0 0.0
  %2687 = vmatprep.subr.mxu0 0.0
  %2688 = vmatpush1.xpose.msra.mxu0 0.0
  %2689 = vmatprep.subr.mxu0 0.0
  %2690 = vmatpush1.xpose.msra.mxu0 0.0
  %2691 = vmatprep.subr.mxu0 0.0
  %2692 = vmatpush1.xpose.msra.mxu0 0.0
  %2693 = vmatprep.subr.mxu0 0.0
  %2694 = vmatpush1.xpose.msra.mxu0 0.0
  %2695 = vmatprep.subr.mxu0 0.0
  %2696 = vmatpush1.xpose.msra.mxu0 0.0
  %2697 = vmatprep.subr.mxu0 0.0
  %2698 = vmatpush1.xpose.msra.mxu0 0.0
  %2699 = vmatprep.subr.mxu0 0.0
  %2700 = vmatpush1.xpose.msra.mxu0 0.0
  %2701 = vmatprep.subr.mxu0 0.0
  %2702 = vmatpush1.xpose.msra.mxu0 0.0
  %2703 = vmatprep.subr.mxu0 0.0
  %2704 = vmatpush1.xpose.msra.mxu0 0.0
  %2705 = vmatprep.subr.mxu0 0.0
  %2706 = vmatpush1.xpose.msra.mxu0 0.0
  %2707 = vmatprep.subr.mxu0 0.0
  %2708 = vmatpush1.xpose.msra.mxu0 0.0
  %2709 = vmatprep.subr.mxu0 0.0
  %2710 = vmatpush1.xpose.msra.mxu0 0.0
  %2711 = vmatprep.subr.mxu0 0.0
  %2712 = vmatpush1.xpose.msra.mxu0 0.0
  %2713 = vmatprep.subr.mxu0 0.0
  %2714 = vmatpush1.xpose.msra.mxu0 0.0
  %2715 = vmatprep.subr.mxu0 0.0
  %2716 = vmatpush1.xpose.msra.mxu0 0.0
  %2717 = vmatprep.subr.mxu0 0.0
  %2718 = vmatpush1.xpose.msra.mxu0 0.0
  %2719 = vmatprep.subr.mxu0 0.0
  %2720 = vmatpush1.xpose.msra.mxu0 0.0
  %2721 = vmatprep.subr.mxu0 0.0
  %2722 = vmatpush1.xpose.msra.mxu0 0.0
  %2723 = vmatprep.subr.mxu0 0.0
  %2724 = vmatpush1.xpose.msra.mxu0 0.0
  %2725 = vmatprep.subr.mxu0 0.0
  %2726 = vmatpush1.xpose.msra.mxu0 0.0
  %2727 = vmatprep.subr.mxu0 0.0
  %2728 = vmatpush1.xpose.msra.mxu0 0.0
  %2729 = vmatprep.subr.mxu0 0.0
  %2730 = vmatpush1.xpose.msra.mxu0 0.0
  %2731 = vmatprep.subr.mxu0 0.0
  %2732 = vmatpush1.xpose.msra.mxu0 0.0
  %2733 = vmatprep.subr.mxu0 0.0
  %2734 = vmatpush1.xpose.msra.mxu0 0.0
  %2735 = vmatprep.subr.mxu0 0.0
  %2736 = vmatpush1.xpose.msra.mxu0 0.0
  %2737 = vmatprep.subr.mxu0 0.0
  %2738 = vmatpush1.xpose.msra.mxu0 0.0
  %2739 = vmatprep.mubr.f32.mxu0 0.0
  %2740 = vmatmul.mubr.f32.gmra.mrb[0].mxu0 %v2671
  %v2741 = vpop.f32.mrb[0].mxu0
  %v2742 = vadd.f32 0.0, %v2741
  %v2743 = vpop.f32.mrb[0].mxu0
  %2744 = vdwg.mxu0
  %2746 = vrot.lane.b32.xlu0 %v2656, 96
  %v2747 = vpop.permute.xlu0 %2746
  %v2749 = vsel %vm186, %v2646, 0
  %v2751 = vsel %vm186, %v2747, 0
  %2753 = vmatprep.subr.mxu0 0.0
  %2754 = vmatpush1.xpose.msra.mxu0 %v2751
  %2755 = vmatprep.subr.mxu0 0.0
  %2756 = vmatpush1.xpose.msra.mxu0 0.0
  %2757 = vmatprep.subr.mxu0 0.0
  %2758 = vmatpush1.xpose.msra.mxu0 0.0
  %2759 = vmatprep.subr.mxu0 0.0
  %2760 = vmatpush1.xpose.msra.mxu0 0.0
  %2761 = vmatprep.subr.mxu0 0.0
  %2762 = vmatpush1.xpose.msra.mxu0 0.0
  %2763 = vmatprep.subr.mxu0 0.0
  %2764 = vmatpush1.xpose.msra.mxu0 0.0
  %2765 = vmatprep.subr.mxu0 0.0
  %2766 = vmatpush1.xpose.msra.mxu0 0.0
  %2767 = vmatprep.subr.mxu0 0.0
  %2768 = vmatpush1.xpose.msra.mxu0 0.0
  %2769 = vmatprep.subr.mxu0 0.0
  %2770 = vmatpush1.xpose.msra.mxu0 0.0
  %2771 = vmatprep.subr.mxu0 0.0
  %2772 = vmatpush1.xpose.msra.mxu0 0.0
  %2773 = vmatprep.subr.mxu0 0.0
  %2774 = vmatpush1.xpose.msra.mxu0 0.0
  %2775 = vmatprep.subr.mxu0 0.0
  %2776 = vmatpush1.xpose.msra.mxu0 0.0
  %2777 = vmatprep.subr.mxu0 0.0
  %2778 = vmatpush1.xpose.msra.mxu0 0.0
  %2779 = vmatprep.subr.mxu0 0.0
  %2780 = vmatpush1.xpose.msra.mxu0 0.0
  %2781 = vmatprep.subr.mxu0 0.0
  %2782 = vmatpush1.xpose.msra.mxu0 0.0
  %2783 = vmatprep.subr.mxu0 0.0
  %2784 = vmatpush1.xpose.msra.mxu0 0.0
  %2785 = vmatprep.subr.mxu0 0.0
  %2786 = vmatpush1.xpose.msra.mxu0 0.0
  %2787 = vmatprep.subr.mxu0 0.0
  %2788 = vmatpush1.xpose.msra.mxu0 0.0
  %2789 = vmatprep.subr.mxu0 0.0
  %2790 = vmatpush1.xpose.msra.mxu0 0.0
  %2791 = vmatprep.subr.mxu0 0.0
  %2792 = vmatpush1.xpose.msra.mxu0 0.0
  %2793 = vmatprep.subr.mxu0 0.0
  %2794 = vmatpush1.xpose.msra.mxu0 0.0
  %2795 = vmatprep.subr.mxu0 0.0
  %2796 = vmatpush1.xpose.msra.mxu0 0.0
  %2797 = vmatprep.subr.mxu0 0.0
  %2798 = vmatpush1.xpose.msra.mxu0 0.0
  %2799 = vmatprep.subr.mxu0 0.0
  %2800 = vmatpush1.xpose.msra.mxu0 0.0
  %2801 = vmatprep.subr.mxu0 0.0
  %2802 = vmatpush1.xpose.msra.mxu0 0.0
  %2803 = vmatprep.subr.mxu0 0.0
  %2804 = vmatpush1.xpose.msra.mxu0 0.0
  %2805 = vmatprep.subr.mxu0 0.0
  %2806 = vmatpush1.xpose.msra.mxu0 0.0
  %2807 = vmatprep.subr.mxu0 0.0
  %2808 = vmatpush1.xpose.msra.mxu0 0.0
  %2809 = vmatprep.subr.mxu0 0.0
  %2810 = vmatpush1.xpose.msra.mxu0 0.0
  %2811 = vmatprep.subr.mxu0 0.0
  %2812 = vmatpush1.xpose.msra.mxu0 0.0
  %2813 = vmatprep.subr.mxu0 0.0
  %2814 = vmatpush1.xpose.msra.mxu0 0.0
  %2815 = vmatprep.subr.mxu0 0.0
  %2816 = vmatpush1.xpose.msra.mxu0 0.0
  %2817 = vmatprep.mubr.f32.mxu0 0.0
  %2818 = vmatmul.mubr.f32.gmra.mrb[0].mxu0 %v2749
  %v2819 = vpop.f32.mrb[0].mxu0
  %v2820 = vadd.f32 0.0, %v2819
  %v2821 = vpop.f32.mrb[0].mxu0
  %2822 = vdwg.mxu0
  %v2823 = vmul.f32 %v2742, 0.25
  %v2824 = vmul.f32 %v2820, 0.25
  %v2825 = vsel %vm352, %v2823, -3.4028235e+38
  %v2826 = vsel %vm353, %v2824, -3.4028235e+38
  %v2827 = vsel %vm356, %v2825, -inf
  %2828 = vmax.xlane.f32.xlu0 %v2827
  %v2829 = vpop.xlane.xlu0 %2828
  %v2830 = vsel %vm356, %v2826, -inf
  %2831 = vmax.xlane.f32.xlu0 %v2830
  %v2832 = vpop.xlane.xlu0 %2831
  %v2833 = vsub.f32 %v2825, %v2829
  %v2834 = vsub.f32 %v2826, %v2832
  %v2835 = vmul.f32 %v2833, 1.442695
  %v2836 = vpow.pop %v2835
  %v2837 = vmul.f32 %v2834, 1.442695
  %v2838 = vpow.pop %v2837
  %v2839 = vsel %vm356, %v2836, 0.0
  %2840 = vadd.xlane.f32.xlu0 %v2839
  %v2841 = vpop.xlane.xlu0 %2840
  %v2842 = vsel %vm356, %v2838, 0.0
  %2843 = vadd.xlane.f32.xlu0 %v2842
  %v2844 = vpop.xlane.xlu0 %2843
  %v2845 = vrcp.pop %v2841
  %v2846 = vrcp.pop %v2844
  %v2847 = vmul.f32 %v2836, %v2845
  %v2848 = vmul.f32 %v2838, %v2846
  %2850 = vrot.lane.b32.xlu0 %v2665, 64
  %v2851 = vpop.permute.xlu0 %2850
  %v2854 = vsel %vm356, %v2847, 0
  %2856 = vmatprep.subr.mxu0 0.0
  %2857 = vmatpush1.msra.mxu0 %v2851
  %2858 = vmatprep.subr.mxu0 0.0
  %2859 = vmatpush1.msra.mxu0 0.0
  %2860 = vmatprep.subr.mxu0 0.0
  %2861 = vmatpush1.msra.mxu0 0.0
  %2862 = vmatprep.subr.mxu0 0.0
  %2863 = vmatpush1.msra.mxu0 0.0
  %2864 = vmatprep.subr.mxu0 0.0
  %2865 = vmatpush1.msra.mxu0 0.0
  %2866 = vmatprep.subr.mxu0 0.0
  %2867 = vmatpush1.msra.mxu0 0.0
  %2868 = vmatprep.subr.mxu0 0.0
  %2869 = vmatpush1.msra.mxu0 0.0
  %2870 = vmatprep.subr.mxu0 0.0
  %2871 = vmatpush1.msra.mxu0 0.0
  %2872 = vmatprep.subr.mxu0 0.0
  %2873 = vmatpush1.msra.mxu0 0.0
  %2874 = vmatprep.subr.mxu0 0.0
  %2875 = vmatpush1.msra.mxu0 0.0
  %2876 = vmatprep.subr.mxu0 0.0
  %2877 = vmatpush1.msra.mxu0 0.0
  %2878 = vmatprep.subr.mxu0 0.0
  %2879 = vmatpush1.msra.mxu0 0.0
  %2880 = vmatprep.subr.mxu0 0.0
  %2881 = vmatpush1.msra.mxu0 0.0
  %2882 = vmatprep.subr.mxu0 0.0
  %2883 = vmatpush1.msra.mxu0 0.0
  %2884 = vmatprep.subr.mxu0 0.0
  %2885 = vmatpush1.msra.mxu0 0.0
  %2886 = vmatprep.subr.mxu0 0.0
  %2887 = vmatpush1.msra.mxu0 0.0
  %2888 = vmatprep.subr.mxu0 0.0
  %2889 = vmatpush1.msra.mxu0 0.0
  %2890 = vmatprep.subr.mxu0 0.0
  %2891 = vmatpush1.msra.mxu0 0.0
  %2892 = vmatprep.subr.mxu0 0.0
  %2893 = vmatpush1.msra.mxu0 0.0
  %2894 = vmatprep.subr.mxu0 0.0
  %2895 = vmatpush1.msra.mxu0 0.0
  %2896 = vmatprep.subr.mxu0 0.0
  %2897 = vmatpush1.msra.mxu0 0.0
  %2898 = vmatprep.subr.mxu0 0.0
  %2899 = vmatpush1.msra.mxu0 0.0
  %2900 = vmatprep.subr.mxu0 0.0
  %2901 = vmatpush1.msra.mxu0 0.0
  %2902 = vmatprep.subr.mxu0 0.0
  %2903 = vmatpush1.msra.mxu0 0.0
  %2904 = vmatprep.subr.mxu0 0.0
  %2905 = vmatpush1.msra.mxu0 0.0
  %2906 = vmatprep.subr.mxu0 0.0
  %2907 = vmatpush1.msra.mxu0 0.0
  %2908 = vmatprep.subr.mxu0 0.0
  %2909 = vmatpush1.msra.mxu0 0.0
  %2910 = vmatprep.subr.mxu0 0.0
  %2911 = vmatpush1.msra.mxu0 0.0
  %2912 = vmatprep.subr.mxu0 0.0
  %2913 = vmatpush1.msra.mxu0 0.0
  %2914 = vmatprep.subr.mxu0 0.0
  %2915 = vmatpush1.msra.mxu0 0.0
  %2916 = vmatprep.subr.mxu0 0.0
  %2917 = vmatpush1.msra.mxu0 0.0
  %2918 = vmatprep.subr.mxu0 0.0
  %2919 = vmatpush1.msra.mxu0 0.0
  %2920 = vmatprep.mubr.f32.mxu0 0.0
  %2921 = vmatmul.mubr.f32.gmra.mrb[0].mxu0 %v2854
  %v2922 = vpop.f32.mrb[0].mxu0
  %v2923 = vadd.f32 0.0, %v2922
  %v2924 = vpop.f32.mrb[0].mxu0
  %2925 = vdwg.mxu0
  %2927 = vrot.lane.b32.xlu0 %v2666, 64
  %v2928 = vpop.permute.xlu0 %2927
  %v2931 = vsel %vm356, %v2848, 0
  %2933 = vmatprep.subr.mxu0 0.0
  %2934 = vmatpush1.msra.mxu0 %v2928
  %2935 = vmatprep.subr.mxu0 0.0
  %2936 = vmatpush1.msra.mxu0 0.0
  %2937 = vmatprep.subr.mxu0 0.0
  %2938 = vmatpush1.msra.mxu0 0.0
  %2939 = vmatprep.subr.mxu0 0.0
  %2940 = vmatpush1.msra.mxu0 0.0
  %2941 = vmatprep.subr.mxu0 0.0
  %2942 = vmatpush1.msra.mxu0 0.0
  %2943 = vmatprep.subr.mxu0 0.0
  %2944 = vmatpush1.msra.mxu0 0.0
  %2945 = vmatprep.subr.mxu0 0.0
  %2946 = vmatpush1.msra.mxu0 0.0
  %2947 = vmatprep.subr.mxu0 0.0
  %2948 = vmatpush1.msra.mxu0 0.0
  %2949 = vmatprep.subr.mxu0 0.0
  %2950 = vmatpush1.msra.mxu0 0.0
  %2951 = vmatprep.subr.mxu0 0.0
  %2952 = vmatpush1.msra.mxu0 0.0
  %2953 = vmatprep.subr.mxu0 0.0
  %2954 = vmatpush1.msra.mxu0 0.0
  %2955 = vmatprep.subr.mxu0 0.0
  %2956 = vmatpush1.msra.mxu0 0.0
  %2957 = vmatprep.subr.mxu0 0.0
  %2958 = vmatpush1.msra.mxu0 0.0
  %2959 = vmatprep.subr.mxu0 0.0
  %2960 = vmatpush1.msra.mxu0 0.0
  %2961 = vmatprep.subr.mxu0 0.0
  %2962 = vmatpush1.msra.mxu0 0.0
  %2963 = vmatprep.subr.mxu0 0.0
  %2964 = vmatpush1.msra.mxu0 0.0
  %2965 = vmatprep.subr.mxu0 0.0
  %2966 = vmatpush1.msra.mxu0 0.0
  %2967 = vmatprep.subr.mxu0 0.0
  %2968 = vmatpush1.msra.mxu0 0.0
  %2969 = vmatprep.subr.mxu0 0.0
  %2970 = vmatpush1.msra.mxu0 0.0
  %2971 = vmatprep.subr.mxu0 0.0
  %2972 = vmatpush1.msra.mxu0 0.0
  %2973 = vmatprep.subr.mxu0 0.0
  %2974 = vmatpush1.msra.mxu0 0.0
  %2975 = vmatprep.subr.mxu0 0.0
  %2976 = vmatpush1.msra.mxu0 0.0
  %2977 = vmatprep.subr.mxu0 0.0
  %2978 = vmatpush1.msra.mxu0 0.0
  %2979 = vmatprep.subr.mxu0 0.0
  %2980 = vmatpush1.msra.mxu0 0.0
  %2981 = vmatprep.subr.mxu0 0.0
  %2982 = vmatpush1.msra.mxu0 0.0
  %2983 = vmatprep.subr.mxu0 0.0
  %2984 = vmatpush1.msra.mxu0 0.0
  %2985 = vmatprep.subr.mxu0 0.0
  %2986 = vmatpush1.msra.mxu0 0.0
  %2987 = vmatprep.subr.mxu0 0.0
  %2988 = vmatpush1.msra.mxu0 0.0
  %2989 = vmatprep.subr.mxu0 0.0
  %2990 = vmatpush1.msra.mxu0 0.0
  %2991 = vmatprep.subr.mxu0 0.0
  %2992 = vmatpush1.msra.mxu0 0.0
  %2993 = vmatprep.subr.mxu0 0.0
  %2994 = vmatpush1.msra.mxu0 0.0
  %2995 = vmatprep.subr.mxu0 0.0
  %2996 = vmatpush1.msra.mxu0 0.0
  %2997 = vmatprep.mubr.f32.mxu0 0.0
  %2998 = vmatmul.mubr.f32.gmra.mrb[0].mxu0 %v2931
  %v2999 = vpop.f32.mrb[0].mxu0
  %v3000 = vadd.f32 0.0, %v2999
  %v3001 = vpop.f32.mrb[0].mxu0
  %3002 = vdwg.mxu0
  %3003 = vrot.lane.b32.xlu0 %v2645, 112
  %v3004 = vpop.permute.xlu0 %3003
  %3005 = vrot.lane.b32.xlu0 %v2655, 80
  %v3006 = vpop.permute.xlu0 %3005
  %v3007 = vsel %vm186, %v3004, 0
  %v3009 = vsel %vm186, %v3006, 0
  %3011 = vmatprep.subr.mxu0 0.0
  %3012 = vmatpush1.xpose.msra.mxu0 %v3009
  %3013 = vmatprep.subr.mxu0 0.0
  %3014 = vmatpush1.xpose.msra.mxu0 0.0
  %3015 = vmatprep.subr.mxu0 0.0
  %3016 = vmatpush1.xpose.msra.mxu0 0.0
  %3017 = vmatprep.subr.mxu0 0.0
  %3018 = vmatpush1.xpose.msra.mxu0 0.0
  %3019 = vmatprep.subr.mxu0 0.0
  %3020 = vmatpush1.xpose.msra.mxu0 0.0
  %3021 = vmatprep.subr.mxu0 0.0
  %3022 = vmatpush1.xpose.msra.mxu0 0.0
  %3023 = vmatprep.subr.mxu0 0.0
  %3024 = vmatpush1.xpose.msra.mxu0 0.0
  %3025 = vmatprep.subr.mxu0 0.0
  %3026 = vmatpush1.xpose.msra.mxu0 0.0
  %3027 = vmatprep.subr.mxu0 0.0
  %3028 = vmatpush1.xpose.msra.mxu0 0.0
  %3029 = vmatprep.subr.mxu0 0.0
  %3030 = vmatpush1.xpose.msra.mxu0 0.0
  %3031 = vmatprep.subr.mxu0 0.0
  %3032 = vmatpush1.xpose.msra.mxu0 0.0
  %3033 = vmatprep.subr.mxu0 0.0
  %3034 = vmatpush1.xpose.msra.mxu0 0.0
  %3035 = vmatprep.subr.mxu0 0.0
  %3036 = vmatpush1.xpose.msra.mxu0 0.0
  %3037 = vmatprep.subr.mxu0 0.0
  %3038 = vmatpush1.xpose.msra.mxu0 0.0
  %3039 = vmatprep.subr.mxu0 0.0
  %3040 = vmatpush1.xpose.msra.mxu0 0.0
  %3041 = vmatprep.subr.mxu0 0.0
  %3042 = vmatpush1.xpose.msra.mxu0 0.0
  %3043 = vmatprep.subr.mxu0 0.0
  %3044 = vmatpush1.xpose.msra.mxu0 0.0
  %3045 = vmatprep.subr.mxu0 0.0
  %3046 = vmatpush1.xpose.msra.mxu0 0.0
  %3047 = vmatprep.subr.mxu0 0.0
  %3048 = vmatpush1.xpose.msra.mxu0 0.0
  %3049 = vmatprep.subr.mxu0 0.0
  %3050 = vmatpush1.xpose.msra.mxu0 0.0
  %3051 = vmatprep.subr.mxu0 0.0
  %3052 = vmatpush1.xpose.msra.mxu0 0.0
  %3053 = vmatprep.subr.mxu0 0.0
  %3054 = vmatpush1.xpose.msra.mxu0 0.0
  %3055 = vmatprep.subr.mxu0 0.0
  %3056 = vmatpush1.xpose.msra.mxu0 0.0
  %3057 = vmatprep.subr.mxu0 0.0
  %3058 = vmatpush1.xpose.msra.mxu0 0.0
  %3059 = vmatprep.subr.mxu0 0.0
  %3060 = vmatpush1.xpose.msra.mxu0 0.0
  %3061 = vmatprep.subr.mxu0 0.0
  %3062 = vmatpush1.xpose.msra.mxu0 0.0
  %3063 = vmatprep.subr.mxu0 0.0
  %3064 = vmatpush1.xpose.msra.mxu0 0.0
  %3065 = vmatprep.subr.mxu0 0.0
  %3066 = vmatpush1.xpose.msra.mxu0 0.0
  %3067 = vmatprep.subr.mxu0 0.0
  %3068 = vmatpush1.xpose.msra.mxu0 0.0
  %3069 = vmatprep.subr.mxu0 0.0
  %3070 = vmatpush1.xpose.msra.mxu0 0.0
  %3071 = vmatprep.subr.mxu0 0.0
  %3072 = vmatpush1.xpose.msra.mxu0 0.0
  %3073 = vmatprep.subr.mxu0 0.0
  %3074 = vmatpush1.xpose.msra.mxu0 0.0
  %3075 = vmatprep.mubr.f32.mxu0 0.0
  %3076 = vmatmul.mubr.f32.gmra.mrb[0].mxu0 %v3007
  %v3077 = vpop.f32.mrb[0].mxu0
  %v3078 = vadd.f32 0.0, %v3077
  %v3079 = vpop.f32.mrb[0].mxu0
  %3080 = vdwg.mxu0
  %3081 = vrot.lane.b32.xlu0 %v2646, 112
  %v3082 = vpop.permute.xlu0 %3081
  %3083 = vrot.lane.b32.xlu0 %v2656, 80
  %v3084 = vpop.permute.xlu0 %3083
  %v3085 = vsel %vm186, %v3082, 0
  %v3087 = vsel %vm186, %v3084, 0
  %3089 = vmatprep.subr.mxu0 0.0
  %3090 = vmatpush1.xpose.msra.mxu0 %v3087
  %3091 = vmatprep.subr.mxu0 0.0
  %3092 = vmatpush1.xpose.msra.mxu0 0.0
  %3093 = vmatprep.subr.mxu0 0.0
  %3094 = vmatpush1.xpose.msra.mxu0 0.0
  %3095 = vmatprep.subr.mxu0 0.0
  %3096 = vmatpush1.xpose.msra.mxu0 0.0
  %3097 = vmatprep.subr.mxu0 0.0
  %3098 = vmatpush1.xpose.msra.mxu0 0.0
  %3099 = vmatprep.subr.mxu0 0.0
  %3100 = vmatpush1.xpose.msra.mxu0 0.0
  %3101 = vmatprep.subr.mxu0 0.0
  %3102 = vmatpush1.xpose.msra.mxu0 0.0
  %3103 = vmatprep.subr.mxu0 0.0
  %3104 = vmatpush1.xpose.msra.mxu0 0.0
  %3105 = vmatprep.subr.mxu0 0.0
  %3106 = vmatpush1.xpose.msra.mxu0 0.0
  %3107 = vmatprep.subr.mxu0 0.0
  %3108 = vmatpush1.xpose.msra.mxu0 0.0
  %3109 = vmatprep.subr.mxu0 0.0
  %3110 = vmatpush1.xpose.msra.mxu0 0.0
  %3111 = vmatprep.subr.mxu0 0.0
  %3112 = vmatpush1.xpose.msra.mxu0 0.0
  %3113 = vmatprep.subr.mxu0 0.0
  %3114 = vmatpush1.xpose.msra.mxu0 0.0
  %3115 = vmatprep.subr.mxu0 0.0
  %3116 = vmatpush1.xpose.msra.mxu0 0.0
  %3117 = vmatprep.subr.mxu0 0.0
  %3118 = vmatpush1.xpose.msra.mxu0 0.0
  %3119 = vmatprep.subr.mxu0 0.0
  %3120 = vmatpush1.xpose.msra.mxu0 0.0
  %3121 = vmatprep.subr.mxu0 0.0
  %3122 = vmatpush1.xpose.msra.mxu0 0.0
  %3123 = vmatprep.subr.mxu0 0.0
  %3124 = vmatpush1.xpose.msra.mxu0 0.0
  %3125 = vmatprep.subr.mxu0 0.0
  %3126 = vmatpush1.xpose.msra.mxu0 0.0
  %3127 = vmatprep.subr.mxu0 0.0
  %3128 = vmatpush1.xpose.msra.mxu0 0.0
  %3129 = vmatprep.subr.mxu0 0.0
  %3130 = vmatpush1.xpose.msra.mxu0 0.0
  %3131 = vmatprep.subr.mxu0 0.0
  %3132 = vmatpush1.xpose.msra.mxu0 0.0
  %3133 = vmatprep.subr.mxu0 0.0
  %3134 = vmatpush1.xpose.msra.mxu0 0.0
  %3135 = vmatprep.subr.mxu0 0.0
  %3136 = vmatpush1.xpose.msra.mxu0 0.0
  %3137 = vmatprep.subr.mxu0 0.0
  %3138 = vmatpush1.xpose.msra.mxu0 0.0
  %3139 = vmatprep.subr.mxu0 0.0
  %3140 = vmatpush1.xpose.msra.mxu0 0.0
  %3141 = vmatprep.subr.mxu0 0.0
  %3142 = vmatpush1.xpose.msra.mxu0 0.0
  %3143 = vmatprep.subr.mxu0 0.0
  %3144 = vmatpush1.xpose.msra.mxu0 0.0
  %3145 = vmatprep.subr.mxu0 0.0
  %3146 = vmatpush1.xpose.msra.mxu0 0.0
  %3147 = vmatprep.subr.mxu0 0.0
  %3148 = vmatpush1.xpose.msra.mxu0 0.0
  %3149 = vmatprep.subr.mxu0 0.0
  %3150 = vmatpush1.xpose.msra.mxu0 0.0
  %3151 = vmatprep.subr.mxu0 0.0
  %3152 = vmatpush1.xpose.msra.mxu0 0.0
  %3153 = vmatprep.mubr.f32.mxu0 0.0
  %3154 = vmatmul.mubr.f32.gmra.mrb[0].mxu0 %v3085
  %v3155 = vpop.f32.mrb[0].mxu0
  %v3156 = vadd.f32 0.0, %v3155
  %v3157 = vpop.f32.mrb[0].mxu0
  %3158 = vdwg.mxu0
  %v3159 = vmul.f32 %v3078, 0.25
  %v3160 = vmul.f32 %v3156, 0.25
  %v3161 = vsel %vm352, %v3159, -3.4028235e+38
  %v3162 = vsel %vm353, %v3160, -3.4028235e+38
  %v3163 = vsel %vm356, %v3161, -inf
  %3164 = vmax.xlane.f32.xlu0 %v3163
  %v3165 = vpop.xlane.xlu0 %3164
  %v3166 = vsel %vm356, %v3162, -inf
  %3167 = vmax.xlane.f32.xlu0 %v3166
  %v3168 = vpop.xlane.xlu0 %3167
  %v3169 = vsub.f32 %v3161, %v3165
  %v3170 = vsub.f32 %v3162, %v3168
  %v3171 = vmul.f32 %v3169, 1.442695
  %v3172 = vpow.pop %v3171
  %v3173 = vmul.f32 %v3170, 1.442695
  %v3174 = vpow.pop %v3173
  %v3175 = vsel %vm356, %v3172, 0.0
  %3176 = vadd.xlane.f32.xlu0 %v3175
  %v3177 = vpop.xlane.xlu0 %3176
  %v3178 = vsel %vm356, %v3174, 0.0
  %3179 = vadd.xlane.f32.xlu0 %v3178
  %v3180 = vpop.xlane.xlu0 %3179
  %v3181 = vrcp.pop %v3177
  %v3182 = vrcp.pop %v3180
  %v3183 = vmul.f32 %v3172, %v3181
  %v3184 = vmul.f32 %v3174, %v3182
  %3185 = vrot.lane.b32.xlu0 %v2665, 48
  %v3186 = vpop.permute.xlu0 %3185
  %v3189 = vsel %vm356, %v3183, 0
  %3191 = vmatprep.subr.mxu0 0.0
  %3192 = vmatpush1.msra.mxu0 %v3186
  %3193 = vmatprep.subr.mxu0 0.0
  %3194 = vmatpush1.msra.mxu0 0.0
  %3195 = vmatprep.subr.mxu0 0.0
  %3196 = vmatpush1.msra.mxu0 0.0
  %3197 = vmatprep.subr.mxu0 0.0
  %3198 = vmatpush1.msra.mxu0 0.0
  %3199 = vmatprep.subr.mxu0 0.0
  %3200 = vmatpush1.msra.mxu0 0.0
  %3201 = vmatprep.subr.mxu0 0.0
  %3202 = vmatpush1.msra.mxu0 0.0
  %3203 = vmatprep.subr.mxu0 0.0
  %3204 = vmatpush1.msra.mxu0 0.0
  %3205 = vmatprep.subr.mxu0 0.0
  %3206 = vmatpush1.msra.mxu0 0.0
  %3207 = vmatprep.subr.mxu0 0.0
  %3208 = vmatpush1.msra.mxu0 0.0
  %3209 = vmatprep.subr.mxu0 0.0
  %3210 = vmatpush1.msra.mxu0 0.0
  %3211 = vmatprep.subr.mxu0 0.0
  %3212 = vmatpush1.msra.mxu0 0.0
  %3213 = vmatprep.subr.mxu0 0.0
  %3214 = vmatpush1.msra.mxu0 0.0
  %3215 = vmatprep.subr.mxu0 0.0
  %3216 = vmatpush1.msra.mxu0 0.0
  %3217 = vmatprep.subr.mxu0 0.0
  %3218 = vmatpush1.msra.mxu0 0.0
  %3219 = vmatprep.subr.mxu0 0.0
  %3220 = vmatpush1.msra.mxu0 0.0
  %3221 = vmatprep.subr.mxu0 0.0
  %3222 = vmatpush1.msra.mxu0 0.0
  %3223 = vmatprep.subr.mxu0 0.0
  %3224 = vmatpush1.msra.mxu0 0.0
  %3225 = vmatprep.subr.mxu0 0.0
  %3226 = vmatpush1.msra.mxu0 0.0
  %3227 = vmatprep.subr.mxu0 0.0
  %3228 = vmatpush1.msra.mxu0 0.0
  %3229 = vmatprep.subr.mxu0 0.0
  %3230 = vmatpush1.msra.mxu0 0.0
  %3231 = vmatprep.subr.mxu0 0.0
  %3232 = vmatpush1.msra.mxu0 0.0
  %3233 = vmatprep.subr.mxu0 0.0
  %3234 = vmatpush1.msra.mxu0 0.0
  %3235 = vmatprep.subr.mxu0 0.0
  %3236 = vmatpush1.msra.mxu0 0.0
  %3237 = vmatprep.subr.mxu0 0.0
  %3238 = vmatpush1.msra.mxu0 0.0
  %3239 = vmatprep.subr.mxu0 0.0
  %3240 = vmatpush1.msra.mxu0 0.0
  %3241 = vmatprep.subr.mxu0 0.0
  %3242 = vmatpush1.msra.mxu0 0.0
  %3243 = vmatprep.subr.mxu0 0.0
  %3244 = vmatpush1.msra.mxu0 0.0
  %3245 = vmatprep.subr.mxu0 0.0
  %3246 = vmatpush1.msra.mxu0 0.0
  %3247 = vmatprep.subr.mxu0 0.0
  %3248 = vmatpush1.msra.mxu0 0.0
  %3249 = vmatprep.subr.mxu0 0.0
  %3250 = vmatpush1.msra.mxu0 0.0
  %3251 = vmatprep.subr.mxu0 0.0
  %3252 = vmatpush1.msra.mxu0 0.0
  %3253 = vmatprep.subr.mxu0 0.0
  %3254 = vmatpush1.msra.mxu0 0.0
  %3255 = vmatprep.mubr.f32.mxu0 0.0
  %3256 = vmatmul.mubr.f32.gmra.mrb[0].mxu0 %v3189
  %v3257 = vpop.f32.mrb[0].mxu0
  %v3258 = vadd.f32 0.0, %v3257
  %v3259 = vpop.f32.mrb[0].mxu0
  %3260 = vdwg.mxu0
  %3261 = vrot.lane.b32.xlu0 %v2666, 48
  %v3262 = vpop.permute.xlu0 %3261
  %v3265 = vsel %vm356, %v3184, 0
  %3267 = vmatprep.subr.mxu0 0.0
  %3268 = vmatpush1.msra.mxu0 %v3262
  %3269 = vmatprep.subr.mxu0 0.0
  %3270 = vmatpush1.msra.mxu0 0.0
  %3271 = vmatprep.subr.mxu0 0.0
  %3272 = vmatpush1.msra.mxu0 0.0
  %3273 = vmatprep.subr.mxu0 0.0
  %3274 = vmatpush1.msra.mxu0 0.0
  %3275 = vmatprep.subr.mxu0 0.0
  %3276 = vmatpush1.msra.mxu0 0.0
  %3277 = vmatprep.subr.mxu0 0.0
  %3278 = vmatpush1.msra.mxu0 0.0
  %3279 = vmatprep.subr.mxu0 0.0
  %3280 = vmatpush1.msra.mxu0 0.0
  %3281 = vmatprep.subr.mxu0 0.0
  %3282 = vmatpush1.msra.mxu0 0.0
  %3283 = vmatprep.subr.mxu0 0.0
  %3284 = vmatpush1.msra.mxu0 0.0
  %3285 = vmatprep.subr.mxu0 0.0
  %3286 = vmatpush1.msra.mxu0 0.0
  %3287 = vmatprep.subr.mxu0 0.0
  %3288 = vmatpush1.msra.mxu0 0.0
  %3289 = vmatprep.subr.mxu0 0.0
  %3290 = vmatpush1.msra.mxu0 0.0
  %3291 = vmatprep.subr.mxu0 0.0
  %3292 = vmatpush1.msra.mxu0 0.0
  %3293 = vmatprep.subr.mxu0 0.0
  %3294 = vmatpush1.msra.mxu0 0.0
  %3295 = vmatprep.subr.mxu0 0.0
  %3296 = vmatpush1.msra.mxu0 0.0
  %3297 = vmatprep.subr.mxu0 0.0
  %3298 = vmatpush1.msra.mxu0 0.0
  %3299 = vmatprep.subr.mxu0 0.0
  %3300 = vmatpush1.msra.mxu0 0.0
  %3301 = vmatprep.subr.mxu0 0.0
  %3302 = vmatpush1.msra.mxu0 0.0
  %3303 = vmatprep.subr.mxu0 0.0
  %3304 = vmatpush1.msra.mxu0 0.0
  %3305 = vmatprep.subr.mxu0 0.0
  %3306 = vmatpush1.msra.mxu0 0.0
  %3307 = vmatprep.subr.mxu0 0.0
  %3308 = vmatpush1.msra.mxu0 0.0
  %3309 = vmatprep.subr.mxu0 0.0
  %3310 = vmatpush1.msra.mxu0 0.0
  %3311 = vmatprep.subr.mxu0 0.0
  %3312 = vmatpush1.msra.mxu0 0.0
  %3313 = vmatprep.subr.mxu0 0.0
  %3314 = vmatpush1.msra.mxu0 0.0
  %3315 = vmatprep.subr.mxu0 0.0
  %3316 = vmatpush1.msra.mxu0 0.0
  %3317 = vmatprep.subr.mxu0 0.0
  %3318 = vmatpush1.msra.mxu0 0.0
  %3319 = vmatprep.subr.mxu0 0.0
  %3320 = vmatpush1.msra.mxu0 0.0
  %3321 = vmatprep.subr.mxu0 0.0
  %3322 = vmatpush1.msra.mxu0 0.0
  %3323 = vmatprep.subr.mxu0 0.0
  %3324 = vmatpush1.msra.mxu0 0.0
  %3325 = vmatprep.subr.mxu0 0.0
  %3326 = vmatpush1.msra.mxu0 0.0
  %3327 = vmatprep.subr.mxu0 0.0
  %3328 = vmatpush1.msra.mxu0 0.0
  %3329 = vmatprep.subr.mxu0 0.0
  %3330 = vmatpush1.msra.mxu0 0.0
  %3331 = vmatprep.mubr.f32.mxu0 0.0
  %3332 = vmatmul.mubr.f32.gmra.mrb[0].mxu0 %v3265
  %v3333 = vpop.f32.mrb[0].mxu0
  %v3334 = vadd.f32 0.0, %v3333
  %v3335 = vpop.f32.mrb[0].mxu0
  %3336 = vdwg.mxu0
  %3339 = vrot.lane.b32.xlu0 %v3258, 16
  %v3340 = vpop.permute.xlu0 %3339
  %3341 = vrot.lane.b32.xlu0 %v3334, 16
  %v3342 = vpop.permute.xlu0 %3341
  %v3345 = vsel %vm186, %v2923, %v3340
  %v3346 = vsel %vm186, %v3000, %v3342
  %v3347 = vlaneseq
  %v3348 = vshrl.u32 %v3347, 7
  %v3349 = vsub.s32 0, %v3348
  %v3350 = vrot.slane %v2554, %v3349
  %3355 = vrot.lane.b32.xlu0 %v2542, 32
  %v3356 = vpop.permute.xlu0 %3355
  %3357 = vrot.lane.b32.xlu0 %v2544, 32
  %v3358 = vpop.permute.xlu0 %3357
  %3359 = vrot.lane.b32.xlu0 %v2546, 32
  %v3360 = vpop.permute.xlu0 %3359
  %3361 = vrot.lane.b32.xlu0 %v2548, 32
  %v3362 = vpop.permute.xlu0 %3361
  %v3368 = vsel %vm75, %v3345, 0
  %v3371 = vsel %vm75, %v3346, 0
  %3373 = vmatprep.subr.mxu0 0.0
  %3374 = vmatpush1.msra.mxu0 %v3356
  %3375 = vmatprep.subr.mxu0 0.0
  %3376 = vmatpush1.msra.mxu0 %v3358
  %3377 = vmatprep.subr.mxu0 0.0
  %3378 = vmatpush1.msra.mxu0 %v3360
  %3379 = vmatprep.subr.mxu0 0.0
  %3380 = vmatpush1.msra.mxu0 %v3362
  %3381 = vmatprep.subr.mxu0 0.0
  %3382 = vmatpush1.msra.mxu0 0.0
  %3383 = vmatprep.subr.mxu0 0.0
  %3384 = vmatpush1.msra.mxu0 0.0
  %3385 = vmatprep.subr.mxu0 0.0
  %3386 = vmatpush1.msra.mxu0 0.0
  %3387 = vmatprep.subr.mxu0 0.0
  %3388 = vmatpush1.msra.mxu0 0.0
  %3389 = vmatprep.subr.mxu0 0.0
  %3390 = vmatpush1.msra.mxu0 0.0
  %3391 = vmatprep.subr.mxu0 0.0
  %3392 = vmatpush1.msra.mxu0 0.0
  %3393 = vmatprep.subr.mxu0 0.0
  %3394 = vmatpush1.msra.mxu0 0.0
  %3395 = vmatprep.subr.mxu0 0.0
  %3396 = vmatpush1.msra.mxu0 0.0
  %3397 = vmatprep.subr.mxu0 0.0
  %3398 = vmatpush1.msra.mxu0 0.0
  %3399 = vmatprep.subr.mxu0 0.0
  %3400 = vmatpush1.msra.mxu0 0.0
  %3401 = vmatprep.subr.mxu0 0.0
  %3402 = vmatpush1.msra.mxu0 0.0
  %3403 = vmatprep.subr.mxu0 0.0
  %3404 = vmatpush1.msra.mxu0 0.0
  %3405 = vmatprep.subr.mxu0 0.0
  %3406 = vmatpush1.msra.mxu0 0.0
  %3407 = vmatprep.subr.mxu0 0.0
  %3408 = vmatpush1.msra.mxu0 0.0
  %3409 = vmatprep.subr.mxu0 0.0
  %3410 = vmatpush1.msra.mxu0 0.0
  %3411 = vmatprep.subr.mxu0 0.0
  %3412 = vmatpush1.msra.mxu0 0.0
  %3413 = vmatprep.subr.mxu0 0.0
  %3414 = vmatpush1.msra.mxu0 0.0
  %3415 = vmatprep.subr.mxu0 0.0
  %3416 = vmatpush1.msra.mxu0 0.0
  %3417 = vmatprep.subr.mxu0 0.0
  %3418 = vmatpush1.msra.mxu0 0.0
  %3419 = vmatprep.subr.mxu0 0.0
  %3420 = vmatpush1.msra.mxu0 0.0
  %3421 = vmatprep.subr.mxu0 0.0
  %3422 = vmatpush1.msra.mxu0 0.0
  %3423 = vmatprep.subr.mxu0 0.0
  %3424 = vmatpush1.msra.mxu0 0.0
  %3425 = vmatprep.subr.mxu0 0.0
  %3426 = vmatpush1.msra.mxu0 0.0
  %3427 = vmatprep.subr.mxu0 0.0
  %3428 = vmatpush1.msra.mxu0 0.0
  %3429 = vmatprep.subr.mxu0 0.0
  %3430 = vmatpush1.msra.mxu0 0.0
  %3431 = vmatprep.subr.mxu0 0.0
  %3432 = vmatpush1.msra.mxu0 0.0
  %3433 = vmatprep.subr.mxu0 0.0
  %3434 = vmatpush1.msra.mxu0 0.0
  %3435 = vmatprep.subr.mxu0 0.0
  %3436 = vmatpush1.msra.mxu0 0.0
  %3437 = vmatprep.mubr.f32.mxu0 0.0
  %3438 = vmatmul.mubr.f32.gmra.mrb[0].mxu0 %v3368
  %v3439 = vpop.f32.mrb[0].mxu0
  %v3440 = vadd.f32 %v3350, %v3439
  %v3441 = vpop.f32.mrb[0].mxu0
  %3442 = vmatprep.mubr.f32.mxu0 0.0
  %3443 = vmatmul.mubr.f32.gmra.mrb[0].mxu0 %v3371
  %v3444 = vpop.f32.mrb[0].mxu0
  %v3445 = vadd.f32 %v3350, %v3444
  %v3446 = vpop.f32.mrb[0].mxu0
  %3447 = vdwg.mxu0
  %v3448 = vadd.f32 %v3440, %v2539
  %v3449 = vadd.f32 %v3445, %v2540
  %v3450 = vsel %vm75, %v3448, 0.0
  %3451 = vadd.xlane.f32.xlu0 %v3450
  %v3452 = vpop.xlane.xlu0 %3451
  %v3453 = vsel %vm75, %v3449, 0.0
  %3454 = vadd.xlane.f32.xlu0 %v3453
  %v3455 = vpop.xlane.xlu0 %3454
  %v3456 = vmul.f32 %v3452, %v986
  %v3457 = vmul.f32 %v3455, %v986
  %v3458 = vsub.f32 %v3448, %v3456
  %v3459 = vsub.f32 %v3449, %v3457
  %v3460 = vmul.f32 %v3458, %v3458
  %v3461 = vmul.f32 %v3459, %v3459
  %v3462 = vsel %vm75, %v3460, 0.0
  %3463 = vadd.xlane.f32.xlu0 %v3462
  %v3464 = vpop.xlane.xlu0 %3463
  %v3465 = vsel %vm75, %v3461, 0.0
  %3466 = vadd.xlane.f32.xlu0 %v3465
  %v3467 = vpop.xlane.xlu0 %3466
  %v3468 = vmul.f32 %v3464, %v986
  %v3469 = vmul.f32 %v3467, %v986
  %v3470 = vadd.f32 %v3468, 1e-12
  %v3471 = vadd.f32 %v3469, 1e-12
  %v3472 = vrsqrt.pop %v3470
  %v3473 = vrsqrt.pop %v3471
  %v3474 = vmul.f32 %v3458, %v3472
  %v3475 = vmul.f32 %v3459, %v3473
  %v3476 = vlaneseq
  %v3477 = vshrl.u32 %v3476, 7
  %v3478 = vsub.s32 0, %v3477
  %v3479 = vrot.slane %v2555, %v3478
  %v3480 = vmul.f32 %v3474, %v3479
  %v3481 = vmul.f32 %v3475, %v3479
  %v3482 = vlaneseq
  %v3483 = vshrl.u32 %v3482, 7
  %v3484 = vsub.s32 0, %v3483
  %v3485 = vrot.slane %v2556, %v3484
  %v3486 = vadd.f32 %v3480, %v3485
  %v3487 = vadd.f32 %v3481, %v3485
  %s3488 = scalar_lea.vmem %s5, 2
  %v3489 = vld [vmem:[%s3488] sm:$0x1]
  %v3490 = vlaneseq
  %v3491 = vshrl.u32 %v3490, 7
  %v3492 = vsub.s32 0, %v3491
  %v3493 = vrot.slane %v3489, %v3492
  %v3495 = vsel %vm75, %v3486, 0
  %v3498 = vsel %vm75, %v3487, 0
  %3500 = vmatprep.subr.mxu0 0.0
  %3501 = vmatpush1.msra.mxu0 %v2543
  %3502 = vmatprep.subr.mxu0 0.0
  %3503 = vmatpush1.msra.mxu0 %v2545
  %3504 = vmatprep.subr.mxu0 0.0
  %3505 = vmatpush1.msra.mxu0 %v2547
  %3506 = vmatprep.subr.mxu0 0.0
  %3507 = vmatpush1.msra.mxu0 %v2549
  %3508 = vmatprep.subr.mxu0 0.0
  %3509 = vmatpush1.msra.mxu0 0.0
  %3510 = vmatprep.subr.mxu0 0.0
  %3511 = vmatpush1.msra.mxu0 0.0
  %3512 = vmatprep.subr.mxu0 0.0
  %3513 = vmatpush1.msra.mxu0 0.0
  %3514 = vmatprep.subr.mxu0 0.0
  %3515 = vmatpush1.msra.mxu0 0.0
  %3516 = vmatprep.subr.mxu0 0.0
  %3517 = vmatpush1.msra.mxu0 0.0
  %3518 = vmatprep.subr.mxu0 0.0
  %3519 = vmatpush1.msra.mxu0 0.0
  %3520 = vmatprep.subr.mxu0 0.0
  %3521 = vmatpush1.msra.mxu0 0.0
  %3522 = vmatprep.subr.mxu0 0.0
  %3523 = vmatpush1.msra.mxu0 0.0
  %3524 = vmatprep.subr.mxu0 0.0
  %3525 = vmatpush1.msra.mxu0 0.0
  %3526 = vmatprep.subr.mxu0 0.0
  %3527 = vmatpush1.msra.mxu0 0.0
  %3528 = vmatprep.subr.mxu0 0.0
  %3529 = vmatpush1.msra.mxu0 0.0
  %3530 = vmatprep.subr.mxu0 0.0
  %3531 = vmatpush1.msra.mxu0 0.0
  %3532 = vmatprep.subr.mxu0 0.0
  %3533 = vmatpush1.msra.mxu0 0.0
  %3534 = vmatprep.subr.mxu0 0.0
  %3535 = vmatpush1.msra.mxu0 0.0
  %3536 = vmatprep.subr.mxu0 0.0
  %3537 = vmatpush1.msra.mxu0 0.0
  %3538 = vmatprep.subr.mxu0 0.0
  %3539 = vmatpush1.msra.mxu0 0.0
  %3540 = vmatprep.subr.mxu0 0.0
  %3541 = vmatpush1.msra.mxu0 0.0
  %3542 = vmatprep.subr.mxu0 0.0
  %3543 = vmatpush1.msra.mxu0 0.0
  %3544 = vmatprep.subr.mxu0 0.0
  %3545 = vmatpush1.msra.mxu0 0.0
  %3546 = vmatprep.subr.mxu0 0.0
  %3547 = vmatpush1.msra.mxu0 0.0
  %3548 = vmatprep.subr.mxu0 0.0
  %3549 = vmatpush1.msra.mxu0 0.0
  %3550 = vmatprep.subr.mxu0 0.0
  %3551 = vmatpush1.msra.mxu0 0.0
  %3552 = vmatprep.subr.mxu0 0.0
  %3553 = vmatpush1.msra.mxu0 0.0
  %3554 = vmatprep.subr.mxu0 0.0
  %3555 = vmatpush1.msra.mxu0 0.0
  %3556 = vmatprep.subr.mxu0 0.0
  %3557 = vmatpush1.msra.mxu0 0.0
  %3558 = vmatprep.subr.mxu0 0.0
  %3559 = vmatpush1.msra.mxu0 0.0
  %3560 = vmatprep.subr.mxu0 0.0
  %3561 = vmatpush1.msra.mxu0 0.0
  %3562 = vmatprep.subr.mxu0 0.0
  %3563 = vmatpush1.msra.mxu0 0.0
  %3564 = vmatprep.mubr.f32.mxu0 0.0
  %3565 = vmatmul.mubr.f32.gmra.mrb[0].mxu0 %v3495
  %v3566 = vpop.f32.mrb[0].mxu0
  %v3567 = vadd.f32 %v3493, %v3566
  %v3568 = vpop.f32.mrb[0].mxu0
  %3569 = vmatprep.mubr.f32.mxu0 0.0
  %3570 = vmatmul.mubr.f32.gmra.mrb[0].mxu0 %v3498
  %v3571 = vpop.f32.mrb[0].mxu0
  %v3572 = vadd.f32 %v3493, %v3571
  %v3573 = vpop.f32.mrb[0].mxu0
  %3574 = vdwg.mxu0
  %v3575 = vmul.f32 %v3567, %v3567
  %v3576 = vmul.f32 %v3572, %v3572
  %v3577 = vmul.f32 %v3567, %v3575
  %v3578 = vmul.f32 %v3572, %v3576
  %v3579 = vmul.f32 %v3577, 0.044715
  %v3580 = vmul.f32 %v3578, 0.044715
  %v3581 = vadd.f32 %v3567, %v3579
  %v3582 = vadd.f32 %v3572, %v3580
  %v3583 = vmul.f32 %v3581, 0.7978846
  %v3584 = vmul.f32 %v3582, 0.7978846
  %v3585 = vtanh.pop %v3583
  %v3586 = vtanh.pop %v3584
  %v3587 = vadd.f32 %v3585, 1.0
  %v3588 = vadd.f32 %v3586, 1.0
  %v3589 = vmul.f32 %v3587, 0.5
  %v3590 = vmul.f32 %v3588, 0.5
  %v3591 = vmul.f32 %v3567, %v3589
  %v3592 = vmul.f32 %v3572, %v3590
  %s3593 = scalar_lea.vmem %s3, 256
  %v3594 = vld [vmem:[%s3593] sm:$0xff]
  %v3595 = vld [vmem:[%s3593 + $0x8] sm:$0xff]
  %v3596 = vld [vmem:[%s3593 + $0x10] sm:$0xff]
  %v3597 = vld [vmem:[%s3593 + $0x18] sm:$0xff]
  %v3598 = vld [vmem:[%s3593 + $0x20] sm:$0xff]
  %v3599 = vld [vmem:[%s3593 + $0x28] sm:$0xff]
  %v3600 = vld [vmem:[%s3593 + $0x30] sm:$0xff]
  %v3601 = vld [vmem:[%s3593 + $0x38] sm:$0xff]
  %v3602 = vld [vmem:[%s3593 + $0x40] sm:$0xff]
  %v3603 = vld [vmem:[%s3593 + $0x48] sm:$0xff]
  %v3604 = vld [vmem:[%s3593 + $0x50] sm:$0xff]
  %v3605 = vld [vmem:[%s3593 + $0x58] sm:$0xff]
  %v3606 = vld [vmem:[%s3593 + $0x60] sm:$0xff]
  %v3607 = vld [vmem:[%s3593 + $0x68] sm:$0xff]
  %v3608 = vld [vmem:[%s3593 + $0x70] sm:$0xff]
  %v3609 = vld [vmem:[%s3593 + $0x78] sm:$0xff]
  %v3610 = vlaneseq
  %v3611 = vshrl.u32 %v3610, 7
  %v3612 = vsub.s32 0, %v3611
  %v3613 = vrot.slane %v2557, %v3612
  %3614 = vmatprep.subr.mxu0 0.0
  %3615 = vmatpush1.msra.mxu0 %v3594
  %3616 = vmatprep.subr.mxu0 0.0
  %3617 = vmatpush1.msra.mxu0 %v3595
  %3618 = vmatprep.subr.mxu0 0.0
  %3619 = vmatpush1.msra.mxu0 %v3596
  %3620 = vmatprep.subr.mxu0 0.0
  %3621 = vmatpush1.msra.mxu0 %v3597
  %3622 = vmatprep.subr.mxu0 0.0
  %3623 = vmatpush1.msra.mxu0 %v3598
  %3624 = vmatprep.subr.mxu0 0.0
  %3625 = vmatpush1.msra.mxu0 %v3599
  %3626 = vmatprep.subr.mxu0 0.0
  %3627 = vmatpush1.msra.mxu0 %v3600
  %3628 = vmatprep.subr.mxu0 0.0
  %3629 = vmatpush1.msra.mxu0 %v3601
  %3630 = vmatprep.subr.mxu0 0.0
  %3631 = vmatpush1.msra.mxu0 %v3602
  %3632 = vmatprep.subr.mxu0 0.0
  %3633 = vmatpush1.msra.mxu0 %v3603
  %3634 = vmatprep.subr.mxu0 0.0
  %3635 = vmatpush1.msra.mxu0 %v3604
  %3636 = vmatprep.subr.mxu0 0.0
  %3637 = vmatpush1.msra.mxu0 %v3605
  %3638 = vmatprep.subr.mxu0 0.0
  %3639 = vmatpush1.msra.mxu0 %v3606
  %3640 = vmatprep.subr.mxu0 0.0
  %3641 = vmatpush1.msra.mxu0 %v3607
  %3642 = vmatprep.subr.mxu0 0.0
  %3643 = vmatpush1.msra.mxu0 %v3608
  %3644 = vmatprep.subr.mxu0 0.0
  %3645 = vmatpush1.msra.mxu0 %v3609
  %3646 = vmatprep.subr.mxu0 0.0
  %3647 = vmatpush1.msra.mxu0 0.0
  %3648 = vmatprep.subr.mxu0 0.0
  %3649 = vmatpush1.msra.mxu0 0.0
  %3650 = vmatprep.subr.mxu0 0.0
  %3651 = vmatpush1.msra.mxu0 0.0
  %3652 = vmatprep.subr.mxu0 0.0
  %3653 = vmatpush1.msra.mxu0 0.0
  %3654 = vmatprep.subr.mxu0 0.0
  %3655 = vmatpush1.msra.mxu0 0.0
  %3656 = vmatprep.subr.mxu0 0.0
  %3657 = vmatpush1.msra.mxu0 0.0
  %3658 = vmatprep.subr.mxu0 0.0
  %3659 = vmatpush1.msra.mxu0 0.0
  %3660 = vmatprep.subr.mxu0 0.0
  %3661 = vmatpush1.msra.mxu0 0.0
  %3662 = vmatprep.subr.mxu0 0.0
  %3663 = vmatpush1.msra.mxu0 0.0
  %3664 = vmatprep.subr.mxu0 0.0
  %3665 = vmatpush1.msra.mxu0 0.0
  %3666 = vmatprep.subr.mxu0 0.0
  %3667 = vmatpush1.msra.mxu0 0.0
  %3668 = vmatprep.subr.mxu0 0.0
  %3669 = vmatpush1.msra.mxu0 0.0
  %3670 = vmatprep.subr.mxu0 0.0
  %3671 = vmatpush1.msra.mxu0 0.0
  %3672 = vmatprep.subr.mxu0 0.0
  %3673 = vmatpush1.msra.mxu0 0.0
  %3674 = vmatprep.subr.mxu0 0.0
  %3675 = vmatpush1.msra.mxu0 0.0
  %3676 = vmatprep.subr.mxu0 0.0
  %3677 = vmatpush1.msra.mxu0 0.0
  %3678 = vmatprep.mubr.f32.mxu0 0.0
  %3679 = vmatmul.mubr.f32.gmra.mrb[0].mxu0 %v3591
  %v3680 = vpop.f32.mrb[0].mxu0
  %v3681 = vadd.f32 %v3613, %v3680
  %v3682 = vpop.f32.mrb[0].mxu0
  %3683 = vmatprep.mubr.f32.mxu0 0.0
  %3684 = vmatmul.mubr.f32.gmra.mrb[0].mxu0 %v3592
  %v3685 = vpop.f32.mrb[0].mxu0
  %v3686 = vadd.f32 %v3613, %v3685
  %v3687 = vpop.f32.mrb[0].mxu0
  %3688 = vdwg.mxu0
  %v3689 = vadd.f32 %v3681, %v3486
  %v3690 = vadd.f32 %v3686, %v3487
  %v3691 = vsel %vm75, %v3689, 0.0
  %3692 = vadd.xlane.f32.xlu0 %v3691
  %v3693 = vpop.xlane.xlu0 %3692
  %v3694 = vsel %vm75, %v3690, 0.0
  %3695 = vadd.xlane.f32.xlu0 %v3694
  %v3696 = vpop.xlane.xlu0 %3695
  %v3697 = vmul.f32 %v3693, %v986
  %v3698 = vmul.f32 %v3696, %v986
  %v3699 = vsub.f32 %v3689, %v3697
  %v3700 = vsub.f32 %v3690, %v3698
  %v3701 = vmul.f32 %v3699, %v3699
  %v3702 = vmul.f32 %v3700, %v3700
  %v3703 = vsel %vm75, %v3701, 0.0
  %3704 = vadd.xlane.f32.xlu0 %v3703
  %v3705 = vpop.xlane.xlu0 %3704
  %v3706 = vsel %vm75, %v3702, 0.0
  %3707 = vadd.xlane.f32.xlu0 %v3706
  %v3708 = vpop.xlane.xlu0 %3707
  %v3709 = vmul.f32 %v3705, %v986
  %v3710 = vmul.f32 %v3708, %v986
  %v3711 = vadd.f32 %v3709, 1e-12
  %v3712 = vadd.f32 %v3710, 1e-12
  %v3713 = vrsqrt.pop %v3711
  %v3714 = vrsqrt.pop %v3712
  %v3715 = vmul.f32 %v3699, %v3713
  %v3716 = vmul.f32 %v3700, %v3714
  %v3717 = vlaneseq
  %v3718 = vshrl.u32 %v3717, 7
  %v3719 = vsub.s32 0, %v3718
  %v3720 = vrot.slane %v2558, %v3719
  %v3721 = vmul.f32 %v3715, %v3720
  %v3722 = vmul.f32 %v3716, %v3720
  %v3723 = vlaneseq
  %v3724 = vshrl.u32 %v3723, 7
  %v3725 = vsub.s32 0, %v3724
  %v3726 = vrot.slane %v2559, %v3725
  %v3727 = vadd.f32 %v3721, %v3726
  %v3728 = vadd.f32 %v3722, %v3726
  %s3729 = scalar_lea.vmem %s2, 192
  %v3730 = vld [vmem:[%s3729] sm:$0xff]
  %v3731 = vld [vmem:[%s3729 + $0x8] sm:$0xff]
  %v3732 = vld [vmem:[%s3729 + $0x10] sm:$0xff]
  %v3733 = vld [vmem:[%s3729 + $0x18] sm:$0xff]
  %v3734 = vld [vmem:[%s3729 + $0x20] sm:$0xff]
  %v3735 = vld [vmem:[%s3729 + $0x28] sm:$0xff]
  %v3736 = vld [vmem:[%s3729 + $0x30] sm:$0xff]
  %v3737 = vld [vmem:[%s3729 + $0x38] sm:$0xff]
  %s3738 = scalar_lea.vmem %s4, 48
  %v3739 = vld [vmem:[%s3738] sm:$0x1]
  %v3740 = vld [vmem:[%s3738 + $0x1] sm:$0x1]
  %v3741 = vld [vmem:[%s3738 + $0x2] sm:$0x1]
  %v3742 = vld [vmem:[%s3738 + $0x3] sm:$0x1]
  %v3743 = vld [vmem:[%s3738 + $0x4] sm:$0x1]
  %v3744 = vld [vmem:[%s3738 + $0x5] sm:$0x1]
  %v3745 = vld [vmem:[%s3738 + $0x6] sm:$0x1]
  %v3746 = vld [vmem:[%s3738 + $0x7] sm:$0x1]
  %v3747 = vld [vmem:[%s3738 + $0x8] sm:$0x1]
  %v3749 = vsel %vm75, %v3727, 0
  %v3752 = vsel %vm75, %v3728, 0
  %3754 = vmatprep.subr.mxu0 0.0
  %3755 = vmatpush1.msra.mxu0 %v3730
  %3756 = vmatprep.subr.mxu0 0.0
  %3757 = vmatpush1.msra.mxu0 %v3732
  %3758 = vmatprep.subr.mxu0 0.0
  %3759 = vmatpush1.msra.mxu0 %v3734
  %3760 = vmatprep.subr.mxu0 0.0
  %3761 = vmatpush1.msra.mxu0 %v3736
  %3762 = vmatprep.subr.mxu0 0.0
  %3763 = vmatpush1.msra.mxu0 0.0
  %3764 = vmatprep.subr.mxu0 0.0
  %3765 = vmatpush1.msra.mxu0 0.0
  %3766 = vmatprep.subr.mxu0 0.0
  %3767 = vmatpush1.msra.mxu0 0.0
  %3768 = vmatprep.subr.mxu0 0.0
  %3769 = vmatpush1.msra.mxu0 0.0
  %3770 = vmatprep.subr.mxu0 0.0
  %3771 = vmatpush1.msra.mxu0 0.0
  %3772 = vmatprep.subr.mxu0 0.0
  %3773 = vmatpush1.msra.mxu0 0.0
  %3774 = vmatprep.subr.mxu0 0.0
  %3775 = vmatpush1.msra.mxu0 0.0
  %3776 = vmatprep.subr.mxu0 0.0
  %3777 = vmatpush1.msra.mxu0 0.0
  %3778 = vmatprep.subr.mxu0 0.0
  %3779 = vmatpush1.msra.mxu0 0.0
  %3780 = vmatprep.subr.mxu0 0.0
  %3781 = vmatpush1.msra.mxu0 0.0
  %3782 = vmatprep.subr.mxu0 0.0
  %3783 = vmatpush1.msra.mxu0 0.0
  %3784 = vmatprep.subr.mxu0 0.0
  %3785 = vmatpush1.msra.mxu0 0.0
  %3786 = vmatprep.subr.mxu0 0.0
  %3787 = vmatpush1.msra.mxu0 0.0
  %3788 = vmatprep.subr.mxu0 0.0
  %3789 = vmatpush1.msra.mxu0 0.0
  %3790 = vmatprep.subr.mxu0 0.0
  %3791 = vmatpush1.msra.mxu0 0.0
  %3792 = vmatprep.subr.mxu0 0.0
  %3793 = vmatpush1.msra.mxu0 0.0
  %3794 = vmatprep.subr.mxu0 0.0
  %3795 = vmatpush1.msra.mxu0 0.0
  %3796 = vmatprep.subr.mxu0 0.0
  %3797 = vmatpush1.msra.mxu0 0.0
  %3798 = vmatprep.subr.mxu0 0.0
  %3799 = vmatpush1.msra.mxu0 0.0
  %3800 = vmatprep.subr.mxu0 0.0
  %3801 = vmatpush1.msra.mxu0 0.0
  %3802 = vmatprep.subr.mxu0 0.0
  %3803 = vmatpush1.msra.mxu0 0.0
  %3804 = vmatprep.subr.mxu0 0.0
  %3805 = vmatpush1.msra.mxu0 0.0
  %3806 = vmatprep.subr.mxu0 0.0
  %3807 = vmatpush1.msra.mxu0 0.0
  %3808 = vmatprep.subr.mxu0 0.0
  %3809 = vmatpush1.msra.mxu0 0.0
  %3810 = vmatprep.subr.mxu0 0.0
  %3811 = vmatpush1.msra.mxu0 0.0
  %3812 = vmatprep.subr.mxu0 0.0
  %3813 = vmatpush1.msra.mxu0 0.0
  %3814 = vmatprep.subr.mxu0 0.0
  %3815 = vmatpush1.msra.mxu0 0.0
  %3816 = vmatprep.subr.mxu0 0.0
  %3817 = vmatpush1.msra.mxu0 0.0
  %3818 = vmatprep.mubr.f32.mxu0 0.0
  %3819 = vmatmul.mubr.f32.gmra.mrb[0].mxu0 %v3749
  %v3820 = vpop.f32.mrb[0].mxu0
  %v3821 = vadd.f32 0.0, %v3820
  %v3822 = vpop.f32.mrb[0].mxu0
  %3823 = vmatprep.mubr.f32.mxu0 0.0
  %3824 = vmatmul.mubr.f32.gmra.mrb[0].mxu0 %v3752
  %v3825 = vpop.f32.mrb[0].mxu0
  %v3826 = vadd.f32 0.0, %v3825
  %v3827 = vpop.f32.mrb[0].mxu0
  %3828 = vdwg.mxu0
  %v3829 = vlaneseq
  %v3830 = vshrl.u32 %v3829, 7
  %v3831 = vsub.s32 0, %v3830
  %v3832 = vrot.slane %v3739, %v3831
  %v3833 = vadd.f32 %v3821, %v3832
  %v3834 = vadd.f32 %v3826, %v3832
  %v3835 = vlaneseq
  %v3836 = vshrl.u32 %v3835, 7
  %v3837 = vsub.s32 0, %v3836
  %v3838 = vrot.slane %v3740, %v3837
  %3840 = vrot.lane.b32.xlu0 %v3838, 32
  %v3841 = vpop.permute.xlu0 %3840
  %v3843 = vadd.f32 %v3821, %v3841
  %v3844 = vadd.f32 %v3826, %v3841
  %v3845 = vlaneseq
  %v3846 = vshrl.u32 %v3845, 7
  %v3847 = vsub.s32 0, %v3846
  %v3848 = vrot.slane %v3741, %v3847
  %3850 = vrot.lane.b32.xlu0 %v3848, 64
  %v3851 = vpop.permute.xlu0 %3850
  %v3853 = vadd.f32 %v3821, %v3851
  %v3854 = vadd.f32 %v3826, %v3851
  %3856 = vrot.lane.b32.xlu0 %v3843, 96
  %v3857 = vpop.permute.xlu0 %3856
  %v3859 = vsel %vm186, %v3833, 0
  %v3861 = vsel %vm186, %v3857, 0
  %3863 = vmatprep.subr.mxu0 0.0
  %3864 = vmatpush1.xpose.msra.mxu0 %v3861
  %3865 = vmatprep.subr.mxu0 0.0
  %3866 = vmatpush1.xpose.msra.mxu0 0.0
  %3867 = vmatprep.subr.mxu0 0.0
  %3868 = vmatpush1.xpose.msra.mxu0 0.0
  %3869 = vmatprep.subr.mxu0 0.0
  %3870 = vmatpush1.xpose.msra.mxu0 0.0
  %3871 = vmatprep.subr.mxu0 0.0
  %3872 = vmatpush1.xpose.msra.mxu0 0.0
  %3873 = vmatprep.subr.mxu0 0.0
  %3874 = vmatpush1.xpose.msra.mxu0 0.0
  %3875 = vmatprep.subr.mxu0 0.0
  %3876 = vmatpush1.xpose.msra.mxu0 0.0
  %3877 = vmatprep.subr.mxu0 0.0
  %3878 = vmatpush1.xpose.msra.mxu0 0.0
  %3879 = vmatprep.subr.mxu0 0.0
  %3880 = vmatpush1.xpose.msra.mxu0 0.0
  %3881 = vmatprep.subr.mxu0 0.0
  %3882 = vmatpush1.xpose.msra.mxu0 0.0
  %3883 = vmatprep.subr.mxu0 0.0
  %3884 = vmatpush1.xpose.msra.mxu0 0.0
  %3885 = vmatprep.subr.mxu0 0.0
  %3886 = vmatpush1.xpose.msra.mxu0 0.0
  %3887 = vmatprep.subr.mxu0 0.0
  %3888 = vmatpush1.xpose.msra.mxu0 0.0
  %3889 = vmatprep.subr.mxu0 0.0
  %3890 = vmatpush1.xpose.msra.mxu0 0.0
  %3891 = vmatprep.subr.mxu0 0.0
  %3892 = vmatpush1.xpose.msra.mxu0 0.0
  %3893 = vmatprep.subr.mxu0 0.0
  %3894 = vmatpush1.xpose.msra.mxu0 0.0
  %3895 = vmatprep.subr.mxu0 0.0
  %3896 = vmatpush1.xpose.msra.mxu0 0.0
  %3897 = vmatprep.subr.mxu0 0.0
  %3898 = vmatpush1.xpose.msra.mxu0 0.0
  %3899 = vmatprep.subr.mxu0 0.0
  %3900 = vmatpush1.xpose.msra.mxu0 0.0
  %3901 = vmatprep.subr.mxu0 0.0
  %3902 = vmatpush1.xpose.msra.mxu0 0.0
  %3903 = vmatprep.subr.mxu0 0.0
  %3904 = vmatpush1.xpose.msra.mxu0 0.0
  %3905 = vmatprep.subr.mxu0 0.0
  %3906 = vmatpush1.xpose.msra.mxu0 0.0
  %3907 = vmatprep.subr.mxu0 0.0
  %3908 = vmatpush1.xpose.msra.mxu0 0.0
  %3909 = vmatprep.subr.mxu0 0.0
  %3910 = vmatpush1.xpose.msra.mxu0 0.0
  %3911 = vmatprep.subr.mxu0 0.0
  %3912 = vmatpush1.xpose.msra.mxu0 0.0
  %3913 = vmatprep.subr.mxu0 0.0
  %3914 = vmatpush1.xpose.msra.mxu0 0.0
  %3915 = vmatprep.subr.mxu0 0.0
  %3916 = vmatpush1.xpose.msra.mxu0 0.0
  %3917 = vmatprep.subr.mxu0 0.0
  %3918 = vmatpush1.xpose.msra.mxu0 0.0
  %3919 = vmatprep.subr.mxu0 0.0
  %3920 = vmatpush1.xpose.msra.mxu0 0.0
  %3921 = vmatprep.subr.mxu0 0.0
  %3922 = vmatpush1.xpose.msra.mxu0 0.0
  %3923 = vmatprep.subr.mxu0 0.0
  %3924 = vmatpush1.xpose.msra.mxu0 0.0
  %3925 = vmatprep.subr.mxu0 0.0
  %3926 = vmatpush1.xpose.msra.mxu0 0.0
  %3927 = vmatprep.mubr.f32.mxu0 0.0
  %3928 = vmatmul.mubr.f32.gmra.mrb[0].mxu0 %v3859
  %v3929 = vpop.f32.mrb[0].mxu0
  %v3930 = vadd.f32 0.0, %v3929
  %v3931 = vpop.f32.mrb[0].mxu0
  %3932 = vdwg.mxu0
  %3934 = vrot.lane.b32.xlu0 %v3844, 96
  %v3935 = vpop.permute.xlu0 %3934
  %v3937 = vsel %vm186, %v3834, 0
  %v3939 = vsel %vm186, %v3935, 0
  %3941 = vmatprep.subr.mxu0 0.0
  %3942 = vmatpush1.xpose.msra.mxu0 %v3939
  %3943 = vmatprep.subr.mxu0 0.0
  %3944 = vmatpush1.xpose.msra.mxu0 0.0
  %3945 = vmatprep.subr.mxu0 0.0
  %3946 = vmatpush1.xpose.msra.mxu0 0.0
  %3947 = vmatprep.subr.mxu0 0.0
  %3948 = vmatpush1.xpose.msra.mxu0 0.0
  %3949 = vmatprep.subr.mxu0 0.0
  %3950 = vmatpush1.xpose.msra.mxu0 0.0
  %3951 = vmatprep.subr.mxu0 0.0
  %3952 = vmatpush1.xpose.msra.mxu0 0.0
  %3953 = vmatprep.subr.mxu0 0.0
  %3954 = vmatpush1.xpose.msra.mxu0 0.0
  %3955 = vmatprep.subr.mxu0 0.0
  %3956 = vmatpush1.xpose.msra.mxu0 0.0
  %3957 = vmatprep.subr.mxu0 0.0
  %3958 = vmatpush1.xpose.msra.mxu0 0.0
  %3959 = vmatprep.subr.mxu0 0.0
  %3960 = vmatpush1.xpose.msra.mxu0 0.0
  %3961 = vmatprep.subr.mxu0 0.0
  %3962 = vmatpush1.xpose.msra.mxu0 0.0
  %3963 = vmatprep.subr.mxu0 0.0
  %3964 = vmatpush1.xpose.msra.mxu0 0.0
  %3965 = vmatprep.subr.mxu0 0.0
  %3966 = vmatpush1.xpose.msra.mxu0 0.0
  %3967 = vmatprep.subr.mxu0 0.0
  %3968 = vmatpush1.xpose.msra.mxu0 0.0
  %3969 = vmatprep.subr.mxu0 0.0
  %3970 = vmatpush1.xpose.msra.mxu0 0.0
  %3971 = vmatprep.subr.mxu0 0.0
  %3972 = vmatpush1.xpose.msra.mxu0 0.0
  %3973 = vmatprep.subr.mxu0 0.0
  %3974 = vmatpush1.xpose.msra.mxu0 0.0
  %3975 = vmatprep.subr.mxu0 0.0
  %3976 = vmatpush1.xpose.msra.mxu0 0.0
  %3977 = vmatprep.subr.mxu0 0.0
  %3978 = vmatpush1.xpose.msra.mxu0 0.0
  %3979 = vmatprep.subr.mxu0 0.0
  %3980 = vmatpush1.xpose.msra.mxu0 0.0
  %3981 = vmatprep.subr.mxu0 0.0
  %3982 = vmatpush1.xpose.msra.mxu0 0.0
  %3983 = vmatprep.subr.mxu0 0.0
  %3984 = vmatpush1.xpose.msra.mxu0 0.0
  %3985 = vmatprep.subr.mxu0 0.0
  %3986 = vmatpush1.xpose.msra.mxu0 0.0
  %3987 = vmatprep.subr.mxu0 0.0
  %3988 = vmatpush1.xpose.msra.mxu0 0.0
  %3989 = vmatprep.subr.mxu0 0.0
  %3990 = vmatpush1.xpose.msra.mxu0 0.0
  %3991 = vmatprep.subr.mxu0 0.0
  %3992 = vmatpush1.xpose.msra.mxu0 0.0
  %3993 = vmatprep.subr.mxu0 0.0
  %3994 = vmatpush1.xpose.msra.mxu0 0.0
  %3995 = vmatprep.subr.mxu0 0.0
  %3996 = vmatpush1.xpose.msra.mxu0 0.0
  %3997 = vmatprep.subr.mxu0 0.0
  %3998 = vmatpush1.xpose.msra.mxu0 0.0
  %3999 = vmatprep.subr.mxu0 0.0
  %4000 = vmatpush1.xpose.msra.mxu0 0.0
  %4001 = vmatprep.subr.mxu0 0.0
  %4002 = vmatpush1.xpose.msra.mxu0 0.0
  %4003 = vmatprep.subr.mxu0 0.0
  %4004 = vmatpush1.xpose.msra.mxu0 0.0
  %4005 = vmatprep.mubr.f32.mxu0 0.0
  %4006 = vmatmul.mubr.f32.gmra.mrb[0].mxu0 %v3937
  %v4007 = vpop.f32.mrb[0].mxu0
  %v4008 = vadd.f32 0.0, %v4007
  %v4009 = vpop.f32.mrb[0].mxu0
  %4010 = vdwg.mxu0
  %v4011 = vmul.f32 %v3930, 0.25
  %v4012 = vmul.f32 %v4008, 0.25
  %v4013 = vsel %vm352, %v4011, -3.4028235e+38
  %v4014 = vsel %vm353, %v4012, -3.4028235e+38
  %v4015 = vsel %vm356, %v4013, -inf
  %4016 = vmax.xlane.f32.xlu0 %v4015
  %v4017 = vpop.xlane.xlu0 %4016
  %v4018 = vsel %vm356, %v4014, -inf
  %4019 = vmax.xlane.f32.xlu0 %v4018
  %v4020 = vpop.xlane.xlu0 %4019
  %v4021 = vsub.f32 %v4013, %v4017
  %v4022 = vsub.f32 %v4014, %v4020
  %v4023 = vmul.f32 %v4021, 1.442695
  %v4024 = vpow.pop %v4023
  %v4025 = vmul.f32 %v4022, 1.442695
  %v4026 = vpow.pop %v4025
  %v4027 = vsel %vm356, %v4024, 0.0
  %4028 = vadd.xlane.f32.xlu0 %v4027
  %v4029 = vpop.xlane.xlu0 %4028
  %v4030 = vsel %vm356, %v4026, 0.0
  %4031 = vadd.xlane.f32.xlu0 %v4030
  %v4032 = vpop.xlane.xlu0 %4031
  %v4033 = vrcp.pop %v4029
  %v4034 = vrcp.pop %v4032
  %v4035 = vmul.f32 %v4024, %v4033
  %v4036 = vmul.f32 %v4026, %v4034
  %4038 = vrot.lane.b32.xlu0 %v3853, 64
  %v4039 = vpop.permute.xlu0 %4038
  %v4042 = vsel %vm356, %v4035, 0
  %4044 = vmatprep.subr.mxu0 0.0
  %4045 = vmatpush1.msra.mxu0 %v4039
  %4046 = vmatprep.subr.mxu0 0.0
  %4047 = vmatpush1.msra.mxu0 0.0
  %4048 = vmatprep.subr.mxu0 0.0
  %4049 = vmatpush1.msra.mxu0 0.0
  %4050 = vmatprep.subr.mxu0 0.0
  %4051 = vmatpush1.msra.mxu0 0.0
  %4052 = vmatprep.subr.mxu0 0.0
  %4053 = vmatpush1.msra.mxu0 0.0
  %4054 = vmatprep.subr.mxu0 0.0
  %4055 = vmatpush1.msra.mxu0 0.0
  %4056 = vmatprep.subr.mxu0 0.0
  %4057 = vmatpush1.msra.mxu0 0.0
  %4058 = vmatprep.subr.mxu0 0.0
  %4059 = vmatpush1.msra.mxu0 0.0
  %4060 = vmatprep.subr.mxu0 0.0
  %4061 = vmatpush1.msra.mxu0 0.0
  %4062 = vmatprep.subr.mxu0 0.0
  %4063 = vmatpush1.msra.mxu0 0.0
  %4064 = vmatprep.subr.mxu0 0.0
  %4065 = vmatpush1.msra.mxu0 0.0
  %4066 = vmatprep.subr.mxu0 0.0
  %4067 = vmatpush1.msra.mxu0 0.0
  %4068 = vmatprep.subr.mxu0 0.0
  %4069 = vmatpush1.msra.mxu0 0.0
  %4070 = vmatprep.subr.mxu0 0.0
  %4071 = vmatpush1.msra.mxu0 0.0
  %4072 = vmatprep.subr.mxu0 0.0
  %4073 = vmatpush1.msra.mxu0 0.0
  %4074 = vmatprep.subr.mxu0 0.0
  %4075 = vmatpush1.msra.mxu0 0.0
  %4076 = vmatprep.subr.mxu0 0.0
  %4077 = vmatpush1.msra.mxu0 0.0
  %4078 = vmatprep.subr.mxu0 0.0
  %4079 = vmatpush1.msra.mxu0 0.0
  %4080 = vmatprep.subr.mxu0 0.0
  %4081 = vmatpush1.msra.mxu0 0.0
  %4082 = vmatprep.subr.mxu0 0.0
  %4083 = vmatpush1.msra.mxu0 0.0
  %4084 = vmatprep.subr.mxu0 0.0
  %4085 = vmatpush1.msra.mxu0 0.0
  %4086 = vmatprep.subr.mxu0 0.0
  %4087 = vmatpush1.msra.mxu0 0.0
  %4088 = vmatprep.subr.mxu0 0.0
  %4089 = vmatpush1.msra.mxu0 0.0
  %4090 = vmatprep.subr.mxu0 0.0
  %4091 = vmatpush1.msra.mxu0 0.0
  %4092 = vmatprep.subr.mxu0 0.0
  %4093 = vmatpush1.msra.mxu0 0.0
  %4094 = vmatprep.subr.mxu0 0.0
  %4095 = vmatpush1.msra.mxu0 0.0
  %4096 = vmatprep.subr.mxu0 0.0
  %4097 = vmatpush1.msra.mxu0 0.0
  %4098 = vmatprep.subr.mxu0 0.0
  %4099 = vmatpush1.msra.mxu0 0.0
  %4100 = vmatprep.subr.mxu0 0.0
  %4101 = vmatpush1.msra.mxu0 0.0
  %4102 = vmatprep.subr.mxu0 0.0
  %4103 = vmatpush1.msra.mxu0 0.0
  %4104 = vmatprep.subr.mxu0 0.0
  %4105 = vmatpush1.msra.mxu0 0.0
  %4106 = vmatprep.subr.mxu0 0.0
  %4107 = vmatpush1.msra.mxu0 0.0
  %4108 = vmatprep.mubr.f32.mxu0 0.0
  %4109 = vmatmul.mubr.f32.gmra.mrb[0].mxu0 %v4042
  %v4110 = vpop.f32.mrb[0].mxu0
  %v4111 = vadd.f32 0.0, %v4110
  %v4112 = vpop.f32.mrb[0].mxu0
  %4113 = vdwg.mxu0
  %4115 = vrot.lane.b32.xlu0 %v3854, 64
  %v4116 = vpop.permute.xlu0 %4115
  %v4119 = vsel %vm356, %v4036, 0
  %4121 = vmatprep.subr.mxu0 0.0
  %4122 = vmatpush1.msra.mxu0 %v4116
  %4123 = vmatprep.subr.mxu0 0.0
  %4124 = vmatpush1.msra.mxu0 0.0
  %4125 = vmatprep.subr.mxu0 0.0
  %4126 = vmatpush1.msra.mxu0 0.0
  %4127 = vmatprep.subr.mxu0 0.0
  %4128 = vmatpush1.msra.mxu0 0.0
  %4129 = vmatprep.subr.mxu0 0.0
  %4130 = vmatpush1.msra.mxu0 0.0
  %4131 = vmatprep.subr.mxu0 0.0
  %4132 = vmatpush1.msra.mxu0 0.0
  %4133 = vmatprep.subr.mxu0 0.0
  %4134 = vmatpush1.msra.mxu0 0.0
  %4135 = vmatprep.subr.mxu0 0.0
  %4136 = vmatpush1.msra.mxu0 0.0
  %4137 = vmatprep.subr.mxu0 0.0
  %4138 = vmatpush1.msra.mxu0 0.0
  %4139 = vmatprep.subr.mxu0 0.0
  %4140 = vmatpush1.msra.mxu0 0.0
  %4141 = vmatprep.subr.mxu0 0.0
  %4142 = vmatpush1.msra.mxu0 0.0
  %4143 = vmatprep.subr.mxu0 0.0
  %4144 = vmatpush1.msra.mxu0 0.0
  %4145 = vmatprep.subr.mxu0 0.0
  %4146 = vmatpush1.msra.mxu0 0.0
  %4147 = vmatprep.subr.mxu0 0.0
  %4148 = vmatpush1.msra.mxu0 0.0
  %4149 = vmatprep.subr.mxu0 0.0
  %4150 = vmatpush1.msra.mxu0 0.0
  %4151 = vmatprep.subr.mxu0 0.0
  %4152 = vmatpush1.msra.mxu0 0.0
  %4153 = vmatprep.subr.mxu0 0.0
  %4154 = vmatpush1.msra.mxu0 0.0
  %4155 = vmatprep.subr.mxu0 0.0
  %4156 = vmatpush1.msra.mxu0 0.0
  %4157 = vmatprep.subr.mxu0 0.0
  %4158 = vmatpush1.msra.mxu0 0.0
  %4159 = vmatprep.subr.mxu0 0.0
  %4160 = vmatpush1.msra.mxu0 0.0
  %4161 = vmatprep.subr.mxu0 0.0
  %4162 = vmatpush1.msra.mxu0 0.0
  %4163 = vmatprep.subr.mxu0 0.0
  %4164 = vmatpush1.msra.mxu0 0.0
  %4165 = vmatprep.subr.mxu0 0.0
  %4166 = vmatpush1.msra.mxu0 0.0
  %4167 = vmatprep.subr.mxu0 0.0
  %4168 = vmatpush1.msra.mxu0 0.0
  %4169 = vmatprep.subr.mxu0 0.0
  %4170 = vmatpush1.msra.mxu0 0.0
  %4171 = vmatprep.subr.mxu0 0.0
  %4172 = vmatpush1.msra.mxu0 0.0
  %4173 = vmatprep.subr.mxu0 0.0
  %4174 = vmatpush1.msra.mxu0 0.0
  %4175 = vmatprep.subr.mxu0 0.0
  %4176 = vmatpush1.msra.mxu0 0.0
  %4177 = vmatprep.subr.mxu0 0.0
  %4178 = vmatpush1.msra.mxu0 0.0
  %4179 = vmatprep.subr.mxu0 0.0
  %4180 = vmatpush1.msra.mxu0 0.0
  %4181 = vmatprep.subr.mxu0 0.0
  %4182 = vmatpush1.msra.mxu0 0.0
  %4183 = vmatprep.subr.mxu0 0.0
  %4184 = vmatpush1.msra.mxu0 0.0
  %4185 = vmatprep.mubr.f32.mxu0 0.0
  %4186 = vmatmul.mubr.f32.gmra.mrb[0].mxu0 %v4119
  %v4187 = vpop.f32.mrb[0].mxu0
  %v4188 = vadd.f32 0.0, %v4187
  %v4189 = vpop.f32.mrb[0].mxu0
  %4190 = vdwg.mxu0
  %4191 = vrot.lane.b32.xlu0 %v3833, 112
  %v4192 = vpop.permute.xlu0 %4191
  %4193 = vrot.lane.b32.xlu0 %v3843, 80
  %v4194 = vpop.permute.xlu0 %4193
  %v4195 = vsel %vm186, %v4192, 0
  %v4197 = vsel %vm186, %v4194, 0
  %4199 = vmatprep.subr.mxu0 0.0
  %4200 = vmatpush1.xpose.msra.mxu0 %v4197
  %4201 = vmatprep.subr.mxu0 0.0
  %4202 = vmatpush1.xpose.msra.mxu0 0.0
  %4203 = vmatprep.subr.mxu0 0.0
  %4204 = vmatpush1.xpose.msra.mxu0 0.0
  %4205 = vmatprep.subr.mxu0 0.0
  %4206 = vmatpush1.xpose.msra.mxu0 0.0
  %4207 = vmatprep.subr.mxu0 0.0
  %4208 = vmatpush1.xpose.msra.mxu0 0.0
  %4209 = vmatprep.subr.mxu0 0.0
  %4210 = vmatpush1.xpose.msra.mxu0 0.0
  %4211 = vmatprep.subr.mxu0 0.0
  %4212 = vmatpush1.xpose.msra.mxu0 0.0
  %4213 = vmatprep.subr.mxu0 0.0
  %4214 = vmatpush1.xpose.msra.mxu0 0.0
  %4215 = vmatprep.subr.mxu0 0.0
  %4216 = vmatpush1.xpose.msra.mxu0 0.0
  %4217 = vmatprep.subr.mxu0 0.0
  %4218 = vmatpush1.xpose.msra.mxu0 0.0
  %4219 = vmatprep.subr.mxu0 0.0
  %4220 = vmatpush1.xpose.msra.mxu0 0.0
  %4221 = vmatprep.subr.mxu0 0.0
  %4222 = vmatpush1.xpose.msra.mxu0 0.0
  %4223 = vmatprep.subr.mxu0 0.0
  %4224 = vmatpush1.xpose.msra.mxu0 0.0
  %4225 = vmatprep.subr.mxu0 0.0
  %4226 = vmatpush1.xpose.msra.mxu0 0.0
  %4227 = vmatprep.subr.mxu0 0.0
  %4228 = vmatpush1.xpose.msra.mxu0 0.0
  %4229 = vmatprep.subr.mxu0 0.0
  %4230 = vmatpush1.xpose.msra.mxu0 0.0
  %4231 = vmatprep.subr.mxu0 0.0
  %4232 = vmatpush1.xpose.msra.mxu0 0.0
  %4233 = vmatprep.subr.mxu0 0.0
  %4234 = vmatpush1.xpose.msra.mxu0 0.0
  %4235 = vmatprep.subr.mxu0 0.0
  %4236 = vmatpush1.xpose.msra.mxu0 0.0
  %4237 = vmatprep.subr.mxu0 0.0
  %4238 = vmatpush1.xpose.msra.mxu0 0.0
  %4239 = vmatprep.subr.mxu0 0.0
  %4240 = vmatpush1.xpose.msra.mxu0 0.0
  %4241 = vmatprep.subr.mxu0 0.0
  %4242 = vmatpush1.xpose.msra.mxu0 0.0
  %4243 = vmatprep.subr.mxu0 0.0
  %4244 = vmatpush1.xpose.msra.mxu0 0.0
  %4245 = vmatprep.subr.mxu0 0.0
  %4246 = vmatpush1.xpose.msra.mxu0 0.0
  %4247 = vmatprep.subr.mxu0 0.0
  %4248 = vmatpush1.xpose.msra.mxu0 0.0
  %4249 = vmatprep.subr.mxu0 0.0
  %4250 = vmatpush1.xpose.msra.mxu0 0.0
  %4251 = vmatprep.subr.mxu0 0.0
  %4252 = vmatpush1.xpose.msra.mxu0 0.0
  %4253 = vmatprep.subr.mxu0 0.0
  %4254 = vmatpush1.xpose.msra.mxu0 0.0
  %4255 = vmatprep.subr.mxu0 0.0
  %4256 = vmatpush1.xpose.msra.mxu0 0.0
  %4257 = vmatprep.subr.mxu0 0.0
  %4258 = vmatpush1.xpose.msra.mxu0 0.0
  %4259 = vmatprep.subr.mxu0 0.0
  %4260 = vmatpush1.xpose.msra.mxu0 0.0
  %4261 = vmatprep.subr.mxu0 0.0
  %4262 = vmatpush1.xpose.msra.mxu0 0.0
  %4263 = vmatprep.mubr.f32.mxu0 0.0
  %4264 = vmatmul.mubr.f32.gmra.mrb[0].mxu0 %v4195
  %v4265 = vpop.f32.mrb[0].mxu0
  %v4266 = vadd.f32 0.0, %v4265
  %v4267 = vpop.f32.mrb[0].mxu0
  %4268 = vdwg.mxu0
  %4269 = vrot.lane.b32.xlu0 %v3834, 112
  %v4270 = vpop.permute.xlu0 %4269
  %4271 = vrot.lane.b32.xlu0 %v3844, 80
  %v4272 = vpop.permute.xlu0 %4271
  %v4273 = vsel %vm186, %v4270, 0
  %v4275 = vsel %vm186, %v4272, 0
  %4277 = vmatprep.subr.mxu0 0.0
  %4278 = vmatpush1.xpose.msra.mxu0 %v4275
  %4279 = vmatprep.subr.mxu0 0.0
  %4280 = vmatpush1.xpose.msra.mxu0 0.0
  %4281 = vmatprep.subr.mxu0 0.0
  %4282 = vmatpush1.xpose.msra.mxu0 0.0
  %4283 = vmatprep.subr.mxu0 0.0
  %4284 = vmatpush1.xpose.msra.mxu0 0.0
  %4285 = vmatprep.subr.mxu0 0.0
  %4286 = vmatpush1.xpose.msra.mxu0 0.0
  %4287 = vmatprep.subr.mxu0 0.0
  %4288 = vmatpush1.xpose.msra.mxu0 0.0
  %4289 = vmatprep.subr.mxu0 0.0
  %4290 = vmatpush1.xpose.msra.mxu0 0.0
  %4291 = vmatprep.subr.mxu0 0.0
  %4292 = vmatpush1.xpose.msra.mxu0 0.0
  %4293 = vmatprep.subr.mxu0 0.0
  %4294 = vmatpush1.xpose.msra.mxu0 0.0
  %4295 = vmatprep.subr.mxu0 0.0
  %4296 = vmatpush1.xpose.msra.mxu0 0.0
  %4297 = vmatprep.subr.mxu0 0.0
  %4298 = vmatpush1.xpose.msra.mxu0 0.0
  %4299 = vmatprep.subr.mxu0 0.0
  %4300 = vmatpush1.xpose.msra.mxu0 0.0
  %4301 = vmatprep.subr.mxu0 0.0
  %4302 = vmatpush1.xpose.msra.mxu0 0.0
  %4303 = vmatprep.subr.mxu0 0.0
  %4304 = vmatpush1.xpose.msra.mxu0 0.0
  %4305 = vmatprep.subr.mxu0 0.0
  %4306 = vmatpush1.xpose.msra.mxu0 0.0
  %4307 = vmatprep.subr.mxu0 0.0
  %4308 = vmatpush1.xpose.msra.mxu0 0.0
  %4309 = vmatprep.subr.mxu0 0.0
  %4310 = vmatpush1.xpose.msra.mxu0 0.0
  %4311 = vmatprep.subr.mxu0 0.0
  %4312 = vmatpush1.xpose.msra.mxu0 0.0
  %4313 = vmatprep.subr.mxu0 0.0
  %4314 = vmatpush1.xpose.msra.mxu0 0.0
  %4315 = vmatprep.subr.mxu0 0.0
  %4316 = vmatpush1.xpose.msra.mxu0 0.0
  %4317 = vmatprep.subr.mxu0 0.0
  %4318 = vmatpush1.xpose.msra.mxu0 0.0
  %4319 = vmatprep.subr.mxu0 0.0
  %4320 = vmatpush1.xpose.msra.mxu0 0.0
  %4321 = vmatprep.subr.mxu0 0.0
  %4322 = vmatpush1.xpose.msra.mxu0 0.0
  %4323 = vmatprep.subr.mxu0 0.0
  %4324 = vmatpush1.xpose.msra.mxu0 0.0
  %4325 = vmatprep.subr.mxu0 0.0
  %4326 = vmatpush1.xpose.msra.mxu0 0.0
  %4327 = vmatprep.subr.mxu0 0.0
  %4328 = vmatpush1.xpose.msra.mxu0 0.0
  %4329 = vmatprep.subr.mxu0 0.0
  %4330 = vmatpush1.xpose.msra.mxu0 0.0
  %4331 = vmatprep.subr.mxu0 0.0
  %4332 = vmatpush1.xpose.msra.mxu0 0.0
  %4333 = vmatprep.subr.mxu0 0.0
  %4334 = vmatpush1.xpose.msra.mxu0 0.0
  %4335 = vmatprep.subr.mxu0 0.0
  %4336 = vmatpush1.xpose.msra.mxu0 0.0
  %4337 = vmatprep.subr.mxu0 0.0
  %4338 = vmatpush1.xpose.msra.mxu0 0.0
  %4339 = vmatprep.subr.mxu0 0.0
  %4340 = vmatpush1.xpose.msra.mxu0 0.0
  %4341 = vmatprep.mubr.f32.mxu0 0.0
  %4342 = vmatmul.mubr.f32.gmra.mrb[0].mxu0 %v4273
  %v4343 = vpop.f32.mrb[0].mxu0
  %v4344 = vadd.f32 0.0, %v4343
  %v4345 = vpop.f32.mrb[0].mxu0
  %4346 = vdwg.mxu0
  %v4347 = vmul.f32 %v4266, 0.25
  %v4348 = vmul.f32 %v4344, 0.25
  %v4349 = vsel %vm352, %v4347, -3.4028235e+38
  %v4350 = vsel %vm353, %v4348, -3.4028235e+38
  %v4351 = vsel %vm356, %v4349, -inf
  %4352 = vmax.xlane.f32.xlu0 %v4351
  %v4353 = vpop.xlane.xlu0 %4352
  %v4354 = vsel %vm356, %v4350, -inf
  %4355 = vmax.xlane.f32.xlu0 %v4354
  %v4356 = vpop.xlane.xlu0 %4355
  %v4357 = vsub.f32 %v4349, %v4353
  %v4358 = vsub.f32 %v4350, %v4356
  %v4359 = vmul.f32 %v4357, 1.442695
  %v4360 = vpow.pop %v4359
  %v4361 = vmul.f32 %v4358, 1.442695
  %v4362 = vpow.pop %v4361
  %v4363 = vsel %vm356, %v4360, 0.0
  %4364 = vadd.xlane.f32.xlu0 %v4363
  %v4365 = vpop.xlane.xlu0 %4364
  %v4366 = vsel %vm356, %v4362, 0.0
  %4367 = vadd.xlane.f32.xlu0 %v4366
  %v4368 = vpop.xlane.xlu0 %4367
  %v4369 = vrcp.pop %v4365
  %v4370 = vrcp.pop %v4368
  %v4371 = vmul.f32 %v4360, %v4369
  %v4372 = vmul.f32 %v4362, %v4370
  %4373 = vrot.lane.b32.xlu0 %v3853, 48
  %v4374 = vpop.permute.xlu0 %4373
  %v4377 = vsel %vm356, %v4371, 0
  %4379 = vmatprep.subr.mxu0 0.0
  %4380 = vmatpush1.msra.mxu0 %v4374
  %4381 = vmatprep.subr.mxu0 0.0
  %4382 = vmatpush1.msra.mxu0 0.0
  %4383 = vmatprep.subr.mxu0 0.0
  %4384 = vmatpush1.msra.mxu0 0.0
  %4385 = vmatprep.subr.mxu0 0.0
  %4386 = vmatpush1.msra.mxu0 0.0
  %4387 = vmatprep.subr.mxu0 0.0
  %4388 = vmatpush1.msra.mxu0 0.0
  %4389 = vmatprep.subr.mxu0 0.0
  %4390 = vmatpush1.msra.mxu0 0.0
  %4391 = vmatprep.subr.mxu0 0.0
  %4392 = vmatpush1.msra.mxu0 0.0
  %4393 = vmatprep.subr.mxu0 0.0
  %4394 = vmatpush1.msra.mxu0 0.0
  %4395 = vmatprep.subr.mxu0 0.0
  %4396 = vmatpush1.msra.mxu0 0.0
  %4397 = vmatprep.subr.mxu0 0.0
  %4398 = vmatpush1.msra.mxu0 0.0
  %4399 = vmatprep.subr.mxu0 0.0
  %4400 = vmatpush1.msra.mxu0 0.0
  %4401 = vmatprep.subr.mxu0 0.0
  %4402 = vmatpush1.msra.mxu0 0.0
  %4403 = vmatprep.subr.mxu0 0.0
  %4404 = vmatpush1.msra.mxu0 0.0
  %4405 = vmatprep.subr.mxu0 0.0
  %4406 = vmatpush1.msra.mxu0 0.0
  %4407 = vmatprep.subr.mxu0 0.0
  %4408 = vmatpush1.msra.mxu0 0.0
  %4409 = vmatprep.subr.mxu0 0.0
  %4410 = vmatpush1.msra.mxu0 0.0
  %4411 = vmatprep.subr.mxu0 0.0
  %4412 = vmatpush1.msra.mxu0 0.0
  %4413 = vmatprep.subr.mxu0 0.0
  %4414 = vmatpush1.msra.mxu0 0.0
  %4415 = vmatprep.subr.mxu0 0.0
  %4416 = vmatpush1.msra.mxu0 0.0
  %4417 = vmatprep.subr.mxu0 0.0
  %4418 = vmatpush1.msra.mxu0 0.0
  %4419 = vmatprep.subr.mxu0 0.0
  %4420 = vmatpush1.msra.mxu0 0.0
  %4421 = vmatprep.subr.mxu0 0.0
  %4422 = vmatpush1.msra.mxu0 0.0
  %4423 = vmatprep.subr.mxu0 0.0
  %4424 = vmatpush1.msra.mxu0 0.0
  %4425 = vmatprep.subr.mxu0 0.0
  %4426 = vmatpush1.msra.mxu0 0.0
  %4427 = vmatprep.subr.mxu0 0.0
  %4428 = vmatpush1.msra.mxu0 0.0
  %4429 = vmatprep.subr.mxu0 0.0
  %4430 = vmatpush1.msra.mxu0 0.0
  %4431 = vmatprep.subr.mxu0 0.0
  %4432 = vmatpush1.msra.mxu0 0.0
  %4433 = vmatprep.subr.mxu0 0.0
  %4434 = vmatpush1.msra.mxu0 0.0
  %4435 = vmatprep.subr.mxu0 0.0
  %4436 = vmatpush1.msra.mxu0 0.0
  %4437 = vmatprep.subr.mxu0 0.0
  %4438 = vmatpush1.msra.mxu0 0.0
  %4439 = vmatprep.subr.mxu0 0.0
  %4440 = vmatpush1.msra.mxu0 0.0
  %4441 = vmatprep.subr.mxu0 0.0
  %4442 = vmatpush1.msra.mxu0 0.0
  %4443 = vmatprep.mubr.f32.mxu0 0.0
  %4444 = vmatmul.mubr.f32.gmra.mrb[0].mxu0 %v4377
  %v4445 = vpop.f32.mrb[0].mxu0
  %v4446 = vadd.f32 0.0, %v4445
  %v4447 = vpop.f32.mrb[0].mxu0
  %4448 = vdwg.mxu0
  %4449 = vrot.lane.b32.xlu0 %v3854, 48
  %v4450 = vpop.permute.xlu0 %4449
  %v4453 = vsel %vm356, %v4372, 0
  %4455 = vmatprep.subr.mxu0 0.0
  %4456 = vmatpush1.msra.mxu0 %v4450
  %4457 = vmatprep.subr.mxu0 0.0
  %4458 = vmatpush1.msra.mxu0 0.0
  %4459 = vmatprep.subr.mxu0 0.0
  %4460 = vmatpush1.msra.mxu0 0.0
  %4461 = vmatprep.subr.mxu0 0.0
  %4462 = vmatpush1.msra.mxu0 0.0
  %4463 = vmatprep.subr.mxu0 0.0
  %4464 = vmatpush1.msra.mxu0 0.0
  %4465 = vmatprep.subr.mxu0 0.0
  %4466 = vmatpush1.msra.mxu0 0.0
  %4467 = vmatprep.subr.mxu0 0.0
  %4468 = vmatpush1.msra.mxu0 0.0
  %4469 = vmatprep.subr.mxu0 0.0
  %4470 = vmatpush1.msra.mxu0 0.0
  %4471 = vmatprep.subr.mxu0 0.0
  %4472 = vmatpush1.msra.mxu0 0.0
  %4473 = vmatprep.subr.mxu0 0.0
  %4474 = vmatpush1.msra.mxu0 0.0
  %4475 = vmatprep.subr.mxu0 0.0
  %4476 = vmatpush1.msra.mxu0 0.0
  %4477 = vmatprep.subr.mxu0 0.0
  %4478 = vmatpush1.msra.mxu0 0.0
  %4479 = vmatprep.subr.mxu0 0.0
  %4480 = vmatpush1.msra.mxu0 0.0
  %4481 = vmatprep.subr.mxu0 0.0
  %4482 = vmatpush1.msra.mxu0 0.0
  %4483 = vmatprep.subr.mxu0 0.0
  %4484 = vmatpush1.msra.mxu0 0.0
  %4485 = vmatprep.subr.mxu0 0.0
  %4486 = vmatpush1.msra.mxu0 0.0
  %4487 = vmatprep.subr.mxu0 0.0
  %4488 = vmatpush1.msra.mxu0 0.0
  %4489 = vmatprep.subr.mxu0 0.0
  %4490 = vmatpush1.msra.mxu0 0.0
  %4491 = vmatprep.subr.mxu0 0.0
  %4492 = vmatpush1.msra.mxu0 0.0
  %4493 = vmatprep.subr.mxu0 0.0
  %4494 = vmatpush1.msra.mxu0 0.0
  %4495 = vmatprep.subr.mxu0 0.0
  %4496 = vmatpush1.msra.mxu0 0.0
  %4497 = vmatprep.subr.mxu0 0.0
  %4498 = vmatpush1.msra.mxu0 0.0
  %4499 = vmatprep.subr.mxu0 0.0
  %4500 = vmatpush1.msra.mxu0 0.0
  %4501 = vmatprep.subr.mxu0 0.0
  %4502 = vmatpush1.msra.mxu0 0.0
  %4503 = vmatprep.subr.mxu0 0.0
  %4504 = vmatpush1.msra.mxu0 0.0
  %4505 = vmatprep.subr.mxu0 0.0
  %4506 = vmatpush1.msra.mxu0 0.0
  %4507 = vmatprep.subr.mxu0 0.0
  %4508 = vmatpush1.msra.mxu0 0.0
  %4509 = vmatprep.subr.mxu0 0.0
  %4510 = vmatpush1.msra.mxu0 0.0
  %4511 = vmatprep.subr.mxu0 0.0
  %4512 = vmatpush1.msra.mxu0 0.0
  %4513 = vmatprep.subr.mxu0 0.0
  %4514 = vmatpush1.msra.mxu0 0.0
  %4515 = vmatprep.subr.mxu0 0.0
  %4516 = vmatpush1.msra.mxu0 0.0
  %4517 = vmatprep.subr.mxu0 0.0
  %4518 = vmatpush1.msra.mxu0 0.0
  %4519 = vmatprep.mubr.f32.mxu0 0.0
  %4520 = vmatmul.mubr.f32.gmra.mrb[0].mxu0 %v4453
  %v4521 = vpop.f32.mrb[0].mxu0
  %v4522 = vadd.f32 0.0, %v4521
  %v4523 = vpop.f32.mrb[0].mxu0
  %4524 = vdwg.mxu0
  %4527 = vrot.lane.b32.xlu0 %v4446, 16
  %v4528 = vpop.permute.xlu0 %4527
  %4529 = vrot.lane.b32.xlu0 %v4522, 16
  %v4530 = vpop.permute.xlu0 %4529
  %v4533 = vsel %vm186, %v4111, %v4528
  %v4534 = vsel %vm186, %v4188, %v4530
  %v4535 = vlaneseq
  %v4536 = vshrl.u32 %v4535, 7
  %v4537 = vsub.s32 0, %v4536
  %v4538 = vrot.slane %v3742, %v4537
  %4543 = vrot.lane.b32.xlu0 %v3730, 32
  %v4544 = vpop.permute.xlu0 %4543
  %4545 = vrot.lane.b32.xlu0 %v3732, 32
  %v4546 = vpop.permute.xlu0 %4545
  %4547 = vrot.lane.b32.xlu0 %v3734, 32
  %v4548 = vpop.permute.xlu0 %4547
  %4549 = vrot.lane.b32.xlu0 %v3736, 32
  %v4550 = vpop.permute.xlu0 %4549
  %v4556 = vsel %vm75, %v4533, 0
  %v4559 = vsel %vm75, %v4534, 0
  %4561 = vmatprep.subr.mxu0 0.0
  %4562 = vmatpush1.msra.mxu0 %v4544
  %4563 = vmatprep.subr.mxu0 0.0
  %4564 = vmatpush1.msra.mxu0 %v4546
  %4565 = vmatprep.subr.mxu0 0.0
  %4566 = vmatpush1.msra.mxu0 %v4548
  %4567 = vmatprep.subr.mxu0 0.0
  %4568 = vmatpush1.msra.mxu0 %v4550
  %4569 = vmatprep.subr.mxu0 0.0
  %4570 = vmatpush1.msra.mxu0 0.0
  %4571 = vmatprep.subr.mxu0 0.0
  %4572 = vmatpush1.msra.mxu0 0.0
  %4573 = vmatprep.subr.mxu0 0.0
  %4574 = vmatpush1.msra.mxu0 0.0
  %4575 = vmatprep.subr.mxu0 0.0
  %4576 = vmatpush1.msra.mxu0 0.0
  %4577 = vmatprep.subr.mxu0 0.0
  %4578 = vmatpush1.msra.mxu0 0.0
  %4579 = vmatprep.subr.mxu0 0.0
  %4580 = vmatpush1.msra.mxu0 0.0
  %4581 = vmatprep.subr.mxu0 0.0
  %4582 = vmatpush1.msra.mxu0 0.0
  %4583 = vmatprep.subr.mxu0 0.0
  %4584 = vmatpush1.msra.mxu0 0.0
  %4585 = vmatprep.subr.mxu0 0.0
  %4586 = vmatpush1.msra.mxu0 0.0
  %4587 = vmatprep.subr.mxu0 0.0
  %4588 = vmatpush1.msra.mxu0 0.0
  %4589 = vmatprep.subr.mxu0 0.0
  %4590 = vmatpush1.msra.mxu0 0.0
  %4591 = vmatprep.subr.mxu0 0.0
  %4592 = vmatpush1.msra.mxu0 0.0
  %4593 = vmatprep.subr.mxu0 0.0
  %4594 = vmatpush1.msra.mxu0 0.0
  %4595 = vmatprep.subr.mxu0 0.0
  %4596 = vmatpush1.msra.mxu0 0.0
  %4597 = vmatprep.subr.mxu0 0.0
  %4598 = vmatpush1.msra.mxu0 0.0
  %4599 = vmatprep.subr.mxu0 0.0
  %4600 = vmatpush1.msra.mxu0 0.0
  %4601 = vmatprep.subr.mxu0 0.0
  %4602 = vmatpush1.msra.mxu0 0.0
  %4603 = vmatprep.subr.mxu0 0.0
  %4604 = vmatpush1.msra.mxu0 0.0
  %4605 = vmatprep.subr.mxu0 0.0
  %4606 = vmatpush1.msra.mxu0 0.0
  %4607 = vmatprep.subr.mxu0 0.0
  %4608 = vmatpush1.msra.mxu0 0.0
  %4609 = vmatprep.subr.mxu0 0.0
  %4610 = vmatpush1.msra.mxu0 0.0
  %4611 = vmatprep.subr.mxu0 0.0
  %4612 = vmatpush1.msra.mxu0 0.0
  %4613 = vmatprep.subr.mxu0 0.0
  %4614 = vmatpush1.msra.mxu0 0.0
  %4615 = vmatprep.subr.mxu0 0.0
  %4616 = vmatpush1.msra.mxu0 0.0
  %4617 = vmatprep.subr.mxu0 0.0
  %4618 = vmatpush1.msra.mxu0 0.0
  %4619 = vmatprep.subr.mxu0 0.0
  %4620 = vmatpush1.msra.mxu0 0.0
  %4621 = vmatprep.subr.mxu0 0.0
  %4622 = vmatpush1.msra.mxu0 0.0
  %4623 = vmatprep.subr.mxu0 0.0
  %4624 = vmatpush1.msra.mxu0 0.0
  %4625 = vmatprep.mubr.f32.mxu0 0.0
  %4626 = vmatmul.mubr.f32.gmra.mrb[0].mxu0 %v4556
  %v4627 = vpop.f32.mrb[0].mxu0
  %v4628 = vadd.f32 %v4538, %v4627
  %v4629 = vpop.f32.mrb[0].mxu0
  %4630 = vmatprep.mubr.f32.mxu0 0.0
  %4631 = vmatmul.mubr.f32.gmra.mrb[0].mxu0 %v4559
  %v4632 = vpop.f32.mrb[0].mxu0
  %v4633 = vadd.f32 %v4538, %v4632
  %v4634 = vpop.f32.mrb[0].mxu0
  %4635 = vdwg.mxu0
  %v4636 = vadd.f32 %v4628, %v3727
  %v4637 = vadd.f32 %v4633, %v3728
  %v4638 = vsel %vm75, %v4636, 0.0
  %4639 = vadd.xlane.f32.xlu0 %v4638
  %v4640 = vpop.xlane.xlu0 %4639
  %v4641 = vsel %vm75, %v4637, 0.0
  %4642 = vadd.xlane.f32.xlu0 %v4641
  %v4643 = vpop.xlane.xlu0 %4642
  %v4644 = vmul.f32 %v4640, %v986
  %v4645 = vmul.f32 %v4643, %v986
  %v4646 = vsub.f32 %v4636, %v4644
  %v4647 = vsub.f32 %v4637, %v4645
  %v4648 = vmul.f32 %v4646, %v4646
  %v4649 = vmul.f32 %v4647, %v4647
  %v4650 = vsel %vm75, %v4648, 0.0
  %4651 = vadd.xlane.f32.xlu0 %v4650
  %v4652 = vpop.xlane.xlu0 %4651
  %v4653 = vsel %vm75, %v4649, 0.0
  %4654 = vadd.xlane.f32.xlu0 %v4653
  %v4655 = vpop.xlane.xlu0 %4654
  %v4656 = vmul.f32 %v4652, %v986
  %v4657 = vmul.f32 %v4655, %v986
  %v4658 = vadd.f32 %v4656, 1e-12
  %v4659 = vadd.f32 %v4657, 1e-12
  %v4660 = vrsqrt.pop %v4658
  %v4661 = vrsqrt.pop %v4659
  %v4662 = vmul.f32 %v4646, %v4660
  %v4663 = vmul.f32 %v4647, %v4661
  %v4664 = vlaneseq
  %v4665 = vshrl.u32 %v4664, 7
  %v4666 = vsub.s32 0, %v4665
  %v4667 = vrot.slane %v3743, %v4666
  %v4668 = vmul.f32 %v4662, %v4667
  %v4669 = vmul.f32 %v4663, %v4667
  %v4670 = vlaneseq
  %v4671 = vshrl.u32 %v4670, 7
  %v4672 = vsub.s32 0, %v4671
  %v4673 = vrot.slane %v3744, %v4672
  %v4674 = vadd.f32 %v4668, %v4673
  %v4675 = vadd.f32 %v4669, %v4673
  %v4676 = vld [vmem:[%s3488 + $0x1] sm:$0x1]
  %v4677 = vlaneseq
  %v4678 = vshrl.u32 %v4677, 7
  %v4679 = vsub.s32 0, %v4678
  %v4680 = vrot.slane %v4676, %v4679
  %v4682 = vsel %vm75, %v4674, 0
  %v4685 = vsel %vm75, %v4675, 0
  %4687 = vmatprep.subr.mxu0 0.0
  %4688 = vmatpush1.msra.mxu0 %v3731
  %4689 = vmatprep.subr.mxu0 0.0
  %4690 = vmatpush1.msra.mxu0 %v3733
  %4691 = vmatprep.subr.mxu0 0.0
  %4692 = vmatpush1.msra.mxu0 %v3735
  %4693 = vmatprep.subr.mxu0 0.0
  %4694 = vmatpush1.msra.mxu0 %v3737
  %4695 = vmatprep.subr.mxu0 0.0
  %4696 = vmatpush1.msra.mxu0 0.0
  %4697 = vmatprep.subr.mxu0 0.0
  %4698 = vmatpush1.msra.mxu0 0.0
  %4699 = vmatprep.subr.mxu0 0.0
  %4700 = vmatpush1.msra.mxu0 0.0
  %4701 = vmatprep.subr.mxu0 0.0
  %4702 = vmatpush1.msra.mxu0 0.0
  %4703 = vmatprep.subr.mxu0 0.0
  %4704 = vmatpush1.msra.mxu0 0.0
  %4705 = vmatprep.subr.mxu0 0.0
  %4706 = vmatpush1.msra.mxu0 0.0
  %4707 = vmatprep.subr.mxu0 0.0
  %4708 = vmatpush1.msra.mxu0 0.0
  %4709 = vmatprep.subr.mxu0 0.0
  %4710 = vmatpush1.msra.mxu0 0.0
  %4711 = vmatprep.subr.mxu0 0.0
  %4712 = vmatpush1.msra.mxu0 0.0
  %4713 = vmatprep.subr.mxu0 0.0
  %4714 = vmatpush1.msra.mxu0 0.0
  %4715 = vmatprep.subr.mxu0 0.0
  %4716 = vmatpush1.msra.mxu0 0.0
  %4717 = vmatprep.subr.mxu0 0.0
  %4718 = vmatpush1.msra.mxu0 0.0
  %4719 = vmatprep.subr.mxu0 0.0
  %4720 = vmatpush1.msra.mxu0 0.0
  %4721 = vmatprep.subr.mxu0 0.0
  %4722 = vmatpush1.msra.mxu0 0.0
  %4723 = vmatprep.subr.mxu0 0.0
  %4724 = vmatpush1.msra.mxu0 0.0
  %4725 = vmatprep.subr.mxu0 0.0
  %4726 = vmatpush1.msra.mxu0 0.0
  %4727 = vmatprep.subr.mxu0 0.0
  %4728 = vmatpush1.msra.mxu0 0.0
  %4729 = vmatprep.subr.mxu0 0.0
  %4730 = vmatpush1.msra.mxu0 0.0
  %4731 = vmatprep.subr.mxu0 0.0
  %4732 = vmatpush1.msra.mxu0 0.0
  %4733 = vmatprep.subr.mxu0 0.0
  %4734 = vmatpush1.msra.mxu0 0.0
  %4735 = vmatprep.subr.mxu0 0.0
  %4736 = vmatpush1.msra.mxu0 0.0
  %4737 = vmatprep.subr.mxu0 0.0
  %4738 = vmatpush1.msra.mxu0 0.0
  %4739 = vmatprep.subr.mxu0 0.0
  %4740 = vmatpush1.msra.mxu0 0.0
  %4741 = vmatprep.subr.mxu0 0.0
  %4742 = vmatpush1.msra.mxu0 0.0
  %4743 = vmatprep.subr.mxu0 0.0
  %4744 = vmatpush1.msra.mxu0 0.0
  %4745 = vmatprep.subr.mxu0 0.0
  %4746 = vmatpush1.msra.mxu0 0.0
  %4747 = vmatprep.subr.mxu0 0.0
  %4748 = vmatpush1.msra.mxu0 0.0
  %4749 = vmatprep.subr.mxu0 0.0
  %4750 = vmatpush1.msra.mxu0 0.0
  %4751 = vmatprep.mubr.f32.mxu0 0.0
  %4752 = vmatmul.mubr.f32.gmra.mrb[0].mxu0 %v4682
  %v4753 = vpop.f32.mrb[0].mxu0
  %v4754 = vadd.f32 %v4680, %v4753
  %v4755 = vpop.f32.mrb[0].mxu0
  %4756 = vmatprep.mubr.f32.mxu0 0.0
  %4757 = vmatmul.mubr.f32.gmra.mrb[0].mxu0 %v4685
  %v4758 = vpop.f32.mrb[0].mxu0
  %v4759 = vadd.f32 %v4680, %v4758
  %v4760 = vpop.f32.mrb[0].mxu0
  %4761 = vdwg.mxu0
  %v4762 = vmul.f32 %v4754, %v4754
  %v4763 = vmul.f32 %v4759, %v4759
  %v4764 = vmul.f32 %v4754, %v4762
  %v4765 = vmul.f32 %v4759, %v4763
  %v4766 = vmul.f32 %v4764, 0.044715
  %v4767 = vmul.f32 %v4765, 0.044715
  %v4768 = vadd.f32 %v4754, %v4766
  %v4769 = vadd.f32 %v4759, %v4767
  %v4770 = vmul.f32 %v4768, 0.7978846
  %v4771 = vmul.f32 %v4769, 0.7978846
  %v4772 = vtanh.pop %v4770
  %v4773 = vtanh.pop %v4771
  %v4774 = vadd.f32 %v4772, 1.0
  %v4775 = vadd.f32 %v4773, 1.0
  %v4776 = vmul.f32 %v4774, 0.5
  %v4777 = vmul.f32 %v4775, 0.5
  %v4778 = vmul.f32 %v4754, %v4776
  %v4779 = vmul.f32 %v4759, %v4777
  %s4780 = scalar_lea.vmem %s3, 384
  %v4781 = vld [vmem:[%s4780] sm:$0xff]
  %v4782 = vld [vmem:[%s4780 + $0x8] sm:$0xff]
  %v4783 = vld [vmem:[%s4780 + $0x10] sm:$0xff]
  %v4784 = vld [vmem:[%s4780 + $0x18] sm:$0xff]
  %v4785 = vld [vmem:[%s4780 + $0x20] sm:$0xff]
  %v4786 = vld [vmem:[%s4780 + $0x28] sm:$0xff]
  %v4787 = vld [vmem:[%s4780 + $0x30] sm:$0xff]
  %v4788 = vld [vmem:[%s4780 + $0x38] sm:$0xff]
  %v4789 = vld [vmem:[%s4780 + $0x40] sm:$0xff]
  %v4790 = vld [vmem:[%s4780 + $0x48] sm:$0xff]
  %v4791 = vld [vmem:[%s4780 + $0x50] sm:$0xff]
  %v4792 = vld [vmem:[%s4780 + $0x58] sm:$0xff]
  %v4793 = vld [vmem:[%s4780 + $0x60] sm:$0xff]
  %v4794 = vld [vmem:[%s4780 + $0x68] sm:$0xff]
  %v4795 = vld [vmem:[%s4780 + $0x70] sm:$0xff]
  %v4796 = vld [vmem:[%s4780 + $0x78] sm:$0xff]
  %v4797 = vlaneseq
  %v4798 = vshrl.u32 %v4797, 7
  %v4799 = vsub.s32 0, %v4798
  %v4800 = vrot.slane %v3745, %v4799
  %4801 = vmatprep.subr.mxu0 0.0
  %4802 = vmatpush1.msra.mxu0 %v4781
  %4803 = vmatprep.subr.mxu0 0.0
  %4804 = vmatpush1.msra.mxu0 %v4782
  %4805 = vmatprep.subr.mxu0 0.0
  %4806 = vmatpush1.msra.mxu0 %v4783
  %4807 = vmatprep.subr.mxu0 0.0
  %4808 = vmatpush1.msra.mxu0 %v4784
  %4809 = vmatprep.subr.mxu0 0.0
  %4810 = vmatpush1.msra.mxu0 %v4785
  %4811 = vmatprep.subr.mxu0 0.0
  %4812 = vmatpush1.msra.mxu0 %v4786
  %4813 = vmatprep.subr.mxu0 0.0
  %4814 = vmatpush1.msra.mxu0 %v4787
  %4815 = vmatprep.subr.mxu0 0.0
  %4816 = vmatpush1.msra.mxu0 %v4788
  %4817 = vmatprep.subr.mxu0 0.0
  %4818 = vmatpush1.msra.mxu0 %v4789
  %4819 = vmatprep.subr.mxu0 0.0
  %4820 = vmatpush1.msra.mxu0 %v4790
  %4821 = vmatprep.subr.mxu0 0.0
  %4822 = vmatpush1.msra.mxu0 %v4791
  %4823 = vmatprep.subr.mxu0 0.0
  %4824 = vmatpush1.msra.mxu0 %v4792
  %4825 = vmatprep.subr.mxu0 0.0
  %4826 = vmatpush1.msra.mxu0 %v4793
  %4827 = vmatprep.subr.mxu0 0.0
  %4828 = vmatpush1.msra.mxu0 %v4794
  %4829 = vmatprep.subr.mxu0 0.0
  %4830 = vmatpush1.msra.mxu0 %v4795
  %4831 = vmatprep.subr.mxu0 0.0
  %4832 = vmatpush1.msra.mxu0 %v4796
  %4833 = vmatprep.subr.mxu0 0.0
  %4834 = vmatpush1.msra.mxu0 0.0
  %4835 = vmatprep.subr.mxu0 0.0
  %4836 = vmatpush1.msra.mxu0 0.0
  %4837 = vmatprep.subr.mxu0 0.0
  %4838 = vmatpush1.msra.mxu0 0.0
  %4839 = vmatprep.subr.mxu0 0.0
  %4840 = vmatpush1.msra.mxu0 0.0
  %4841 = vmatprep.subr.mxu0 0.0
  %4842 = vmatpush1.msra.mxu0 0.0
  %4843 = vmatprep.subr.mxu0 0.0
  %4844 = vmatpush1.msra.mxu0 0.0
  %4845 = vmatprep.subr.mxu0 0.0
  %4846 = vmatpush1.msra.mxu0 0.0
  %4847 = vmatprep.subr.mxu0 0.0
  %4848 = vmatpush1.msra.mxu0 0.0
  %4849 = vmatprep.subr.mxu0 0.0
  %4850 = vmatpush1.msra.mxu0 0.0
  %4851 = vmatprep.subr.mxu0 0.0
  %4852 = vmatpush1.msra.mxu0 0.0
  %4853 = vmatprep.subr.mxu0 0.0
  %4854 = vmatpush1.msra.mxu0 0.0
  %4855 = vmatprep.subr.mxu0 0.0
  %4856 = vmatpush1.msra.mxu0 0.0
  %4857 = vmatprep.subr.mxu0 0.0
  %4858 = vmatpush1.msra.mxu0 0.0
  %4859 = vmatprep.subr.mxu0 0.0
  %4860 = vmatpush1.msra.mxu0 0.0
  %4861 = vmatprep.subr.mxu0 0.0
  %4862 = vmatpush1.msra.mxu0 0.0
  %4863 = vmatprep.subr.mxu0 0.0
  %4864 = vmatpush1.msra.mxu0 0.0
  %4865 = vmatprep.mubr.f32.mxu0 0.0
  %4866 = vmatmul.mubr.f32.gmra.mrb[0].mxu0 %v4778
  %v4867 = vpop.f32.mrb[0].mxu0
  %v4868 = vadd.f32 %v4800, %v4867
  %v4869 = vpop.f32.mrb[0].mxu0
  %4870 = vmatprep.mubr.f32.mxu0 0.0
  %4871 = vmatmul.mubr.f32.gmra.mrb[0].mxu0 %v4779
  %v4872 = vpop.f32.mrb[0].mxu0
  %v4873 = vadd.f32 %v4800, %v4872
  %v4874 = vpop.f32.mrb[0].mxu0
  %4875 = vdwg.mxu0
  %v4876 = vadd.f32 %v4868, %v4674
  %v4877 = vadd.f32 %v4873, %v4675
  %v4878 = vsel %vm75, %v4876, 0.0
  %4879 = vadd.xlane.f32.xlu0 %v4878
  %v4880 = vpop.xlane.xlu0 %4879
  %v4881 = vsel %vm75, %v4877, 0.0
  %4882 = vadd.xlane.f32.xlu0 %v4881
  %v4883 = vpop.xlane.xlu0 %4882
  %v4884 = vmul.f32 %v4880, %v986
  %v4885 = vmul.f32 %v4883, %v986
  %v4886 = vsub.f32 %v4876, %v4884
  %v4887 = vsub.f32 %v4877, %v4885
  %v4888 = vmul.f32 %v4886, %v4886
  %v4889 = vmul.f32 %v4887, %v4887
  %v4890 = vsel %vm75, %v4888, 0.0
  %4891 = vadd.xlane.f32.xlu0 %v4890
  %v4892 = vpop.xlane.xlu0 %4891
  %v4893 = vsel %vm75, %v4889, 0.0
  %4894 = vadd.xlane.f32.xlu0 %v4893
  %v4895 = vpop.xlane.xlu0 %4894
  %v4896 = vmul.f32 %v4892, %v986
  %v4897 = vmul.f32 %v4895, %v986
  %v4898 = vadd.f32 %v4896, 1e-12
  %v4899 = vadd.f32 %v4897, 1e-12
  %v4900 = vrsqrt.pop %v4898
  %v4901 = vrsqrt.pop %v4899
  %v4902 = vmul.f32 %v4886, %v4900
  %v4903 = vmul.f32 %v4887, %v4901
  %v4904 = vlaneseq
  %v4905 = vshrl.u32 %v4904, 7
  %v4906 = vsub.s32 0, %v4905
  %v4907 = vrot.slane %v3746, %v4906
  %v4908 = vmul.f32 %v4902, %v4907
  %v4909 = vmul.f32 %v4903, %v4907
  %v4910 = vlaneseq
  %v4911 = vshrl.u32 %v4910, 7
  %v4912 = vsub.s32 0, %v4911
  %v4913 = vrot.slane %v3747, %v4912
  %v4914 = vadd.f32 %v4908, %v4913
  %v4915 = vadd.f32 %v4909, %v4913
  %s4916 = scalar_lea.vmem %s6, 32
  %v4917 = vld [vmem:[%s4916] sm:$0xff]
  %v4918 = vld [vmem:[%s4916 + $0x8] sm:$0xff]
  %v4919 = vld [vmem:[%s4916 + $0x10] sm:$0xff]
  %v4920 = vld [vmem:[%s4916 + $0x18] sm:$0xff]
  %v4921 = vld [vmem:[%s7 + $0x1] sm:$0x1]
  %v4922 = vlaneseq
  %v4923 = vshrl.u32 %v4922, 7
  %v4924 = vsub.s32 0, %v4923
  %v4925 = vrot.slane %v4921, %v4924
  %v4927 = vsel %vm75, %v4914, 0
  %v4930 = vsel %vm75, %v4915, 0
  %4932 = vmatprep.subr.mxu0 0.0
  %4933 = vmatpush1.msra.mxu0 %v4917
  %4934 = vmatprep.subr.mxu0 0.0
  %4935 = vmatpush1.msra.mxu0 %v4918
  %4936 = vmatprep.subr.mxu0 0.0
  %4937 = vmatpush1.msra.mxu0 %v4919
  %4938 = vmatprep.subr.mxu0 0.0
  %4939 = vmatpush1.msra.mxu0 %v4920
  %4940 = vmatprep.subr.mxu0 0.0
  %4941 = vmatpush1.msra.mxu0 0.0
  %4942 = vmatprep.subr.mxu0 0.0
  %4943 = vmatpush1.msra.mxu0 0.0
  %4944 = vmatprep.subr.mxu0 0.0
  %4945 = vmatpush1.msra.mxu0 0.0
  %4946 = vmatprep.subr.mxu0 0.0
  %4947 = vmatpush1.msra.mxu0 0.0
  %4948 = vmatprep.subr.mxu0 0.0
  %4949 = vmatpush1.msra.mxu0 0.0
  %4950 = vmatprep.subr.mxu0 0.0
  %4951 = vmatpush1.msra.mxu0 0.0
  %4952 = vmatprep.subr.mxu0 0.0
  %4953 = vmatpush1.msra.mxu0 0.0
  %4954 = vmatprep.subr.mxu0 0.0
  %4955 = vmatpush1.msra.mxu0 0.0
  %4956 = vmatprep.subr.mxu0 0.0
  %4957 = vmatpush1.msra.mxu0 0.0
  %4958 = vmatprep.subr.mxu0 0.0
  %4959 = vmatpush1.msra.mxu0 0.0
  %4960 = vmatprep.subr.mxu0 0.0
  %4961 = vmatpush1.msra.mxu0 0.0
  %4962 = vmatprep.subr.mxu0 0.0
  %4963 = vmatpush1.msra.mxu0 0.0
  %4964 = vmatprep.subr.mxu0 0.0
  %4965 = vmatpush1.msra.mxu0 0.0
  %4966 = vmatprep.subr.mxu0 0.0
  %4967 = vmatpush1.msra.mxu0 0.0
  %4968 = vmatprep.subr.mxu0 0.0
  %4969 = vmatpush1.msra.mxu0 0.0
  %4970 = vmatprep.subr.mxu0 0.0
  %4971 = vmatpush1.msra.mxu0 0.0
  %4972 = vmatprep.subr.mxu0 0.0
  %4973 = vmatpush1.msra.mxu0 0.0
  %4974 = vmatprep.subr.mxu0 0.0
  %4975 = vmatpush1.msra.mxu0 0.0
  %4976 = vmatprep.subr.mxu0 0.0
  %4977 = vmatpush1.msra.mxu0 0.0
  %4978 = vmatprep.subr.mxu0 0.0
  %4979 = vmatpush1.msra.mxu0 0.0
  %4980 = vmatprep.subr.mxu0 0.0
  %4981 = vmatpush1.msra.mxu0 0.0
  %4982 = vmatprep.subr.mxu0 0.0
  %4983 = vmatpush1.msra.mxu0 0.0
  %4984 = vmatprep.subr.mxu0 0.0
  %4985 = vmatpush1.msra.mxu0 0.0
  %4986 = vmatprep.subr.mxu0 0.0
  %4987 = vmatpush1.msra.mxu0 0.0
  %4988 = vmatprep.subr.mxu0 0.0
  %4989 = vmatpush1.msra.mxu0 0.0
  %4990 = vmatprep.subr.mxu0 0.0
  %4991 = vmatpush1.msra.mxu0 0.0
  %4992 = vmatprep.subr.mxu0 0.0
  %4993 = vmatpush1.msra.mxu0 0.0
  %4994 = vmatprep.subr.mxu0 0.0
  %4995 = vmatpush1.msra.mxu0 0.0
  %4996 = vmatprep.mubr.f32.mxu0 0.0
  %4997 = vmatmul.mubr.f32.gmra.mrb[0].mxu0 %v4927
  %v4998 = vpop.f32.mrb[0].mxu0
  %v4999 = vadd.f32 %v4925, %v4998
  %v5000 = vpop.f32.mrb[0].mxu0
  %5001 = vmatprep.mubr.f32.mxu0 0.0
  %5002 = vmatmul.mubr.f32.gmra.mrb[0].mxu0 %v4930
  %v5003 = vpop.f32.mrb[0].mxu0
  %v5004 = vadd.f32 %v4925, %v5003
  %v5005 = vpop.f32.mrb[0].mxu0
  %5006 = vdwg.mxu0
  %s5007 = scalar_lea.vmem %s8, 16
  %5008 = vst.msk [vmem:[%s5007] sm:$0xff] %vm2535, %v4999
  %5009 = vst.msk [vmem:[%s5007 + $0x8] sm:$0xff] %vm2535, %v5004
  // Predicated region
  $region34: #{tpu_custom_call.1} parent=0 // pred_check
    _
  $region35: #{tpu_custom_call.1} parent=0 // pred_check_branch
    %5011 = sbr.rel (0) target = $region37
  $region36: #{tpu_custom_call.1} parent=0 // pred_region
    _
  $region37: #{tpu_custom_call.1} parent=0 // pred_fallthru
    _
  // Predicated region
  $region38: #{tpu_custom_call.1} parent=0 // pred_check
    _
  $region39: #{tpu_custom_call.1} parent=0 // pred_check_branch
    %5013 = sbr.rel (0) target = $region41
  $region40: #{tpu_custom_call.1} parent=0 // pred_region
    _
  $region41: #{tpu_custom_call.1} parent=0 // pred_fallthru
    _

</llo_original>
